<compile_context>
chip_gen: v7x
topology: tpu7x:2x2x1
jax: 0.10.0
libtpu: 0.0.40
codegen_flags: <defaults>
</compile_context>

<pallas_src>
import functools

import jax
import jax.numpy as jnp
from jax.experimental import pallas as pl
from jax.experimental.pallas import tpu as pltpu


def _round_up(x, m):
    return ((x + m - 1) // m) * m


def _vae_kernel(
    x_ref, eps_ref,
    ew1_ref, eb1_ref, ew2_ref, eb2_ref, ew3_ref, eb3_ref,
    dw1_ref, db1_ref, dw2_ref, db2_ref, dw3_ref, db3_ref,
    xhat_ref, muvar_ref,
):
    f32 = jnp.float32
    bf16 = jnp.bfloat16
    latent_pad = eps_ref.shape[-1]          # Lp (multiple of 128)

    def dense(act_bf16, w_ref, b_ref):
        # bf16 MXU operands, f32 accumulation, f32 bias/epilogue.
        return jnp.dot(act_bf16, w_ref[...], preferred_element_type=f32) + b_ref[...]

    def relu_bf16(y_f32):
        # ReLU in f32 (v5e has no bf16 VPU), single cast feeding the next MXU op.
        return jnp.maximum(y_f32, 0.0).astype(bf16)

    x = x_ref[...]                           # bf16, lane-dense
    eps = eps_ref[...]                       # bf16

    # -------- encoder: Dp -> Hp -> Hp -> 2*Lp (mu | raw_var, lane-packed) ----
    h = relu_bf16(dense(x, ew1_ref, eb1_ref))       # dropout = identity (inference)
    h = relu_bf16(dense(h, ew2_ref, eb2_ref))
    enc = dense(h, ew3_ref, eb3_ref)                # [TB, 2*Lp] f32

    # lane-aligned split (Lp is a multiple of 128 -> no XLU lane shifts/masks)
    mu = enc[:, :latent_pad]
    raw_var = enc[:, latent_pad:]
    # numerically stable softplus: log1p(exp(x)) -> x for large x
    var = jnp.where(raw_var > 20.0, raw_var,
                    jnp.log1p(jnp.exp(jnp.minimum(raw_var, 20.0))))

    # -------- reparameterization ---------------------------------------------
    z = mu + eps * jnp.sqrt(var + 1e-10)

    # -------- decoder: Lp -> Hp -> Hp -> Dp -----------------------------------
    d = relu_bf16(dense(z.astype(bf16), dw1_ref, db1_ref))
    d = relu_bf16(dense(d, dw2_ref, db2_ref))
    logits = dense(d, dw3_ref, db3_ref)
    # sigmoid = 1/(1+exp(-x)): exp on EUP, approx reciprocal on EUP (no VALU
    # divide); clamp since the approximate reciprocal can land just outside [0,1].
    x_hat = pl.reciprocal(1.0 + jnp.exp(-logits), approx=True)
    x_hat = jnp.minimum(jnp.maximum(x_hat, 0.0), 1.0)

    # -------- lane-dense bf16 stores ------------------------------------------
    xhat_ref[...] = x_hat.astype(xhat_ref.dtype)
    muvar_ref[:, :latent_pad] = mu.astype(muvar_ref.dtype)   # packed mu|var output
    muvar_ref[:, latent_pad:] = var.astype(muvar_ref.dtype)  # (split in wrapper)


def pack_vae_params(params, input_dim, hidden_dim, latent_dim):
    """Zero-pad feature dims to 128-lane multiples, place mu / var halves of the
    encoder head on their own 128-lane-aligned column ranges, cast weights to
    bf16 (MXU operands). Biases stay f32."""
    (ew1, eb1, ew2, eb2, ew3, eb3, dw1, db1, dw2, db2, dw3, db3) = params
    Dp = _round_up(input_dim, 128)
    Hp = _round_up(hidden_dim, 128)
    Lp = _round_up(latent_dim, 128)

    def pad2(a, rows, cols):
        r, c = a.shape
        return jnp.pad(a, ((0, rows - r), (0, cols - c)))

    def w(a, rp, cp):
        return pad2(a, rp, cp).astype(jnp.bfloat16)

    def b(a, cp):
        return pad2(a, 1, cp).astype(jnp.float32)

    # Encoder head: original cols [0,L) -> lanes [0,L); cols [L,2L) -> lanes [Lp,Lp+L)
    ew3_p = jnp.zeros((Hp, 2 * Lp), jnp.float32)
    ew3_p = ew3_p.at[:hidden_dim, :latent_dim].set(ew3[:, :latent_dim])
    ew3_p = ew3_p.at[:hidden_dim, Lp:Lp + latent_dim].set(ew3[:, latent_dim:])
    eb3_p = jnp.zeros((1, 2 * Lp), jnp.float32)
    eb3_p = eb3_p.at[:, :latent_dim].set(eb3[:, :latent_dim])
    eb3_p = eb3_p.at[:, Lp:Lp + latent_dim].set(eb3[:, latent_dim:])

    packed = (
        w(ew1, Dp, Hp), b(eb1, Hp),
        w(ew2, Hp, Hp), b(eb2, Hp),
        ew3_p.astype(jnp.bfloat16), eb3_p,
        w(dw1, Lp, Hp), b(db1, Hp),
        w(dw2, Hp, Hp), b(db2, Hp),
        w(dw3, Hp, Dp), b(db3, Dp),
    )
    return packed, (Dp, Hp, Lp)


def _pick_batch_tile(batch, requested):
    """Largest 128-multiple tile <= requested that keeps >= 2 grid steps
    (so ("parallel",) can shard the batch axis across v7x's 2 TensorCores)."""
    tb = max(128, _round_up(requested, 128))
    half = max(128, _round_up((batch + 1) // 2, 128))
    return min(tb, half)


def _pad_cast_2d(a, rows, cols, dtype):
    """Cast + zero-pad; the pad is skipped entirely when already aligned so no
    extra HBM pass is spent on the largest tensors."""
    a = a.astype(dtype)
    pr, pc = rows - a.shape[0], cols - a.shape[1]
    if pr or pc:
        a = jnp.pad(a, ((0, pr), (0, pc)))
    return a


@functools.partial(
    jax.jit, static_argnames=("dims", "batch_tile", "single_buffer_weights"))
def _vae_forward_impl(x, eps, packed_params, *, dims, batch_tile,
                      single_buffer_weights):
    input_dim, _, latent_dim = dims
    ew1 = packed_params[0]
    dw1 = packed_params[6]
    Dp, Hp = ew1.shape
    Lp = dw1.shape[0]

    B = x.shape[0]
    TB = _pick_batch_tile(B, batch_tile)
    Bp = _round_up(max(B, TB), TB)

    xp = _pad_cast_2d(x, Bp, Dp, jnp.bfloat16)
    epsp = _pad_cast_2d(eps, Bp, Lp, jnp.bfloat16)

    grid = (Bp // TB,)
    tile_map = lambda i: (i, 0)     # batch-tiled arrays
    const_map = lambda i: (0, 0)    # weights/biases: resident across grid steps

    if single_buffer_weights:
        # Constant-index blocks are only fetched once; Buffered(1) avoids the
        # dead second VMEM buffer for each of the 12 weight/bias blocks.
        def w_spec(p):
            return pl.BlockSpec(p.shape, const_map,
                                pipeline_mode=pl.Buffered(buffer_count=1))
    else:
        def w_spec(p):
            return pl.BlockSpec(p.shape, const_map)

    in_specs = (
        [pl.BlockSpec((TB, Dp), tile_map),
         pl.BlockSpec((TB, Lp), tile_map)]
        + [w_spec(p) for p in packed_params]
    )
    out_specs = (
        pl.BlockSpec((TB, Dp), tile_map),        # x_hat (lane-dense, bf16)
        pl.BlockSpec((TB, 2 * Lp), tile_map),    # packed mu|var (lane-dense, bf16)
    )
    out_shape = (
        jax.ShapeDtypeStruct((Bp, Dp), jnp.bfloat16),
        jax.ShapeDtypeStruct((Bp, 2 * Lp), jnp.bfloat16),
    )

    flops_per_row = 2 * (Dp * Hp + Hp * Hp + Hp * 2 * Lp + Lp * Hp + Hp * Hp + Hp * Dp)
    cost = pl.CostEstimate(
        flops=Bp * flops_per_row,
        transcendentals=Bp * (2 * Lp + 2 * Dp),
        bytes_accessed=(xp.size + epsp.size) * 2
        + sum(p.size * p.dtype.itemsize for p in packed_params)
        + (Bp * Dp + Bp * 2 * Lp) * 2,
    )

    xhat_p, muvar_p = pl.pallas_call(
        _vae_kernel,
        out_shape=out_shape,
        grid=grid,
        in_specs=in_specs,
        out_specs=out_specs,
        compiler_params=pltpu.CompilerParams(
            dimension_semantics=("parallel",),      # megacore-shard batch on v7x
            vmem_limit_bytes=48 * 1024 * 1024,      # safe on v7x's 64 MiB VMEM
        ),
        cost_estimate=cost,
    )(xp, epsp, *packed_params)

    # Outputs stay bf16 (half the HBM write traffic); caller can upcast if needed.
    x_hat = xhat_p[:B, :input_dim]
    mu = muvar_p[:B, :latent_dim]
    var = muvar_p[:B, Lp:Lp + latent_dim]
    return x_hat, mu, var


def vae_forward(x, eps, packed_params, *, dims, batch_tile=512):
    """Full VAE forward: batch-tiled Pallas kernel with VMEM-resident weights."""
    try:
        return _vae_forward_impl(x, eps, packed_params, dims=dims,
                                 batch_tile=batch_tile,
                                 single_buffer_weights=True)
    except Exception:
        # Fallback for JAX builds where pipeline_mode=pl.Buffered(...) is not
        # supported on top-level pallas_call BlockSpecs.
        return _vae_forward_impl(x, eps, packed_params, dims=dims,
                                 batch_tile=batch_tile,
                                 single_buffer_weights=False)


def vae_reference(x, eps, params):
    """Pure-JAX reference on the UNPADDED params (same bf16-dot / f32-accumulate
    numerics as the kernel, exact sigmoid, f32 outputs)."""
    (ew1, eb1, ew2, eb2, ew3, eb3, dw1, db1, dw2, db2, dw3, db3) = params
    latent_dim = dw1.shape[0]

    def dense(a, w, b):
        return jnp.dot(a.astype(jnp.bfloat16), w.astype(jnp.bfloat16),
                       preferred_element_type=jnp.float32) + b

    h = jnp.maximum(dense(x, ew1, eb1), 0.0)
    h = jnp.maximum(dense(h, ew2, eb2), 0.0)
    enc = dense(h, ew3, eb3)
    mu, raw_var = enc[:, :latent_dim], enc[:, latent_dim:]
    var = jnp.where(raw_var > 20.0, raw_var,
                    jnp.log1p(jnp.exp(jnp.minimum(raw_var, 20.0))))
    z = mu + eps.astype(jnp.float32) * jnp.sqrt(var + 1e-10)
    d = jnp.maximum(dense(z, dw1, db1), 0.0)
    d = jnp.maximum(dense(d, dw2, db2), 0.0)
    x_hat = jax.nn.sigmoid(dense(d, dw3, db3))
    return x_hat, mu, var


def init_linear(key, fan_in, fan_out):
    """PyTorch-style uniform(-1/sqrt(fan_in), 1/sqrt(fan_in)) init.
    Weight returned pre-transposed [fan_in, fan_out]; bias [1, fan_out]."""
    kw, kb = jax.random.split(key)
    bound = 1.0 / jnp.sqrt(jnp.float32(fan_in))
    w = jax.random.uniform(kw, (fan_in, fan_out), jnp.float32, -bound, bound)
    b = jax.random.uniform(kb, (1, fan_out), jnp.float32, -bound, bound)
    return w, b


if __name__ == "__main__":
    # Demo shapes: feature dims MXU/lane-friendly; latent=64 exercises the
    # 128-lane padding path; batch=512 -> 256-row tiles, two parallel grid
    # steps (v7x megacore).  For real v6e/v7x models prefer hidden dims that
    # are multiples of 256 to fill the 2x256x256 MXU.
    batch = 512
    input_dim = 256
    hidden_dim = 128
    latent_dim = 64

    root = jax.random.PRNGKey(0)
    keys = jax.random.split(root, 8)

    # Encoder: input_dim -> hidden -> hidden -> 2*latent
    ew1, eb1 = init_linear(keys[0], input_dim, hidden_dim)
    ew2, eb2 = init_linear(keys[1], hidden_dim, hidden_dim)
    ew3, eb3 = init_linear(keys[2], hidden_dim, 2 * latent_dim)
    # Decoder: latent -> hidden -> hidden -> input_dim
    dw1, db1 = init_linear(keys[3], latent_dim, hidden_dim)
    dw2, db2 = init_linear(keys[4], hidden_dim, hidden_dim)
    dw3, db3 = init_linear(keys[5], hidden_dim, input_dim)

    params = (ew1, eb1, ew2, eb2, ew3, eb3, dw1, db1, dw2, db2, dw3, db3)
    packed, _ = pack_vae_params(params, input_dim, hidden_dim, latent_dim)

    # bf16 input streams (the kernel is HBM-bandwidth-bound; bf16 halves traffic).
    x = jax.random.uniform(keys[6], (batch, input_dim), jnp.bfloat16)
    eps = jax.random.normal(keys[7], (batch, latent_dim), jnp.bfloat16)

    x_hat, mu, var = vae_forward(
        x, eps, packed,
        dims=(input_dim, hidden_dim, latent_dim),
        batch_tile=512,
    )
    jax.block_until_ready((x_hat, mu, var))

    # Shape / range sanity.
    assert x_hat.shape == (batch, input_dim)
    assert mu.shape == (batch, latent_dim)
    assert var.shape == (batch, latent_dim)
    assert bool(jnp.all(var >= 0.0))
    assert bool(jnp.all((x_hat >= 0.0) & (x_hat <= 1.0)))   # clamped in-kernel

    # Numerical parity with a pure-JAX reference (unpadded params, f32 outputs).
    xr, mr, vr = vae_reference(x, eps, params)
    f32 = jnp.float32
    assert bool(jnp.allclose(mu.astype(f32), mr, atol=1e-2, rtol=1e-2))
    assert bool(jnp.allclose(var.astype(f32), vr, atol=1e-2, rtol=1e-2))
    assert bool(jnp.allclose(x_hat.astype(f32), xr, atol=1e-2, rtol=1e-2))

    print("KERNEL_OK")
</pallas_src>

<mosaic_0001>
module attributes {stable_mosaic.version = 11 : i64} {
  func.func @_vae_kernel(%arg0: i32, %arg1: memref<256x256xbf16, #tpu.memory_space<vmem>>, %arg2: memref<256x128xbf16, #tpu.memory_space<vmem>>, %arg3: memref<256x128xbf16, #tpu.memory_space<vmem>>, %arg4: memref<1x128xf32, #tpu.memory_space<vmem>>, %arg5: memref<128x128xbf16, #tpu.memory_space<vmem>>, %arg6: memref<1x128xf32, #tpu.memory_space<vmem>>, %arg7: memref<128x256xbf16, #tpu.memory_space<vmem>>, %arg8: memref<1x256xf32, #tpu.memory_space<vmem>>, %arg9: memref<128x128xbf16, #tpu.memory_space<vmem>>, %arg10: memref<1x128xf32, #tpu.memory_space<vmem>>, %arg11: memref<128x128xbf16, #tpu.memory_space<vmem>>, %arg12: memref<1x128xf32, #tpu.memory_space<vmem>>, %arg13: memref<128x256xbf16, #tpu.memory_space<vmem>>, %arg14: memref<1x256xf32, #tpu.memory_space<vmem>>, %arg15: memref<256x256xbf16, #tpu.memory_space<vmem>>, %arg16: memref<256x256xbf16, #tpu.memory_space<vmem>>) attributes {dimension_semantics = [#tpu.dimension_semantics<parallel>], iteration_bounds = array<i64: 2>, scalar_prefetch = 0 : i64, scratch_operands = 0 : i64, tpu.core_type = #tpu.core_type<tc>, window_params = [{transform_indices = @transform_0, window_bounds = array<i64: 256, 256>}, {transform_indices = @transform_1, window_bounds = array<i64: 256, 128>}, {pipeline_mode = #tpu.pipeline_mode<synchronous>, transform_indices = @transform_2, window_bounds = array<i64: 256, 128>}, {pipeline_mode = #tpu.pipeline_mode<synchronous>, transform_indices = @transform_3, window_bounds = array<i64: 1, 128>}, {pipeline_mode = #tpu.pipeline_mode<synchronous>, transform_indices = @transform_4, window_bounds = array<i64: 128, 128>}, {pipeline_mode = #tpu.pipeline_mode<synchronous>, transform_indices = @transform_5, window_bounds = array<i64: 1, 128>}, {pipeline_mode = #tpu.pipeline_mode<synchronous>, transform_indices = @transform_6, window_bounds = array<i64: 128, 256>}, {pipeline_mode = #tpu.pipeline_mode<synchronous>, transform_indices = @transform_7, window_bounds = array<i64: 1, 256>}, {pipeline_mode = #tpu.pipeline_mode<synchronous>, transform_indices = @transform_8, window_bounds = array<i64: 128, 128>}, {pipeline_mode = #tpu.pipeline_mode<synchronous>, transform_indices = @transform_9, window_bounds = array<i64: 1, 128>}, {pipeline_mode = #tpu.pipeline_mode<synchronous>, transform_indices = @transform_10, window_bounds = array<i64: 128, 128>}, {pipeline_mode = #tpu.pipeline_mode<synchronous>, transform_indices = @transform_11, window_bounds = array<i64: 1, 128>}, {pipeline_mode = #tpu.pipeline_mode<synchronous>, transform_indices = @transform_12, window_bounds = array<i64: 128, 256>}, {pipeline_mode = #tpu.pipeline_mode<synchronous>, transform_indices = @transform_13, window_bounds = array<i64: 1, 256>}, {transform_indices = @transform_14, window_bounds = array<i64: 256, 256>}, {transform_indices = @transform_15, window_bounds = array<i64: 256, 256>}]} {
    %c0 = arith.constant 0 : index
    %c0_0 = arith.constant 0 : index
    %0 = vector.load %arg1[%c0, %c0_0] : memref<256x256xbf16, #tpu.memory_space<vmem>>, vector<256x256xbf16>
    %c0_1 = arith.constant 0 : index
    %c0_2 = arith.constant 0 : index
    %1 = vector.load %arg2[%c0_1, %c0_2] : memref<256x128xbf16, #tpu.memory_space<vmem>>, vector<256x128xbf16>
    %c0_3 = arith.constant 0 : index
    %c0_4 = arith.constant 0 : index
    %2 = vector.load %arg3[%c0_3, %c0_4] : memref<256x128xbf16, #tpu.memory_space<vmem>>, vector<256x128xbf16>
    %cst = arith.constant dense<0.000000e+00> : vector<256x128xf32>
    %3 = tpu.matmul %0, %2, %cst {dimension_numbers = #tpu.dot_dimension_numbers<[1], [0], [0], [1], [0, 0, 1, 1], [], []>} : vector<256x256xbf16>, vector<256x128xbf16>, vector<256x128xf32> -> vector<256x128xf32>
    %c0_5 = arith.constant 0 : index
    %c0_6 = arith.constant 0 : index
    %4 = vector.load %arg4[%c0_5, %c0_6] : memref<1x128xf32, #tpu.memory_space<vmem>>, vector<1x128xf32>
    %5 = vector.broadcast %4 : vector<1x128xf32> to vector<256x128xf32>
    %6 = arith.addf %3, %5 : vector<256x128xf32>
    %cst_7 = arith.constant 0.000000e+00 : f32
    %7 = vector.broadcast %cst_7 : f32 to vector<256x128xf32>
    %8 = arith.maximumf %6, %7 : vector<256x128xf32>
    %9 = arith.truncf %8 : vector<256x128xf32> to vector<256x128xbf16>
    %c0_8 = arith.constant 0 : index
    %c0_9 = arith.constant 0 : index
    %10 = vector.load %arg5[%c0_8, %c0_9] : memref<128x128xbf16, #tpu.memory_space<vmem>>, vector<128x128xbf16>
    %cst_10 = arith.constant dense<0.000000e+00> : vector<256x128xf32>
    %11 = tpu.matmul %9, %10, %cst_10 {dimension_numbers = #tpu.dot_dimension_numbers<[1], [0], [0], [1], [0, 0, 1, 1], [], []>} : vector<256x128xbf16>, vector<128x128xbf16>, vector<256x128xf32> -> vector<256x128xf32>
    %c0_11 = arith.constant 0 : index
    %c0_12 = arith.constant 0 : index
    %12 = vector.load %arg6[%c0_11, %c0_12] : memref<1x128xf32, #tpu.memory_space<vmem>>, vector<1x128xf32>
    %13 = vector.broadcast %12 : vector<1x128xf32> to vector<256x128xf32>
    %14 = arith.addf %11, %13 : vector<256x128xf32>
    %cst_13 = arith.constant 0.000000e+00 : f32
    %15 = vector.broadcast %cst_13 : f32 to vector<256x128xf32>
    %16 = arith.maximumf %14, %15 : vector<256x128xf32>
    %17 = arith.truncf %16 : vector<256x128xf32> to vector<256x128xbf16>
    %c0_14 = arith.constant 0 : index
    %c0_15 = arith.constant 0 : index
    %18 = vector.load %arg7[%c0_14, %c0_15] : memref<128x256xbf16, #tpu.memory_space<vmem>>, vector<128x256xbf16>
    %cst_16 = arith.constant dense<0.000000e+00> : vector<256x256xf32>
    %19 = tpu.matmul %17, %18, %cst_16 {dimension_numbers = #tpu.dot_dimension_numbers<[1], [0], [0], [1], [0, 0, 1, 1], [], []>} : vector<256x128xbf16>, vector<128x256xbf16>, vector<256x256xf32> -> vector<256x256xf32>
    %c0_17 = arith.constant 0 : index
    %c0_18 = arith.constant 0 : index
    %20 = vector.load %arg8[%c0_17, %c0_18] : memref<1x256xf32, #tpu.memory_space<vmem>>, vector<1x256xf32>
    %21 = vector.broadcast %20 : vector<1x256xf32> to vector<256x256xf32>
    %22 = arith.addf %19, %21 : vector<256x256xf32>
    %23 = vector.extract_strided_slice %22 {offsets = [0, 0], sizes = [256, 128], strides = [1, 1]} : vector<256x256xf32> to vector<256x128xf32>
    %24 = vector.extract_strided_slice %22 {offsets = [0, 128], sizes = [256, 128], strides = [1, 1]} : vector<256x256xf32> to vector<256x128xf32>
    %cst_19 = arith.constant 2.000000e+01 : f32
    %25 = vector.broadcast %cst_19 : f32 to vector<256x128xf32>
    %26 = arith.cmpf ogt, %24, %25 : vector<256x128xf32>
    %cst_20 = arith.constant 2.000000e+01 : f32
    %27 = vector.broadcast %cst_20 : f32 to vector<256x128xf32>
    %28 = arith.minimumf %24, %27 : vector<256x128xf32>
    %29 = math.exp %28 : vector<256x128xf32>
    %30 = math.log1p %29 : vector<256x128xf32>
    %31 = arith.select %26, %24, %30 : vector<256x128xi1>, vector<256x128xf32>
    %cst_21 = arith.constant 1.000000e-10 : f32
    %32 = vector.broadcast %cst_21 : f32 to vector<256x128xf32>
    %33 = arith.addf %31, %32 : vector<256x128xf32>
    %34 = math.sqrt %33 : vector<256x128xf32>
    %35 = arith.extf %1 : vector<256x128xbf16> to vector<256x128xf32>
    %36 = arith.mulf %35, %34 : vector<256x128xf32>
    %37 = arith.addf %23, %36 : vector<256x128xf32>
    %38 = arith.truncf %37 : vector<256x128xf32> to vector<256x128xbf16>
    %c0_22 = arith.constant 0 : index
    %c0_23 = arith.constant 0 : index
    %39 = vector.load %arg9[%c0_22, %c0_23] : memref<128x128xbf16, #tpu.memory_space<vmem>>, vector<128x128xbf16>
    %cst_24 = arith.constant dense<0.000000e+00> : vector<256x128xf32>
    %40 = tpu.matmul %38, %39, %cst_24 {dimension_numbers = #tpu.dot_dimension_numbers<[1], [0], [0], [1], [0, 0, 1, 1], [], []>} : vector<256x128xbf16>, vector<128x128xbf16>, vector<256x128xf32> -> vector<256x128xf32>
    %c0_25 = arith.constant 0 : index
    %c0_26 = arith.constant 0 : index
    %41 = vector.load %arg10[%c0_25, %c0_26] : memref<1x128xf32, #tpu.memory_space<vmem>>, vector<1x128xf32>
    %42 = vector.broadcast %41 : vector<1x128xf32> to vector<256x128xf32>
    %43 = arith.addf %40, %42 : vector<256x128xf32>
    %cst_27 = arith.constant 0.000000e+00 : f32
    %44 = vector.broadcast %cst_27 : f32 to vector<256x128xf32>
    %45 = arith.maximumf %43, %44 : vector<256x128xf32>
    %46 = arith.truncf %45 : vector<256x128xf32> to vector<256x128xbf16>
    %c0_28 = arith.constant 0 : index
    %c0_29 = arith.constant 0 : index
    %47 = vector.load %arg11[%c0_28, %c0_29] : memref<128x128xbf16, #tpu.memory_space<vmem>>, vector<128x128xbf16>
    %cst_30 = arith.constant dense<0.000000e+00> : vector<256x128xf32>
    %48 = tpu.matmul %46, %47, %cst_30 {dimension_numbers = #tpu.dot_dimension_numbers<[1], [0], [0], [1], [0, 0, 1, 1], [], []>} : vector<256x128xbf16>, vector<128x128xbf16>, vector<256x128xf32> -> vector<256x128xf32>
    %c0_31 = arith.constant 0 : index
    %c0_32 = arith.constant 0 : index
    %49 = vector.load %arg12[%c0_31, %c0_32] : memref<1x128xf32, #tpu.memory_space<vmem>>, vector<1x128xf32>
    %50 = vector.broadcast %49 : vector<1x128xf32> to vector<256x128xf32>
    %51 = arith.addf %48, %50 : vector<256x128xf32>
    %cst_33 = arith.constant 0.000000e+00 : f32
    %52 = vector.broadcast %cst_33 : f32 to vector<256x128xf32>
    %53 = arith.maximumf %51, %52 : vector<256x128xf32>
    %54 = arith.truncf %53 : vector<256x128xf32> to vector<256x128xbf16>
    %c0_34 = arith.constant 0 : index
    %c0_35 = arith.constant 0 : index
    %55 = vector.load %arg13[%c0_34, %c0_35] : memref<128x256xbf16, #tpu.memory_space<vmem>>, vector<128x256xbf16>
    %cst_36 = arith.constant dense<0.000000e+00> : vector<256x256xf32>
    %56 = tpu.matmul %54, %55, %cst_36 {dimension_numbers = #tpu.dot_dimension_numbers<[1], [0], [0], [1], [0, 0, 1, 1], [], []>} : vector<256x128xbf16>, vector<128x256xbf16>, vector<256x256xf32> -> vector<256x256xf32>
    %c0_37 = arith.constant 0 : index
    %c0_38 = arith.constant 0 : index
    %57 = vector.load %arg14[%c0_37, %c0_38] : memref<1x256xf32, #tpu.memory_space<vmem>>, vector<1x256xf32>
    %58 = vector.broadcast %57 : vector<1x256xf32> to vector<256x256xf32>
    %59 = arith.addf %56, %58 : vector<256x256xf32>
    %cst_39 = arith.constant 0.000000e+00 : f32
    %60 = vector.broadcast %cst_39 : f32 to vector<256x256xf32>
    %61 = arith.subf %60, %59 : vector<256x256xf32>
    %62 = math.exp %61 : vector<256x256xf32>
    %cst_40 = arith.constant 1.000000e+00 : f32
    %63 = vector.broadcast %cst_40 : f32 to vector<256x256xf32>
    %64 = arith.addf %63, %62 : vector<256x256xf32>
    %65 = tpu.reciprocal %64 {approx = true} : vector<256x256xf32> -> vector<256x256xf32>
    %cst_41 = arith.constant 0.000000e+00 : f32
    %66 = vector.broadcast %cst_41 : f32 to vector<256x256xf32>
    %67 = arith.maximumf %65, %66 : vector<256x256xf32>
    %cst_42 = arith.constant 1.000000e+00 : f32
    %68 = vector.broadcast %cst_42 : f32 to vector<256x256xf32>
    %69 = arith.minimumf %67, %68 : vector<256x256xf32>
    %70 = arith.truncf %69 : vector<256x256xf32> to vector<256x256xbf16>
    %c0_43 = arith.constant 0 : index
    %c0_44 = arith.constant 0 : index
    %71 = vector.load %arg15[%c0_43, %c0_44] : memref<256x256xbf16, #tpu.memory_space<vmem>>, vector<256x256xbf16>
    tpu.vector_store %arg15[%c0_43, %c0_44], %70 {strides = array<i32>} : memref<256x256xbf16, #tpu.memory_space<vmem>>, vector<256x256xbf16>,
    %72 = arith.truncf %23 : vector<256x128xf32> to vector<256x128xbf16>
    %c0_45 = arith.constant 0 : index
    %c0_46 = arith.constant 0 : index
    %73 = vector.load %arg16[%c0_45, %c0_46] : memref<256x256xbf16, #tpu.memory_space<vmem>>, vector<256x128xbf16>
    tpu.vector_store %arg16[%c0_45, %c0_46], %72 {strides = array<i32>} : memref<256x256xbf16, #tpu.memory_space<vmem>>, vector<256x128xbf16>,
    %74 = arith.truncf %31 : vector<256x128xf32> to vector<256x128xbf16>
    %c0_47 = arith.constant 0 : index
    %c128 = arith.constant 128 : index
    %75 = vector.load %arg16[%c0_47, %c128] : memref<256x256xbf16, #tpu.memory_space<vmem>>, vector<256x128xbf16>
    tpu.vector_store %arg16[%c0_47, %c128], %74 {strides = array<i32>} : memref<256x256xbf16, #tpu.memory_space<vmem>>, vector<256x128xbf16>,
    return
  }
  func.func @transform_0(%arg0: i32) -> (i32, i32) {
    %c0_i32 = arith.constant 0 : i32
    %c0_i32_0 = arith.constant 0 : i32
    return %arg0, %c0_i32 : i32, i32
  }
  func.func @transform_1(%arg0: i32) -> (i32, i32) {
    %c0_i32 = arith.constant 0 : i32
    %c0_i32_0 = arith.constant 0 : i32
    return %arg0, %c0_i32 : i32, i32
  }
  func.func @transform_2(%arg0: i32) -> (i32, i32) {
    %c0_i32 = arith.constant 0 : i32
    %c0_i32_0 = arith.constant 0 : i32
    %c0_i32_1 = arith.constant 0 : i32
    return %c0_i32, %c0_i32_0 : i32, i32
  }
  func.func @transform_3(%arg0: i32) -> (i32, i32) {
    %c0_i32 = arith.constant 0 : i32
    %c0_i32_0 = arith.constant 0 : i32
    %c0_i32_1 = arith.constant 0 : i32
    return %c0_i32, %c0_i32_0 : i32, i32
  }
  func.func @transform_4(%arg0: i32) -> (i32, i32) {
    %c0_i32 = arith.constant 0 : i32
    %c0_i32_0 = arith.constant 0 : i32
    %c0_i32_1 = arith.constant 0 : i32
    return %c0_i32, %c0_i32_0 : i32, i32
  }
  func.func @transform_5(%arg0: i32) -> (i32, i32) {
    %c0_i32 = arith.constant 0 : i32
    %c0_i32_0 = arith.constant 0 : i32
    %c0_i32_1 = arith.constant 0 : i32
    return %c0_i32, %c0_i32_0 : i32, i32
  }
  func.func @transform_6(%arg0: i32) -> (i32, i32) {
    %c0_i32 = arith.constant 0 : i32
    %c0_i32_0 = arith.constant 0 : i32
    %c0_i32_1 = arith.constant 0 : i32
    return %c0_i32, %c0_i32_0 : i32, i32
  }
  func.func @transform_7(%arg0: i32) -> (i32, i32) {
    %c0_i32 = arith.constant 0 : i32
    %c0_i32_0 = arith.constant 0 : i32
    %c0_i32_1 = arith.constant 0 : i32
    return %c0_i32, %c0_i32_0 : i32, i32
  }
  func.func @transform_8(%arg0: i32) -> (i32, i32) {
    %c0_i32 = arith.constant 0 : i32
    %c0_i32_0 = arith.constant 0 : i32
    %c0_i32_1 = arith.constant 0 : i32
    return %c0_i32, %c0_i32_0 : i32, i32
  }
  func.func @transform_9(%arg0: i32) -> (i32, i32) {
    %c0_i32 = arith.constant 0 : i32
    %c0_i32_0 = arith.constant 0 : i32
    %c0_i32_1 = arith.constant 0 : i32
    return %c0_i32, %c0_i32_0 : i32, i32
  }
  func.func @transform_10(%arg0: i32) -> (i32, i32) {
    %c0_i32 = arith.constant 0 : i32
    %c0_i32_0 = arith.constant 0 : i32
    %c0_i32_1 = arith.constant 0 : i32
    return %c0_i32, %c0_i32_0 : i32, i32
  }
  func.func @transform_11(%arg0: i32) -> (i32, i32) {
    %c0_i32 = arith.constant 0 : i32
    %c0_i32_0 = arith.constant 0 : i32
    %c0_i32_1 = arith.constant 0 : i32
    return %c0_i32, %c0_i32_0 : i32, i32
  }
  func.func @transform_12(%arg0: i32) -> (i32, i32) {
    %c0_i32 = arith.constant 0 : i32
    %c0_i32_0 = arith.constant 0 : i32
    %c0_i32_1 = arith.constant 0 : i32
    return %c0_i32, %c0_i32_0 : i32, i32
  }
  func.func @transform_13(%arg0: i32) -> (i32, i32) {
    %c0_i32 = arith.constant 0 : i32
    %c0_i32_0 = arith.constant 0 : i32
    %c0_i32_1 = arith.constant 0 : i32
    return %c0_i32, %c0_i32_0 : i32, i32
  }
  func.func @transform_14(%arg0: i32) -> (i32, i32) {
    %c0_i32 = arith.constant 0 : i32
    %c0_i32_0 = arith.constant 0 : i32
    return %arg0, %c0_i32 : i32, i32
  }
  func.func @transform_15(%arg0: i32) -> (i32, i32) {
    %c0_i32 = arith.constant 0 : i32
    %c0_i32_0 = arith.constant 0 : i32
    return %arg0, %c0_i32 : i32, i32
  }
}

module attributes {stable_mosaic.version = 11 : i64} {
  func.func @_vae_kernel(%arg0: i32, %arg1: memref<256x256xbf16, #tpu.memory_space<vmem>>, %arg2: memref<256x128xbf16, #tpu.memory_space<vmem>>, %arg3: memref<256x128xbf16, #tpu.memory_space<vmem>>, %arg4: memref<1x128xf32, #tpu.memory_space<vmem>>, %arg5: memref<128x128xbf16, #tpu.memory_space<vmem>>, %arg6: memref<1x128xf32, #tpu.memory_space<vmem>>, %arg7: memref<128x256xbf16, #tpu.memory_space<vmem>>, %arg8: memref<1x256xf32, #tpu.memory_space<vmem>>, %arg9: memref<128x128xbf16, #tpu.memory_space<vmem>>, %arg10: memref<1x128xf32, #tpu.memory_space<vmem>>, %arg11: memref<128x128xbf16, #tpu.memory_space<vmem>>, %arg12: memref<1x128xf32, #tpu.memory_space<vmem>>, %arg13: memref<128x256xbf16, #tpu.memory_space<vmem>>, %arg14: memref<1x256xf32, #tpu.memory_space<vmem>>, %arg15: memref<256x256xbf16, #tpu.memory_space<vmem>>, %arg16: memref<256x256xbf16, #tpu.memory_space<vmem>>) attributes {dimension_semantics = [#tpu.dimension_semantics<parallel>], iteration_bounds = array<i64: 2>, scalar_prefetch = 0 : i64, scratch_operands = 0 : i64, tpu.core_type = #tpu.core_type<tc>, window_params = [{transform_indices = @transform_0, window_bounds = array<i64: 256, 256>}, {transform_indices = @transform_1, window_bounds = array<i64: 256, 128>}, {pipeline_mode = #tpu.pipeline_mode<synchronous>, transform_indices = @transform_2, window_bounds = array<i64: 256, 128>}, {pipeline_mode = #tpu.pipeline_mode<synchronous>, transform_indices = @transform_3, window_bounds = array<i64: 1, 128>}, {pipeline_mode = #tpu.pipeline_mode<synchronous>, transform_indices = @transform_4, window_bounds = array<i64: 128, 128>}, {pipeline_mode = #tpu.pipeline_mode<synchronous>, transform_indices = @transform_5, window_bounds = array<i64: 1, 128>}, {pipeline_mode = #tpu.pipeline_mode<synchronous>, transform_indices = @transform_6, window_bounds = array<i64: 128, 256>}, {pipeline_mode = #tpu.pipeline_mode<synchronous>, transform_indices = @transform_7, window_bounds = array<i64: 1, 256>}, {pipeline_mode = #tpu.pipeline_mode<synchronous>, transform_indices = @transform_8, window_bounds = array<i64: 128, 128>}, {pipeline_mode = #tpu.pipeline_mode<synchronous>, transform_indices = @transform_9, window_bounds = array<i64: 1, 128>}, {pipeline_mode = #tpu.pipeline_mode<synchronous>, transform_indices = @transform_10, window_bounds = array<i64: 128, 128>}, {pipeline_mode = #tpu.pipeline_mode<synchronous>, transform_indices = @transform_11, window_bounds = array<i64: 1, 128>}, {pipeline_mode = #tpu.pipeline_mode<synchronous>, transform_indices = @transform_12, window_bounds = array<i64: 128, 256>}, {pipeline_mode = #tpu.pipeline_mode<synchronous>, transform_indices = @transform_13, window_bounds = array<i64: 1, 256>}, {transform_indices = @transform_14, window_bounds = array<i64: 256, 256>}, {transform_indices = @transform_15, window_bounds = array<i64: 256, 256>}]} {
    %c0 = arith.constant 0 : index
    %c0_0 = arith.constant 0 : index
    %0 = vector.load %arg1[%c0, %c0_0] : memref<256x256xbf16, #tpu.memory_space<vmem>>, vector<256x256xbf16>
    %c0_1 = arith.constant 0 : index
    %c0_2 = arith.constant 0 : index
    %1 = vector.load %arg2[%c0_1, %c0_2] : memref<256x128xbf16, #tpu.memory_space<vmem>>, vector<256x128xbf16>
    %c0_3 = arith.constant 0 : index
    %c0_4 = arith.constant 0 : index
    %2 = vector.load %arg3[%c0_3, %c0_4] : memref<256x128xbf16, #tpu.memory_space<vmem>>, vector<256x128xbf16>
    %cst = arith.constant dense<0.000000e+00> : vector<256x128xf32>
    %3 = tpu.matmul %0, %2, %cst {dimension_numbers = #tpu.dot_dimension_numbers<[1], [0], [0], [1], [0, 0, 1, 1], [], []>} : vector<256x256xbf16>, vector<256x128xbf16>, vector<256x128xf32> -> vector<256x128xf32>
    %c0_5 = arith.constant 0 : index
    %c0_6 = arith.constant 0 : index
    %4 = vector.load %arg4[%c0_5, %c0_6] : memref<1x128xf32, #tpu.memory_space<vmem>>, vector<1x128xf32>
    %5 = vector.broadcast %4 : vector<1x128xf32> to vector<256x128xf32>
    %6 = arith.addf %3, %5 : vector<256x128xf32>
    %cst_7 = arith.constant 0.000000e+00 : f32
    %7 = vector.broadcast %cst_7 : f32 to vector<256x128xf32>
    %8 = arith.maximumf %6, %7 : vector<256x128xf32>
    %9 = arith.truncf %8 : vector<256x128xf32> to vector<256x128xbf16>
    %c0_8 = arith.constant 0 : index
    %c0_9 = arith.constant 0 : index
    %10 = vector.load %arg5[%c0_8, %c0_9] : memref<128x128xbf16, #tpu.memory_space<vmem>>, vector<128x128xbf16>
    %cst_10 = arith.constant dense<0.000000e+00> : vector<256x128xf32>
    %11 = tpu.matmul %9, %10, %cst_10 {dimension_numbers = #tpu.dot_dimension_numbers<[1], [0], [0], [1], [0, 0, 1, 1], [], []>} : vector<256x128xbf16>, vector<128x128xbf16>, vector<256x128xf32> -> vector<256x128xf32>
    %c0_11 = arith.constant 0 : index
    %c0_12 = arith.constant 0 : index
    %12 = vector.load %arg6[%c0_11, %c0_12] : memref<1x128xf32, #tpu.memory_space<vmem>>, vector<1x128xf32>
    %13 = vector.broadcast %12 : vector<1x128xf32> to vector<256x128xf32>
    %14 = arith.addf %11, %13 : vector<256x128xf32>
    %cst_13 = arith.constant 0.000000e+00 : f32
    %15 = vector.broadcast %cst_13 : f32 to vector<256x128xf32>
    %16 = arith.maximumf %14, %15 : vector<256x128xf32>
    %17 = arith.truncf %16 : vector<256x128xf32> to vector<256x128xbf16>
    %c0_14 = arith.constant 0 : index
    %c0_15 = arith.constant 0 : index
    %18 = vector.load %arg7[%c0_14, %c0_15] : memref<128x256xbf16, #tpu.memory_space<vmem>>, vector<128x256xbf16>
    %cst_16 = arith.constant dense<0.000000e+00> : vector<256x256xf32>
    %19 = tpu.matmul %17, %18, %cst_16 {dimension_numbers = #tpu.dot_dimension_numbers<[1], [0], [0], [1], [0, 0, 1, 1], [], []>} : vector<256x128xbf16>, vector<128x256xbf16>, vector<256x256xf32> -> vector<256x256xf32>
    %c0_17 = arith.constant 0 : index
    %c0_18 = arith.constant 0 : index
    %20 = vector.load %arg8[%c0_17, %c0_18] : memref<1x256xf32, #tpu.memory_space<vmem>>, vector<1x256xf32>
    %21 = vector.broadcast %20 : vector<1x256xf32> to vector<256x256xf32>
    %22 = arith.addf %19, %21 : vector<256x256xf32>
    %23 = vector.extract_strided_slice %22 {offsets = [0, 0], sizes = [256, 128], strides = [1, 1]} : vector<256x256xf32> to vector<256x128xf32>
    %24 = vector.extract_strided_slice %22 {offsets = [0, 128], sizes = [256, 128], strides = [1, 1]} : vector<256x256xf32> to vector<256x128xf32>
    %cst_19 = arith.constant 2.000000e+01 : f32
    %25 = vector.broadcast %cst_19 : f32 to vector<256x128xf32>
    %26 = arith.cmpf ogt, %24, %25 : vector<256x128xf32>
    %cst_20 = arith.constant 2.000000e+01 : f32
    %27 = vector.broadcast %cst_20 : f32 to vector<256x128xf32>
    %28 = arith.minimumf %24, %27 : vector<256x128xf32>
    %29 = math.exp %28 : vector<256x128xf32>
    %30 = math.log1p %29 : vector<256x128xf32>
    %31 = arith.select %26, %24, %30 : vector<256x128xi1>, vector<256x128xf32>
    %cst_21 = arith.constant 1.000000e-10 : f32
    %32 = vector.broadcast %cst_21 : f32 to vector<256x128xf32>
    %33 = arith.addf %31, %32 : vector<256x128xf32>
    %34 = math.sqrt %33 : vector<256x128xf32>
    %35 = arith.extf %1 : vector<256x128xbf16> to vector<256x128xf32>
    %36 = arith.mulf %35, %34 : vector<256x128xf32>
    %37 = arith.addf %23, %36 : vector<256x128xf32>
    %38 = arith.truncf %37 : vector<256x128xf32> to vector<256x128xbf16>
    %c0_22 = arith.constant 0 : index
    %c0_23 = arith.constant 0 : index
    %39 = vector.load %arg9[%c0_22, %c0_23] : memref<128x128xbf16, #tpu.memory_space<vmem>>, vector<128x128xbf16>
    %cst_24 = arith.constant dense<0.000000e+00> : vector<256x128xf32>
    %40 = tpu.matmul %38, %39, %cst_24 {dimension_numbers = #tpu.dot_dimension_numbers<[1], [0], [0], [1], [0, 0, 1, 1], [], []>} : vector<256x128xbf16>, vector<128x128xbf16>, vector<256x128xf32> -> vector<256x128xf32>
    %c0_25 = arith.constant 0 : index
    %c0_26 = arith.constant 0 : index
    %41 = vector.load %arg10[%c0_25, %c0_26] : memref<1x128xf32, #tpu.memory_space<vmem>>, vector<1x128xf32>
    %42 = vector.broadcast %41 : vector<1x128xf32> to vector<256x128xf32>
    %43 = arith.addf %40, %42 : vector<256x128xf32>
    %cst_27 = arith.constant 0.000000e+00 : f32
    %44 = vector.broadcast %cst_27 : f32 to vector<256x128xf32>
    %45 = arith.maximumf %43, %44 : vector<256x128xf32>
    %46 = arith.truncf %45 : vector<256x128xf32> to vector<256x128xbf16>
    %c0_28 = arith.constant 0 : index
    %c0_29 = arith.constant 0 : index
    %47 = vector.load %arg11[%c0_28, %c0_29] : memref<128x128xbf16, #tpu.memory_space<vmem>>, vector<128x128xbf16>
    %cst_30 = arith.constant dense<0.000000e+00> : vector<256x128xf32>
    %48 = tpu.matmul %46, %47, %cst_30 {dimension_numbers = #tpu.dot_dimension_numbers<[1], [0], [0], [1], [0, 0, 1, 1], [], []>} : vector<256x128xbf16>, vector<128x128xbf16>, vector<256x128xf32> -> vector<256x128xf32>
    %c0_31 = arith.constant 0 : index
    %c0_32 = arith.constant 0 : index
    %49 = vector.load %arg12[%c0_31, %c0_32] : memref<1x128xf32, #tpu.memory_space<vmem>>, vector<1x128xf32>
    %50 = vector.broadcast %49 : vector<1x128xf32> to vector<256x128xf32>
    %51 = arith.addf %48, %50 : vector<256x128xf32>
    %cst_33 = arith.constant 0.000000e+00 : f32
    %52 = vector.broadcast %cst_33 : f32 to vector<256x128xf32>
    %53 = arith.maximumf %51, %52 : vector<256x128xf32>
    %54 = arith.truncf %53 : vector<256x128xf32> to vector<256x128xbf16>
    %c0_34 = arith.constant 0 : index
    %c0_35 = arith.constant 0 : index
    %55 = vector.load %arg13[%c0_34, %c0_35] : memref<128x256xbf16, #tpu.memory_space<vmem>>, vector<128x256xbf16>
    %cst_36 = arith.constant dense<0.000000e+00> : vector<256x256xf32>
    %56 = tpu.matmul %54, %55, %cst_36 {dimension_numbers = #tpu.dot_dimension_numbers<[1], [0], [0], [1], [0, 0, 1, 1], [], []>} : vector<256x128xbf16>, vector<128x256xbf16>, vector<256x256xf32> -> vector<256x256xf32>
    %c0_37 = arith.constant 0 : index
    %c0_38 = arith.constant 0 : index
    %57 = vector.load %arg14[%c0_37, %c0_38] : memref<1x256xf32, #tpu.memory_space<vmem>>, vector<1x256xf32>
    %58 = vector.broadcast %57 : vector<1x256xf32> to vector<256x256xf32>
    %59 = arith.addf %56, %58 : vector<256x256xf32>
    %cst_39 = arith.constant 0.000000e+00 : f32
    %60 = vector.broadcast %cst_39 : f32 to vector<256x256xf32>
    %61 = arith.subf %60, %59 : vector<256x256xf32>
    %62 = math.exp %61 : vector<256x256xf32>
    %cst_40 = arith.constant 1.000000e+00 : f32
    %63 = vector.broadcast %cst_40 : f32 to vector<256x256xf32>
    %64 = arith.addf %63, %62 : vector<256x256xf32>
    %65 = tpu.reciprocal %64 {approx = true} : vector<256x256xf32> -> vector<256x256xf32>
    %cst_41 = arith.constant 0.000000e+00 : f32
    %66 = vector.broadcast %cst_41 : f32 to vector<256x256xf32>
    %67 = arith.maximumf %65, %66 : vector<256x256xf32>
    %cst_42 = arith.constant 1.000000e+00 : f32
    %68 = vector.broadcast %cst_42 : f32 to vector<256x256xf32>
    %69 = arith.minimumf %67, %68 : vector<256x256xf32>
    %70 = arith.truncf %69 : vector<256x256xf32> to vector<256x256xbf16>
    %c0_43 = arith.constant 0 : index
    %c0_44 = arith.constant 0 : index
    %71 = vector.load %arg15[%c0_43, %c0_44] : memref<256x256xbf16, #tpu.memory_space<vmem>>, vector<256x256xbf16>
    tpu.vector_store %arg15[%c0_43, %c0_44], %70 {strides = array<i32>} : memref<256x256xbf16, #tpu.memory_space<vmem>>, vector<256x256xbf16>,
    %72 = arith.truncf %23 : vector<256x128xf32> to vector<256x128xbf16>
    %c0_45 = arith.constant 0 : index
    %c0_46 = arith.constant 0 : index
    %73 = vector.load %arg16[%c0_45, %c0_46] : memref<256x256xbf16, #tpu.memory_space<vmem>>, vector<256x128xbf16>
    tpu.vector_store %arg16[%c0_45, %c0_46], %72 {strides = array<i32>} : memref<256x256xbf16, #tpu.memory_space<vmem>>, vector<256x128xbf16>,
    %74 = arith.truncf %31 : vector<256x128xf32> to vector<256x128xbf16>
    %c0_47 = arith.constant 0 : index
    %c128 = arith.constant 128 : index
    %75 = vector.load %arg16[%c0_47, %c128] : memref<256x256xbf16, #tpu.memory_space<vmem>>, vector<256x128xbf16>
    tpu.vector_store %arg16[%c0_47, %c128], %74 {strides = array<i32>} : memref<256x256xbf16, #tpu.memory_space<vmem>>, vector<256x128xbf16>,
    return
  }
  func.func @transform_0(%arg0: i32) -> (i32, i32) {
    %c0_i32 = arith.constant 0 : i32
    %c0_i32_0 = arith.constant 0 : i32
    return %arg0, %c0_i32 : i32, i32
  }
  func.func @transform_1(%arg0: i32) -> (i32, i32) {
    %c0_i32 = arith.constant 0 : i32
    %c0_i32_0 = arith.constant 0 : i32
    return %arg0, %c0_i32 : i32, i32
  }
  func.func @transform_2(%arg0: i32) -> (i32, i32) {
    %c0_i32 = arith.constant 0 : i32
    %c0_i32_0 = arith.constant 0 : i32
    %c0_i32_1 = arith.constant 0 : i32
    return %c0_i32, %c0_i32_0 : i32, i32
  }
  func.func @transform_3(%arg0: i32) -> (i32, i32) {
    %c0_i32 = arith.constant 0 : i32
    %c0_i32_0 = arith.constant 0 : i32
    %c0_i32_1 = arith.constant 0 : i32
    return %c0_i32, %c0_i32_0 : i32, i32
  }
  func.func @transform_4(%arg0: i32) -> (i32, i32) {
    %c0_i32 = arith.constant 0 : i32
    %c0_i32_0 = arith.constant 0 : i32
    %c0_i32_1 = arith.constant 0 : i32
    return %c0_i32, %c0_i32_0 : i32, i32
  }
  func.func @transform_5(%arg0: i32) -> (i32, i32) {
    %c0_i32 = arith.constant 0 : i32
    %c0_i32_0 = arith.constant 0 : i32
    %c0_i32_1 = arith.constant 0 : i32
    return %c0_i32, %c0_i32_0 : i32, i32
  }
  func.func @transform_6(%arg0: i32) -> (i32, i32) {
    %c0_i32 = arith.constant 0 : i32
    %c0_i32_0 = arith.constant 0 : i32
    %c0_i32_1 = arith.constant 0 : i32
    return %c0_i32, %c0_i32_0 : i32, i32
  }
  func.func @transform_7(%arg0: i32) -> (i32, i32) {
    %c0_i32 = arith.constant 0 : i32
    %c0_i32_0 = arith.constant 0 : i32
    %c0_i32_1 = arith.constant 0 : i32
    return %c0_i32, %c0_i32_0 : i32, i32
  }
  func.func @transform_8(%arg0: i32) -> (i32, i32) {
    %c0_i32 = arith.constant 0 : i32
    %c0_i32_0 = arith.constant 0 : i32
    %c0_i32_1 = arith.constant 0 : i32
    return %c0_i32, %c0_i32_0 : i32, i32
  }
  func.func @transform_9(%arg0: i32) -> (i32, i32) {
    %c0_i32 = arith.constant 0 : i32
    %c0_i32_0 = arith.constant 0 : i32
    %c0_i32_1 = arith.constant 0 : i32
    return %c0_i32, %c0_i32_0 : i32, i32
  }
  func.func @transform_10(%arg0: i32) -> (i32, i32) {
    %c0_i32 = arith.constant 0 : i32
    %c0_i32_0 = arith.constant 0 : i32
    %c0_i32_1 = arith.constant 0 : i32
    return %c0_i32, %c0_i32_0 : i32, i32
  }
  func.func @transform_11(%arg0: i32) -> (i32, i32) {
    %c0_i32 = arith.constant 0 : i32
    %c0_i32_0 = arith.constant 0 : i32
    %c0_i32_1 = arith.constant 0 : i32
    return %c0_i32, %c0_i32_0 : i32, i32
  }
  func.func @transform_12(%arg0: i32) -> (i32, i32) {
    %c0_i32 = arith.constant 0 : i32
    %c0_i32_0 = arith.constant 0 : i32
    %c0_i32_1 = arith.constant 0 : i32
    return %c0_i32, %c0_i32_0 : i32, i32
  }
  func.func @transform_13(%arg0: i32) -> (i32, i32) {
    %c0_i32 = arith.constant 0 : i32
    %c0_i32_0 = arith.constant 0 : i32
    %c0_i32_1 = arith.constant 0 : i32
    return %c0_i32, %c0_i32_0 : i32, i32
  }
  func.func @transform_14(%arg0: i32) -> (i32, i32) {
    %c0_i32 = arith.constant 0 : i32
    %c0_i32_0 = arith.constant 0 : i32
    return %arg0, %c0_i32 : i32, i32
  }
  func.func @transform_15(%arg0: i32) -> (i32, i32) {
    %c0_i32 = arith.constant 0 : i32
    %c0_i32_0 = arith.constant 0 : i32
    return %arg0, %c0_i32 : i32, i32
  }
}

</mosaic_0001>

<llo_original>
// kernel: _vae_forward_impl.1
$region0: #{_vae_forward_impl.1}
  #allocation0 [shape = 'u32[]', space=smem, size = 0x4, offset = 0x4, fixed_abs, tag = 'smem constant byte address 0x4 - core index']
  #allocation1 [shape = 'u32[144,128]{1,0:T(1,128)}', space=vmem, size = 0x12000, scoped, tag = 'internal scratch']
  %s0 = inlined_call_operand.vmem [shape: bf16[512,256], index: 0, kind: input, shape index: {}]
  %s1 = inlined_call_operand.vmem [shape: bf16[512,128], index: 1, kind: input, shape index: {}]
  %s2 = inlined_call_operand.vmem [shape: bf16[256,128], index: 2, kind: input, shape index: {}]
  %s3 = inlined_call_operand.vmem [shape: f32[1,128], index: 3, kind: input, shape index: {}]
  %s4 = inlined_call_operand.hbm [shape: bf16[128,128], index: 4, kind: input, shape index: {}]
  %s5 = inlined_call_operand.vmem [shape: f32[1,128], index: 5, kind: input, shape index: {}]
  %s6 = inlined_call_operand.vmem [shape: bf16[128,256], index: 6, kind: input, shape index: {}]
  %s7 = inlined_call_operand.vmem [shape: f32[1,256], index: 7, kind: input, shape index: {}]
  %s8 = inlined_call_operand.hbm [shape: bf16[128,128], index: 8, kind: input, shape index: {}]
  %s9 = inlined_call_operand.vmem [shape: f32[1,128], index: 9, kind: input, shape index: {}]
  %s10 = inlined_call_operand.hbm [shape: bf16[128,128], index: 10, kind: input, shape index: {}]
  %s11 = inlined_call_operand.vmem [shape: f32[1,128], index: 11, kind: input, shape index: {}]
  %s12 = inlined_call_operand.vmem [shape: bf16[128,256], index: 12, kind: input, shape index: {}]
  %s13 = inlined_call_operand.vmem [shape: f32[1,256], index: 13, kind: input, shape index: {}]
  %s14 = inlined_call_operand.hbm [shape: bf16[512,256], index: 14, kind: output, shape index: {0}]
  %s15 = inlined_call_operand.vmem [shape: bf16[512,256], index: 15, kind: output, shape index: {1}]
  %16 = xla_tuple %s14, %s15
  %s17 = sld [smem:[#allocation0]]
  $region109: #{_vae_forward_impl.1} parent=0
    _
  %s19 = ssub.s32 1, %s17
  %s20 = scalar_select 0, %s19, %s17
  $region1: #{_vae_forward_impl.1} parent=0
    #allocation2 [shape = 'u8[32768]{0}', space=vmem, size = 0x8000, scoped, tag = 'input window, operand 4, single buffered']
    #allocation3 [shape = 's32[2]{0}', space=sflag, size = 0x8, scoped, tag = 'scoped memory for _vae_forward_impl.1']
    #allocation4 [shape = 's32[2]{0}', space=sflag, size = 0x8, scoped, tag = 'scoped memory for _vae_forward_impl.1']
    #allocation5 [shape = 'u8[32768]{0}', space=vmem, size = 0x8000, scoped, tag = 'input window, operand 8, single buffered']
    #allocation6 [shape = 's32[1]{0}', space=sflag, size = 0x4, scoped, tag = 'scoped memory for _vae_forward_impl.1']
    #allocation7 [shape = 'u8[32768]{0}', space=vmem, size = 0x8000, scoped, tag = 'input window, operand 10, single buffered']
    #allocation8 [shape = 'u8[262144]{0}', space=vmem, size = 0x40000, scoped, tag = 'output window, operand 0']
    %21 = vsyncpa [#allocation3], 0
    %22 = vsyncpa [#allocation6], 0
    %23 = vsyncpa [#allocation4], 0
    %s24 = scalar_lea.sflag [#allocation4], 1
    %25 = vsyncpa %s24, 0
    loop: start=0, step=1, limit=4
    $region2: #{_vae_forward_impl.1} parent=1 // loop_pre_header
      _
    $region3: #{_vae_forward_impl.1} parent=1 // loop_header
      %s27 = sphi 0, %s31
      %p28 = scmp.ge.s32.totalorder %s27, 4
      %s37 = sphi 0, %s39
      %s40 = sphi 0, %s37
      %s41 = sphi 0, %s40
      %s57 = sphi 0, %s41
      %s63 = sphi 0, %s65
      %s66 = sphi 0, %s63
      %s67 = sphi 0, %s66
      %s83 = sphi 0, %s67
      %s87 = sphi 0, %s87
      %s89 = sphi 0, %s87
      %s90 = sphi 0, %s89
      %s104 = sphi 0, %s90
      %s108 = sphi 0, %s108
      %s110 = sphi 0, %s108
      %s111 = sphi 0, %s110
      %s125 = sphi 0, %s111
      %s129 = sphi 0, %s129
      %s131 = sphi 0, %s129
      %s132 = sphi 0, %s131
      %s146 = sphi 0, %s132
      %s150 = sphi 0, %s150
      %s152 = sphi 0, %s150
      %s153 = sphi 0, %s152
      %s167 = sphi 0, %s153
      %s171 = sphi 0, %s171
      %s173 = sphi 0, %s171
      %s174 = sphi 0, %s173
      %s188 = sphi 0, %s174
      %s192 = sphi 0, %s192
      %s194 = sphi 0, %s192
      %s195 = sphi 0, %s194
      %s209 = sphi 0, %s195
      %s213 = sphi 0, %s213
      %s215 = sphi 0, %s213
      %s216 = sphi 0, %s215
      %s230 = sphi 0, %s216
      %s234 = sphi 0, %s234
      %s236 = sphi 0, %s234
      %s237 = sphi 0, %s236
      %s251 = sphi 0, %s237
      %s255 = sphi 0, %s255
      %s257 = sphi 0, %s255
      %s258 = sphi 0, %s257
      %s272 = sphi 0, %s258
      %s276 = sphi 0, %s276
      %s278 = sphi 0, %s276
      %s279 = sphi 0, %s278
      %s293 = sphi 0, %s279
      %s297 = sphi 0, %s297
      %s299 = sphi 0, %s297
      %s300 = sphi 0, %s299
      %s314 = sphi 0, %s300
      %s318 = sphi 0, %s318
      %s320 = sphi 0, %s318
      %s321 = sphi 0, %s320
      %s335 = sphi 0, %s321
      %s341 = sphi 0, %s343
      %s344 = sphi 0, %s341
      %s345 = sphi 0, %s344
      %s361 = sphi 0, %s345
      %s367 = sphi 0, %s369
      %s370 = sphi 0, %s367
      %s371 = sphi 0, %s370
      %s387 = sphi 0, %s371
    $region4: #{_vae_forward_impl.1} parent=1 // loop_header_branch
      %30 = sbr.rel (%p28) target = $region8
    $region5: #{_vae_forward_impl.1} parent=1 // loop_body
      %s32 = ssub.s32 %s27, 1
      %s33 = ssub.s32 %s27, 2
      %s34 = sadd.s32 %s27, 1
      %s35 = ssub.s32 %s27, %s34
      %p36 = scmp.eq.s32.totalorder %s35, 0
      %s38 = sadd.s32 %s37, 1
      %s39 = scalar_select %p36, %s37, %s38
      %p42 = pneg %p36
      %p43 = scmp.eq.s32.totalorder %s27, 1
      %p44 = por %p42, %p43
      %p45 = scmp.ne.s32.totalorder %s37, %s40
      %p46 = scmp.eq.s32.totalorder %s27, 0
      %p47 = por %p45, %p46
      %p48 = scmp.ne.s32.totalorder %s37, %s40
      %p49 = scmp.eq.s32.totalorder %s32, 1
      %p50 = por %p48, %p49
      %p51 = scmp.ne.s32.totalorder %s40, %s41
      %p52 = scmp.eq.s32.totalorder %s32, 0
      %p53 = por %p51, %p52
      %p54 = scmp.ne.s32.totalorder %s40, %s41
      %p55 = scmp.eq.s32.totalorder %s33, 1
      %p56 = por %p54, %p55
      %p58 = scmp.ne.s32.totalorder %s41, %s57
      %p59 = scmp.eq.s32.totalorder %s33, 0
      %p60 = por %p58, %p59
      %s61 = ssub.s32 %s27, %s34
      %p62 = scmp.eq.s32.totalorder %s61, 0
      %s64 = sadd.s32 %s63, 1
      %s65 = scalar_select %p62, %s63, %s64
      %p68 = pneg %p62
      %p69 = scmp.eq.s32.totalorder %s27, 1
      %p70 = por %p68, %p69
      %p71 = scmp.ne.s32.totalorder %s63, %s66
      %p72 = scmp.eq.s32.totalorder %s27, 0
      %p73 = por %p71, %p72
      %p74 = scmp.ne.s32.totalorder %s63, %s66
      %p75 = scmp.eq.s32.totalorder %s32, 1
      %p76 = por %p74, %p75
      %p77 = scmp.ne.s32.totalorder %s66, %s67
      %p78 = scmp.eq.s32.totalorder %s32, 0
      %p79 = por %p77, %p78
      %p80 = scmp.ne.s32.totalorder %s66, %s67
      %p81 = scmp.eq.s32.totalorder %s33, 1
      %p82 = por %p80, %p81
      %p84 = scmp.ne.s32.totalorder %s67, %s83
      %p85 = scmp.eq.s32.totalorder %s33, 0
      %p86 = por %p84, %p85
      %s88 = sadd.s32 %s87, 1
      %p91 = scmp.eq.s32.totalorder %s27, 1
      %p92 = scmp.ne.s32.totalorder %s87, %s89
      %p93 = scmp.eq.s32.totalorder %s27, 0
      %p94 = por %p92, %p93
      %p95 = scmp.ne.s32.totalorder %s87, %s89
      %p96 = scmp.eq.s32.totalorder %s32, 1
      %p97 = por %p95, %p96
      %p98 = scmp.ne.s32.totalorder %s89, %s90
      %p99 = scmp.eq.s32.totalorder %s32, 0
      %p100 = por %p98, %p99
      %p101 = scmp.ne.s32.totalorder %s89, %s90
      %p102 = scmp.eq.s32.totalorder %s33, 1
      %p103 = por %p101, %p102
      %p105 = scmp.ne.s32.totalorder %s90, %s104
      %p106 = scmp.eq.s32.totalorder %s33, 0
      %p107 = por %p105, %p106
      %s109 = sadd.s32 %s108, 1
      %p112 = scmp.eq.s32.totalorder %s27, 1
      %p113 = scmp.ne.s32.totalorder %s108, %s110
      %p114 = scmp.eq.s32.totalorder %s27, 0
      %p115 = por %p113, %p114
      %p116 = scmp.ne.s32.totalorder %s108, %s110
      %p117 = scmp.eq.s32.totalorder %s32, 1
      %p118 = por %p116, %p117
      %p119 = scmp.ne.s32.totalorder %s110, %s111
      %p120 = scmp.eq.s32.totalorder %s32, 0
      %p121 = por %p119, %p120
      %p122 = scmp.ne.s32.totalorder %s110, %s111
      %p123 = scmp.eq.s32.totalorder %s33, 1
      %p124 = por %p122, %p123
      %p126 = scmp.ne.s32.totalorder %s111, %s125
      %p127 = scmp.eq.s32.totalorder %s33, 0
      %p128 = por %p126, %p127
      %s130 = sadd.s32 %s129, 1
      %p133 = scmp.eq.s32.totalorder %s27, 1
      %p134 = scmp.ne.s32.totalorder %s129, %s131
      %p135 = scmp.eq.s32.totalorder %s27, 0
      %p136 = por %p134, %p135
      %p137 = scmp.ne.s32.totalorder %s129, %s131
      %p138 = scmp.eq.s32.totalorder %s32, 1
      %p139 = por %p137, %p138
      %p140 = scmp.ne.s32.totalorder %s131, %s132
      %p141 = scmp.eq.s32.totalorder %s32, 0
      %p142 = por %p140, %p141
      %p143 = scmp.ne.s32.totalorder %s131, %s132
      %p144 = scmp.eq.s32.totalorder %s33, 1
      %p145 = por %p143, %p144
      %p147 = scmp.ne.s32.totalorder %s132, %s146
      %p148 = scmp.eq.s32.totalorder %s33, 0
      %p149 = por %p147, %p148
      %s151 = sadd.s32 %s150, 1
      %p154 = scmp.eq.s32.totalorder %s27, 1
      %p155 = scmp.ne.s32.totalorder %s150, %s152
      %p156 = scmp.eq.s32.totalorder %s27, 0
      %p157 = por %p155, %p156
      %p158 = scmp.ne.s32.totalorder %s150, %s152
      %p159 = scmp.eq.s32.totalorder %s32, 1
      %p160 = por %p158, %p159
      %p161 = scmp.ne.s32.totalorder %s152, %s153
      %p162 = scmp.eq.s32.totalorder %s32, 0
      %p163 = por %p161, %p162
      %p164 = scmp.ne.s32.totalorder %s152, %s153
      %p165 = scmp.eq.s32.totalorder %s33, 1
      %p166 = por %p164, %p165
      %p168 = scmp.ne.s32.totalorder %s153, %s167
      %p169 = scmp.eq.s32.totalorder %s33, 0
      %p170 = por %p168, %p169
      %s172 = sadd.s32 %s171, 1
      %p175 = scmp.eq.s32.totalorder %s27, 1
      %p176 = scmp.ne.s32.totalorder %s171, %s173
      %p177 = scmp.eq.s32.totalorder %s27, 0
      %p178 = por %p176, %p177
      %p179 = scmp.ne.s32.totalorder %s171, %s173
      %p180 = scmp.eq.s32.totalorder %s32, 1
      %p181 = por %p179, %p180
      %p182 = scmp.ne.s32.totalorder %s173, %s174
      %p183 = scmp.eq.s32.totalorder %s32, 0
      %p184 = por %p182, %p183
      %p185 = scmp.ne.s32.totalorder %s173, %s174
      %p186 = scmp.eq.s32.totalorder %s33, 1
      %p187 = por %p185, %p186
      %p189 = scmp.ne.s32.totalorder %s174, %s188
      %p190 = scmp.eq.s32.totalorder %s33, 0
      %p191 = por %p189, %p190
      %s193 = sadd.s32 %s192, 1
      %p196 = scmp.eq.s32.totalorder %s27, 1
      %p197 = scmp.ne.s32.totalorder %s192, %s194
      %p198 = scmp.eq.s32.totalorder %s27, 0
      %p199 = por %p197, %p198
      %p200 = scmp.ne.s32.totalorder %s192, %s194
      %p201 = scmp.eq.s32.totalorder %s32, 1
      %p202 = por %p200, %p201
      %p203 = scmp.ne.s32.totalorder %s194, %s195
      %p204 = scmp.eq.s32.totalorder %s32, 0
      %p205 = por %p203, %p204
      %p206 = scmp.ne.s32.totalorder %s194, %s195
      %p207 = scmp.eq.s32.totalorder %s33, 1
      %p208 = por %p206, %p207
      %p210 = scmp.ne.s32.totalorder %s195, %s209
      %p211 = scmp.eq.s32.totalorder %s33, 0
      %p212 = por %p210, %p211
      %s214 = sadd.s32 %s213, 1
      %p217 = scmp.eq.s32.totalorder %s27, 1
      %p218 = scmp.ne.s32.totalorder %s213, %s215
      %p219 = scmp.eq.s32.totalorder %s27, 0
      %p220 = por %p218, %p219
      %p221 = scmp.ne.s32.totalorder %s213, %s215
      %p222 = scmp.eq.s32.totalorder %s32, 1
      %p223 = por %p221, %p222
      %p224 = scmp.ne.s32.totalorder %s215, %s216
      %p225 = scmp.eq.s32.totalorder %s32, 0
      %p226 = por %p224, %p225
      %p227 = scmp.ne.s32.totalorder %s215, %s216
      %p228 = scmp.eq.s32.totalorder %s33, 1
      %p229 = por %p227, %p228
      %p231 = scmp.ne.s32.totalorder %s216, %s230
      %p232 = scmp.eq.s32.totalorder %s33, 0
      %p233 = por %p231, %p232
      %s235 = sadd.s32 %s234, 1
      %p238 = scmp.eq.s32.totalorder %s27, 1
      %p239 = scmp.ne.s32.totalorder %s234, %s236
      %p240 = scmp.eq.s32.totalorder %s27, 0
      %p241 = por %p239, %p240
      %p242 = scmp.ne.s32.totalorder %s234, %s236
      %p243 = scmp.eq.s32.totalorder %s32, 1
      %p244 = por %p242, %p243
      %p245 = scmp.ne.s32.totalorder %s236, %s237
      %p246 = scmp.eq.s32.totalorder %s32, 0
      %p247 = por %p245, %p246
      %p248 = scmp.ne.s32.totalorder %s236, %s237
      %p249 = scmp.eq.s32.totalorder %s33, 1
      %p250 = por %p248, %p249
      %p252 = scmp.ne.s32.totalorder %s237, %s251
      %p253 = scmp.eq.s32.totalorder %s33, 0
      %p254 = por %p252, %p253
      %s256 = sadd.s32 %s255, 1
      %p259 = scmp.eq.s32.totalorder %s27, 1
      %p260 = scmp.ne.s32.totalorder %s255, %s257
      %p261 = scmp.eq.s32.totalorder %s27, 0
      %p262 = por %p260, %p261
      %p263 = scmp.ne.s32.totalorder %s255, %s257
      %p264 = scmp.eq.s32.totalorder %s32, 1
      %p265 = por %p263, %p264
      %p266 = scmp.ne.s32.totalorder %s257, %s258
      %p267 = scmp.eq.s32.totalorder %s32, 0
      %p268 = por %p266, %p267
      %p269 = scmp.ne.s32.totalorder %s257, %s258
      %p270 = scmp.eq.s32.totalorder %s33, 1
      %p271 = por %p269, %p270
      %p273 = scmp.ne.s32.totalorder %s258, %s272
      %p274 = scmp.eq.s32.totalorder %s33, 0
      %p275 = por %p273, %p274
      %s277 = sadd.s32 %s276, 1
      %p280 = scmp.eq.s32.totalorder %s27, 1
      %p281 = scmp.ne.s32.totalorder %s276, %s278
      %p282 = scmp.eq.s32.totalorder %s27, 0
      %p283 = por %p281, %p282
      %p284 = scmp.ne.s32.totalorder %s276, %s278
      %p285 = scmp.eq.s32.totalorder %s32, 1
      %p286 = por %p284, %p285
      %p287 = scmp.ne.s32.totalorder %s278, %s279
      %p288 = scmp.eq.s32.totalorder %s32, 0
      %p289 = por %p287, %p288
      %p290 = scmp.ne.s32.totalorder %s278, %s279
      %p291 = scmp.eq.s32.totalorder %s33, 1
      %p292 = por %p290, %p291
      %p294 = scmp.ne.s32.totalorder %s279, %s293
      %p295 = scmp.eq.s32.totalorder %s33, 0
      %p296 = por %p294, %p295
      %s298 = sadd.s32 %s297, 1
      %p301 = scmp.eq.s32.totalorder %s27, 1
      %p302 = scmp.ne.s32.totalorder %s297, %s299
      %p303 = scmp.eq.s32.totalorder %s27, 0
      %p304 = por %p302, %p303
      %p305 = scmp.ne.s32.totalorder %s297, %s299
      %p306 = scmp.eq.s32.totalorder %s32, 1
      %p307 = por %p305, %p306
      %p308 = scmp.ne.s32.totalorder %s299, %s300
      %p309 = scmp.eq.s32.totalorder %s32, 0
      %p310 = por %p308, %p309
      %p311 = scmp.ne.s32.totalorder %s299, %s300
      %p312 = scmp.eq.s32.totalorder %s33, 1
      %p313 = por %p311, %p312
      %p315 = scmp.ne.s32.totalorder %s300, %s314
      %p316 = scmp.eq.s32.totalorder %s33, 0
      %p317 = por %p315, %p316
      %s319 = sadd.s32 %s318, 1
      %p322 = scmp.eq.s32.totalorder %s27, 1
      %p323 = scmp.ne.s32.totalorder %s318, %s320
      %p324 = scmp.eq.s32.totalorder %s27, 0
      %p325 = por %p323, %p324
      %p326 = scmp.ne.s32.totalorder %s318, %s320
      %p327 = scmp.eq.s32.totalorder %s32, 1
      %p328 = por %p326, %p327
      %p329 = scmp.ne.s32.totalorder %s320, %s321
      %p330 = scmp.eq.s32.totalorder %s32, 0
      %p331 = por %p329, %p330
      %p332 = scmp.ne.s32.totalorder %s320, %s321
      %p333 = scmp.eq.s32.totalorder %s33, 1
      %p334 = por %p332, %p333
      %p336 = scmp.ne.s32.totalorder %s321, %s335
      %p337 = scmp.eq.s32.totalorder %s33, 0
      %p338 = por %p336, %p337
      %s339 = ssub.s32 %s27, %s34
      %p340 = scmp.eq.s32.totalorder %s339, 0
      %s342 = sadd.s32 %s341, 1
      %s343 = scalar_select %p340, %s341, %s342
      %p346 = pneg %p340
      %p347 = scmp.eq.s32.totalorder %s27, 1
      %p348 = por %p346, %p347
      %p349 = scmp.ne.s32.totalorder %s341, %s344
      %p350 = scmp.eq.s32.totalorder %s27, 0
      %p351 = por %p349, %p350
      %p352 = scmp.ne.s32.totalorder %s341, %s344
      %p353 = scmp.eq.s32.totalorder %s32, 1
      %p354 = por %p352, %p353
      %p355 = scmp.ne.s32.totalorder %s344, %s345
      %p356 = scmp.eq.s32.totalorder %s32, 0
      %p357 = por %p355, %p356
      %p358 = scmp.ne.s32.totalorder %s344, %s345
      %p359 = scmp.eq.s32.totalorder %s33, 1
      %p360 = por %p358, %p359
      %p362 = scmp.ne.s32.totalorder %s345, %s361
      %p363 = scmp.eq.s32.totalorder %s33, 0
      %p364 = por %p362, %p363
      %s365 = ssub.s32 %s27, %s34
      %p366 = scmp.eq.s32.totalorder %s365, 0
      %s368 = sadd.s32 %s367, 1
      %s369 = scalar_select %p366, %s367, %s368
      %p372 = pneg %p366
      %p373 = scmp.eq.s32.totalorder %s27, 1
      %p374 = por %p372, %p373
      %p375 = scmp.ne.s32.totalorder %s367, %s370
      %p376 = scmp.eq.s32.totalorder %s27, 0
      %p377 = por %p375, %p376
      %p378 = scmp.ne.s32.totalorder %s367, %s370
      %p379 = scmp.eq.s32.totalorder %s32, 1
      %p380 = por %p378, %p379
      %p381 = scmp.ne.s32.totalorder %s370, %s371
      %p382 = scmp.eq.s32.totalorder %s32, 0
      %p383 = por %p381, %p382
      %p384 = scmp.ne.s32.totalorder %s370, %s371
      %p385 = scmp.eq.s32.totalorder %s33, 1
      %p386 = por %p384, %p385
      %p388 = scmp.ne.s32.totalorder %s371, %s387
      %p389 = scmp.eq.s32.totalorder %s33, 0
      %p390 = por %p388, %p389
      %p391 = scmp.le.s32.totalorder 1, %s27
      %p392 = scmp.lt.s32.totalorder %s27, 3
      %p393 = pnand %p391, %p392
      %p394 = pneg %p393
      // Predicated region
      $region9: #{_vae_forward_impl.1} parent=5 // pred_check
        _
      $region10: #{_vae_forward_impl.1} parent=5 // pred_check_branch
        %396 = sbr.rel (%p393) target = $region12
      $region11: #{_vae_forward_impl.1} parent=5 // pred_region
        %s397 = ssub.s32 %s27, 1
        // Predicated region
        $region13: #{_vae_forward_impl.1} parent=11 // pred_check
          %p398 = pneg %p100
        $region14: #{_vae_forward_impl.1} parent=11 // pred_check_branch
          %400 = sbr.rel (%p398) target = $region16
        $region15: #{_vae_forward_impl.1} parent=11 // pred_region
          _
        $region16: #{_vae_forward_impl.1} parent=11 // pred_fallthru
          _
        // Predicated region
        $region17: #{_vae_forward_impl.1} parent=11 // pred_check
          %p401 = pneg %p121
        $region18: #{_vae_forward_impl.1} parent=11 // pred_check_branch
          %403 = sbr.rel (%p401) target = $region20
        $region19: #{_vae_forward_impl.1} parent=11 // pred_region
          _
        $region20: #{_vae_forward_impl.1} parent=11 // pred_fallthru
          _
        // Predicated region
        $region21: #{_vae_forward_impl.1} parent=11 // pred_check
          %p404 = pneg %p142
        $region22: #{_vae_forward_impl.1} parent=11 // pred_check_branch
          %406 = sbr.rel (%p404) target = $region24
        $region23: #{_vae_forward_impl.1} parent=11 // pred_region
          %s408 = ssub.s32 1024, 1024
          %409 = vsyncadd [#allocation3], %s408
          %s410 = sshll.u32 [#allocation2], 4
          %s411 = int_to_ptr.vmem [resolvable:$true] %s410
          %416 = dma.hbm_to_vmem [thread:$0]  %s4, 1024, %s411, [#allocation3], 64, 64, 4
        $region24: #{_vae_forward_impl.1} parent=11 // pred_fallthru
          _
        // Predicated region
        $region25: #{_vae_forward_impl.1} parent=11 // pred_check
          %p417 = pneg %p163
        $region26: #{_vae_forward_impl.1} parent=11 // pred_check_branch
          %419 = sbr.rel (%p417) target = $region28
        $region27: #{_vae_forward_impl.1} parent=11 // pred_region
          _
        $region28: #{_vae_forward_impl.1} parent=11 // pred_fallthru
          _
        // Predicated region
        $region29: #{_vae_forward_impl.1} parent=11 // pred_check
          %p420 = pneg %p184
        $region30: #{_vae_forward_impl.1} parent=11 // pred_check_branch
          %422 = sbr.rel (%p420) target = $region32
        $region31: #{_vae_forward_impl.1} parent=11 // pred_region
          _
        $region32: #{_vae_forward_impl.1} parent=11 // pred_fallthru
          _
        // Predicated region
        $region33: #{_vae_forward_impl.1} parent=11 // pred_check
          %p423 = pneg %p205
        $region34: #{_vae_forward_impl.1} parent=11 // pred_check_branch
          %425 = sbr.rel (%p423) target = $region36
        $region35: #{_vae_forward_impl.1} parent=11 // pred_region
          _
        $region36: #{_vae_forward_impl.1} parent=11 // pred_fallthru
          _
        // Predicated region
        $region37: #{_vae_forward_impl.1} parent=11 // pred_check
          %p426 = pneg %p226
        $region38: #{_vae_forward_impl.1} parent=11 // pred_check_branch
          %428 = sbr.rel (%p426) target = $region40
        $region39: #{_vae_forward_impl.1} parent=11 // pred_region
          %s430 = ssub.s32 1024, 1024
          %431 = vsyncadd [#allocation6], %s430
          %s432 = sshll.u32 [#allocation5], 4
          %s433 = int_to_ptr.vmem [resolvable:$true] %s432
          %438 = dma.hbm_to_vmem [thread:$0]  %s8, 1024, %s433, [#allocation6], 64, 64, 4
        $region40: #{_vae_forward_impl.1} parent=11 // pred_fallthru
          _
        // Predicated region
        $region41: #{_vae_forward_impl.1} parent=11 // pred_check
          %p439 = pneg %p247
        $region42: #{_vae_forward_impl.1} parent=11 // pred_check_branch
          %441 = sbr.rel (%p439) target = $region44
        $region43: #{_vae_forward_impl.1} parent=11 // pred_region
          _
        $region44: #{_vae_forward_impl.1} parent=11 // pred_fallthru
          _
        // Predicated region
        $region45: #{_vae_forward_impl.1} parent=11 // pred_check
          %p442 = pneg %p268
        $region46: #{_vae_forward_impl.1} parent=11 // pred_check_branch
          %444 = sbr.rel (%p442) target = $region48
        $region47: #{_vae_forward_impl.1} parent=11 // pred_region
          %s446 = ssub.s32 1024, 1024
          %447 = vsyncadd [#allocation6], %s446
          %s448 = sshll.u32 [#allocation7], 4
          %s449 = int_to_ptr.vmem [resolvable:$true] %s448
          %454 = dma.hbm_to_vmem [thread:$0]  %s10, 1024, %s449, [#allocation6], 64, 64, 4
        $region48: #{_vae_forward_impl.1} parent=11 // pred_fallthru
          _
        // Predicated region
        $region49: #{_vae_forward_impl.1} parent=11 // pred_check
          %p455 = pneg %p289
        $region50: #{_vae_forward_impl.1} parent=11 // pred_check_branch
          %457 = sbr.rel (%p455) target = $region52
        $region51: #{_vae_forward_impl.1} parent=11 // pred_region
          _
        $region52: #{_vae_forward_impl.1} parent=11 // pred_fallthru
          _
        // Predicated region
        $region53: #{_vae_forward_impl.1} parent=11 // pred_check
          %p458 = pneg %p310
        $region54: #{_vae_forward_impl.1} parent=11 // pred_check_branch
          %460 = sbr.rel (%p458) target = $region56
        $region55: #{_vae_forward_impl.1} parent=11 // pred_region
          _
        $region56: #{_vae_forward_impl.1} parent=11 // pred_fallthru
          _
        // Predicated region
        $region57: #{_vae_forward_impl.1} parent=11 // pred_check
          %p461 = pneg %p331
        $region58: #{_vae_forward_impl.1} parent=11 // pred_check_branch
          %463 = sbr.rel (%p461) target = $region60
        $region59: #{_vae_forward_impl.1} parent=11 // pred_region
          _
        $region60: #{_vae_forward_impl.1} parent=11 // pred_fallthru
          _
      $region12: #{_vae_forward_impl.1} parent=5 // pred_fallthru
        _
      %p464 = scmp.lt.s32.totalorder %s27, 2
      // Predicated region
      $region61: #{_vae_forward_impl.1} parent=5 // pred_check
        %p465 = pneg %p464
      $region62: #{_vae_forward_impl.1} parent=5 // pred_check_branch
        %467 = sbr.rel (%p465) target = $region64
      $region63: #{_vae_forward_impl.1} parent=5 // pred_region
        // Predicated region
        $region65: #{_vae_forward_impl.1} parent=63 // pred_check
          %p468 = pneg %p47
        $region66: #{_vae_forward_impl.1} parent=63 // pred_check_branch
          %470 = sbr.rel (%p468) target = $region68
        $region67: #{_vae_forward_impl.1} parent=63 // pred_region
          %s471 = smul.u32 32, %s27
          %p472 = scmp.lt.s32.totalorder %s471, 63
          %s473 = scalar_select %p472, %s471, 63
          %s474 = smul.addr %s473, 2
          %s475 = smul.addr %s474, 4
          %s476 = scalar_lea.vmem %s0, %s475
          %s477 = smul.u32 32, %s27
        $region68: #{_vae_forward_impl.1} parent=63 // pred_fallthru
          _
        // Predicated region
        $region69: #{_vae_forward_impl.1} parent=63 // pred_check
          %p478 = pneg %p73
        $region70: #{_vae_forward_impl.1} parent=63 // pred_check_branch
          %480 = sbr.rel (%p478) target = $region72
        $region71: #{_vae_forward_impl.1} parent=63 // pred_region
          %s481 = smul.u32 32, %s27
          %p482 = scmp.lt.s32.totalorder %s481, 63
          %s483 = scalar_select %p482, %s481, 63
          %s484 = smul.addr %s483, 4
          %s485 = scalar_lea.vmem %s1, %s484
          %s486 = smul.u32 32, %s27
        $region72: #{_vae_forward_impl.1} parent=63 // pred_fallthru
          _
      $region64: #{_vae_forward_impl.1} parent=5 // pred_fallthru
        _
      %p487 = scmp.le.s32.totalorder 1, %s27
      %p488 = scmp.lt.s32.totalorder %s27, 3
      %p489 = pnand %p487, %p488
      %p490 = pneg %p489
      // Predicated region
      $region73: #{_vae_forward_impl.1} parent=5 // pred_check
        _
      $region74: #{_vae_forward_impl.1} parent=5 // pred_check_branch
        %492 = sbr.rel (%p489) target = $region76
      $region75: #{_vae_forward_impl.1} parent=5 // pred_region
        %s493 = ssub.s32 %s27, 1
        // Predicated region
        $region77: #{_vae_forward_impl.1} parent=75 // pred_check
          %p494 = pneg %p142
        $region78: #{_vae_forward_impl.1} parent=75 // pred_check_branch
          %496 = sbr.rel (%p494) target = $region80
        $region79: #{_vae_forward_impl.1} parent=75 // pred_region
          %497 = dma.done [#allocation3], 1024
        $region80: #{_vae_forward_impl.1} parent=75 // pred_fallthru
          _
        // Predicated region
        $region81: #{_vae_forward_impl.1} parent=75 // pred_check
          %p498 = pneg %p226
        $region82: #{_vae_forward_impl.1} parent=75 // pred_check_branch
          %500 = sbr.rel (%p498) target = $region84
        $region83: #{_vae_forward_impl.1} parent=75 // pred_region
          %501 = dma.done [#allocation6], 1024
        $region84: #{_vae_forward_impl.1} parent=75 // pred_fallthru
          _
        // Predicated region
        $region85: #{_vae_forward_impl.1} parent=75 // pred_check
          %p502 = pneg %p268
        $region86: #{_vae_forward_impl.1} parent=75 // pred_check_branch
          %504 = sbr.rel (%p502) target = $region88
        $region87: #{_vae_forward_impl.1} parent=75 // pred_region
          %505 = dma.done [#allocation6], 1024
        $region88: #{_vae_forward_impl.1} parent=75 // pred_fallthru
          _
        %s506 = smul.u32 32, %s32
        %p507 = scmp.lt.s32.totalorder %s506, 63
        %s508 = scalar_select %p507, %s506, 63
        %s509 = smul.addr %s508, 2
        %s510 = smul.addr %s509, 4
        %s511 = scalar_lea.vmem %s0, %s510
        %p512 = pneg %p53
        %p513 = pneg %p50
        %s514 = smul.u32 32, %s32
        %p515 = scmp.lt.s32.totalorder %s514, 63
        %s516 = scalar_select %p515, %s514, 63
        %s517 = smul.addr %s516, 4
        %s518 = scalar_lea.vmem %s1, %s517
        %p519 = pneg %p79
        %p520 = pneg %p76
        %p521 = pneg %p100
        %p522 = pneg %p97
        %p523 = pneg %p121
        %p524 = pneg %p118
        %p525 = pneg %p142
        %p526 = pneg %p139
        %p527 = pneg %p163
        %p528 = pneg %p160
        %p529 = pneg %p184
        %p530 = pneg %p181
        %p531 = pneg %p205
        %p532 = pneg %p202
        %p533 = pneg %p226
        %p534 = pneg %p223
        %p535 = pneg %p247
        %p536 = pneg %p244
        %p537 = pneg %p268
        %p538 = pneg %p265
        %p539 = pneg %p289
        %p540 = pneg %p286
        %p541 = pneg %p310
        %p542 = pneg %p307
        %p543 = pneg %p331
        %p544 = pneg %p328
        %p545 = pneg %p357
        %p546 = pneg %p354
        %s547 = sand.u32 %s344, 1
        %s548 = scalar_lea.sflag [#allocation4], %s547
        %s549 = sand.u32 %s344, 1
        %s550 = smul.addr %s549, 256
        %s551 = scalar_lea.vmem [#allocation8], %s550
        %p552 = pneg %p383
        %p553 = pneg %p380
        %s554 = smul.u32 32, %s32
        %p555 = scmp.lt.s32.totalorder %s554, 63
        %s556 = scalar_select %p555, %s554, 63
        %s557 = smul.addr %s556, 2
        %s558 = smul.addr %s557, 4
        %s559 = scalar_lea.vmem %s15, %s558
        %s560 = smul.u32 32, %s32
        %p561 = scmp.lt.s32.totalorder %s560, 63
        %s562 = scalar_select %p561, %s560, 63
        %s563 = smul.addr %s562, 2
        %s564 = smul.addr %s563, 4
        %s565 = scalar_lea.vmem %s0, %s564
        %s566 = smul.u32 32, %s32
        %s567 = smul.u32 32, %s32
        %p568 = scmp.lt.s32.totalorder %s567, 63
        %s569 = scalar_select %p568, %s567, 63
        %s570 = smul.addr %s569, 4
        %s571 = scalar_lea.vmem %s1, %s570
        %s572 = smul.u32 32, %s32
        %s573 = smul.u32 32, %s32
        %s574 = smul.u32 32, %s32
        %p575 = scmp.lt.s32.totalorder %s574, 63
        %s576 = scalar_select %p575, %s574, 63
        %s577 = smul.addr %s576, 2
        %s578 = smul.addr %s577, 4
        %s579 = scalar_lea.vmem %s15, %s578
        %s580 = smul.u32 32, %s32
        %v582 = vld [vmem:[%s565] sm:$0xff]
        %v583 = vld [vmem:[%s565 + $0x8] sm:$0xff]
        %v584 = vld [vmem:[%s565 + $0x10] sm:$0xff]
        %v585 = vld [vmem:[%s565 + $0x18] sm:$0xff]
        %v586 = vld [vmem:[%s565 + $0x20] sm:$0xff]
        %v587 = vld [vmem:[%s565 + $0x28] sm:$0xff]
        %v588 = vld [vmem:[%s565 + $0x30] sm:$0xff]
        %v589 = vld [vmem:[%s565 + $0x38] sm:$0xff]
        %v590 = vld [vmem:[%s565 + $0x40] sm:$0xff]
        %v591 = vld [vmem:[%s565 + $0x48] sm:$0xff]
        %v592 = vld [vmem:[%s565 + $0x50] sm:$0xff]
        %v593 = vld [vmem:[%s565 + $0x58] sm:$0xff]
        %v594 = vld [vmem:[%s565 + $0x60] sm:$0xff]
        %v595 = vld [vmem:[%s565 + $0x68] sm:$0xff]
        %v596 = vld [vmem:[%s565 + $0x70] sm:$0xff]
        %v597 = vld [vmem:[%s565 + $0x78] sm:$0xff]
        %v598 = vld [vmem:[%s565 + $0x80] sm:$0xff]
        %v599 = vld [vmem:[%s565 + $0x88] sm:$0xff]
        %v600 = vld [vmem:[%s565 + $0x90] sm:$0xff]
        %v601 = vld [vmem:[%s565 + $0x98] sm:$0xff]
        %v602 = vld [vmem:[%s565 + $0xa0] sm:$0xff]
        %v603 = vld [vmem:[%s565 + $0xa8] sm:$0xff]
        %v604 = vld [vmem:[%s565 + $0xb0] sm:$0xff]
        %v605 = vld [vmem:[%s565 + $0xb8] sm:$0xff]
        %v606 = vld [vmem:[%s565 + $0xc0] sm:$0xff]
        %v607 = vld [vmem:[%s565 + $0xc8] sm:$0xff]
        %v608 = vld [vmem:[%s565 + $0xd0] sm:$0xff]
        %v609 = vld [vmem:[%s565 + $0xd8] sm:$0xff]
        %v610 = vld [vmem:[%s565 + $0xe0] sm:$0xff]
        %v611 = vld [vmem:[%s565 + $0xe8] sm:$0xff]
        %v612 = vld [vmem:[%s565 + $0xf0] sm:$0xff]
        %v613 = vld [vmem:[%s565 + $0xf8] sm:$0xff]
        %v614 = vld [vmem:[%s571] sm:$0xf]
        %v615 = vld [vmem:[%s571 + $0x4] sm:$0xf]
        %v616 = vld [vmem:[%s571 + $0x8] sm:$0xf]
        %v617 = vld [vmem:[%s571 + $0xc] sm:$0xf]
        %v618 = vld [vmem:[%s571 + $0x10] sm:$0xf]
        %v619 = vld [vmem:[%s571 + $0x14] sm:$0xf]
        %v620 = vld [vmem:[%s571 + $0x18] sm:$0xf]
        %v621 = vld [vmem:[%s571 + $0x1c] sm:$0xf]
        %v622 = vld [vmem:[%s571 + $0x20] sm:$0xf]
        %v623 = vld [vmem:[%s571 + $0x24] sm:$0xf]
        %v624 = vld [vmem:[%s571 + $0x28] sm:$0xf]
        %v625 = vld [vmem:[%s571 + $0x2c] sm:$0xf]
        %v626 = vld [vmem:[%s571 + $0x30] sm:$0xf]
        %v627 = vld [vmem:[%s571 + $0x34] sm:$0xf]
        %v628 = vld [vmem:[%s571 + $0x38] sm:$0xf]
        %v629 = vld [vmem:[%s571 + $0x3c] sm:$0xf]
        %v630 = vld [vmem:[%s571 + $0x40] sm:$0xf]
        %v631 = vld [vmem:[%s571 + $0x44] sm:$0xf]
        %v632 = vld [vmem:[%s571 + $0x48] sm:$0xf]
        %v633 = vld [vmem:[%s571 + $0x4c] sm:$0xf]
        %v634 = vld [vmem:[%s571 + $0x50] sm:$0xf]
        %v635 = vld [vmem:[%s571 + $0x54] sm:$0xf]
        %v636 = vld [vmem:[%s571 + $0x58] sm:$0xf]
        %v637 = vld [vmem:[%s571 + $0x5c] sm:$0xf]
        %v638 = vld [vmem:[%s571 + $0x60] sm:$0xf]
        %v639 = vld [vmem:[%s571 + $0x64] sm:$0xf]
        %v640 = vld [vmem:[%s571 + $0x68] sm:$0xf]
        %v641 = vld [vmem:[%s571 + $0x6c] sm:$0xf]
        %v642 = vld [vmem:[%s571 + $0x70] sm:$0xf]
        %v643 = vld [vmem:[%s571 + $0x74] sm:$0xf]
        %v644 = vld [vmem:[%s571 + $0x78] sm:$0xf]
        %v645 = vld [vmem:[%s571 + $0x7c] sm:$0xf]
        %v646 = vld [vmem:[%s2] sm:$0xf]
        %v647 = vld [vmem:[%s2 + $0x4] sm:$0xf]
        %v648 = vld [vmem:[%s2 + $0x8] sm:$0xf]
        %v649 = vld [vmem:[%s2 + $0xc] sm:$0xf]
        %v650 = vld [vmem:[%s2 + $0x10] sm:$0xf]
        %v651 = vld [vmem:[%s2 + $0x14] sm:$0xf]
        %v652 = vld [vmem:[%s2 + $0x18] sm:$0xf]
        %v653 = vld [vmem:[%s2 + $0x1c] sm:$0xf]
        %v654 = vld [vmem:[%s2 + $0x20] sm:$0xf]
        %v655 = vld [vmem:[%s2 + $0x24] sm:$0xf]
        %v656 = vld [vmem:[%s2 + $0x28] sm:$0xf]
        %v657 = vld [vmem:[%s2 + $0x2c] sm:$0xf]
        %v658 = vld [vmem:[%s2 + $0x30] sm:$0xf]
        %v659 = vld [vmem:[%s2 + $0x34] sm:$0xf]
        %v660 = vld [vmem:[%s2 + $0x38] sm:$0xf]
        %v661 = vld [vmem:[%s2 + $0x3c] sm:$0xf]
        %v662 = vld [vmem:[%s2 + $0x40] sm:$0xf]
        %v663 = vld [vmem:[%s2 + $0x44] sm:$0xf]
        %v664 = vld [vmem:[%s2 + $0x48] sm:$0xf]
        %v665 = vld [vmem:[%s2 + $0x4c] sm:$0xf]
        %v666 = vld [vmem:[%s2 + $0x50] sm:$0xf]
        %v667 = vld [vmem:[%s2 + $0x54] sm:$0xf]
        %v668 = vld [vmem:[%s2 + $0x58] sm:$0xf]
        %v669 = vld [vmem:[%s2 + $0x5c] sm:$0xf]
        %v670 = vld [vmem:[%s2 + $0x60] sm:$0xf]
        %v671 = vld [vmem:[%s2 + $0x64] sm:$0xf]
        %v672 = vld [vmem:[%s2 + $0x68] sm:$0xf]
        %v673 = vld [vmem:[%s2 + $0x6c] sm:$0xf]
        %v674 = vld [vmem:[%s2 + $0x70] sm:$0xf]
        %v675 = vld [vmem:[%s2 + $0x74] sm:$0xf]
        %v676 = vld [vmem:[%s2 + $0x78] sm:$0xf]
        %v677 = vld [vmem:[%s2 + $0x7c] sm:$0xf]
        %v678 = vld [vmem:[%s3] sm:$0x1]
        %v680 = vlaneseq
        %v681 = vshrl.u32 %v680, 7
        %v682 = vsub.s32 0, %v681
        %v683 = vrot.slane %v678, %v682
        %v717 = vunpack.c.l.b16 %v582
        %v718 = vunpack.c.h.b16 %v582
        %v719 = vunpack.c.l.b16 %v583
        %v720 = vunpack.c.h.b16 %v583
        %v721 = vunpack.c.l.b16 %v584
        %v722 = vunpack.c.h.b16 %v584
        %v723 = vunpack.c.l.b16 %v585
        %v724 = vunpack.c.h.b16 %v585
        %v725 = vunpack.c.l.b16 %v586
        %v726 = vunpack.c.h.b16 %v586
        %v727 = vunpack.c.l.b16 %v587
        %v728 = vunpack.c.h.b16 %v587
        %v729 = vunpack.c.l.b16 %v588
        %v730 = vunpack.c.h.b16 %v588
        %v731 = vunpack.c.l.b16 %v589
        %v732 = vunpack.c.h.b16 %v589
        %v733 = vunpack.c.l.b16 %v590
        %v734 = vunpack.c.h.b16 %v590
        %v735 = vunpack.c.l.b16 %v591
        %v736 = vunpack.c.h.b16 %v591
        %v737 = vunpack.c.l.b16 %v592
        %v738 = vunpack.c.h.b16 %v592
        %v739 = vunpack.c.l.b16 %v593
        %v740 = vunpack.c.h.b16 %v593
        %v741 = vunpack.c.l.b16 %v594
        %v742 = vunpack.c.h.b16 %v594
        %v743 = vunpack.c.l.b16 %v595
        %v744 = vunpack.c.h.b16 %v595
        %v745 = vunpack.c.l.b16 %v596
        %v746 = vunpack.c.h.b16 %v596
        %v747 = vunpack.c.l.b16 %v597
        %v748 = vunpack.c.h.b16 %v597
        %v749 = vunpack.c.l.b16 %v598
        %v750 = vunpack.c.h.b16 %v598
        %v751 = vunpack.c.l.b16 %v599
        %v752 = vunpack.c.h.b16 %v599
        %v753 = vunpack.c.l.b16 %v600
        %v754 = vunpack.c.h.b16 %v600
        %v755 = vunpack.c.l.b16 %v601
        %v756 = vunpack.c.h.b16 %v601
        %v757 = vunpack.c.l.b16 %v602
        %v758 = vunpack.c.h.b16 %v602
        %v759 = vunpack.c.l.b16 %v603
        %v760 = vunpack.c.h.b16 %v603
        %v761 = vunpack.c.l.b16 %v604
        %v762 = vunpack.c.h.b16 %v604
        %v763 = vunpack.c.l.b16 %v605
        %v764 = vunpack.c.h.b16 %v605
        %v765 = vunpack.c.l.b16 %v606
        %v766 = vunpack.c.h.b16 %v606
        %v767 = vunpack.c.l.b16 %v607
        %v768 = vunpack.c.h.b16 %v607
        %v769 = vunpack.c.l.b16 %v608
        %v770 = vunpack.c.h.b16 %v608
        %v771 = vunpack.c.l.b16 %v609
        %v772 = vunpack.c.h.b16 %v609
        %v773 = vunpack.c.l.b16 %v610
        %v774 = vunpack.c.h.b16 %v610
        %v775 = vunpack.c.l.b16 %v611
        %v776 = vunpack.c.h.b16 %v611
        %v777 = vunpack.c.l.b16 %v612
        %v778 = vunpack.c.h.b16 %v612
        %v779 = vunpack.c.l.b16 %v613
        %v780 = vunpack.c.h.b16 %v613
        %v781 = vpack.c.b16 %v719, %v717
        %v782 = vpack.c.b16 %v720, %v718
        %v783 = vpack.c.b16 %v723, %v721
        %v784 = vpack.c.b16 %v724, %v722
        %v785 = vpack.c.b16 %v727, %v725
        %v786 = vpack.c.b16 %v728, %v726
        %v787 = vpack.c.b16 %v731, %v729
        %v788 = vpack.c.b16 %v732, %v730
        %v789 = vpack.c.b16 %v735, %v733
        %v790 = vpack.c.b16 %v736, %v734
        %v791 = vpack.c.b16 %v739, %v737
        %v792 = vpack.c.b16 %v740, %v738
        %v793 = vpack.c.b16 %v743, %v741
        %v794 = vpack.c.b16 %v744, %v742
        %v795 = vpack.c.b16 %v747, %v745
        %v796 = vpack.c.b16 %v748, %v746
        %v797 = vpack.c.b16 %v751, %v749
        %v798 = vpack.c.b16 %v752, %v750
        %v799 = vpack.c.b16 %v755, %v753
        %v800 = vpack.c.b16 %v756, %v754
        %v801 = vpack.c.b16 %v759, %v757
        %v802 = vpack.c.b16 %v760, %v758
        %v803 = vpack.c.b16 %v763, %v761
        %v804 = vpack.c.b16 %v764, %v762
        %v805 = vpack.c.b16 %v767, %v765
        %v806 = vpack.c.b16 %v768, %v766
        %v807 = vpack.c.b16 %v771, %v769
        %v808 = vpack.c.b16 %v772, %v770
        %v809 = vpack.c.b16 %v775, %v773
        %v810 = vpack.c.b16 %v776, %v774
        %v811 = vpack.c.b16 %v779, %v777
        %v812 = vpack.c.b16 %v780, %v778
        %v877 = vunpack.c.l.b16 %v646
        %v878 = vunpack.c.l.b16 %v647
        %v879 = vunpack.c.l.b16 %v648
        %v880 = vunpack.c.l.b16 %v649
        %v881 = vunpack.c.l.b16 %v650
        %v882 = vunpack.c.l.b16 %v651
        %v883 = vunpack.c.l.b16 %v652
        %v884 = vunpack.c.l.b16 %v653
        %v885 = vunpack.c.l.b16 %v654
        %v886 = vunpack.c.l.b16 %v655
        %v887 = vunpack.c.l.b16 %v656
        %v888 = vunpack.c.l.b16 %v657
        %v889 = vunpack.c.l.b16 %v658
        %v890 = vunpack.c.l.b16 %v659
        %v891 = vunpack.c.l.b16 %v660
        %v892 = vunpack.c.l.b16 %v661
        %v893 = vunpack.c.l.b16 %v662
        %v894 = vunpack.c.l.b16 %v663
        %v895 = vunpack.c.l.b16 %v664
        %v896 = vunpack.c.l.b16 %v665
        %v897 = vunpack.c.l.b16 %v666
        %v898 = vunpack.c.l.b16 %v667
        %v899 = vunpack.c.l.b16 %v668
        %v900 = vunpack.c.l.b16 %v669
        %v901 = vunpack.c.l.b16 %v670
        %v902 = vunpack.c.l.b16 %v671
        %v903 = vunpack.c.l.b16 %v672
        %v904 = vunpack.c.l.b16 %v673
        %v905 = vunpack.c.l.b16 %v674
        %v906 = vunpack.c.l.b16 %v675
        %v907 = vunpack.c.l.b16 %v676
        %v908 = vunpack.c.l.b16 %v677
        %v909 = vpack.c.b16 %v878, %v877
        %v910 = vpack.c.b16 %v880, %v879
        %v911 = vpack.c.b16 %v882, %v881
        %v912 = vpack.c.b16 %v884, %v883
        %v913 = vpack.c.b16 %v886, %v885
        %v914 = vpack.c.b16 %v888, %v887
        %v915 = vpack.c.b16 %v890, %v889
        %v916 = vpack.c.b16 %v892, %v891
        %v917 = vpack.c.b16 %v894, %v893
        %v918 = vpack.c.b16 %v896, %v895
        %v919 = vpack.c.b16 %v898, %v897
        %v920 = vpack.c.b16 %v900, %v899
        %v921 = vpack.c.b16 %v902, %v901
        %v922 = vpack.c.b16 %v904, %v903
        %v923 = vpack.c.b16 %v906, %v905
        %v924 = vpack.c.b16 %v908, %v907
        %941 = vmatprep.subr.bf16.mxu0 0
        %942 = vmatpush1.bf16.msra.mxu0 %v909
        %943 = vmatprep.subr.bf16.mxu0 0
        %944 = vmatpush1.bf16.msra.mxu0 %v910
        %945 = vmatprep.subr.bf16.mxu0 0
        %946 = vmatpush1.bf16.msra.mxu0 %v911
        %947 = vmatprep.subr.bf16.mxu0 0
        %948 = vmatpush1.bf16.msra.mxu0 %v912
        %949 = vmatprep.subr.bf16.mxu0 0
        %950 = vmatpush1.bf16.msra.mxu0 %v913
        %951 = vmatprep.subr.bf16.mxu0 0
        %952 = vmatpush1.bf16.msra.mxu0 %v914
        %953 = vmatprep.subr.bf16.mxu0 0
        %954 = vmatpush1.bf16.msra.mxu0 %v915
        %955 = vmatprep.subr.bf16.mxu0 0
        %956 = vmatpush1.bf16.msra.mxu0 %v916
        %957 = vmatprep.subr.bf16.mxu0 0
        %958 = vmatpush1.bf16.msra.mxu0 %v917
        %959 = vmatprep.subr.bf16.mxu0 0
        %960 = vmatpush1.bf16.msra.mxu0 %v918
        %961 = vmatprep.subr.bf16.mxu0 0
        %962 = vmatpush1.bf16.msra.mxu0 %v919
        %963 = vmatprep.subr.bf16.mxu0 0
        %964 = vmatpush1.bf16.msra.mxu0 %v920
        %965 = vmatprep.subr.bf16.mxu0 0
        %966 = vmatpush1.bf16.msra.mxu0 %v921
        %967 = vmatprep.subr.bf16.mxu0 0
        %968 = vmatpush1.bf16.msra.mxu0 %v922
        %969 = vmatprep.subr.bf16.mxu0 0
        %970 = vmatpush1.bf16.msra.mxu0 %v923
        %971 = vmatprep.subr.bf16.mxu0 0
        %972 = vmatpush1.bf16.msra.mxu0 %v924
        %973 = vmatprep.mubr.bf16.mxu0 %v782
        %974 = vmatmul.mubr.bf16.gmra.mrb[0].mxu0 %v781
        %v975 = vpop.f32.mrb[0].mxu0
        %v976 = vadd.f32 %v683, %v975
        %v977 = vpop.f32.mrb[0].mxu0
        %v978 = vpop.f32.mrb[0].mxu0
        %v979 = vadd.f32 %v683, %v978
        %v980 = vpop.f32.mrb[0].mxu0
        %981 = vmatprep.mubr.bf16.mxu0 %v784
        %982 = vmatmul.mubr.bf16.gmra.mrb[0].mxu0 %v783
        %v983 = vpop.f32.mrb[0].mxu0
        %v984 = vadd.f32 %v683, %v983
        %v985 = vpop.f32.mrb[0].mxu0
        %v986 = vpop.f32.mrb[0].mxu0
        %v987 = vadd.f32 %v683, %v986
        %v988 = vpop.f32.mrb[0].mxu0
        %989 = vmatprep.mubr.bf16.mxu0 %v786
        %990 = vmatmul.mubr.bf16.gmra.mrb[0].mxu0 %v785
        %v991 = vpop.f32.mrb[0].mxu0
        %v992 = vadd.f32 %v683, %v991
        %v993 = vpop.f32.mrb[0].mxu0
        %v994 = vpop.f32.mrb[0].mxu0
        %v995 = vadd.f32 %v683, %v994
        %v996 = vpop.f32.mrb[0].mxu0
        %997 = vmatprep.mubr.bf16.mxu0 %v788
        %998 = vmatmul.mubr.bf16.gmra.mrb[0].mxu0 %v787
        %v999 = vpop.f32.mrb[0].mxu0
        %v1000 = vadd.f32 %v683, %v999
        %v1001 = vpop.f32.mrb[0].mxu0
        %v1002 = vpop.f32.mrb[0].mxu0
        %v1003 = vadd.f32 %v683, %v1002
        %v1004 = vpop.f32.mrb[0].mxu0
        %1005 = vmatprep.mubr.bf16.mxu0 %v790
        %1006 = vmatmul.mubr.bf16.gmra.mrb[0].mxu0 %v789
        %v1007 = vpop.f32.mrb[0].mxu0
        %v1008 = vadd.f32 %v683, %v1007
        %v1009 = vpop.f32.mrb[0].mxu0
        %v1010 = vpop.f32.mrb[0].mxu0
        %v1011 = vadd.f32 %v683, %v1010
        %v1012 = vpop.f32.mrb[0].mxu0
        %1013 = vmatprep.mubr.bf16.mxu0 %v792
        %1014 = vmatmul.mubr.bf16.gmra.mrb[0].mxu0 %v791
        %v1015 = vpop.f32.mrb[0].mxu0
        %v1016 = vadd.f32 %v683, %v1015
        %v1017 = vpop.f32.mrb[0].mxu0
        %v1018 = vpop.f32.mrb[0].mxu0
        %v1019 = vadd.f32 %v683, %v1018
        %v1020 = vpop.f32.mrb[0].mxu0
        %1021 = vmatprep.mubr.bf16.mxu0 %v794
        %1022 = vmatmul.mubr.bf16.gmra.mrb[0].mxu0 %v793
        %v1023 = vpop.f32.mrb[0].mxu0
        %v1024 = vadd.f32 %v683, %v1023
        %v1025 = vpop.f32.mrb[0].mxu0
        %v1026 = vpop.f32.mrb[0].mxu0
        %v1027 = vadd.f32 %v683, %v1026
        %v1028 = vpop.f32.mrb[0].mxu0
        %1029 = vmatprep.mubr.bf16.mxu0 %v796
        %1030 = vmatmul.mubr.bf16.gmra.mrb[0].mxu0 %v795
        %v1031 = vpop.f32.mrb[0].mxu0
        %v1032 = vadd.f32 %v683, %v1031
        %v1033 = vpop.f32.mrb[0].mxu0
        %v1034 = vpop.f32.mrb[0].mxu0
        %v1035 = vadd.f32 %v683, %v1034
        %v1036 = vpop.f32.mrb[0].mxu0
        %1037 = vmatprep.mubr.bf16.mxu0 %v798
        %1038 = vmatmul.mubr.bf16.gmra.mrb[0].mxu0 %v797
        %v1039 = vpop.f32.mrb[0].mxu0
        %v1040 = vadd.f32 %v683, %v1039
        %v1041 = vpop.f32.mrb[0].mxu0
        %v1042 = vpop.f32.mrb[0].mxu0
        %v1043 = vadd.f32 %v683, %v1042
        %v1044 = vpop.f32.mrb[0].mxu0
        %1045 = vmatprep.mubr.bf16.mxu0 %v800
        %1046 = vmatmul.mubr.bf16.gmra.mrb[0].mxu0 %v799
        %v1047 = vpop.f32.mrb[0].mxu0
        %v1048 = vadd.f32 %v683, %v1047
        %v1049 = vpop.f32.mrb[0].mxu0
        %v1050 = vpop.f32.mrb[0].mxu0
        %v1051 = vadd.f32 %v683, %v1050
        %v1052 = vpop.f32.mrb[0].mxu0
        %1053 = vmatprep.mubr.bf16.mxu0 %v802
        %1054 = vmatmul.mubr.bf16.gmra.mrb[0].mxu0 %v801
        %v1055 = vpop.f32.mrb[0].mxu0
        %v1056 = vadd.f32 %v683, %v1055
        %v1057 = vpop.f32.mrb[0].mxu0
        %v1058 = vpop.f32.mrb[0].mxu0
        %v1059 = vadd.f32 %v683, %v1058
        %v1060 = vpop.f32.mrb[0].mxu0
        %1061 = vmatprep.mubr.bf16.mxu0 %v804
        %1062 = vmatmul.mubr.bf16.gmra.mrb[0].mxu0 %v803
        %v1063 = vpop.f32.mrb[0].mxu0
        %v1064 = vadd.f32 %v683, %v1063
        %v1065 = vpop.f32.mrb[0].mxu0
        %v1066 = vpop.f32.mrb[0].mxu0
        %v1067 = vadd.f32 %v683, %v1066
        %v1068 = vpop.f32.mrb[0].mxu0
        %1069 = vmatprep.mubr.bf16.mxu0 %v806
        %1070 = vmatmul.mubr.bf16.gmra.mrb[0].mxu0 %v805
        %v1071 = vpop.f32.mrb[0].mxu0
        %v1072 = vadd.f32 %v683, %v1071
        %v1073 = vpop.f32.mrb[0].mxu0
        %v1074 = vpop.f32.mrb[0].mxu0
        %v1075 = vadd.f32 %v683, %v1074
        %v1076 = vpop.f32.mrb[0].mxu0
        %1077 = vmatprep.mubr.bf16.mxu0 %v808
        %1078 = vmatmul.mubr.bf16.gmra.mrb[0].mxu0 %v807
        %v1079 = vpop.f32.mrb[0].mxu0
        %v1080 = vadd.f32 %v683, %v1079
        %v1081 = vpop.f32.mrb[0].mxu0
        %v1082 = vpop.f32.mrb[0].mxu0
        %v1083 = vadd.f32 %v683, %v1082
        %v1084 = vpop.f32.mrb[0].mxu0
        %1085 = vmatprep.mubr.bf16.mxu0 %v810
        %1086 = vmatmul.mubr.bf16.gmra.mrb[0].mxu0 %v809
        %v1087 = vpop.f32.mrb[0].mxu0
        %v1088 = vadd.f32 %v683, %v1087
        %v1089 = vpop.f32.mrb[0].mxu0
        %v1090 = vpop.f32.mrb[0].mxu0
        %v1091 = vadd.f32 %v683, %v1090
        %v1092 = vpop.f32.mrb[0].mxu0
        %1093 = vmatprep.mubr.bf16.mxu0 %v812
        %1094 = vmatmul.mubr.bf16.gmra.mrb[0].mxu0 %v811
        %v1095 = vpop.f32.mrb[0].mxu0
        %v1096 = vadd.f32 %v683, %v1095
        %v1097 = vpop.f32.mrb[0].mxu0
        %v1098 = vpop.f32.mrb[0].mxu0
        %v1099 = vadd.f32 %v683, %v1098
        %v1100 = vpop.f32.mrb[0].mxu0
        %1101 = vdwg.mxu0
        %v1102 = vmax.f32 %v976, 0.0
        %v1103 = vmax.f32 %v979, 0.0
        %v1104 = vmax.f32 %v984, 0.0
        %v1105 = vmax.f32 %v987, 0.0
        %v1106 = vmax.f32 %v992, 0.0
        %v1107 = vmax.f32 %v995, 0.0
        %v1108 = vmax.f32 %v1000, 0.0
        %v1109 = vmax.f32 %v1003, 0.0
        %v1110 = vmax.f32 %v1008, 0.0
        %v1111 = vmax.f32 %v1011, 0.0
        %v1112 = vmax.f32 %v1016, 0.0
        %v1113 = vmax.f32 %v1019, 0.0
        %v1114 = vmax.f32 %v1024, 0.0
        %v1115 = vmax.f32 %v1027, 0.0
        %v1116 = vmax.f32 %v1032, 0.0
        %v1117 = vmax.f32 %v1035, 0.0
        %v1118 = vmax.f32 %v1040, 0.0
        %v1119 = vmax.f32 %v1043, 0.0
        %v1120 = vmax.f32 %v1048, 0.0
        %v1121 = vmax.f32 %v1051, 0.0
        %v1122 = vmax.f32 %v1056, 0.0
        %v1123 = vmax.f32 %v1059, 0.0
        %v1124 = vmax.f32 %v1064, 0.0
        %v1125 = vmax.f32 %v1067, 0.0
        %v1126 = vmax.f32 %v1072, 0.0
        %v1127 = vmax.f32 %v1075, 0.0
        %v1128 = vmax.f32 %v1080, 0.0
        %v1129 = vmax.f32 %v1083, 0.0
        %v1130 = vmax.f32 %v1088, 0.0
        %v1131 = vmax.f32 %v1091, 0.0
        %v1132 = vmax.f32 %v1096, 0.0
        %v1133 = vmax.f32 %v1099, 0.0
        %v1134 = vpack.c.bf16 %v1103, %v1102
        %v1135 = vpack.c.bf16 %v1105, %v1104
        %v1136 = vpack.c.bf16 %v1107, %v1106
        %v1137 = vpack.c.bf16 %v1109, %v1108
        %v1138 = vpack.c.bf16 %v1111, %v1110
        %v1139 = vpack.c.bf16 %v1113, %v1112
        %v1140 = vpack.c.bf16 %v1115, %v1114
        %v1141 = vpack.c.bf16 %v1117, %v1116
        %v1142 = vpack.c.bf16 %v1119, %v1118
        %v1143 = vpack.c.bf16 %v1121, %v1120
        %v1144 = vpack.c.bf16 %v1123, %v1122
        %v1145 = vpack.c.bf16 %v1125, %v1124
        %v1146 = vpack.c.bf16 %v1127, %v1126
        %v1147 = vpack.c.bf16 %v1129, %v1128
        %v1148 = vpack.c.bf16 %v1131, %v1130
        %v1149 = vpack.c.bf16 %v1133, %v1132
        %v1150 = vld [vmem:[#allocation2] sm:$0xf]
        %v1151 = vld [vmem:[#allocation2 + $0x4] sm:$0xf]
        %v1152 = vld [vmem:[#allocation2 + $0x8] sm:$0xf]
        %v1153 = vld [vmem:[#allocation2 + $0xc] sm:$0xf]
        %v1154 = vld [vmem:[#allocation2 + $0x10] sm:$0xf]
        %v1155 = vld [vmem:[#allocation2 + $0x14] sm:$0xf]
        %v1156 = vld [vmem:[#allocation2 + $0x18] sm:$0xf]
        %v1157 = vld [vmem:[#allocation2 + $0x1c] sm:$0xf]
        %v1158 = vld [vmem:[#allocation2 + $0x20] sm:$0xf]
        %v1159 = vld [vmem:[#allocation2 + $0x24] sm:$0xf]
        %v1160 = vld [vmem:[#allocation2 + $0x28] sm:$0xf]
        %v1161 = vld [vmem:[#allocation2 + $0x2c] sm:$0xf]
        %v1162 = vld [vmem:[#allocation2 + $0x30] sm:$0xf]
        %v1163 = vld [vmem:[#allocation2 + $0x34] sm:$0xf]
        %v1164 = vld [vmem:[#allocation2 + $0x38] sm:$0xf]
        %v1165 = vld [vmem:[#allocation2 + $0x3c] sm:$0xf]
        %v1166 = vld [vmem:[%s5] sm:$0x1]
        %v1168 = vlaneseq
        %v1169 = vshrl.u32 %v1168, 7
        %v1170 = vsub.s32 0, %v1169
        %v1171 = vrot.slane %v1166, %v1170
        %v1189 = vunpack.c.l.b16 %v1150
        %v1190 = vunpack.c.l.b16 %v1151
        %v1191 = vunpack.c.l.b16 %v1152
        %v1192 = vunpack.c.l.b16 %v1153
        %v1193 = vunpack.c.l.b16 %v1154
        %v1194 = vunpack.c.l.b16 %v1155
        %v1195 = vunpack.c.l.b16 %v1156
        %v1196 = vunpack.c.l.b16 %v1157
        %v1197 = vunpack.c.l.b16 %v1158
        %v1198 = vunpack.c.l.b16 %v1159
        %v1199 = vunpack.c.l.b16 %v1160
        %v1200 = vunpack.c.l.b16 %v1161
        %v1201 = vunpack.c.l.b16 %v1162
        %v1202 = vunpack.c.l.b16 %v1163
        %v1203 = vunpack.c.l.b16 %v1164
        %v1204 = vunpack.c.l.b16 %v1165
        %v1205 = vpack.c.b16 %v1190, %v1189
        %v1206 = vpack.c.b16 %v1192, %v1191
        %v1207 = vpack.c.b16 %v1194, %v1193
        %v1208 = vpack.c.b16 %v1196, %v1195
        %v1209 = vpack.c.b16 %v1198, %v1197
        %v1210 = vpack.c.b16 %v1200, %v1199
        %v1211 = vpack.c.b16 %v1202, %v1201
        %v1212 = vpack.c.b16 %v1204, %v1203
        %1221 = vmatprep.subr.bf16.mxu0 0
        %1222 = vmatpush1.bf16.msra.mxu0 %v1205
        %1223 = vmatprep.subr.bf16.mxu0 0
        %1224 = vmatpush1.bf16.msra.mxu0 %v1206
        %1225 = vmatprep.subr.bf16.mxu0 0
        %1226 = vmatpush1.bf16.msra.mxu0 %v1207
        %1227 = vmatprep.subr.bf16.mxu0 0
        %1228 = vmatpush1.bf16.msra.mxu0 %v1208
        %1229 = vmatprep.subr.bf16.mxu0 0
        %1230 = vmatpush1.bf16.msra.mxu0 %v1209
        %1231 = vmatprep.subr.bf16.mxu0 0
        %1232 = vmatpush1.bf16.msra.mxu0 %v1210
        %1233 = vmatprep.subr.bf16.mxu0 0
        %1234 = vmatpush1.bf16.msra.mxu0 %v1211
        %1235 = vmatprep.subr.bf16.mxu0 0
        %1236 = vmatpush1.bf16.msra.mxu0 %v1212
        %1237 = vmatprep.subr.bf16.mxu0 0
        %1238 = vmatpush1.bf16.msra.mxu0 0
        %1239 = vmatprep.subr.bf16.mxu0 0
        %1240 = vmatpush1.bf16.msra.mxu0 0
        %1241 = vmatprep.subr.bf16.mxu0 0
        %1242 = vmatpush1.bf16.msra.mxu0 0
        %1243 = vmatprep.subr.bf16.mxu0 0
        %1244 = vmatpush1.bf16.msra.mxu0 0
        %1245 = vmatprep.subr.bf16.mxu0 0
        %1246 = vmatpush1.bf16.msra.mxu0 0
        %1247 = vmatprep.subr.bf16.mxu0 0
        %1248 = vmatpush1.bf16.msra.mxu0 0
        %1249 = vmatprep.subr.bf16.mxu0 0
        %1250 = vmatpush1.bf16.msra.mxu0 0
        %1251 = vmatprep.subr.bf16.mxu0 0
        %1252 = vmatpush1.bf16.msra.mxu0 0
        %1253 = vmatprep.mubr.bf16.mxu0 0
        %1254 = vmatmul.mubr.bf16.gmra.mrb[0].mxu0 %v1134
        %v1255 = vpop.f32.mrb[0].mxu0
        %v1256 = vadd.f32 %v1171, %v1255
        %v1257 = vpop.f32.mrb[0].mxu0
        %v1258 = vpop.f32.mrb[0].mxu0
        %v1259 = vadd.f32 %v1171, %v1258
        %v1260 = vpop.f32.mrb[0].mxu0
        %1261 = vmatprep.mubr.bf16.mxu0 0
        %1262 = vmatmul.mubr.bf16.gmra.mrb[0].mxu0 %v1135
        %v1263 = vpop.f32.mrb[0].mxu0
        %v1264 = vadd.f32 %v1171, %v1263
        %v1265 = vpop.f32.mrb[0].mxu0
        %v1266 = vpop.f32.mrb[0].mxu0
        %v1267 = vadd.f32 %v1171, %v1266
        %v1268 = vpop.f32.mrb[0].mxu0
        %1269 = vmatprep.mubr.bf16.mxu0 0
        %1270 = vmatmul.mubr.bf16.gmra.mrb[0].mxu0 %v1136
        %v1271 = vpop.f32.mrb[0].mxu0
        %v1272 = vadd.f32 %v1171, %v1271
        %v1273 = vpop.f32.mrb[0].mxu0
        %v1274 = vpop.f32.mrb[0].mxu0
        %v1275 = vadd.f32 %v1171, %v1274
        %v1276 = vpop.f32.mrb[0].mxu0
        %1277 = vmatprep.mubr.bf16.mxu0 0
        %1278 = vmatmul.mubr.bf16.gmra.mrb[0].mxu0 %v1137
        %v1279 = vpop.f32.mrb[0].mxu0
        %v1280 = vadd.f32 %v1171, %v1279
        %v1281 = vpop.f32.mrb[0].mxu0
        %v1282 = vpop.f32.mrb[0].mxu0
        %v1283 = vadd.f32 %v1171, %v1282
        %v1284 = vpop.f32.mrb[0].mxu0
        %1285 = vmatprep.mubr.bf16.mxu0 0
        %1286 = vmatmul.mubr.bf16.gmra.mrb[0].mxu0 %v1138
        %v1287 = vpop.f32.mrb[0].mxu0
        %v1288 = vadd.f32 %v1171, %v1287
        %v1289 = vpop.f32.mrb[0].mxu0
        %v1290 = vpop.f32.mrb[0].mxu0
        %v1291 = vadd.f32 %v1171, %v1290
        %v1292 = vpop.f32.mrb[0].mxu0
        %1293 = vmatprep.mubr.bf16.mxu0 0
        %1294 = vmatmul.mubr.bf16.gmra.mrb[0].mxu0 %v1139
        %v1295 = vpop.f32.mrb[0].mxu0
        %v1296 = vadd.f32 %v1171, %v1295
        %v1297 = vpop.f32.mrb[0].mxu0
        %v1298 = vpop.f32.mrb[0].mxu0
        %v1299 = vadd.f32 %v1171, %v1298
        %v1300 = vpop.f32.mrb[0].mxu0
        %1301 = vmatprep.mubr.bf16.mxu0 0
        %1302 = vmatmul.mubr.bf16.gmra.mrb[0].mxu0 %v1140
        %v1303 = vpop.f32.mrb[0].mxu0
        %v1304 = vadd.f32 %v1171, %v1303
        %v1305 = vpop.f32.mrb[0].mxu0
        %v1306 = vpop.f32.mrb[0].mxu0
        %v1307 = vadd.f32 %v1171, %v1306
        %v1308 = vpop.f32.mrb[0].mxu0
        %1309 = vmatprep.mubr.bf16.mxu0 0
        %1310 = vmatmul.mubr.bf16.gmra.mrb[0].mxu0 %v1141
        %v1311 = vpop.f32.mrb[0].mxu0
        %v1312 = vadd.f32 %v1171, %v1311
        %v1313 = vpop.f32.mrb[0].mxu0
        %v1314 = vpop.f32.mrb[0].mxu0
        %v1315 = vadd.f32 %v1171, %v1314
        %v1316 = vpop.f32.mrb[0].mxu0
        %1317 = vmatprep.mubr.bf16.mxu0 0
        %1318 = vmatmul.mubr.bf16.gmra.mrb[0].mxu0 %v1142
        %v1319 = vpop.f32.mrb[0].mxu0
        %v1320 = vadd.f32 %v1171, %v1319
        %v1321 = vpop.f32.mrb[0].mxu0
        %v1322 = vpop.f32.mrb[0].mxu0
        %v1323 = vadd.f32 %v1171, %v1322
        %v1324 = vpop.f32.mrb[0].mxu0
        %1325 = vmatprep.mubr.bf16.mxu0 0
        %1326 = vmatmul.mubr.bf16.gmra.mrb[0].mxu0 %v1143
        %v1327 = vpop.f32.mrb[0].mxu0
        %v1328 = vadd.f32 %v1171, %v1327
        %v1329 = vpop.f32.mrb[0].mxu0
        %v1330 = vpop.f32.mrb[0].mxu0
        %v1331 = vadd.f32 %v1171, %v1330
        %v1332 = vpop.f32.mrb[0].mxu0
        %1333 = vmatprep.mubr.bf16.mxu0 0
        %1334 = vmatmul.mubr.bf16.gmra.mrb[0].mxu0 %v1144
        %v1335 = vpop.f32.mrb[0].mxu0
        %v1336 = vadd.f32 %v1171, %v1335
        %v1337 = vpop.f32.mrb[0].mxu0
        %v1338 = vpop.f32.mrb[0].mxu0
        %v1339 = vadd.f32 %v1171, %v1338
        %v1340 = vpop.f32.mrb[0].mxu0
        %1341 = vmatprep.mubr.bf16.mxu0 0
        %1342 = vmatmul.mubr.bf16.gmra.mrb[0].mxu0 %v1145
        %v1343 = vpop.f32.mrb[0].mxu0
        %v1344 = vadd.f32 %v1171, %v1343
        %v1345 = vpop.f32.mrb[0].mxu0
        %v1346 = vpop.f32.mrb[0].mxu0
        %v1347 = vadd.f32 %v1171, %v1346
        %v1348 = vpop.f32.mrb[0].mxu0
        %1349 = vmatprep.mubr.bf16.mxu0 0
        %1350 = vmatmul.mubr.bf16.gmra.mrb[0].mxu0 %v1146
        %v1351 = vpop.f32.mrb[0].mxu0
        %v1352 = vadd.f32 %v1171, %v1351
        %v1353 = vpop.f32.mrb[0].mxu0
        %v1354 = vpop.f32.mrb[0].mxu0
        %v1355 = vadd.f32 %v1171, %v1354
        %v1356 = vpop.f32.mrb[0].mxu0
        %1357 = vmatprep.mubr.bf16.mxu0 0
        %1358 = vmatmul.mubr.bf16.gmra.mrb[0].mxu0 %v1147
        %v1359 = vpop.f32.mrb[0].mxu0
        %v1360 = vadd.f32 %v1171, %v1359
        %v1361 = vpop.f32.mrb[0].mxu0
        %v1362 = vpop.f32.mrb[0].mxu0
        %v1363 = vadd.f32 %v1171, %v1362
        %v1364 = vpop.f32.mrb[0].mxu0
        %1365 = vmatprep.mubr.bf16.mxu0 0
        %1366 = vmatmul.mubr.bf16.gmra.mrb[0].mxu0 %v1148
        %v1367 = vpop.f32.mrb[0].mxu0
        %v1368 = vadd.f32 %v1171, %v1367
        %v1369 = vpop.f32.mrb[0].mxu0
        %v1370 = vpop.f32.mrb[0].mxu0
        %v1371 = vadd.f32 %v1171, %v1370
        %v1372 = vpop.f32.mrb[0].mxu0
        %1373 = vmatprep.mubr.bf16.mxu0 0
        %1374 = vmatmul.mubr.bf16.gmra.mrb[0].mxu0 %v1149
        %v1375 = vpop.f32.mrb[0].mxu0
        %v1376 = vadd.f32 %v1171, %v1375
        %v1377 = vpop.f32.mrb[0].mxu0
        %v1378 = vpop.f32.mrb[0].mxu0
        %v1379 = vadd.f32 %v1171, %v1378
        %v1380 = vpop.f32.mrb[0].mxu0
        %1381 = vdwg.mxu0
        %v1382 = vmax.f32 %v1256, 0.0
        %v1383 = vmax.f32 %v1259, 0.0
        %v1384 = vmax.f32 %v1264, 0.0
        %v1385 = vmax.f32 %v1267, 0.0
        %v1386 = vmax.f32 %v1272, 0.0
        %v1387 = vmax.f32 %v1275, 0.0
        %v1388 = vmax.f32 %v1280, 0.0
        %v1389 = vmax.f32 %v1283, 0.0
        %v1390 = vmax.f32 %v1288, 0.0
        %v1391 = vmax.f32 %v1291, 0.0
        %v1392 = vmax.f32 %v1296, 0.0
        %v1393 = vmax.f32 %v1299, 0.0
        %v1394 = vmax.f32 %v1304, 0.0
        %v1395 = vmax.f32 %v1307, 0.0
        %v1396 = vmax.f32 %v1312, 0.0
        %v1397 = vmax.f32 %v1315, 0.0
        %v1398 = vmax.f32 %v1320, 0.0
        %v1399 = vmax.f32 %v1323, 0.0
        %v1400 = vmax.f32 %v1328, 0.0
        %v1401 = vmax.f32 %v1331, 0.0
        %v1402 = vmax.f32 %v1336, 0.0
        %v1403 = vmax.f32 %v1339, 0.0
        %v1404 = vmax.f32 %v1344, 0.0
        %v1405 = vmax.f32 %v1347, 0.0
        %v1406 = vmax.f32 %v1352, 0.0
        %v1407 = vmax.f32 %v1355, 0.0
        %v1408 = vmax.f32 %v1360, 0.0
        %v1409 = vmax.f32 %v1363, 0.0
        %v1410 = vmax.f32 %v1368, 0.0
        %v1411 = vmax.f32 %v1371, 0.0
        %v1412 = vmax.f32 %v1376, 0.0
        %v1413 = vmax.f32 %v1379, 0.0
        %v1414 = vpack.c.bf16 %v1383, %v1382
        %v1415 = vpack.c.bf16 %v1385, %v1384
        %v1416 = vpack.c.bf16 %v1387, %v1386
        %v1417 = vpack.c.bf16 %v1389, %v1388
        %v1418 = vpack.c.bf16 %v1391, %v1390
        %v1419 = vpack.c.bf16 %v1393, %v1392
        %v1420 = vpack.c.bf16 %v1395, %v1394
        %v1421 = vpack.c.bf16 %v1397, %v1396
        %v1422 = vpack.c.bf16 %v1399, %v1398
        %v1423 = vpack.c.bf16 %v1401, %v1400
        %v1424 = vpack.c.bf16 %v1403, %v1402
        %v1425 = vpack.c.bf16 %v1405, %v1404
        %v1426 = vpack.c.bf16 %v1407, %v1406
        %v1427 = vpack.c.bf16 %v1409, %v1408
        %v1428 = vpack.c.bf16 %v1411, %v1410
        %v1429 = vpack.c.bf16 %v1413, %v1412
        %v1430 = vld [vmem:[%s6] sm:$0xff]
        %v1431 = vld [vmem:[%s6 + $0x8] sm:$0xff]
        %v1432 = vld [vmem:[%s6 + $0x10] sm:$0xff]
        %v1433 = vld [vmem:[%s6 + $0x18] sm:$0xff]
        %v1434 = vld [vmem:[%s6 + $0x20] sm:$0xff]
        %v1435 = vld [vmem:[%s6 + $0x28] sm:$0xff]
        %v1436 = vld [vmem:[%s6 + $0x30] sm:$0xff]
        %v1437 = vld [vmem:[%s6 + $0x38] sm:$0xff]
        %v1438 = vld [vmem:[%s6 + $0x40] sm:$0xff]
        %v1439 = vld [vmem:[%s6 + $0x48] sm:$0xff]
        %v1440 = vld [vmem:[%s6 + $0x50] sm:$0xff]
        %v1441 = vld [vmem:[%s6 + $0x58] sm:$0xff]
        %v1442 = vld [vmem:[%s6 + $0x60] sm:$0xff]
        %v1443 = vld [vmem:[%s6 + $0x68] sm:$0xff]
        %v1444 = vld [vmem:[%s6 + $0x70] sm:$0xff]
        %v1445 = vld [vmem:[%s6 + $0x78] sm:$0xff]
        %v1446 = vld [vmem:[%s7] sm:$0x3]
        %v1448 = vlaneseq
        %v1449 = vshrl.u32 %v1448, 7
        %v1450 = vsub.s32 0, %v1449
        %v1451 = vrot.slane %v1446, %v1450
        %v1452 = vlaneseq
        %v1453 = vshrl.u32 %v1452, 7
        %v1454 = vsub.s32 1, %v1453
        %v1455 = vrot.slane %v1446, %v1454
        %v1474 = vunpack.c.l.b16 %v1430
        %v1475 = vunpack.c.h.b16 %v1430
        %v1476 = vunpack.c.l.b16 %v1431
        %v1477 = vunpack.c.h.b16 %v1431
        %v1478 = vunpack.c.l.b16 %v1432
        %v1479 = vunpack.c.h.b16 %v1432
        %v1480 = vunpack.c.l.b16 %v1433
        %v1481 = vunpack.c.h.b16 %v1433
        %v1482 = vunpack.c.l.b16 %v1434
        %v1483 = vunpack.c.h.b16 %v1434
        %v1484 = vunpack.c.l.b16 %v1435
        %v1485 = vunpack.c.h.b16 %v1435
        %v1486 = vunpack.c.l.b16 %v1436
        %v1487 = vunpack.c.h.b16 %v1436
        %v1488 = vunpack.c.l.b16 %v1437
        %v1489 = vunpack.c.h.b16 %v1437
        %v1490 = vunpack.c.l.b16 %v1438
        %v1491 = vunpack.c.h.b16 %v1438
        %v1492 = vunpack.c.l.b16 %v1439
        %v1493 = vunpack.c.h.b16 %v1439
        %v1494 = vunpack.c.l.b16 %v1440
        %v1495 = vunpack.c.h.b16 %v1440
        %v1496 = vunpack.c.l.b16 %v1441
        %v1497 = vunpack.c.h.b16 %v1441
        %v1498 = vunpack.c.l.b16 %v1442
        %v1499 = vunpack.c.h.b16 %v1442
        %v1500 = vunpack.c.l.b16 %v1443
        %v1501 = vunpack.c.h.b16 %v1443
        %v1502 = vunpack.c.l.b16 %v1444
        %v1503 = vunpack.c.h.b16 %v1444
        %v1504 = vunpack.c.l.b16 %v1445
        %v1505 = vunpack.c.h.b16 %v1445
        %v1506 = vpack.c.b16 %v1476, %v1474
        %v1507 = vpack.c.b16 %v1477, %v1475
        %v1508 = vpack.c.b16 %v1480, %v1478
        %v1509 = vpack.c.b16 %v1481, %v1479
        %v1510 = vpack.c.b16 %v1484, %v1482
        %v1511 = vpack.c.b16 %v1485, %v1483
        %v1512 = vpack.c.b16 %v1488, %v1486
        %v1513 = vpack.c.b16 %v1489, %v1487
        %v1514 = vpack.c.b16 %v1492, %v1490
        %v1515 = vpack.c.b16 %v1493, %v1491
        %v1516 = vpack.c.b16 %v1496, %v1494
        %v1517 = vpack.c.b16 %v1497, %v1495
        %v1518 = vpack.c.b16 %v1500, %v1498
        %v1519 = vpack.c.b16 %v1501, %v1499
        %v1520 = vpack.c.b16 %v1504, %v1502
        %v1521 = vpack.c.b16 %v1505, %v1503
        %1538 = vmatprep.subr.bf16.mxu0 %v1507
        %1539 = vmatpush1.bf16.msra.mxu0 %v1506
        %1540 = vmatprep.subr.bf16.mxu0 %v1509
        %1541 = vmatpush1.bf16.msra.mxu0 %v1508
        %1542 = vmatprep.subr.bf16.mxu0 %v1511
        %1543 = vmatpush1.bf16.msra.mxu0 %v1510
        %1544 = vmatprep.subr.bf16.mxu0 %v1513
        %1545 = vmatpush1.bf16.msra.mxu0 %v1512
        %1546 = vmatprep.subr.bf16.mxu0 %v1515
        %1547 = vmatpush1.bf16.msra.mxu0 %v1514
        %1548 = vmatprep.subr.bf16.mxu0 %v1517
        %1549 = vmatpush1.bf16.msra.mxu0 %v1516
        %1550 = vmatprep.subr.bf16.mxu0 %v1519
        %1551 = vmatpush1.bf16.msra.mxu0 %v1518
        %1552 = vmatprep.subr.bf16.mxu0 %v1521
        %1553 = vmatpush1.bf16.msra.mxu0 %v1520
        %1554 = vmatprep.subr.bf16.mxu0 0
        %1555 = vmatpush1.bf16.msra.mxu0 0
        %1556 = vmatprep.subr.bf16.mxu0 0
        %1557 = vmatpush1.bf16.msra.mxu0 0
        %1558 = vmatprep.subr.bf16.mxu0 0
        %1559 = vmatpush1.bf16.msra.mxu0 0
        %1560 = vmatprep.subr.bf16.mxu0 0
        %1561 = vmatpush1.bf16.msra.mxu0 0
        %1562 = vmatprep.subr.bf16.mxu0 0
        %1563 = vmatpush1.bf16.msra.mxu0 0
        %1564 = vmatprep.subr.bf16.mxu0 0
        %1565 = vmatpush1.bf16.msra.mxu0 0
        %1566 = vmatprep.subr.bf16.mxu0 0
        %1567 = vmatpush1.bf16.msra.mxu0 0
        %1568 = vmatprep.subr.bf16.mxu0 0
        %1569 = vmatpush1.bf16.msra.mxu0 0
        %1570 = vmatprep.mubr.bf16.mxu0 0
        %1571 = vmatmul.mubr.bf16.gmra.mrb[0].mxu0 %v1414
        %v1572 = vpop.f32.mrb[0].mxu0
        %v1573 = vadd.f32 %v1451, %v1572
        %v1574 = vpop.f32.mrb[0].mxu0
        %v1575 = vadd.f32 %v1455, %v1574
        %v1576 = vpop.f32.mrb[0].mxu0
        %v1577 = vadd.f32 %v1451, %v1576
        %v1578 = vpop.f32.mrb[0].mxu0
        %v1579 = vadd.f32 %v1455, %v1578
        %1580 = vmatprep.mubr.bf16.mxu0 0
        %1581 = vmatmul.mubr.bf16.gmra.mrb[0].mxu0 %v1415
        %v1582 = vpop.f32.mrb[0].mxu0
        %v1583 = vadd.f32 %v1451, %v1582
        %v1584 = vpop.f32.mrb[0].mxu0
        %v1585 = vadd.f32 %v1455, %v1584
        %v1586 = vpop.f32.mrb[0].mxu0
        %v1587 = vadd.f32 %v1451, %v1586
        %v1588 = vpop.f32.mrb[0].mxu0
        %v1589 = vadd.f32 %v1455, %v1588
        %1590 = vmatprep.mubr.bf16.mxu0 0
        %1591 = vmatmul.mubr.bf16.gmra.mrb[0].mxu0 %v1416
        %v1592 = vpop.f32.mrb[0].mxu0
        %v1593 = vadd.f32 %v1451, %v1592
        %v1594 = vpop.f32.mrb[0].mxu0
        %v1595 = vadd.f32 %v1455, %v1594
        %v1596 = vpop.f32.mrb[0].mxu0
        %v1597 = vadd.f32 %v1451, %v1596
        %v1598 = vpop.f32.mrb[0].mxu0
        %v1599 = vadd.f32 %v1455, %v1598
        %1600 = vmatprep.mubr.bf16.mxu0 0
        %1601 = vmatmul.mubr.bf16.gmra.mrb[0].mxu0 %v1417
        %v1602 = vpop.f32.mrb[0].mxu0
        %v1603 = vadd.f32 %v1451, %v1602
        %v1604 = vpop.f32.mrb[0].mxu0
        %v1605 = vadd.f32 %v1455, %v1604
        %v1606 = vpop.f32.mrb[0].mxu0
        %v1607 = vadd.f32 %v1451, %v1606
        %v1608 = vpop.f32.mrb[0].mxu0
        %v1609 = vadd.f32 %v1455, %v1608
        %1610 = vmatprep.mubr.bf16.mxu0 0
        %1611 = vmatmul.mubr.bf16.gmra.mrb[0].mxu0 %v1418
        %v1612 = vpop.f32.mrb[0].mxu0
        %v1613 = vadd.f32 %v1451, %v1612
        %v1614 = vpop.f32.mrb[0].mxu0
        %v1615 = vadd.f32 %v1455, %v1614
        %v1616 = vpop.f32.mrb[0].mxu0
        %v1617 = vadd.f32 %v1451, %v1616
        %v1618 = vpop.f32.mrb[0].mxu0
        %v1619 = vadd.f32 %v1455, %v1618
        %1620 = vmatprep.mubr.bf16.mxu0 0
        %1621 = vmatmul.mubr.bf16.gmra.mrb[0].mxu0 %v1419
        %v1622 = vpop.f32.mrb[0].mxu0
        %v1623 = vadd.f32 %v1451, %v1622
        %v1624 = vpop.f32.mrb[0].mxu0
        %v1625 = vadd.f32 %v1455, %v1624
        %v1626 = vpop.f32.mrb[0].mxu0
        %v1627 = vadd.f32 %v1451, %v1626
        %v1628 = vpop.f32.mrb[0].mxu0
        %v1629 = vadd.f32 %v1455, %v1628
        %1630 = vmatprep.mubr.bf16.mxu0 0
        %1631 = vmatmul.mubr.bf16.gmra.mrb[0].mxu0 %v1420
        %v1632 = vpop.f32.mrb[0].mxu0
        %v1633 = vadd.f32 %v1451, %v1632
        %v1634 = vpop.f32.mrb[0].mxu0
        %v1635 = vadd.f32 %v1455, %v1634
        %v1636 = vpop.f32.mrb[0].mxu0
        %v1637 = vadd.f32 %v1451, %v1636
        %v1638 = vpop.f32.mrb[0].mxu0
        %v1639 = vadd.f32 %v1455, %v1638
        %1640 = vmatprep.mubr.bf16.mxu0 0
        %1641 = vmatmul.mubr.bf16.gmra.mrb[0].mxu0 %v1421
        %v1642 = vpop.f32.mrb[0].mxu0
        %v1643 = vadd.f32 %v1451, %v1642
        %v1644 = vpop.f32.mrb[0].mxu0
        %v1645 = vadd.f32 %v1455, %v1644
        %v1646 = vpop.f32.mrb[0].mxu0
        %v1647 = vadd.f32 %v1451, %v1646
        %v1648 = vpop.f32.mrb[0].mxu0
        %v1649 = vadd.f32 %v1455, %v1648
        %1650 = vmatprep.mubr.bf16.mxu0 0
        %1651 = vmatmul.mubr.bf16.gmra.mrb[0].mxu0 %v1422
        %v1652 = vpop.f32.mrb[0].mxu0
        %v1653 = vadd.f32 %v1451, %v1652
        %v1654 = vpop.f32.mrb[0].mxu0
        %v1655 = vadd.f32 %v1455, %v1654
        %v1656 = vpop.f32.mrb[0].mxu0
        %v1657 = vadd.f32 %v1451, %v1656
        %v1658 = vpop.f32.mrb[0].mxu0
        %v1659 = vadd.f32 %v1455, %v1658
        %1660 = vmatprep.mubr.bf16.mxu0 0
        %1661 = vmatmul.mubr.bf16.gmra.mrb[0].mxu0 %v1423
        %v1662 = vpop.f32.mrb[0].mxu0
        %v1663 = vadd.f32 %v1451, %v1662
        %v1664 = vpop.f32.mrb[0].mxu0
        %v1665 = vadd.f32 %v1455, %v1664
        %v1666 = vpop.f32.mrb[0].mxu0
        %v1667 = vadd.f32 %v1451, %v1666
        %v1668 = vpop.f32.mrb[0].mxu0
        %v1669 = vadd.f32 %v1455, %v1668
        %1670 = vmatprep.mubr.bf16.mxu0 0
        %1671 = vmatmul.mubr.bf16.gmra.mrb[0].mxu0 %v1424
        %v1672 = vpop.f32.mrb[0].mxu0
        %v1673 = vadd.f32 %v1451, %v1672
        %v1674 = vpop.f32.mrb[0].mxu0
        %v1675 = vadd.f32 %v1455, %v1674
        %v1676 = vpop.f32.mrb[0].mxu0
        %v1677 = vadd.f32 %v1451, %v1676
        %v1678 = vpop.f32.mrb[0].mxu0
        %v1679 = vadd.f32 %v1455, %v1678
        %1680 = vmatprep.mubr.bf16.mxu0 0
        %1681 = vmatmul.mubr.bf16.gmra.mrb[0].mxu0 %v1425
        %v1682 = vpop.f32.mrb[0].mxu0
        %v1683 = vadd.f32 %v1451, %v1682
        %v1684 = vpop.f32.mrb[0].mxu0
        %v1685 = vadd.f32 %v1455, %v1684
        %v1686 = vpop.f32.mrb[0].mxu0
        %v1687 = vadd.f32 %v1451, %v1686
        %v1688 = vpop.f32.mrb[0].mxu0
        %v1689 = vadd.f32 %v1455, %v1688
        %1690 = vmatprep.mubr.bf16.mxu0 0
        %1691 = vmatmul.mubr.bf16.gmra.mrb[0].mxu0 %v1426
        %v1692 = vpop.f32.mrb[0].mxu0
        %v1693 = vadd.f32 %v1451, %v1692
        %v1694 = vpop.f32.mrb[0].mxu0
        %v1695 = vadd.f32 %v1455, %v1694
        %v1696 = vpop.f32.mrb[0].mxu0
        %v1697 = vadd.f32 %v1451, %v1696
        %v1698 = vpop.f32.mrb[0].mxu0
        %v1699 = vadd.f32 %v1455, %v1698
        %1700 = vmatprep.mubr.bf16.mxu0 0
        %1701 = vmatmul.mubr.bf16.gmra.mrb[0].mxu0 %v1427
        %v1702 = vpop.f32.mrb[0].mxu0
        %v1703 = vadd.f32 %v1451, %v1702
        %v1704 = vpop.f32.mrb[0].mxu0
        %v1705 = vadd.f32 %v1455, %v1704
        %v1706 = vpop.f32.mrb[0].mxu0
        %v1707 = vadd.f32 %v1451, %v1706
        %v1708 = vpop.f32.mrb[0].mxu0
        %v1709 = vadd.f32 %v1455, %v1708
        %1710 = vmatprep.mubr.bf16.mxu0 0
        %1711 = vmatmul.mubr.bf16.gmra.mrb[0].mxu0 %v1428
        %v1712 = vpop.f32.mrb[0].mxu0
        %v1713 = vadd.f32 %v1451, %v1712
        %v1714 = vpop.f32.mrb[0].mxu0
        %v1715 = vadd.f32 %v1455, %v1714
        %v1716 = vpop.f32.mrb[0].mxu0
        %v1717 = vadd.f32 %v1451, %v1716
        %v1718 = vpop.f32.mrb[0].mxu0
        %v1719 = vadd.f32 %v1455, %v1718
        %1720 = vmatprep.mubr.bf16.mxu0 0
        %1721 = vmatmul.mubr.bf16.gmra.mrb[0].mxu0 %v1429
        %v1722 = vpop.f32.mrb[0].mxu0
        %v1723 = vadd.f32 %v1451, %v1722
        %v1724 = vpop.f32.mrb[0].mxu0
        %v1725 = vadd.f32 %v1455, %v1724
        %v1726 = vpop.f32.mrb[0].mxu0
        %v1727 = vadd.f32 %v1451, %v1726
        %v1728 = vpop.f32.mrb[0].mxu0
        %v1729 = vadd.f32 %v1455, %v1728
        %1730 = vdwg.mxu0
        %vm1731 = vcmp.gt.f32.partialorder %v1575, 20.0
        %vm1732 = vcmp.gt.f32.partialorder %v1579, 20.0
        %vm1733 = vcmp.gt.f32.partialorder %v1585, 20.0
        %vm1734 = vcmp.gt.f32.partialorder %v1589, 20.0
        %vm1735 = vcmp.gt.f32.partialorder %v1595, 20.0
        %vm1736 = vcmp.gt.f32.partialorder %v1599, 20.0
        %vm1737 = vcmp.gt.f32.partialorder %v1605, 20.0
        %vm1738 = vcmp.gt.f32.partialorder %v1609, 20.0
        %vm1739 = vcmp.gt.f32.partialorder %v1615, 20.0
        %vm1740 = vcmp.gt.f32.partialorder %v1619, 20.0
        %vm1741 = vcmp.gt.f32.partialorder %v1625, 20.0
        %vm1742 = vcmp.gt.f32.partialorder %v1629, 20.0
        %vm1743 = vcmp.gt.f32.partialorder %v1635, 20.0
        %vm1744 = vcmp.gt.f32.partialorder %v1639, 20.0
        %vm1745 = vcmp.gt.f32.partialorder %v1645, 20.0
        %vm1746 = vcmp.gt.f32.partialorder %v1649, 20.0
        %vm1747 = vcmp.gt.f32.partialorder %v1655, 20.0
        %vm1748 = vcmp.gt.f32.partialorder %v1659, 20.0
        %vm1749 = vcmp.gt.f32.partialorder %v1665, 20.0
        %vm1750 = vcmp.gt.f32.partialorder %v1669, 20.0
        %vm1751 = vcmp.gt.f32.partialorder %v1675, 20.0
        %vm1752 = vcmp.gt.f32.partialorder %v1679, 20.0
        %vm1753 = vcmp.gt.f32.partialorder %v1685, 20.0
        %vm1754 = vcmp.gt.f32.partialorder %v1689, 20.0
        %vm1755 = vcmp.gt.f32.partialorder %v1695, 20.0
        %vm1756 = vcmp.gt.f32.partialorder %v1699, 20.0
        %vm1757 = vcmp.gt.f32.partialorder %v1705, 20.0
        %vm1758 = vcmp.gt.f32.partialorder %v1709, 20.0
        %vm1759 = vcmp.gt.f32.partialorder %v1715, 20.0
        %vm1760 = vcmp.gt.f32.partialorder %v1719, 20.0
        %vm1761 = vcmp.gt.f32.partialorder %v1725, 20.0
        %vm1762 = vcmp.gt.f32.partialorder %v1729, 20.0
        %v1763 = vmin.f32 %v1575, 20.0
        %v1764 = vmin.f32 %v1579, 20.0
        %v1765 = vmin.f32 %v1585, 20.0
        %v1766 = vmin.f32 %v1589, 20.0
        %v1767 = vmin.f32 %v1595, 20.0
        %v1768 = vmin.f32 %v1599, 20.0
        %v1769 = vmin.f32 %v1605, 20.0
        %v1770 = vmin.f32 %v1609, 20.0
        %v1771 = vmin.f32 %v1615, 20.0
        %v1772 = vmin.f32 %v1619, 20.0
        %v1773 = vmin.f32 %v1625, 20.0
        %v1774 = vmin.f32 %v1629, 20.0
        %v1775 = vmin.f32 %v1635, 20.0
        %v1776 = vmin.f32 %v1639, 20.0
        %v1777 = vmin.f32 %v1645, 20.0
        %v1778 = vmin.f32 %v1649, 20.0
        %v1779 = vmin.f32 %v1655, 20.0
        %v1780 = vmin.f32 %v1659, 20.0
        %v1781 = vmin.f32 %v1665, 20.0
        %v1782 = vmin.f32 %v1669, 20.0
        %v1783 = vmin.f32 %v1675, 20.0
        %v1784 = vmin.f32 %v1679, 20.0
        %v1785 = vmin.f32 %v1685, 20.0
        %v1786 = vmin.f32 %v1689, 20.0
        %v1787 = vmin.f32 %v1695, 20.0
        %v1788 = vmin.f32 %v1699, 20.0
        %v1789 = vmin.f32 %v1705, 20.0
        %v1790 = vmin.f32 %v1709, 20.0
        %v1791 = vmin.f32 %v1715, 20.0
        %v1792 = vmin.f32 %v1719, 20.0
        %v1793 = vmin.f32 %v1725, 20.0
        %v1794 = vmin.f32 %v1729, 20.0
        %v1795 = vmul.f32 %v1763, 1.442695
        %v1796 = vpow.pop %v1795
        %v1797 = vmul.f32 %v1764, 1.442695
        %v1798 = vpow.pop %v1797
        %v1799 = vmul.f32 %v1765, 1.442695
        %v1800 = vpow.pop %v1799
        %v1801 = vmul.f32 %v1766, 1.442695
        %v1802 = vpow.pop %v1801
        %v1803 = vmul.f32 %v1767, 1.442695
        %v1804 = vpow.pop %v1803
        %v1805 = vmul.f32 %v1768, 1.442695
        %v1806 = vpow.pop %v1805
        %v1807 = vmul.f32 %v1769, 1.442695
        %v1808 = vpow.pop %v1807
        %v1809 = vmul.f32 %v1770, 1.442695
        %v1810 = vpow.pop %v1809
        %v1811 = vmul.f32 %v1771, 1.442695
        %v1812 = vpow.pop %v1811
        %v1813 = vmul.f32 %v1772, 1.442695
        %v1814 = vpow.pop %v1813
        %v1815 = vmul.f32 %v1773, 1.442695
        %v1816 = vpow.pop %v1815
        %v1817 = vmul.f32 %v1774, 1.442695
        %v1818 = vpow.pop %v1817
        %v1819 = vmul.f32 %v1775, 1.442695
        %v1820 = vpow.pop %v1819
        %v1821 = vmul.f32 %v1776, 1.442695
        %v1822 = vpow.pop %v1821
        %v1823 = vmul.f32 %v1777, 1.442695
        %v1824 = vpow.pop %v1823
        %v1825 = vmul.f32 %v1778, 1.442695
        %v1826 = vpow.pop %v1825
        %v1827 = vmul.f32 %v1779, 1.442695
        %v1828 = vpow.pop %v1827
        %v1829 = vmul.f32 %v1780, 1.442695
        %v1830 = vpow.pop %v1829
        %v1831 = vmul.f32 %v1781, 1.442695
        %v1832 = vpow.pop %v1831
        %v1833 = vmul.f32 %v1782, 1.442695
        %v1834 = vpow.pop %v1833
        %v1835 = vmul.f32 %v1783, 1.442695
        %v1836 = vpow.pop %v1835
        %v1837 = vmul.f32 %v1784, 1.442695
        %v1838 = vpow.pop %v1837
        %v1839 = vmul.f32 %v1785, 1.442695
        %v1840 = vpow.pop %v1839
        %v1841 = vmul.f32 %v1786, 1.442695
        %v1842 = vpow.pop %v1841
        %v1843 = vmul.f32 %v1787, 1.442695
        %v1844 = vpow.pop %v1843
        %v1845 = vmul.f32 %v1788, 1.442695
        %v1846 = vpow.pop %v1845
        %v1847 = vmul.f32 %v1789, 1.442695
        %v1848 = vpow.pop %v1847
        %v1849 = vmul.f32 %v1790, 1.442695
        %v1850 = vpow.pop %v1849
        %v1851 = vmul.f32 %v1791, 1.442695
        %v1852 = vpow.pop %v1851
        %v1853 = vmul.f32 %v1792, 1.442695
        %v1854 = vpow.pop %v1853
        %v1855 = vmul.f32 %v1793, 1.442695
        %v1856 = vpow.pop %v1855
        %v1857 = vmul.f32 %v1794, 1.442695
        %v1858 = vpow.pop %v1857
        %v1859 = vadd.f32 %v1796, 1.0
        %v1860 = vlog2.pop %v1859
        %v1861 = vmul.f32 %v1860, 0.6931472
        %v1862 = vmul.f32 -0.5, %v1796
        %v1863 = vadd.f32 %v1862, 1.0
        %v1864 = vmul.f32 %v1863, %v1796
        %v1865 = vand.u32 2147483647, %v1796
        %vm1866 = vcmp.lt.f32.partialorder %v1865, 0.0004427343
        %v1867 = vsel %vm1866, %v1864, %v1861
        %v1868 = vadd.f32 %v1798, 1.0
        %v1869 = vlog2.pop %v1868
        %v1870 = vmul.f32 %v1869, 0.6931472
        %v1871 = vmul.f32 -0.5, %v1798
        %v1872 = vadd.f32 %v1871, 1.0
        %v1873 = vmul.f32 %v1872, %v1798
        %v1874 = vand.u32 2147483647, %v1798
        %vm1875 = vcmp.lt.f32.partialorder %v1874, 0.0004427343
        %v1876 = vsel %vm1875, %v1873, %v1870
        %v1877 = vadd.f32 %v1800, 1.0
        %v1878 = vlog2.pop %v1877
        %v1879 = vmul.f32 %v1878, 0.6931472
        %v1880 = vmul.f32 -0.5, %v1800
        %v1881 = vadd.f32 %v1880, 1.0
        %v1882 = vmul.f32 %v1881, %v1800
        %v1883 = vand.u32 2147483647, %v1800
        %vm1884 = vcmp.lt.f32.partialorder %v1883, 0.0004427343
        %v1885 = vsel %vm1884, %v1882, %v1879
        %v1886 = vadd.f32 %v1802, 1.0
        %v1887 = vlog2.pop %v1886
        %v1888 = vmul.f32 %v1887, 0.6931472
        %v1889 = vmul.f32 -0.5, %v1802
        %v1890 = vadd.f32 %v1889, 1.0
        %v1891 = vmul.f32 %v1890, %v1802
        %v1892 = vand.u32 2147483647, %v1802
        %vm1893 = vcmp.lt.f32.partialorder %v1892, 0.0004427343
        %v1894 = vsel %vm1893, %v1891, %v1888
        %v1895 = vadd.f32 %v1804, 1.0
        %v1896 = vlog2.pop %v1895
        %v1897 = vmul.f32 %v1896, 0.6931472
        %v1898 = vmul.f32 -0.5, %v1804
        %v1899 = vadd.f32 %v1898, 1.0
        %v1900 = vmul.f32 %v1899, %v1804
        %v1901 = vand.u32 2147483647, %v1804
        %vm1902 = vcmp.lt.f32.partialorder %v1901, 0.0004427343
        %v1903 = vsel %vm1902, %v1900, %v1897
        %v1904 = vadd.f32 %v1806, 1.0
        %v1905 = vlog2.pop %v1904
        %v1906 = vmul.f32 %v1905, 0.6931472
        %v1907 = vmul.f32 -0.5, %v1806
        %v1908 = vadd.f32 %v1907, 1.0
        %v1909 = vmul.f32 %v1908, %v1806
        %v1910 = vand.u32 2147483647, %v1806
        %vm1911 = vcmp.lt.f32.partialorder %v1910, 0.0004427343
        %v1912 = vsel %vm1911, %v1909, %v1906
        %v1913 = vadd.f32 %v1808, 1.0
        %v1914 = vlog2.pop %v1913
        %v1915 = vmul.f32 %v1914, 0.6931472
        %v1916 = vmul.f32 -0.5, %v1808
        %v1917 = vadd.f32 %v1916, 1.0
        %v1918 = vmul.f32 %v1917, %v1808
        %v1919 = vand.u32 2147483647, %v1808
        %vm1920 = vcmp.lt.f32.partialorder %v1919, 0.0004427343
        %v1921 = vsel %vm1920, %v1918, %v1915
        %v1922 = vadd.f32 %v1810, 1.0
        %v1923 = vlog2.pop %v1922
        %v1924 = vmul.f32 %v1923, 0.6931472
        %v1925 = vmul.f32 -0.5, %v1810
        %v1926 = vadd.f32 %v1925, 1.0
        %v1927 = vmul.f32 %v1926, %v1810
        %v1928 = vand.u32 2147483647, %v1810
        %vm1929 = vcmp.lt.f32.partialorder %v1928, 0.0004427343
        %v1930 = vsel %vm1929, %v1927, %v1924
        %v1931 = vadd.f32 %v1812, 1.0
        %v1932 = vlog2.pop %v1931
        %v1933 = vmul.f32 %v1932, 0.6931472
        %v1934 = vmul.f32 -0.5, %v1812
        %v1935 = vadd.f32 %v1934, 1.0
        %v1936 = vmul.f32 %v1935, %v1812
        %v1937 = vand.u32 2147483647, %v1812
        %vm1938 = vcmp.lt.f32.partialorder %v1937, 0.0004427343
        %v1939 = vsel %vm1938, %v1936, %v1933
        %v1940 = vadd.f32 %v1814, 1.0
        %v1941 = vlog2.pop %v1940
        %v1942 = vmul.f32 %v1941, 0.6931472
        %v1943 = vmul.f32 -0.5, %v1814
        %v1944 = vadd.f32 %v1943, 1.0
        %v1945 = vmul.f32 %v1944, %v1814
        %v1946 = vand.u32 2147483647, %v1814
        %vm1947 = vcmp.lt.f32.partialorder %v1946, 0.0004427343
        %v1948 = vsel %vm1947, %v1945, %v1942
        %v1949 = vadd.f32 %v1816, 1.0
        %v1950 = vlog2.pop %v1949
        %v1951 = vmul.f32 %v1950, 0.6931472
        %v1952 = vmul.f32 -0.5, %v1816
        %v1953 = vadd.f32 %v1952, 1.0
        %v1954 = vmul.f32 %v1953, %v1816
        %v1955 = vand.u32 2147483647, %v1816
        %vm1956 = vcmp.lt.f32.partialorder %v1955, 0.0004427343
        %v1957 = vsel %vm1956, %v1954, %v1951
        %v1958 = vadd.f32 %v1818, 1.0
        %v1959 = vlog2.pop %v1958
        %v1960 = vmul.f32 %v1959, 0.6931472
        %v1961 = vmul.f32 -0.5, %v1818
        %v1962 = vadd.f32 %v1961, 1.0
        %v1963 = vmul.f32 %v1962, %v1818
        %v1964 = vand.u32 2147483647, %v1818
        %vm1965 = vcmp.lt.f32.partialorder %v1964, 0.0004427343
        %v1966 = vsel %vm1965, %v1963, %v1960
        %v1967 = vadd.f32 %v1820, 1.0
        %v1968 = vlog2.pop %v1967
        %v1969 = vmul.f32 %v1968, 0.6931472
        %v1970 = vmul.f32 -0.5, %v1820
        %v1971 = vadd.f32 %v1970, 1.0
        %v1972 = vmul.f32 %v1971, %v1820
        %v1973 = vand.u32 2147483647, %v1820
        %vm1974 = vcmp.lt.f32.partialorder %v1973, 0.0004427343
        %v1975 = vsel %vm1974, %v1972, %v1969
        %v1976 = vadd.f32 %v1822, 1.0
        %v1977 = vlog2.pop %v1976
        %v1978 = vmul.f32 %v1977, 0.6931472
        %v1979 = vmul.f32 -0.5, %v1822
        %v1980 = vadd.f32 %v1979, 1.0
        %v1981 = vmul.f32 %v1980, %v1822
        %v1982 = vand.u32 2147483647, %v1822
        %vm1983 = vcmp.lt.f32.partialorder %v1982, 0.0004427343
        %v1984 = vsel %vm1983, %v1981, %v1978
        %v1985 = vadd.f32 %v1824, 1.0
        %v1986 = vlog2.pop %v1985
        %v1987 = vmul.f32 %v1986, 0.6931472
        %v1988 = vmul.f32 -0.5, %v1824
        %v1989 = vadd.f32 %v1988, 1.0
        %v1990 = vmul.f32 %v1989, %v1824
        %v1991 = vand.u32 2147483647, %v1824
        %vm1992 = vcmp.lt.f32.partialorder %v1991, 0.0004427343
        %v1993 = vsel %vm1992, %v1990, %v1987
        %v1994 = vadd.f32 %v1826, 1.0
        %v1995 = vlog2.pop %v1994
        %v1996 = vmul.f32 %v1995, 0.6931472
        %v1997 = vmul.f32 -0.5, %v1826
        %v1998 = vadd.f32 %v1997, 1.0
        %v1999 = vmul.f32 %v1998, %v1826
        %v2000 = vand.u32 2147483647, %v1826
        %vm2001 = vcmp.lt.f32.partialorder %v2000, 0.0004427343
        %v2002 = vsel %vm2001, %v1999, %v1996
        %v2003 = vadd.f32 %v1828, 1.0
        %v2004 = vlog2.pop %v2003
        %v2005 = vmul.f32 %v2004, 0.6931472
        %v2006 = vmul.f32 -0.5, %v1828
        %v2007 = vadd.f32 %v2006, 1.0
        %v2008 = vmul.f32 %v2007, %v1828
        %v2009 = vand.u32 2147483647, %v1828
        %vm2010 = vcmp.lt.f32.partialorder %v2009, 0.0004427343
        %v2011 = vsel %vm2010, %v2008, %v2005
        %v2012 = vadd.f32 %v1830, 1.0
        %v2013 = vlog2.pop %v2012
        %v2014 = vmul.f32 %v2013, 0.6931472
        %v2015 = vmul.f32 -0.5, %v1830
        %v2016 = vadd.f32 %v2015, 1.0
        %v2017 = vmul.f32 %v2016, %v1830
        %v2018 = vand.u32 2147483647, %v1830
        %vm2019 = vcmp.lt.f32.partialorder %v2018, 0.0004427343
        %v2020 = vsel %vm2019, %v2017, %v2014
        %v2021 = vadd.f32 %v1832, 1.0
        %v2022 = vlog2.pop %v2021
        %v2023 = vmul.f32 %v2022, 0.6931472
        %v2024 = vmul.f32 -0.5, %v1832
        %v2025 = vadd.f32 %v2024, 1.0
        %v2026 = vmul.f32 %v2025, %v1832
        %v2027 = vand.u32 2147483647, %v1832
        %vm2028 = vcmp.lt.f32.partialorder %v2027, 0.0004427343
        %v2029 = vsel %vm2028, %v2026, %v2023
        %v2030 = vadd.f32 %v1834, 1.0
        %v2031 = vlog2.pop %v2030
        %v2032 = vmul.f32 %v2031, 0.6931472
        %v2033 = vmul.f32 -0.5, %v1834
        %v2034 = vadd.f32 %v2033, 1.0
        %v2035 = vmul.f32 %v2034, %v1834
        %v2036 = vand.u32 2147483647, %v1834
        %vm2037 = vcmp.lt.f32.partialorder %v2036, 0.0004427343
        %v2038 = vsel %vm2037, %v2035, %v2032
        %v2039 = vadd.f32 %v1836, 1.0
        %v2040 = vlog2.pop %v2039
        %v2041 = vmul.f32 %v2040, 0.6931472
        %v2042 = vmul.f32 -0.5, %v1836
        %v2043 = vadd.f32 %v2042, 1.0
        %v2044 = vmul.f32 %v2043, %v1836
        %v2045 = vand.u32 2147483647, %v1836
        %vm2046 = vcmp.lt.f32.partialorder %v2045, 0.0004427343
        %v2047 = vsel %vm2046, %v2044, %v2041
        %v2048 = vadd.f32 %v1838, 1.0
        %v2049 = vlog2.pop %v2048
        %v2050 = vmul.f32 %v2049, 0.6931472
        %v2051 = vmul.f32 -0.5, %v1838
        %v2052 = vadd.f32 %v2051, 1.0
        %v2053 = vmul.f32 %v2052, %v1838
        %v2054 = vand.u32 2147483647, %v1838
        %vm2055 = vcmp.lt.f32.partialorder %v2054, 0.0004427343
        %v2056 = vsel %vm2055, %v2053, %v2050
        %v2057 = vadd.f32 %v1840, 1.0
        %v2058 = vlog2.pop %v2057
        %v2059 = vmul.f32 %v2058, 0.6931472
        %v2060 = vmul.f32 -0.5, %v1840
        %v2061 = vadd.f32 %v2060, 1.0
        %v2062 = vmul.f32 %v2061, %v1840
        %v2063 = vand.u32 2147483647, %v1840
        %vm2064 = vcmp.lt.f32.partialorder %v2063, 0.0004427343
        %v2065 = vsel %vm2064, %v2062, %v2059
        %v2066 = vadd.f32 %v1842, 1.0
        %v2067 = vlog2.pop %v2066
        %v2068 = vmul.f32 %v2067, 0.6931472
        %v2069 = vmul.f32 -0.5, %v1842
        %v2070 = vadd.f32 %v2069, 1.0
        %v2071 = vmul.f32 %v2070, %v1842
        %v2072 = vand.u32 2147483647, %v1842
        %vm2073 = vcmp.lt.f32.partialorder %v2072, 0.0004427343
        %v2074 = vsel %vm2073, %v2071, %v2068
        %v2075 = vadd.f32 %v1844, 1.0
        %v2076 = vlog2.pop %v2075
        %v2077 = vmul.f32 %v2076, 0.6931472
        %v2078 = vmul.f32 -0.5, %v1844
        %v2079 = vadd.f32 %v2078, 1.0
        %v2080 = vmul.f32 %v2079, %v1844
        %v2081 = vand.u32 2147483647, %v1844
        %vm2082 = vcmp.lt.f32.partialorder %v2081, 0.0004427343
        %v2083 = vsel %vm2082, %v2080, %v2077
        %v2084 = vadd.f32 %v1846, 1.0
        %v2085 = vlog2.pop %v2084
        %v2086 = vmul.f32 %v2085, 0.6931472
        %v2087 = vmul.f32 -0.5, %v1846
        %v2088 = vadd.f32 %v2087, 1.0
        %v2089 = vmul.f32 %v2088, %v1846
        %v2090 = vand.u32 2147483647, %v1846
        %vm2091 = vcmp.lt.f32.partialorder %v2090, 0.0004427343
        %v2092 = vsel %vm2091, %v2089, %v2086
        %v2093 = vadd.f32 %v1848, 1.0
        %v2094 = vlog2.pop %v2093
        %v2095 = vmul.f32 %v2094, 0.6931472
        %v2096 = vmul.f32 -0.5, %v1848
        %v2097 = vadd.f32 %v2096, 1.0
        %v2098 = vmul.f32 %v2097, %v1848
        %v2099 = vand.u32 2147483647, %v1848
        %vm2100 = vcmp.lt.f32.partialorder %v2099, 0.0004427343
        %v2101 = vsel %vm2100, %v2098, %v2095
        %v2102 = vadd.f32 %v1850, 1.0
        %v2103 = vlog2.pop %v2102
        %v2104 = vmul.f32 %v2103, 0.6931472
        %v2105 = vmul.f32 -0.5, %v1850
        %v2106 = vadd.f32 %v2105, 1.0
        %v2107 = vmul.f32 %v2106, %v1850
        %v2108 = vand.u32 2147483647, %v1850
        %vm2109 = vcmp.lt.f32.partialorder %v2108, 0.0004427343
        %v2110 = vsel %vm2109, %v2107, %v2104
        %v2111 = vadd.f32 %v1852, 1.0
        %v2112 = vlog2.pop %v2111
        %v2113 = vmul.f32 %v2112, 0.6931472
        %v2114 = vmul.f32 -0.5, %v1852
        %v2115 = vadd.f32 %v2114, 1.0
        %v2116 = vmul.f32 %v2115, %v1852
        %v2117 = vand.u32 2147483647, %v1852
        %vm2118 = vcmp.lt.f32.partialorder %v2117, 0.0004427343
        %v2119 = vsel %vm2118, %v2116, %v2113
        %v2120 = vadd.f32 %v1854, 1.0
        %v2121 = vlog2.pop %v2120
        %v2122 = vmul.f32 %v2121, 0.6931472
        %v2123 = vmul.f32 -0.5, %v1854
        %v2124 = vadd.f32 %v2123, 1.0
        %v2125 = vmul.f32 %v2124, %v1854
        %v2126 = vand.u32 2147483647, %v1854
        %vm2127 = vcmp.lt.f32.partialorder %v2126, 0.0004427343
        %v2128 = vsel %vm2127, %v2125, %v2122
        %v2129 = vadd.f32 %v1856, 1.0
        %v2130 = vlog2.pop %v2129
        %v2131 = vmul.f32 %v2130, 0.6931472
        %v2132 = vmul.f32 -0.5, %v1856
        %v2133 = vadd.f32 %v2132, 1.0
        %v2134 = vmul.f32 %v2133, %v1856
        %v2135 = vand.u32 2147483647, %v1856
        %vm2136 = vcmp.lt.f32.partialorder %v2135, 0.0004427343
        %v2137 = vsel %vm2136, %v2134, %v2131
        %v2138 = vadd.f32 %v1858, 1.0
        %v2139 = vlog2.pop %v2138
        %v2140 = vmul.f32 %v2139, 0.6931472
        %v2141 = vmul.f32 -0.5, %v1858
        %v2142 = vadd.f32 %v2141, 1.0
        %v2143 = vmul.f32 %v2142, %v1858
        %v2144 = vand.u32 2147483647, %v1858
        %vm2145 = vcmp.lt.f32.partialorder %v2144, 0.0004427343
        %v2146 = vsel %vm2145, %v2143, %v2140
        %v2147 = vsel %vm1731, %v1575, %v1867
        %v2148 = vsel %vm1732, %v1579, %v1876
        %v2149 = vsel %vm1733, %v1585, %v1885
        %v2150 = vsel %vm1734, %v1589, %v1894
        %v2151 = vsel %vm1735, %v1595, %v1903
        %v2152 = vsel %vm1736, %v1599, %v1912
        %v2153 = vsel %vm1737, %v1605, %v1921
        %v2154 = vsel %vm1738, %v1609, %v1930
        %v2155 = vsel %vm1739, %v1615, %v1939
        %v2156 = vsel %vm1740, %v1619, %v1948
        %v2157 = vsel %vm1741, %v1625, %v1957
        %v2158 = vsel %vm1742, %v1629, %v1966
        %v2159 = vsel %vm1743, %v1635, %v1975
        %v2160 = vsel %vm1744, %v1639, %v1984
        %v2161 = vsel %vm1745, %v1645, %v1993
        %v2162 = vsel %vm1746, %v1649, %v2002
        %v2163 = vsel %vm1747, %v1655, %v2011
        %v2164 = vsel %vm1748, %v1659, %v2020
        %v2165 = vsel %vm1749, %v1665, %v2029
        %v2166 = vsel %vm1750, %v1669, %v2038
        %v2167 = vsel %vm1751, %v1675, %v2047
        %v2168 = vsel %vm1752, %v1679, %v2056
        %v2169 = vsel %vm1753, %v1685, %v2065
        %v2170 = vsel %vm1754, %v1689, %v2074
        %v2171 = vsel %vm1755, %v1695, %v2083
        %v2172 = vsel %vm1756, %v1699, %v2092
        %v2173 = vsel %vm1757, %v1705, %v2101
        %v2174 = vsel %vm1758, %v1709, %v2110
        %v2175 = vsel %vm1759, %v1715, %v2119
        %v2176 = vsel %vm1760, %v1719, %v2128
        %v2177 = vsel %vm1761, %v1725, %v2137
        %v2178 = vsel %vm1762, %v1729, %v2146
        %v2179 = vadd.f32 %v2147, 1e-10
        %v2180 = vadd.f32 %v2148, 1e-10
        %v2181 = vadd.f32 %v2149, 1e-10
        %v2182 = vadd.f32 %v2150, 1e-10
        %v2183 = vadd.f32 %v2151, 1e-10
        %v2184 = vadd.f32 %v2152, 1e-10
        %v2185 = vadd.f32 %v2153, 1e-10
        %v2186 = vadd.f32 %v2154, 1e-10
        %v2187 = vadd.f32 %v2155, 1e-10
        %v2188 = vadd.f32 %v2156, 1e-10
        %v2189 = vadd.f32 %v2157, 1e-10
        %v2190 = vadd.f32 %v2158, 1e-10
        %v2191 = vadd.f32 %v2159, 1e-10
        %v2192 = vadd.f32 %v2160, 1e-10
        %v2193 = vadd.f32 %v2161, 1e-10
        %v2194 = vadd.f32 %v2162, 1e-10
        %v2195 = vadd.f32 %v2163, 1e-10
        %v2196 = vadd.f32 %v2164, 1e-10
        %v2197 = vadd.f32 %v2165, 1e-10
        %v2198 = vadd.f32 %v2166, 1e-10
        %v2199 = vadd.f32 %v2167, 1e-10
        %v2200 = vadd.f32 %v2168, 1e-10
        %v2201 = vadd.f32 %v2169, 1e-10
        %v2202 = vadd.f32 %v2170, 1e-10
        %v2203 = vadd.f32 %v2171, 1e-10
        %v2204 = vadd.f32 %v2172, 1e-10
        %v2205 = vadd.f32 %v2173, 1e-10
        %v2206 = vadd.f32 %v2174, 1e-10
        %v2207 = vadd.f32 %v2175, 1e-10
        %v2208 = vadd.f32 %v2176, 1e-10
        %v2209 = vadd.f32 %v2177, 1e-10
        %v2210 = vadd.f32 %v2178, 1e-10
        %v2211 = vrsqrt.pop %v2179
        %v2212 = vmul.f32 %v2179, %v2211
        %vm2213 = vcmp.eq.f32.partialorder %v2179, inf
        %v2214 = vsel %vm2213, %v2179, %v2212
        %vm2215 = vcmp.eq.f32.partialorder %v2179, 0.0
        %v2216 = vand.u32 %v2179, 2147483648
        %v2217 = vsel %vm2215, %v2216, %v2214
        %v2218 = vrsqrt.pop %v2180
        %v2219 = vmul.f32 %v2180, %v2218
        %vm2220 = vcmp.eq.f32.partialorder %v2180, inf
        %v2221 = vsel %vm2220, %v2180, %v2219
        %vm2222 = vcmp.eq.f32.partialorder %v2180, 0.0
        %v2223 = vand.u32 %v2180, 2147483648
        %v2224 = vsel %vm2222, %v2223, %v2221
        %v2225 = vrsqrt.pop %v2181
        %v2226 = vmul.f32 %v2181, %v2225
        %vm2227 = vcmp.eq.f32.partialorder %v2181, inf
        %v2228 = vsel %vm2227, %v2181, %v2226
        %vm2229 = vcmp.eq.f32.partialorder %v2181, 0.0
        %v2230 = vand.u32 %v2181, 2147483648
        %v2231 = vsel %vm2229, %v2230, %v2228
        %v2232 = vrsqrt.pop %v2182
        %v2233 = vmul.f32 %v2182, %v2232
        %vm2234 = vcmp.eq.f32.partialorder %v2182, inf
        %v2235 = vsel %vm2234, %v2182, %v2233
        %vm2236 = vcmp.eq.f32.partialorder %v2182, 0.0
        %v2237 = vand.u32 %v2182, 2147483648
        %v2238 = vsel %vm2236, %v2237, %v2235
        %v2239 = vrsqrt.pop %v2183
        %v2240 = vmul.f32 %v2183, %v2239
        %vm2241 = vcmp.eq.f32.partialorder %v2183, inf
        %v2242 = vsel %vm2241, %v2183, %v2240
        %vm2243 = vcmp.eq.f32.partialorder %v2183, 0.0
        %v2244 = vand.u32 %v2183, 2147483648
        %v2245 = vsel %vm2243, %v2244, %v2242
        %v2246 = vrsqrt.pop %v2184
        %v2247 = vmul.f32 %v2184, %v2246
        %vm2248 = vcmp.eq.f32.partialorder %v2184, inf
        %v2249 = vsel %vm2248, %v2184, %v2247
        %vm2250 = vcmp.eq.f32.partialorder %v2184, 0.0
        %v2251 = vand.u32 %v2184, 2147483648
        %v2252 = vsel %vm2250, %v2251, %v2249
        %v2253 = vrsqrt.pop %v2185
        %v2254 = vmul.f32 %v2185, %v2253
        %vm2255 = vcmp.eq.f32.partialorder %v2185, inf
        %v2256 = vsel %vm2255, %v2185, %v2254
        %vm2257 = vcmp.eq.f32.partialorder %v2185, 0.0
        %v2258 = vand.u32 %v2185, 2147483648
        %v2259 = vsel %vm2257, %v2258, %v2256
        %v2260 = vrsqrt.pop %v2186
        %v2261 = vmul.f32 %v2186, %v2260
        %vm2262 = vcmp.eq.f32.partialorder %v2186, inf
        %v2263 = vsel %vm2262, %v2186, %v2261
        %vm2264 = vcmp.eq.f32.partialorder %v2186, 0.0
        %v2265 = vand.u32 %v2186, 2147483648
        %v2266 = vsel %vm2264, %v2265, %v2263
        %v2267 = vrsqrt.pop %v2187
        %v2268 = vmul.f32 %v2187, %v2267
        %vm2269 = vcmp.eq.f32.partialorder %v2187, inf
        %v2270 = vsel %vm2269, %v2187, %v2268
        %vm2271 = vcmp.eq.f32.partialorder %v2187, 0.0
        %v2272 = vand.u32 %v2187, 2147483648
        %v2273 = vsel %vm2271, %v2272, %v2270
        %v2274 = vrsqrt.pop %v2188
        %v2275 = vmul.f32 %v2188, %v2274
        %vm2276 = vcmp.eq.f32.partialorder %v2188, inf
        %v2277 = vsel %vm2276, %v2188, %v2275
        %vm2278 = vcmp.eq.f32.partialorder %v2188, 0.0
        %v2279 = vand.u32 %v2188, 2147483648
        %v2280 = vsel %vm2278, %v2279, %v2277
        %v2281 = vrsqrt.pop %v2189
        %v2282 = vmul.f32 %v2189, %v2281
        %vm2283 = vcmp.eq.f32.partialorder %v2189, inf
        %v2284 = vsel %vm2283, %v2189, %v2282
        %vm2285 = vcmp.eq.f32.partialorder %v2189, 0.0
        %v2286 = vand.u32 %v2189, 2147483648
        %v2287 = vsel %vm2285, %v2286, %v2284
        %v2288 = vrsqrt.pop %v2190
        %v2289 = vmul.f32 %v2190, %v2288
        %vm2290 = vcmp.eq.f32.partialorder %v2190, inf
        %v2291 = vsel %vm2290, %v2190, %v2289
        %vm2292 = vcmp.eq.f32.partialorder %v2190, 0.0
        %v2293 = vand.u32 %v2190, 2147483648
        %v2294 = vsel %vm2292, %v2293, %v2291
        %v2295 = vrsqrt.pop %v2191
        %v2296 = vmul.f32 %v2191, %v2295
        %vm2297 = vcmp.eq.f32.partialorder %v2191, inf
        %v2298 = vsel %vm2297, %v2191, %v2296
        %vm2299 = vcmp.eq.f32.partialorder %v2191, 0.0
        %v2300 = vand.u32 %v2191, 2147483648
        %v2301 = vsel %vm2299, %v2300, %v2298
        %v2302 = vrsqrt.pop %v2192
        %v2303 = vmul.f32 %v2192, %v2302
        %vm2304 = vcmp.eq.f32.partialorder %v2192, inf
        %v2305 = vsel %vm2304, %v2192, %v2303
        %vm2306 = vcmp.eq.f32.partialorder %v2192, 0.0
        %v2307 = vand.u32 %v2192, 2147483648
        %v2308 = vsel %vm2306, %v2307, %v2305
        %v2309 = vrsqrt.pop %v2193
        %v2310 = vmul.f32 %v2193, %v2309
        %vm2311 = vcmp.eq.f32.partialorder %v2193, inf
        %v2312 = vsel %vm2311, %v2193, %v2310
        %vm2313 = vcmp.eq.f32.partialorder %v2193, 0.0
        %v2314 = vand.u32 %v2193, 2147483648
        %v2315 = vsel %vm2313, %v2314, %v2312
        %v2316 = vrsqrt.pop %v2194
        %v2317 = vmul.f32 %v2194, %v2316
        %vm2318 = vcmp.eq.f32.partialorder %v2194, inf
        %v2319 = vsel %vm2318, %v2194, %v2317
        %vm2320 = vcmp.eq.f32.partialorder %v2194, 0.0
        %v2321 = vand.u32 %v2194, 2147483648
        %v2322 = vsel %vm2320, %v2321, %v2319
        %v2323 = vrsqrt.pop %v2195
        %v2324 = vmul.f32 %v2195, %v2323
        %vm2325 = vcmp.eq.f32.partialorder %v2195, inf
        %v2326 = vsel %vm2325, %v2195, %v2324
        %vm2327 = vcmp.eq.f32.partialorder %v2195, 0.0
        %v2328 = vand.u32 %v2195, 2147483648
        %v2329 = vsel %vm2327, %v2328, %v2326
        %v2330 = vrsqrt.pop %v2196
        %v2331 = vmul.f32 %v2196, %v2330
        %vm2332 = vcmp.eq.f32.partialorder %v2196, inf
        %v2333 = vsel %vm2332, %v2196, %v2331
        %vm2334 = vcmp.eq.f32.partialorder %v2196, 0.0
        %v2335 = vand.u32 %v2196, 2147483648
        %v2336 = vsel %vm2334, %v2335, %v2333
        %v2337 = vrsqrt.pop %v2197
        %v2338 = vmul.f32 %v2197, %v2337
        %vm2339 = vcmp.eq.f32.partialorder %v2197, inf
        %v2340 = vsel %vm2339, %v2197, %v2338
        %vm2341 = vcmp.eq.f32.partialorder %v2197, 0.0
        %v2342 = vand.u32 %v2197, 2147483648
        %v2343 = vsel %vm2341, %v2342, %v2340
        %v2344 = vrsqrt.pop %v2198
        %v2345 = vmul.f32 %v2198, %v2344
        %vm2346 = vcmp.eq.f32.partialorder %v2198, inf
        %v2347 = vsel %vm2346, %v2198, %v2345
        %vm2348 = vcmp.eq.f32.partialorder %v2198, 0.0
        %v2349 = vand.u32 %v2198, 2147483648
        %v2350 = vsel %vm2348, %v2349, %v2347
        %v2351 = vrsqrt.pop %v2199
        %v2352 = vmul.f32 %v2199, %v2351
        %vm2353 = vcmp.eq.f32.partialorder %v2199, inf
        %v2354 = vsel %vm2353, %v2199, %v2352
        %vm2355 = vcmp.eq.f32.partialorder %v2199, 0.0
        %v2356 = vand.u32 %v2199, 2147483648
        %v2357 = vsel %vm2355, %v2356, %v2354
        %v2358 = vrsqrt.pop %v2200
        %v2359 = vmul.f32 %v2200, %v2358
        %vm2360 = vcmp.eq.f32.partialorder %v2200, inf
        %v2361 = vsel %vm2360, %v2200, %v2359
        %vm2362 = vcmp.eq.f32.partialorder %v2200, 0.0
        %v2363 = vand.u32 %v2200, 2147483648
        %v2364 = vsel %vm2362, %v2363, %v2361
        %v2365 = vrsqrt.pop %v2201
        %v2366 = vmul.f32 %v2201, %v2365
        %vm2367 = vcmp.eq.f32.partialorder %v2201, inf
        %v2368 = vsel %vm2367, %v2201, %v2366
        %vm2369 = vcmp.eq.f32.partialorder %v2201, 0.0
        %v2370 = vand.u32 %v2201, 2147483648
        %v2371 = vsel %vm2369, %v2370, %v2368
        %v2372 = vrsqrt.pop %v2202
        %v2373 = vmul.f32 %v2202, %v2372
        %vm2374 = vcmp.eq.f32.partialorder %v2202, inf
        %v2375 = vsel %vm2374, %v2202, %v2373
        %vm2376 = vcmp.eq.f32.partialorder %v2202, 0.0
        %v2377 = vand.u32 %v2202, 2147483648
        %v2378 = vsel %vm2376, %v2377, %v2375
        %v2379 = vrsqrt.pop %v2203
        %v2380 = vmul.f32 %v2203, %v2379
        %vm2381 = vcmp.eq.f32.partialorder %v2203, inf
        %v2382 = vsel %vm2381, %v2203, %v2380
        %vm2383 = vcmp.eq.f32.partialorder %v2203, 0.0
        %v2384 = vand.u32 %v2203, 2147483648
        %v2385 = vsel %vm2383, %v2384, %v2382
        %v2386 = vrsqrt.pop %v2204
        %v2387 = vmul.f32 %v2204, %v2386
        %vm2388 = vcmp.eq.f32.partialorder %v2204, inf
        %v2389 = vsel %vm2388, %v2204, %v2387
        %vm2390 = vcmp.eq.f32.partialorder %v2204, 0.0
        %v2391 = vand.u32 %v2204, 2147483648
        %v2392 = vsel %vm2390, %v2391, %v2389
        %v2393 = vrsqrt.pop %v2205
        %v2394 = vmul.f32 %v2205, %v2393
        %vm2395 = vcmp.eq.f32.partialorder %v2205, inf
        %v2396 = vsel %vm2395, %v2205, %v2394
        %vm2397 = vcmp.eq.f32.partialorder %v2205, 0.0
        %v2398 = vand.u32 %v2205, 2147483648
        %v2399 = vsel %vm2397, %v2398, %v2396
        %v2400 = vrsqrt.pop %v2206
        %v2401 = vmul.f32 %v2206, %v2400
        %vm2402 = vcmp.eq.f32.partialorder %v2206, inf
        %v2403 = vsel %vm2402, %v2206, %v2401
        %vm2404 = vcmp.eq.f32.partialorder %v2206, 0.0
        %v2405 = vand.u32 %v2206, 2147483648
        %v2406 = vsel %vm2404, %v2405, %v2403
        %v2407 = vrsqrt.pop %v2207
        %v2408 = vmul.f32 %v2207, %v2407
        %vm2409 = vcmp.eq.f32.partialorder %v2207, inf
        %v2410 = vsel %vm2409, %v2207, %v2408
        %vm2411 = vcmp.eq.f32.partialorder %v2207, 0.0
        %v2412 = vand.u32 %v2207, 2147483648
        %v2413 = vsel %vm2411, %v2412, %v2410
        %v2414 = vrsqrt.pop %v2208
        %v2415 = vmul.f32 %v2208, %v2414
        %vm2416 = vcmp.eq.f32.partialorder %v2208, inf
        %v2417 = vsel %vm2416, %v2208, %v2415
        %vm2418 = vcmp.eq.f32.partialorder %v2208, 0.0
        %v2419 = vand.u32 %v2208, 2147483648
        %v2420 = vsel %vm2418, %v2419, %v2417
        %v2421 = vrsqrt.pop %v2209
        %v2422 = vmul.f32 %v2209, %v2421
        %vm2423 = vcmp.eq.f32.partialorder %v2209, inf
        %v2424 = vsel %vm2423, %v2209, %v2422
        %vm2425 = vcmp.eq.f32.partialorder %v2209, 0.0
        %v2426 = vand.u32 %v2209, 2147483648
        %v2427 = vsel %vm2425, %v2426, %v2424
        %v2428 = vrsqrt.pop %v2210
        %v2429 = vmul.f32 %v2210, %v2428
        %vm2430 = vcmp.eq.f32.partialorder %v2210, inf
        %v2431 = vsel %vm2430, %v2210, %v2429
        %vm2432 = vcmp.eq.f32.partialorder %v2210, 0.0
        %v2433 = vand.u32 %v2210, 2147483648
        %v2434 = vsel %vm2432, %v2433, %v2431
        %v2435 = vunpack.c.l.bf16 %v614
        %v2436 = vunpack.c.l.bf16 %v615
        %v2437 = vunpack.c.l.bf16 %v616
        %v2438 = vunpack.c.l.bf16 %v617
        %v2439 = vunpack.c.l.bf16 %v618
        %v2440 = vunpack.c.l.bf16 %v619
        %v2441 = vunpack.c.l.bf16 %v620
        %v2442 = vunpack.c.l.bf16 %v621
        %v2443 = vunpack.c.l.bf16 %v622
        %v2444 = vunpack.c.l.bf16 %v623
        %v2445 = vunpack.c.l.bf16 %v624
        %v2446 = vunpack.c.l.bf16 %v625
        %v2447 = vunpack.c.l.bf16 %v626
        %v2448 = vunpack.c.l.bf16 %v627
        %v2449 = vunpack.c.l.bf16 %v628
        %v2450 = vunpack.c.l.bf16 %v629
        %v2451 = vunpack.c.l.bf16 %v630
        %v2452 = vunpack.c.l.bf16 %v631
        %v2453 = vunpack.c.l.bf16 %v632
        %v2454 = vunpack.c.l.bf16 %v633
        %v2455 = vunpack.c.l.bf16 %v634
        %v2456 = vunpack.c.l.bf16 %v635
        %v2457 = vunpack.c.l.bf16 %v636
        %v2458 = vunpack.c.l.bf16 %v637
        %v2459 = vunpack.c.l.bf16 %v638
        %v2460 = vunpack.c.l.bf16 %v639
        %v2461 = vunpack.c.l.bf16 %v640
        %v2462 = vunpack.c.l.bf16 %v641
        %v2463 = vunpack.c.l.bf16 %v642
        %v2464 = vunpack.c.l.bf16 %v643
        %v2465 = vunpack.c.l.bf16 %v644
        %v2466 = vunpack.c.l.bf16 %v645
        %v2467 = vmul.f32 %v2435, %v2217
        %v2468 = vmul.f32 %v2436, %v2224
        %v2469 = vmul.f32 %v2437, %v2231
        %v2470 = vmul.f32 %v2438, %v2238
        %v2471 = vmul.f32 %v2439, %v2245
        %v2472 = vmul.f32 %v2440, %v2252
        %v2473 = vmul.f32 %v2441, %v2259
        %v2474 = vmul.f32 %v2442, %v2266
        %v2475 = vmul.f32 %v2443, %v2273
        %v2476 = vmul.f32 %v2444, %v2280
        %v2477 = vmul.f32 %v2445, %v2287
        %v2478 = vmul.f32 %v2446, %v2294
        %v2479 = vmul.f32 %v2447, %v2301
        %v2480 = vmul.f32 %v2448, %v2308
        %v2481 = vmul.f32 %v2449, %v2315
        %v2482 = vmul.f32 %v2450, %v2322
        %v2483 = vmul.f32 %v2451, %v2329
        %v2484 = vmul.f32 %v2452, %v2336
        %v2485 = vmul.f32 %v2453, %v2343
        %v2486 = vmul.f32 %v2454, %v2350
        %v2487 = vmul.f32 %v2455, %v2357
        %v2488 = vmul.f32 %v2456, %v2364
        %v2489 = vmul.f32 %v2457, %v2371
        %v2490 = vmul.f32 %v2458, %v2378
        %v2491 = vmul.f32 %v2459, %v2385
        %v2492 = vmul.f32 %v2460, %v2392
        %v2493 = vmul.f32 %v2461, %v2399
        %v2494 = vmul.f32 %v2462, %v2406
        %v2495 = vmul.f32 %v2463, %v2413
        %v2496 = vmul.f32 %v2464, %v2420
        %v2497 = vmul.f32 %v2465, %v2427
        %v2498 = vmul.f32 %v2466, %v2434
        %v2499 = vadd.f32 %v1573, %v2467
        %v2500 = vadd.f32 %v1577, %v2468
        %v2501 = vadd.f32 %v1583, %v2469
        %v2502 = vadd.f32 %v1587, %v2470
        %v2503 = vadd.f32 %v1593, %v2471
        %v2504 = vadd.f32 %v1597, %v2472
        %v2505 = vadd.f32 %v1603, %v2473
        %v2506 = vadd.f32 %v1607, %v2474
        %v2507 = vadd.f32 %v1613, %v2475
        %v2508 = vadd.f32 %v1617, %v2476
        %v2509 = vadd.f32 %v1623, %v2477
        %v2510 = vadd.f32 %v1627, %v2478
        %v2511 = vadd.f32 %v1633, %v2479
        %v2512 = vadd.f32 %v1637, %v2480
        %v2513 = vadd.f32 %v1643, %v2481
        %v2514 = vadd.f32 %v1647, %v2482
        %v2515 = vadd.f32 %v1653, %v2483
        %v2516 = vadd.f32 %v1657, %v2484
        %v2517 = vadd.f32 %v1663, %v2485
        %v2518 = vadd.f32 %v1667, %v2486
        %v2519 = vadd.f32 %v1673, %v2487
        %v2520 = vadd.f32 %v1677, %v2488
        %v2521 = vadd.f32 %v1683, %v2489
        %v2522 = vadd.f32 %v1687, %v2490
        %v2523 = vadd.f32 %v1693, %v2491
        %v2524 = vadd.f32 %v1697, %v2492
        %v2525 = vadd.f32 %v1703, %v2493
        %v2526 = vadd.f32 %v1707, %v2494
        %v2527 = vadd.f32 %v1713, %v2495
        %v2528 = vadd.f32 %v1717, %v2496
        %v2529 = vadd.f32 %v1723, %v2497
        %v2530 = vadd.f32 %v1727, %v2498
        %v2531 = vpack.c.bf16 %v2500, %v2499
        %v2532 = vpack.c.bf16 %v2502, %v2501
        %v2533 = vpack.c.bf16 %v2504, %v2503
        %v2534 = vpack.c.bf16 %v2506, %v2505
        %v2535 = vpack.c.bf16 %v2508, %v2507
        %v2536 = vpack.c.bf16 %v2510, %v2509
        %v2537 = vpack.c.bf16 %v2512, %v2511
        %v2538 = vpack.c.bf16 %v2514, %v2513
        %v2539 = vpack.c.bf16 %v2516, %v2515
        %v2540 = vpack.c.bf16 %v2518, %v2517
        %v2541 = vpack.c.bf16 %v2520, %v2519
        %v2542 = vpack.c.bf16 %v2522, %v2521
        %v2543 = vpack.c.bf16 %v2524, %v2523
        %v2544 = vpack.c.bf16 %v2526, %v2525
        %v2545 = vpack.c.bf16 %v2528, %v2527
        %v2546 = vpack.c.bf16 %v2530, %v2529
        %v2547 = vld [vmem:[#allocation5] sm:$0xf]
        %v2548 = vld [vmem:[#allocation5 + $0x4] sm:$0xf]
        %v2549 = vld [vmem:[#allocation5 + $0x8] sm:$0xf]
        %v2550 = vld [vmem:[#allocation5 + $0xc] sm:$0xf]
        %v2551 = vld [vmem:[#allocation5 + $0x10] sm:$0xf]
        %v2552 = vld [vmem:[#allocation5 + $0x14] sm:$0xf]
        %v2553 = vld [vmem:[#allocation5 + $0x18] sm:$0xf]
        %v2554 = vld [vmem:[#allocation5 + $0x1c] sm:$0xf]
        %v2555 = vld [vmem:[#allocation5 + $0x20] sm:$0xf]
        %v2556 = vld [vmem:[#allocation5 + $0x24] sm:$0xf]
        %v2557 = vld [vmem:[#allocation5 + $0x28] sm:$0xf]
        %v2558 = vld [vmem:[#allocation5 + $0x2c] sm:$0xf]
        %v2559 = vld [vmem:[#allocation5 + $0x30] sm:$0xf]
        %v2560 = vld [vmem:[#allocation5 + $0x34] sm:$0xf]
        %v2561 = vld [vmem:[#allocation5 + $0x38] sm:$0xf]
        %v2562 = vld [vmem:[#allocation5 + $0x3c] sm:$0xf]
        %v2563 = vld [vmem:[%s9] sm:$0x1]
        %v2565 = vlaneseq
        %v2566 = vshrl.u32 %v2565, 7
        %v2567 = vsub.s32 0, %v2566
        %v2568 = vrot.slane %v2563, %v2567
        %v2586 = vunpack.c.l.b16 %v2547
        %v2587 = vunpack.c.l.b16 %v2548
        %v2588 = vunpack.c.l.b16 %v2549
        %v2589 = vunpack.c.l.b16 %v2550
        %v2590 = vunpack.c.l.b16 %v2551
        %v2591 = vunpack.c.l.b16 %v2552
        %v2592 = vunpack.c.l.b16 %v2553
        %v2593 = vunpack.c.l.b16 %v2554
        %v2594 = vunpack.c.l.b16 %v2555
        %v2595 = vunpack.c.l.b16 %v2556
        %v2596 = vunpack.c.l.b16 %v2557
        %v2597 = vunpack.c.l.b16 %v2558
        %v2598 = vunpack.c.l.b16 %v2559
        %v2599 = vunpack.c.l.b16 %v2560
        %v2600 = vunpack.c.l.b16 %v2561
        %v2601 = vunpack.c.l.b16 %v2562
        %v2602 = vpack.c.b16 %v2587, %v2586
        %v2603 = vpack.c.b16 %v2589, %v2588
        %v2604 = vpack.c.b16 %v2591, %v2590
        %v2605 = vpack.c.b16 %v2593, %v2592
        %v2606 = vpack.c.b16 %v2595, %v2594
        %v2607 = vpack.c.b16 %v2597, %v2596
        %v2608 = vpack.c.b16 %v2599, %v2598
        %v2609 = vpack.c.b16 %v2601, %v2600
        %2618 = vmatprep.subr.bf16.mxu0 0
        %2619 = vmatpush1.bf16.msra.mxu0 %v2602
        %2620 = vmatprep.subr.bf16.mxu0 0
        %2621 = vmatpush1.bf16.msra.mxu0 %v2603
        %2622 = vmatprep.subr.bf16.mxu0 0
        %2623 = vmatpush1.bf16.msra.mxu0 %v2604
        %2624 = vmatprep.subr.bf16.mxu0 0
        %2625 = vmatpush1.bf16.msra.mxu0 %v2605
        %2626 = vmatprep.subr.bf16.mxu0 0
        %2627 = vmatpush1.bf16.msra.mxu0 %v2606
        %2628 = vmatprep.subr.bf16.mxu0 0
        %2629 = vmatpush1.bf16.msra.mxu0 %v2607
        %2630 = vmatprep.subr.bf16.mxu0 0
        %2631 = vmatpush1.bf16.msra.mxu0 %v2608
        %2632 = vmatprep.subr.bf16.mxu0 0
        %2633 = vmatpush1.bf16.msra.mxu0 %v2609
        %2634 = vmatprep.subr.bf16.mxu0 0
        %2635 = vmatpush1.bf16.msra.mxu0 0
        %2636 = vmatprep.subr.bf16.mxu0 0
        %2637 = vmatpush1.bf16.msra.mxu0 0
        %2638 = vmatprep.subr.bf16.mxu0 0
        %2639 = vmatpush1.bf16.msra.mxu0 0
        %2640 = vmatprep.subr.bf16.mxu0 0
        %2641 = vmatpush1.bf16.msra.mxu0 0
        %2642 = vmatprep.subr.bf16.mxu0 0
        %2643 = vmatpush1.bf16.msra.mxu0 0
        %2644 = vmatprep.subr.bf16.mxu0 0
        %2645 = vmatpush1.bf16.msra.mxu0 0
        %2646 = vmatprep.subr.bf16.mxu0 0
        %2647 = vmatpush1.bf16.msra.mxu0 0
        %2648 = vmatprep.subr.bf16.mxu0 0
        %2649 = vmatpush1.bf16.msra.mxu0 0
        %2650 = vmatprep.mubr.bf16.mxu0 0
        %2651 = vmatmul.mubr.bf16.gmra.mrb[0].mxu0 %v2531
        %v2652 = vpop.f32.mrb[0].mxu0
        %v2653 = vadd.f32 %v2568, %v2652
        %v2654 = vpop.f32.mrb[0].mxu0
        %v2655 = vpop.f32.mrb[0].mxu0
        %v2656 = vadd.f32 %v2568, %v2655
        %v2657 = vpop.f32.mrb[0].mxu0
        %2658 = vmatprep.mubr.bf16.mxu0 0
        %2659 = vmatmul.mubr.bf16.gmra.mrb[0].mxu0 %v2532
        %v2660 = vpop.f32.mrb[0].mxu0
        %v2661 = vadd.f32 %v2568, %v2660
        %v2662 = vpop.f32.mrb[0].mxu0
        %v2663 = vpop.f32.mrb[0].mxu0
        %v2664 = vadd.f32 %v2568, %v2663
        %v2665 = vpop.f32.mrb[0].mxu0
        %2666 = vmatprep.mubr.bf16.mxu0 0
        %2667 = vmatmul.mubr.bf16.gmra.mrb[0].mxu0 %v2533
        %v2668 = vpop.f32.mrb[0].mxu0
        %v2669 = vadd.f32 %v2568, %v2668
        %v2670 = vpop.f32.mrb[0].mxu0
        %v2671 = vpop.f32.mrb[0].mxu0
        %v2672 = vadd.f32 %v2568, %v2671
        %v2673 = vpop.f32.mrb[0].mxu0
        %2674 = vmatprep.mubr.bf16.mxu0 0
        %2675 = vmatmul.mubr.bf16.gmra.mrb[0].mxu0 %v2534
        %v2676 = vpop.f32.mrb[0].mxu0
        %v2677 = vadd.f32 %v2568, %v2676
        %v2678 = vpop.f32.mrb[0].mxu0
        %v2679 = vpop.f32.mrb[0].mxu0
        %v2680 = vadd.f32 %v2568, %v2679
        %v2681 = vpop.f32.mrb[0].mxu0
        %2682 = vmatprep.mubr.bf16.mxu0 0
        %2683 = vmatmul.mubr.bf16.gmra.mrb[0].mxu0 %v2535
        %v2684 = vpop.f32.mrb[0].mxu0
        %v2685 = vadd.f32 %v2568, %v2684
        %v2686 = vpop.f32.mrb[0].mxu0
        %v2687 = vpop.f32.mrb[0].mxu0
        %v2688 = vadd.f32 %v2568, %v2687
        %v2689 = vpop.f32.mrb[0].mxu0
        %2690 = vmatprep.mubr.bf16.mxu0 0
        %2691 = vmatmul.mubr.bf16.gmra.mrb[0].mxu0 %v2536
        %v2692 = vpop.f32.mrb[0].mxu0
        %v2693 = vadd.f32 %v2568, %v2692
        %v2694 = vpop.f32.mrb[0].mxu0
        %v2695 = vpop.f32.mrb[0].mxu0
        %v2696 = vadd.f32 %v2568, %v2695
        %v2697 = vpop.f32.mrb[0].mxu0
        %2698 = vmatprep.mubr.bf16.mxu0 0
        %2699 = vmatmul.mubr.bf16.gmra.mrb[0].mxu0 %v2537
        %v2700 = vpop.f32.mrb[0].mxu0
        %v2701 = vadd.f32 %v2568, %v2700
        %v2702 = vpop.f32.mrb[0].mxu0
        %v2703 = vpop.f32.mrb[0].mxu0
        %v2704 = vadd.f32 %v2568, %v2703
        %v2705 = vpop.f32.mrb[0].mxu0
        %2706 = vmatprep.mubr.bf16.mxu0 0
        %2707 = vmatmul.mubr.bf16.gmra.mrb[0].mxu0 %v2538
        %v2708 = vpop.f32.mrb[0].mxu0
        %v2709 = vadd.f32 %v2568, %v2708
        %v2710 = vpop.f32.mrb[0].mxu0
        %v2711 = vpop.f32.mrb[0].mxu0
        %v2712 = vadd.f32 %v2568, %v2711
        %v2713 = vpop.f32.mrb[0].mxu0
        %2714 = vmatprep.mubr.bf16.mxu0 0
        %2715 = vmatmul.mubr.bf16.gmra.mrb[0].mxu0 %v2539
        %v2716 = vpop.f32.mrb[0].mxu0
        %v2717 = vadd.f32 %v2568, %v2716
        %v2718 = vpop.f32.mrb[0].mxu0
        %v2719 = vpop.f32.mrb[0].mxu0
        %v2720 = vadd.f32 %v2568, %v2719
        %v2721 = vpop.f32.mrb[0].mxu0
        %2722 = vmatprep.mubr.bf16.mxu0 0
        %2723 = vmatmul.mubr.bf16.gmra.mrb[0].mxu0 %v2540
        %v2724 = vpop.f32.mrb[0].mxu0
        %v2725 = vadd.f32 %v2568, %v2724
        %v2726 = vpop.f32.mrb[0].mxu0
        %v2727 = vpop.f32.mrb[0].mxu0
        %v2728 = vadd.f32 %v2568, %v2727
        %v2729 = vpop.f32.mrb[0].mxu0
        %2730 = vmatprep.mubr.bf16.mxu0 0
        %2731 = vmatmul.mubr.bf16.gmra.mrb[0].mxu0 %v2541
        %v2732 = vpop.f32.mrb[0].mxu0
        %v2733 = vadd.f32 %v2568, %v2732
        %v2734 = vpop.f32.mrb[0].mxu0
        %v2735 = vpop.f32.mrb[0].mxu0
        %v2736 = vadd.f32 %v2568, %v2735
        %v2737 = vpop.f32.mrb[0].mxu0
        %2738 = vmatprep.mubr.bf16.mxu0 0
        %2739 = vmatmul.mubr.bf16.gmra.mrb[0].mxu0 %v2542
        %v2740 = vpop.f32.mrb[0].mxu0
        %v2741 = vadd.f32 %v2568, %v2740
        %v2742 = vpop.f32.mrb[0].mxu0
        %v2743 = vpop.f32.mrb[0].mxu0
        %v2744 = vadd.f32 %v2568, %v2743
        %v2745 = vpop.f32.mrb[0].mxu0
        %2746 = vmatprep.mubr.bf16.mxu0 0
        %2747 = vmatmul.mubr.bf16.gmra.mrb[0].mxu0 %v2543
        %v2748 = vpop.f32.mrb[0].mxu0
        %v2749 = vadd.f32 %v2568, %v2748
        %v2750 = vpop.f32.mrb[0].mxu0
        %v2751 = vpop.f32.mrb[0].mxu0
        %v2752 = vadd.f32 %v2568, %v2751
        %v2753 = vpop.f32.mrb[0].mxu0
        %2754 = vmatprep.mubr.bf16.mxu0 0
        %2755 = vmatmul.mubr.bf16.gmra.mrb[0].mxu0 %v2544
        %v2756 = vpop.f32.mrb[0].mxu0
        %v2757 = vadd.f32 %v2568, %v2756
        %v2758 = vpop.f32.mrb[0].mxu0
        %v2759 = vpop.f32.mrb[0].mxu0
        %v2760 = vadd.f32 %v2568, %v2759
        %v2761 = vpop.f32.mrb[0].mxu0
        %2762 = vmatprep.mubr.bf16.mxu0 0
        %2763 = vmatmul.mubr.bf16.gmra.mrb[0].mxu0 %v2545
        %v2764 = vpop.f32.mrb[0].mxu0
        %v2765 = vadd.f32 %v2568, %v2764
        %v2766 = vpop.f32.mrb[0].mxu0
        %v2767 = vpop.f32.mrb[0].mxu0
        %v2768 = vadd.f32 %v2568, %v2767
        %v2769 = vpop.f32.mrb[0].mxu0
        %2770 = vmatprep.mubr.bf16.mxu0 0
        %2771 = vmatmul.mubr.bf16.gmra.mrb[0].mxu0 %v2546
        %v2772 = vpop.f32.mrb[0].mxu0
        %v2773 = vadd.f32 %v2568, %v2772
        %v2774 = vpop.f32.mrb[0].mxu0
        %v2775 = vpop.f32.mrb[0].mxu0
        %v2776 = vadd.f32 %v2568, %v2775
        %v2777 = vpop.f32.mrb[0].mxu0
        %2778 = vdwg.mxu0
        %v2779 = vmax.f32 %v2653, 0.0
        %v2780 = vmax.f32 %v2656, 0.0
        %v2781 = vmax.f32 %v2661, 0.0
        %v2782 = vmax.f32 %v2664, 0.0
        %v2783 = vmax.f32 %v2669, 0.0
        %v2784 = vmax.f32 %v2672, 0.0
        %v2785 = vmax.f32 %v2677, 0.0
        %v2786 = vmax.f32 %v2680, 0.0
        %v2787 = vmax.f32 %v2685, 0.0
        %v2788 = vmax.f32 %v2688, 0.0
        %v2789 = vmax.f32 %v2693, 0.0
        %v2790 = vmax.f32 %v2696, 0.0
        %v2791 = vmax.f32 %v2701, 0.0
        %v2792 = vmax.f32 %v2704, 0.0
        %v2793 = vmax.f32 %v2709, 0.0
        %v2794 = vmax.f32 %v2712, 0.0
        %v2795 = vmax.f32 %v2717, 0.0
        %v2796 = vmax.f32 %v2720, 0.0
        %v2797 = vmax.f32 %v2725, 0.0
        %v2798 = vmax.f32 %v2728, 0.0
        %v2799 = vmax.f32 %v2733, 0.0
        %v2800 = vmax.f32 %v2736, 0.0
        %v2801 = vmax.f32 %v2741, 0.0
        %v2802 = vmax.f32 %v2744, 0.0
        %v2803 = vmax.f32 %v2749, 0.0
        %v2804 = vmax.f32 %v2752, 0.0
        %v2805 = vmax.f32 %v2757, 0.0
        %v2806 = vmax.f32 %v2760, 0.0
        %v2807 = vmax.f32 %v2765, 0.0
        %v2808 = vmax.f32 %v2768, 0.0
        %v2809 = vmax.f32 %v2773, 0.0
        %v2810 = vmax.f32 %v2776, 0.0
        %v2811 = vpack.c.bf16 %v2780, %v2779
        %v2812 = vpack.c.bf16 %v2782, %v2781
        %v2813 = vpack.c.bf16 %v2784, %v2783
        %v2814 = vpack.c.bf16 %v2786, %v2785
        %v2815 = vpack.c.bf16 %v2788, %v2787
        %v2816 = vpack.c.bf16 %v2790, %v2789
        %v2817 = vpack.c.bf16 %v2792, %v2791
        %v2818 = vpack.c.bf16 %v2794, %v2793
        %v2819 = vpack.c.bf16 %v2796, %v2795
        %v2820 = vpack.c.bf16 %v2798, %v2797
        %v2821 = vpack.c.bf16 %v2800, %v2799
        %v2822 = vpack.c.bf16 %v2802, %v2801
        %v2823 = vpack.c.bf16 %v2804, %v2803
        %v2824 = vpack.c.bf16 %v2806, %v2805
        %v2825 = vpack.c.bf16 %v2808, %v2807
        %v2826 = vpack.c.bf16 %v2810, %v2809
        %v2827 = vld [vmem:[#allocation7] sm:$0xf]
        %v2828 = vld [vmem:[#allocation7 + $0x4] sm:$0xf]
        %v2829 = vld [vmem:[#allocation7 + $0x8] sm:$0xf]
        %v2830 = vld [vmem:[#allocation7 + $0xc] sm:$0xf]
        %v2831 = vld [vmem:[#allocation7 + $0x10] sm:$0xf]
        %v2832 = vld [vmem:[#allocation7 + $0x14] sm:$0xf]
        %v2833 = vld [vmem:[#allocation7 + $0x18] sm:$0xf]
        %v2834 = vld [vmem:[#allocation7 + $0x1c] sm:$0xf]
        %v2835 = vld [vmem:[#allocation7 + $0x20] sm:$0xf]
        %v2836 = vld [vmem:[#allocation7 + $0x24] sm:$0xf]
        %v2837 = vld [vmem:[#allocation7 + $0x28] sm:$0xf]
        %v2838 = vld [vmem:[#allocation7 + $0x2c] sm:$0xf]
        %v2839 = vld [vmem:[#allocation7 + $0x30] sm:$0xf]
        %v2840 = vld [vmem:[#allocation7 + $0x34] sm:$0xf]
        %v2841 = vld [vmem:[#allocation7 + $0x38] sm:$0xf]
        %v2842 = vld [vmem:[#allocation7 + $0x3c] sm:$0xf]
        %v2843 = vld [vmem:[%s11] sm:$0x1]
        %v2845 = vlaneseq
        %v2846 = vshrl.u32 %v2845, 7
        %v2847 = vsub.s32 0, %v2846
        %v2848 = vrot.slane %v2843, %v2847
        %v2866 = vunpack.c.l.b16 %v2827
        %v2867 = vunpack.c.l.b16 %v2828
        %v2868 = vunpack.c.l.b16 %v2829
        %v2869 = vunpack.c.l.b16 %v2830
        %v2870 = vunpack.c.l.b16 %v2831
        %v2871 = vunpack.c.l.b16 %v2832
        %v2872 = vunpack.c.l.b16 %v2833
        %v2873 = vunpack.c.l.b16 %v2834
        %v2874 = vunpack.c.l.b16 %v2835
        %v2875 = vunpack.c.l.b16 %v2836
        %v2876 = vunpack.c.l.b16 %v2837
        %v2877 = vunpack.c.l.b16 %v2838
        %v2878 = vunpack.c.l.b16 %v2839
        %v2879 = vunpack.c.l.b16 %v2840
        %v2880 = vunpack.c.l.b16 %v2841
        %v2881 = vunpack.c.l.b16 %v2842
        %v2882 = vpack.c.b16 %v2867, %v2866
        %v2883 = vpack.c.b16 %v2869, %v2868
        %v2884 = vpack.c.b16 %v2871, %v2870
        %v2885 = vpack.c.b16 %v2873, %v2872
        %v2886 = vpack.c.b16 %v2875, %v2874
        %v2887 = vpack.c.b16 %v2877, %v2876
        %v2888 = vpack.c.b16 %v2879, %v2878
        %v2889 = vpack.c.b16 %v2881, %v2880
        %2898 = vmatprep.subr.bf16.mxu0 0
        %2899 = vmatpush1.bf16.msra.mxu0 %v2882
        %2900 = vmatprep.subr.bf16.mxu0 0
        %2901 = vmatpush1.bf16.msra.mxu0 %v2883
        %2902 = vmatprep.subr.bf16.mxu0 0
        %2903 = vmatpush1.bf16.msra.mxu0 %v2884
        %2904 = vmatprep.subr.bf16.mxu0 0
        %2905 = vmatpush1.bf16.msra.mxu0 %v2885
        %2906 = vmatprep.subr.bf16.mxu0 0
        %2907 = vmatpush1.bf16.msra.mxu0 %v2886
        %2908 = vmatprep.subr.bf16.mxu0 0
        %2909 = vmatpush1.bf16.msra.mxu0 %v2887
        %2910 = vmatprep.subr.bf16.mxu0 0
        %2911 = vmatpush1.bf16.msra.mxu0 %v2888
        %2912 = vmatprep.subr.bf16.mxu0 0
        %2913 = vmatpush1.bf16.msra.mxu0 %v2889
        %2914 = vmatprep.subr.bf16.mxu0 0
        %2915 = vmatpush1.bf16.msra.mxu0 0
        %2916 = vmatprep.subr.bf16.mxu0 0
        %2917 = vmatpush1.bf16.msra.mxu0 0
        %2918 = vmatprep.subr.bf16.mxu0 0
        %2919 = vmatpush1.bf16.msra.mxu0 0
        %2920 = vmatprep.subr.bf16.mxu0 0
        %2921 = vmatpush1.bf16.msra.mxu0 0
        %2922 = vmatprep.subr.bf16.mxu0 0
        %2923 = vmatpush1.bf16.msra.mxu0 0
        %2924 = vmatprep.subr.bf16.mxu0 0
        %2925 = vmatpush1.bf16.msra.mxu0 0
        %2926 = vmatprep.subr.bf16.mxu0 0
        %2927 = vmatpush1.bf16.msra.mxu0 0
        %2928 = vmatprep.subr.bf16.mxu0 0
        %2929 = vmatpush1.bf16.msra.mxu0 0
        %2930 = vmatprep.mubr.bf16.mxu0 0
        %2931 = vmatmul.mubr.bf16.gmra.mrb[0].mxu0 %v2811
        %v2932 = vpop.f32.mrb[0].mxu0
        %v2933 = vadd.f32 %v2848, %v2932
        %v2934 = vpop.f32.mrb[0].mxu0
        %v2935 = vpop.f32.mrb[0].mxu0
        %v2936 = vadd.f32 %v2848, %v2935
        %v2937 = vpop.f32.mrb[0].mxu0
        %2938 = vmatprep.mubr.bf16.mxu0 0
        %2939 = vmatmul.mubr.bf16.gmra.mrb[0].mxu0 %v2812
        %v2940 = vpop.f32.mrb[0].mxu0
        %v2941 = vadd.f32 %v2848, %v2940
        %v2942 = vpop.f32.mrb[0].mxu0
        %v2943 = vpop.f32.mrb[0].mxu0
        %v2944 = vadd.f32 %v2848, %v2943
        %v2945 = vpop.f32.mrb[0].mxu0
        %2946 = vmatprep.mubr.bf16.mxu0 0
        %2947 = vmatmul.mubr.bf16.gmra.mrb[0].mxu0 %v2813
        %v2948 = vpop.f32.mrb[0].mxu0
        %v2949 = vadd.f32 %v2848, %v2948
        %v2950 = vpop.f32.mrb[0].mxu0
        %v2951 = vpop.f32.mrb[0].mxu0
        %v2952 = vadd.f32 %v2848, %v2951
        %v2953 = vpop.f32.mrb[0].mxu0
        %2954 = vmatprep.mubr.bf16.mxu0 0
        %2955 = vmatmul.mubr.bf16.gmra.mrb[0].mxu0 %v2814
        %v2956 = vpop.f32.mrb[0].mxu0
        %v2957 = vadd.f32 %v2848, %v2956
        %v2958 = vpop.f32.mrb[0].mxu0
        %v2959 = vpop.f32.mrb[0].mxu0
        %v2960 = vadd.f32 %v2848, %v2959
        %v2961 = vpop.f32.mrb[0].mxu0
        %2962 = vmatprep.mubr.bf16.mxu0 0
        %2963 = vmatmul.mubr.bf16.gmra.mrb[0].mxu0 %v2815
        %v2964 = vpop.f32.mrb[0].mxu0
        %v2965 = vadd.f32 %v2848, %v2964
        %v2966 = vpop.f32.mrb[0].mxu0
        %v2967 = vpop.f32.mrb[0].mxu0
        %v2968 = vadd.f32 %v2848, %v2967
        %v2969 = vpop.f32.mrb[0].mxu0
        %2970 = vmatprep.mubr.bf16.mxu0 0
        %2971 = vmatmul.mubr.bf16.gmra.mrb[0].mxu0 %v2816
        %v2972 = vpop.f32.mrb[0].mxu0
        %v2973 = vadd.f32 %v2848, %v2972
        %v2974 = vpop.f32.mrb[0].mxu0
        %v2975 = vpop.f32.mrb[0].mxu0
        %v2976 = vadd.f32 %v2848, %v2975
        %v2977 = vpop.f32.mrb[0].mxu0
        %2978 = vmatprep.mubr.bf16.mxu0 0
        %2979 = vmatmul.mubr.bf16.gmra.mrb[0].mxu0 %v2817
        %v2980 = vpop.f32.mrb[0].mxu0
        %v2981 = vadd.f32 %v2848, %v2980
        %v2982 = vpop.f32.mrb[0].mxu0
        %v2983 = vpop.f32.mrb[0].mxu0
        %v2984 = vadd.f32 %v2848, %v2983
        %v2985 = vpop.f32.mrb[0].mxu0
        %2986 = vmatprep.mubr.bf16.mxu0 0
        %2987 = vmatmul.mubr.bf16.gmra.mrb[0].mxu0 %v2818
        %v2988 = vpop.f32.mrb[0].mxu0
        %v2989 = vadd.f32 %v2848, %v2988
        %v2990 = vpop.f32.mrb[0].mxu0
        %v2991 = vpop.f32.mrb[0].mxu0
        %v2992 = vadd.f32 %v2848, %v2991
        %v2993 = vpop.f32.mrb[0].mxu0
        %2994 = vmatprep.mubr.bf16.mxu0 0
        %2995 = vmatmul.mubr.bf16.gmra.mrb[0].mxu0 %v2819
        %v2996 = vpop.f32.mrb[0].mxu0
        %v2997 = vadd.f32 %v2848, %v2996
        %v2998 = vpop.f32.mrb[0].mxu0
        %v2999 = vpop.f32.mrb[0].mxu0
        %v3000 = vadd.f32 %v2848, %v2999
        %v3001 = vpop.f32.mrb[0].mxu0
        %3002 = vmatprep.mubr.bf16.mxu0 0
        %3003 = vmatmul.mubr.bf16.gmra.mrb[0].mxu0 %v2820
        %v3004 = vpop.f32.mrb[0].mxu0
        %v3005 = vadd.f32 %v2848, %v3004
        %v3006 = vpop.f32.mrb[0].mxu0
        %v3007 = vpop.f32.mrb[0].mxu0
        %v3008 = vadd.f32 %v2848, %v3007
        %v3009 = vpop.f32.mrb[0].mxu0
        %3010 = vmatprep.mubr.bf16.mxu0 0
        %3011 = vmatmul.mubr.bf16.gmra.mrb[0].mxu0 %v2821
        %v3012 = vpop.f32.mrb[0].mxu0
        %v3013 = vadd.f32 %v2848, %v3012
        %v3014 = vpop.f32.mrb[0].mxu0
        %v3015 = vpop.f32.mrb[0].mxu0
        %v3016 = vadd.f32 %v2848, %v3015
        %v3017 = vpop.f32.mrb[0].mxu0
        %3018 = vmatprep.mubr.bf16.mxu0 0
        %3019 = vmatmul.mubr.bf16.gmra.mrb[0].mxu0 %v2822
        %v3020 = vpop.f32.mrb[0].mxu0
        %v3021 = vadd.f32 %v2848, %v3020
        %v3022 = vpop.f32.mrb[0].mxu0
        %v3023 = vpop.f32.mrb[0].mxu0
        %v3024 = vadd.f32 %v2848, %v3023
        %v3025 = vpop.f32.mrb[0].mxu0
        %3026 = vmatprep.mubr.bf16.mxu0 0
        %3027 = vmatmul.mubr.bf16.gmra.mrb[0].mxu0 %v2823
        %v3028 = vpop.f32.mrb[0].mxu0
        %v3029 = vadd.f32 %v2848, %v3028
        %v3030 = vpop.f32.mrb[0].mxu0
        %v3031 = vpop.f32.mrb[0].mxu0
        %v3032 = vadd.f32 %v2848, %v3031
        %v3033 = vpop.f32.mrb[0].mxu0
        %3034 = vmatprep.mubr.bf16.mxu0 0
        %3035 = vmatmul.mubr.bf16.gmra.mrb[0].mxu0 %v2824
        %v3036 = vpop.f32.mrb[0].mxu0
        %v3037 = vadd.f32 %v2848, %v3036
        %v3038 = vpop.f32.mrb[0].mxu0
        %v3039 = vpop.f32.mrb[0].mxu0
        %v3040 = vadd.f32 %v2848, %v3039
        %v3041 = vpop.f32.mrb[0].mxu0
        %3042 = vmatprep.mubr.bf16.mxu0 0
        %3043 = vmatmul.mubr.bf16.gmra.mrb[0].mxu0 %v2825
        %v3044 = vpop.f32.mrb[0].mxu0
        %v3045 = vadd.f32 %v2848, %v3044
        %v3046 = vpop.f32.mrb[0].mxu0
        %v3047 = vpop.f32.mrb[0].mxu0
        %v3048 = vadd.f32 %v2848, %v3047
        %v3049 = vpop.f32.mrb[0].mxu0
        %3050 = vmatprep.mubr.bf16.mxu0 0
        %3051 = vmatmul.mubr.bf16.gmra.mrb[0].mxu0 %v2826
        %v3052 = vpop.f32.mrb[0].mxu0
        %v3053 = vadd.f32 %v2848, %v3052
        %v3054 = vpop.f32.mrb[0].mxu0
        %v3055 = vpop.f32.mrb[0].mxu0
        %v3056 = vadd.f32 %v2848, %v3055
        %v3057 = vpop.f32.mrb[0].mxu0
        %3058 = vdwg.mxu0
        %v3059 = vmax.f32 %v2933, 0.0
        %v3060 = vmax.f32 %v2936, 0.0
        %v3061 = vmax.f32 %v2941, 0.0
        %v3062 = vmax.f32 %v2944, 0.0
        %v3063 = vmax.f32 %v2949, 0.0
        %v3064 = vmax.f32 %v2952, 0.0
        %v3065 = vmax.f32 %v2957, 0.0
        %v3066 = vmax.f32 %v2960, 0.0
        %v3067 = vmax.f32 %v2965, 0.0
        %v3068 = vmax.f32 %v2968, 0.0
        %v3069 = vmax.f32 %v2973, 0.0
        %v3070 = vmax.f32 %v2976, 0.0
        %v3071 = vmax.f32 %v2981, 0.0
        %v3072 = vmax.f32 %v2984, 0.0
        %v3073 = vmax.f32 %v2989, 0.0
        %v3074 = vmax.f32 %v2992, 0.0
        %v3075 = vmax.f32 %v2997, 0.0
        %v3076 = vmax.f32 %v3000, 0.0
        %v3077 = vmax.f32 %v3005, 0.0
        %v3078 = vmax.f32 %v3008, 0.0
        %v3079 = vmax.f32 %v3013, 0.0
        %v3080 = vmax.f32 %v3016, 0.0
        %v3081 = vmax.f32 %v3021, 0.0
        %v3082 = vmax.f32 %v3024, 0.0
        %v3083 = vmax.f32 %v3029, 0.0
        %v3084 = vmax.f32 %v3032, 0.0
        %v3085 = vmax.f32 %v3037, 0.0
        %v3086 = vmax.f32 %v3040, 0.0
        %v3087 = vmax.f32 %v3045, 0.0
        %v3088 = vmax.f32 %v3048, 0.0
        %v3089 = vmax.f32 %v3053, 0.0
        %v3090 = vmax.f32 %v3056, 0.0
        %v3091 = vpack.c.bf16 %v3060, %v3059
        %v3092 = vpack.c.bf16 %v3062, %v3061
        %v3093 = vpack.c.bf16 %v3064, %v3063
        %v3094 = vpack.c.bf16 %v3066, %v3065
        %v3095 = vpack.c.bf16 %v3068, %v3067
        %v3096 = vpack.c.bf16 %v3070, %v3069
        %v3097 = vpack.c.bf16 %v3072, %v3071
        %v3098 = vpack.c.bf16 %v3074, %v3073
        %v3099 = vpack.c.bf16 %v3076, %v3075
        %v3100 = vpack.c.bf16 %v3078, %v3077
        %v3101 = vpack.c.bf16 %v3080, %v3079
        %v3102 = vpack.c.bf16 %v3082, %v3081
        %v3103 = vpack.c.bf16 %v3084, %v3083
        %v3104 = vpack.c.bf16 %v3086, %v3085
        %v3105 = vpack.c.bf16 %v3088, %v3087
        %v3106 = vpack.c.bf16 %v3090, %v3089
        %v3107 = vld [vmem:[%s12] sm:$0xff]
        %v3108 = vld [vmem:[%s12 + $0x8] sm:$0xff]
        %v3109 = vld [vmem:[%s12 + $0x10] sm:$0xff]
        %v3110 = vld [vmem:[%s12 + $0x18] sm:$0xff]
        %v3111 = vld [vmem:[%s12 + $0x20] sm:$0xff]
        %v3112 = vld [vmem:[%s12 + $0x28] sm:$0xff]
        %v3113 = vld [vmem:[%s12 + $0x30] sm:$0xff]
        %v3114 = vld [vmem:[%s12 + $0x38] sm:$0xff]
        %v3115 = vld [vmem:[%s12 + $0x40] sm:$0xff]
        %v3116 = vld [vmem:[%s12 + $0x48] sm:$0xff]
        %v3117 = vld [vmem:[%s12 + $0x50] sm:$0xff]
        %v3118 = vld [vmem:[%s12 + $0x58] sm:$0xff]
        %v3119 = vld [vmem:[%s12 + $0x60] sm:$0xff]
        %v3120 = vld [vmem:[%s12 + $0x68] sm:$0xff]
        %v3121 = vld [vmem:[%s12 + $0x70] sm:$0xff]
        %v3122 = vld [vmem:[%s12 + $0x78] sm:$0xff]
        %v3123 = vld [vmem:[%s13] sm:$0x3]
        %v3125 = vlaneseq
        %v3126 = vshrl.u32 %v3125, 7
        %v3127 = vsub.s32 0, %v3126
        %v3128 = vrot.slane %v3123, %v3127
        %v3129 = vlaneseq
        %v3130 = vshrl.u32 %v3129, 7
        %v3131 = vsub.s32 1, %v3130
        %v3132 = vrot.slane %v3123, %v3131
        %v3151 = vunpack.c.l.b16 %v3107
        %v3152 = vunpack.c.h.b16 %v3107
        %v3153 = vunpack.c.l.b16 %v3108
        %v3154 = vunpack.c.h.b16 %v3108
        %v3155 = vunpack.c.l.b16 %v3109
        %v3156 = vunpack.c.h.b16 %v3109
        %v3157 = vunpack.c.l.b16 %v3110
        %v3158 = vunpack.c.h.b16 %v3110
        %v3159 = vunpack.c.l.b16 %v3111
        %v3160 = vunpack.c.h.b16 %v3111
        %v3161 = vunpack.c.l.b16 %v3112
        %v3162 = vunpack.c.h.b16 %v3112
        %v3163 = vunpack.c.l.b16 %v3113
        %v3164 = vunpack.c.h.b16 %v3113
        %v3165 = vunpack.c.l.b16 %v3114
        %v3166 = vunpack.c.h.b16 %v3114
        %v3167 = vunpack.c.l.b16 %v3115
        %v3168 = vunpack.c.h.b16 %v3115
        %v3169 = vunpack.c.l.b16 %v3116
        %v3170 = vunpack.c.h.b16 %v3116
        %v3171 = vunpack.c.l.b16 %v3117
        %v3172 = vunpack.c.h.b16 %v3117
        %v3173 = vunpack.c.l.b16 %v3118
        %v3174 = vunpack.c.h.b16 %v3118
        %v3175 = vunpack.c.l.b16 %v3119
        %v3176 = vunpack.c.h.b16 %v3119
        %v3177 = vunpack.c.l.b16 %v3120
        %v3178 = vunpack.c.h.b16 %v3120
        %v3179 = vunpack.c.l.b16 %v3121
        %v3180 = vunpack.c.h.b16 %v3121
        %v3181 = vunpack.c.l.b16 %v3122
        %v3182 = vunpack.c.h.b16 %v3122
        %v3183 = vpack.c.b16 %v3153, %v3151
        %v3184 = vpack.c.b16 %v3154, %v3152
        %v3185 = vpack.c.b16 %v3157, %v3155
        %v3186 = vpack.c.b16 %v3158, %v3156
        %v3187 = vpack.c.b16 %v3161, %v3159
        %v3188 = vpack.c.b16 %v3162, %v3160
        %v3189 = vpack.c.b16 %v3165, %v3163
        %v3190 = vpack.c.b16 %v3166, %v3164
        %v3191 = vpack.c.b16 %v3169, %v3167
        %v3192 = vpack.c.b16 %v3170, %v3168
        %v3193 = vpack.c.b16 %v3173, %v3171
        %v3194 = vpack.c.b16 %v3174, %v3172
        %v3195 = vpack.c.b16 %v3177, %v3175
        %v3196 = vpack.c.b16 %v3178, %v3176
        %v3197 = vpack.c.b16 %v3181, %v3179
        %v3198 = vpack.c.b16 %v3182, %v3180
        %3215 = vmatprep.subr.bf16.mxu0 %v3184
        %3216 = vmatpush1.bf16.msra.mxu0 %v3183
        %3217 = vmatprep.subr.bf16.mxu0 %v3186
        %3218 = vmatpush1.bf16.msra.mxu0 %v3185
        %3219 = vmatprep.subr.bf16.mxu0 %v3188
        %3220 = vmatpush1.bf16.msra.mxu0 %v3187
        %3221 = vmatprep.subr.bf16.mxu0 %v3190
        %3222 = vmatpush1.bf16.msra.mxu0 %v3189
        %3223 = vmatprep.subr.bf16.mxu0 %v3192
        %3224 = vmatpush1.bf16.msra.mxu0 %v3191
        %3225 = vmatprep.subr.bf16.mxu0 %v3194
        %3226 = vmatpush1.bf16.msra.mxu0 %v3193
        %3227 = vmatprep.subr.bf16.mxu0 %v3196
        %3228 = vmatpush1.bf16.msra.mxu0 %v3195
        %3229 = vmatprep.subr.bf16.mxu0 %v3198
        %3230 = vmatpush1.bf16.msra.mxu0 %v3197
        %3231 = vmatprep.subr.bf16.mxu0 0
        %3232 = vmatpush1.bf16.msra.mxu0 0
        %3233 = vmatprep.subr.bf16.mxu0 0
        %3234 = vmatpush1.bf16.msra.mxu0 0
        %3235 = vmatprep.subr.bf16.mxu0 0
        %3236 = vmatpush1.bf16.msra.mxu0 0
        %3237 = vmatprep.subr.bf16.mxu0 0
        %3238 = vmatpush1.bf16.msra.mxu0 0
        %3239 = vmatprep.subr.bf16.mxu0 0
        %3240 = vmatpush1.bf16.msra.mxu0 0
        %3241 = vmatprep.subr.bf16.mxu0 0
        %3242 = vmatpush1.bf16.msra.mxu0 0
        %3243 = vmatprep.subr.bf16.mxu0 0
        %3244 = vmatpush1.bf16.msra.mxu0 0
        %3245 = vmatprep.subr.bf16.mxu0 0
        %3246 = vmatpush1.bf16.msra.mxu0 0
        %3247 = vmatprep.mubr.bf16.mxu0 0
        %3248 = vmatmul.mubr.bf16.gmra.mrb[0].mxu0 %v3091
        %v3249 = vpop.f32.mrb[0].mxu0
        %v3250 = vadd.f32 %v3128, %v3249
        %v3251 = vpop.f32.mrb[0].mxu0
        %v3252 = vadd.f32 %v3132, %v3251
        %v3253 = vpop.f32.mrb[0].mxu0
        %v3254 = vadd.f32 %v3128, %v3253
        %v3255 = vpop.f32.mrb[0].mxu0
        %v3256 = vadd.f32 %v3132, %v3255
        %3257 = vmatprep.mubr.bf16.mxu0 0
        %3258 = vmatmul.mubr.bf16.gmra.mrb[0].mxu0 %v3092
        %v3259 = vpop.f32.mrb[0].mxu0
        %v3260 = vadd.f32 %v3128, %v3259
        %v3261 = vpop.f32.mrb[0].mxu0
        %v3262 = vadd.f32 %v3132, %v3261
        %v3263 = vpop.f32.mrb[0].mxu0
        %v3264 = vadd.f32 %v3128, %v3263
        %v3265 = vpop.f32.mrb[0].mxu0
        %v3266 = vadd.f32 %v3132, %v3265
        %3267 = vmatprep.mubr.bf16.mxu0 0
        %3268 = vmatmul.mubr.bf16.gmra.mrb[0].mxu0 %v3093
        %v3269 = vpop.f32.mrb[0].mxu0
        %v3270 = vadd.f32 %v3128, %v3269
        %v3271 = vpop.f32.mrb[0].mxu0
        %v3272 = vadd.f32 %v3132, %v3271
        %v3273 = vpop.f32.mrb[0].mxu0
        %v3274 = vadd.f32 %v3128, %v3273
        %v3275 = vpop.f32.mrb[0].mxu0
        %v3276 = vadd.f32 %v3132, %v3275
        %3277 = vmatprep.mubr.bf16.mxu0 0
        %3278 = vmatmul.mubr.bf16.gmra.mrb[0].mxu0 %v3094
        %v3279 = vpop.f32.mrb[0].mxu0
        %v3280 = vadd.f32 %v3128, %v3279
        %v3281 = vpop.f32.mrb[0].mxu0
        %v3282 = vadd.f32 %v3132, %v3281
        %v3283 = vpop.f32.mrb[0].mxu0
        %v3284 = vadd.f32 %v3128, %v3283
        %v3285 = vpop.f32.mrb[0].mxu0
        %v3286 = vadd.f32 %v3132, %v3285
        %3287 = vmatprep.mubr.bf16.mxu0 0
        %3288 = vmatmul.mubr.bf16.gmra.mrb[0].mxu0 %v3095
        %v3289 = vpop.f32.mrb[0].mxu0
        %v3290 = vadd.f32 %v3128, %v3289
        %v3291 = vpop.f32.mrb[0].mxu0
        %v3292 = vadd.f32 %v3132, %v3291
        %v3293 = vpop.f32.mrb[0].mxu0
        %v3294 = vadd.f32 %v3128, %v3293
        %v3295 = vpop.f32.mrb[0].mxu0
        %v3296 = vadd.f32 %v3132, %v3295
        %3297 = vmatprep.mubr.bf16.mxu0 0
        %3298 = vmatmul.mubr.bf16.gmra.mrb[0].mxu0 %v3096
        %v3299 = vpop.f32.mrb[0].mxu0
        %v3300 = vadd.f32 %v3128, %v3299
        %v3301 = vpop.f32.mrb[0].mxu0
        %v3302 = vadd.f32 %v3132, %v3301
        %v3303 = vpop.f32.mrb[0].mxu0
        %v3304 = vadd.f32 %v3128, %v3303
        %v3305 = vpop.f32.mrb[0].mxu0
        %v3306 = vadd.f32 %v3132, %v3305
        %3307 = vmatprep.mubr.bf16.mxu0 0
        %3308 = vmatmul.mubr.bf16.gmra.mrb[0].mxu0 %v3097
        %v3309 = vpop.f32.mrb[0].mxu0
        %v3310 = vadd.f32 %v3128, %v3309
        %v3311 = vpop.f32.mrb[0].mxu0
        %v3312 = vadd.f32 %v3132, %v3311
        %v3313 = vpop.f32.mrb[0].mxu0
        %v3314 = vadd.f32 %v3128, %v3313
        %v3315 = vpop.f32.mrb[0].mxu0
        %v3316 = vadd.f32 %v3132, %v3315
        %3317 = vmatprep.mubr.bf16.mxu0 0
        %3318 = vmatmul.mubr.bf16.gmra.mrb[0].mxu0 %v3098
        %v3319 = vpop.f32.mrb[0].mxu0
        %v3320 = vadd.f32 %v3128, %v3319
        %v3321 = vpop.f32.mrb[0].mxu0
        %v3322 = vadd.f32 %v3132, %v3321
        %v3323 = vpop.f32.mrb[0].mxu0
        %v3324 = vadd.f32 %v3128, %v3323
        %v3325 = vpop.f32.mrb[0].mxu0
        %v3326 = vadd.f32 %v3132, %v3325
        %3327 = vmatprep.mubr.bf16.mxu0 0
        %3328 = vmatmul.mubr.bf16.gmra.mrb[0].mxu0 %v3099
        %v3329 = vpop.f32.mrb[0].mxu0
        %v3330 = vadd.f32 %v3128, %v3329
        %v3331 = vpop.f32.mrb[0].mxu0
        %v3332 = vadd.f32 %v3132, %v3331
        %v3333 = vpop.f32.mrb[0].mxu0
        %v3334 = vadd.f32 %v3128, %v3333
        %v3335 = vpop.f32.mrb[0].mxu0
        %v3336 = vadd.f32 %v3132, %v3335
        %3337 = vmatprep.mubr.bf16.mxu0 0
        %3338 = vmatmul.mubr.bf16.gmra.mrb[0].mxu0 %v3100
        %v3339 = vpop.f32.mrb[0].mxu0
        %v3340 = vadd.f32 %v3128, %v3339
        %v3341 = vpop.f32.mrb[0].mxu0
        %v3342 = vadd.f32 %v3132, %v3341
        %v3343 = vpop.f32.mrb[0].mxu0
        %v3344 = vadd.f32 %v3128, %v3343
        %v3345 = vpop.f32.mrb[0].mxu0
        %v3346 = vadd.f32 %v3132, %v3345
        %3347 = vmatprep.mubr.bf16.mxu0 0
        %3348 = vmatmul.mubr.bf16.gmra.mrb[0].mxu0 %v3101
        %v3349 = vpop.f32.mrb[0].mxu0
        %v3350 = vadd.f32 %v3128, %v3349
        %v3351 = vpop.f32.mrb[0].mxu0
        %v3352 = vadd.f32 %v3132, %v3351
        %v3353 = vpop.f32.mrb[0].mxu0
        %v3354 = vadd.f32 %v3128, %v3353
        %v3355 = vpop.f32.mrb[0].mxu0
        %v3356 = vadd.f32 %v3132, %v3355
        %3357 = vmatprep.mubr.bf16.mxu0 0
        %3358 = vmatmul.mubr.bf16.gmra.mrb[0].mxu0 %v3102
        %v3359 = vpop.f32.mrb[0].mxu0
        %v3360 = vadd.f32 %v3128, %v3359
        %v3361 = vpop.f32.mrb[0].mxu0
        %v3362 = vadd.f32 %v3132, %v3361
        %v3363 = vpop.f32.mrb[0].mxu0
        %v3364 = vadd.f32 %v3128, %v3363
        %v3365 = vpop.f32.mrb[0].mxu0
        %v3366 = vadd.f32 %v3132, %v3365
        %3367 = vmatprep.mubr.bf16.mxu0 0
        %3368 = vmatmul.mubr.bf16.gmra.mrb[0].mxu0 %v3103
        %v3369 = vpop.f32.mrb[0].mxu0
        %v3370 = vadd.f32 %v3128, %v3369
        %v3371 = vpop.f32.mrb[0].mxu0
        %v3372 = vadd.f32 %v3132, %v3371
        %v3373 = vpop.f32.mrb[0].mxu0
        %v3374 = vadd.f32 %v3128, %v3373
        %v3375 = vpop.f32.mrb[0].mxu0
        %v3376 = vadd.f32 %v3132, %v3375
        %3377 = vmatprep.mubr.bf16.mxu0 0
        %3378 = vmatmul.mubr.bf16.gmra.mrb[0].mxu0 %v3104
        %v3379 = vpop.f32.mrb[0].mxu0
        %v3380 = vadd.f32 %v3128, %v3379
        %v3381 = vpop.f32.mrb[0].mxu0
        %v3382 = vadd.f32 %v3132, %v3381
        %v3383 = vpop.f32.mrb[0].mxu0
        %v3384 = vadd.f32 %v3128, %v3383
        %v3385 = vpop.f32.mrb[0].mxu0
        %v3386 = vadd.f32 %v3132, %v3385
        %3387 = vmatprep.mubr.bf16.mxu0 0
        %3388 = vmatmul.mubr.bf16.gmra.mrb[0].mxu0 %v3105
        %v3389 = vpop.f32.mrb[0].mxu0
        %v3390 = vadd.f32 %v3128, %v3389
        %v3391 = vpop.f32.mrb[0].mxu0
        %v3392 = vadd.f32 %v3132, %v3391
        %v3393 = vpop.f32.mrb[0].mxu0
        %v3394 = vadd.f32 %v3128, %v3393
        %v3395 = vpop.f32.mrb[0].mxu0
        %v3396 = vadd.f32 %v3132, %v3395
        %3397 = vmatprep.mubr.bf16.mxu0 0
        %3398 = vmatmul.mubr.bf16.gmra.mrb[0].mxu0 %v3106
        %v3399 = vpop.f32.mrb[0].mxu0
        %v3400 = vadd.f32 %v3128, %v3399
        %v3401 = vpop.f32.mrb[0].mxu0
        %v3402 = vadd.f32 %v3132, %v3401
        %v3403 = vpop.f32.mrb[0].mxu0
        %v3404 = vadd.f32 %v3128, %v3403
        %v3405 = vpop.f32.mrb[0].mxu0
        %v3406 = vadd.f32 %v3132, %v3405
        %3407 = vdwg.mxu0
        %v3408 = vsub.f32 0.0, %v3250
        %v3409 = vsub.f32 0.0, %v3252
        %v3410 = vsub.f32 0.0, %v3254
        %v3411 = vsub.f32 0.0, %v3256
        %v3412 = vsub.f32 0.0, %v3260
        %v3413 = vsub.f32 0.0, %v3262
        %v3414 = vsub.f32 0.0, %v3264
        %v3415 = vsub.f32 0.0, %v3266
        %v3416 = vsub.f32 0.0, %v3270
        %v3417 = vsub.f32 0.0, %v3272
        %v3418 = vsub.f32 0.0, %v3274
        %v3419 = vsub.f32 0.0, %v3276
        %v3420 = vsub.f32 0.0, %v3280
        %v3421 = vsub.f32 0.0, %v3282
        %v3422 = vsub.f32 0.0, %v3284
        %v3423 = vsub.f32 0.0, %v3286
        %v3424 = vsub.f32 0.0, %v3290
        %v3425 = vsub.f32 0.0, %v3292
        %v3426 = vsub.f32 0.0, %v3294
        %v3427 = vsub.f32 0.0, %v3296
        %v3428 = vsub.f32 0.0, %v3300
        %v3429 = vsub.f32 0.0, %v3302
        %v3430 = vsub.f32 0.0, %v3304
        %v3431 = vsub.f32 0.0, %v3306
        %v3432 = vsub.f32 0.0, %v3310
        %v3433 = vsub.f32 0.0, %v3312
        %v3434 = vsub.f32 0.0, %v3314
        %v3435 = vsub.f32 0.0, %v3316
        %v3436 = vsub.f32 0.0, %v3320
        %v3437 = vsub.f32 0.0, %v3322
        %v3438 = vsub.f32 0.0, %v3324
        %v3439 = vsub.f32 0.0, %v3326
        %v3440 = vsub.f32 0.0, %v3330
        %v3441 = vsub.f32 0.0, %v3332
        %v3442 = vsub.f32 0.0, %v3334
        %v3443 = vsub.f32 0.0, %v3336
        %v3444 = vsub.f32 0.0, %v3340
        %v3445 = vsub.f32 0.0, %v3342
        %v3446 = vsub.f32 0.0, %v3344
        %v3447 = vsub.f32 0.0, %v3346
        %v3448 = vsub.f32 0.0, %v3350
        %v3449 = vsub.f32 0.0, %v3352
        %v3450 = vsub.f32 0.0, %v3354
        %v3451 = vsub.f32 0.0, %v3356
        %v3452 = vsub.f32 0.0, %v3360
        %v3453 = vsub.f32 0.0, %v3362
        %v3454 = vsub.f32 0.0, %v3364
        %v3455 = vsub.f32 0.0, %v3366
        %v3456 = vsub.f32 0.0, %v3370
        %v3457 = vsub.f32 0.0, %v3372
        %v3458 = vsub.f32 0.0, %v3374
        %v3459 = vsub.f32 0.0, %v3376
        %v3460 = vsub.f32 0.0, %v3380
        %v3461 = vsub.f32 0.0, %v3382
        %v3462 = vsub.f32 0.0, %v3384
        %v3463 = vsub.f32 0.0, %v3386
        %v3464 = vsub.f32 0.0, %v3390
        %v3465 = vsub.f32 0.0, %v3392
        %v3466 = vsub.f32 0.0, %v3394
        %v3467 = vsub.f32 0.0, %v3396
        %v3468 = vsub.f32 0.0, %v3400
        %v3469 = vsub.f32 0.0, %v3402
        %v3470 = vsub.f32 0.0, %v3404
        %v3471 = vsub.f32 0.0, %v3406
        %v3472 = vmul.f32 %v3408, 1.442695
        %v3473 = vpow.pop %v3472
        %v3474 = vmul.f32 %v3409, 1.442695
        %v3475 = vpow.pop %v3474
        %v3476 = vmul.f32 %v3410, 1.442695
        %v3477 = vpow.pop %v3476
        %v3478 = vmul.f32 %v3411, 1.442695
        %v3479 = vpow.pop %v3478
        %v3480 = vmul.f32 %v3412, 1.442695
        %v3481 = vpow.pop %v3480
        %v3482 = vmul.f32 %v3413, 1.442695
        %v3483 = vpow.pop %v3482
        %v3484 = vmul.f32 %v3414, 1.442695
        %v3485 = vpow.pop %v3484
        %v3486 = vmul.f32 %v3415, 1.442695
        %v3487 = vpow.pop %v3486
        %v3488 = vmul.f32 %v3416, 1.442695
        %v3489 = vpow.pop %v3488
        %v3490 = vmul.f32 %v3417, 1.442695
        %v3491 = vpow.pop %v3490
        %v3492 = vmul.f32 %v3418, 1.442695
        %v3493 = vpow.pop %v3492
        %v3494 = vmul.f32 %v3419, 1.442695
        %v3495 = vpow.pop %v3494
        %v3496 = vmul.f32 %v3420, 1.442695
        %v3497 = vpow.pop %v3496
        %v3498 = vmul.f32 %v3421, 1.442695
        %v3499 = vpow.pop %v3498
        %v3500 = vmul.f32 %v3422, 1.442695
        %v3501 = vpow.pop %v3500
        %v3502 = vmul.f32 %v3423, 1.442695
        %v3503 = vpow.pop %v3502
        %v3504 = vmul.f32 %v3424, 1.442695
        %v3505 = vpow.pop %v3504
        %v3506 = vmul.f32 %v3425, 1.442695
        %v3507 = vpow.pop %v3506
        %v3508 = vmul.f32 %v3426, 1.442695
        %v3509 = vpow.pop %v3508
        %v3510 = vmul.f32 %v3427, 1.442695
        %v3511 = vpow.pop %v3510
        %v3512 = vmul.f32 %v3428, 1.442695
        %v3513 = vpow.pop %v3512
        %v3514 = vmul.f32 %v3429, 1.442695
        %v3515 = vpow.pop %v3514
        %v3516 = vmul.f32 %v3430, 1.442695
        %v3517 = vpow.pop %v3516
        %v3518 = vmul.f32 %v3431, 1.442695
        %v3519 = vpow.pop %v3518
        %v3520 = vmul.f32 %v3432, 1.442695
        %v3521 = vpow.pop %v3520
        %v3522 = vmul.f32 %v3433, 1.442695
        %v3523 = vpow.pop %v3522
        %v3524 = vmul.f32 %v3434, 1.442695
        %v3525 = vpow.pop %v3524
        %v3526 = vmul.f32 %v3435, 1.442695
        %v3527 = vpow.pop %v3526
        %v3528 = vmul.f32 %v3436, 1.442695
        %v3529 = vpow.pop %v3528
        %v3530 = vmul.f32 %v3437, 1.442695
        %v3531 = vpow.pop %v3530
        %v3532 = vmul.f32 %v3438, 1.442695
        %v3533 = vpow.pop %v3532
        %v3534 = vmul.f32 %v3439, 1.442695
        %v3535 = vpow.pop %v3534
        %v3536 = vmul.f32 %v3440, 1.442695
        %v3537 = vpow.pop %v3536
        %v3538 = vmul.f32 %v3441, 1.442695
        %v3539 = vpow.pop %v3538
        %v3540 = vmul.f32 %v3442, 1.442695
        %v3541 = vpow.pop %v3540
        %v3542 = vmul.f32 %v3443, 1.442695
        %v3543 = vpow.pop %v3542
        %v3544 = vmul.f32 %v3444, 1.442695
        %v3545 = vpow.pop %v3544
        %v3546 = vmul.f32 %v3445, 1.442695
        %v3547 = vpow.pop %v3546
        %v3548 = vmul.f32 %v3446, 1.442695
        %v3549 = vpow.pop %v3548
        %v3550 = vmul.f32 %v3447, 1.442695
        %v3551 = vpow.pop %v3550
        %v3552 = vmul.f32 %v3448, 1.442695
        %v3553 = vpow.pop %v3552
        %v3554 = vmul.f32 %v3449, 1.442695
        %v3555 = vpow.pop %v3554
        %v3556 = vmul.f32 %v3450, 1.442695
        %v3557 = vpow.pop %v3556
        %v3558 = vmul.f32 %v3451, 1.442695
        %v3559 = vpow.pop %v3558
        %v3560 = vmul.f32 %v3452, 1.442695
        %v3561 = vpow.pop %v3560
        %v3562 = vmul.f32 %v3453, 1.442695
        %v3563 = vpow.pop %v3562
        %v3564 = vmul.f32 %v3454, 1.442695
        %v3565 = vpow.pop %v3564
        %v3566 = vmul.f32 %v3455, 1.442695
        %v3567 = vpow.pop %v3566
        %v3568 = vmul.f32 %v3456, 1.442695
        %v3569 = vpow.pop %v3568
        %v3570 = vmul.f32 %v3457, 1.442695
        %v3571 = vpow.pop %v3570
        %v3572 = vmul.f32 %v3458, 1.442695
        %v3573 = vpow.pop %v3572
        %v3574 = vmul.f32 %v3459, 1.442695
        %v3575 = vpow.pop %v3574
        %v3576 = vmul.f32 %v3460, 1.442695
        %v3577 = vpow.pop %v3576
        %v3578 = vmul.f32 %v3461, 1.442695
        %v3579 = vpow.pop %v3578
        %v3580 = vmul.f32 %v3462, 1.442695
        %v3581 = vpow.pop %v3580
        %v3582 = vmul.f32 %v3463, 1.442695
        %v3583 = vpow.pop %v3582
        %v3584 = vmul.f32 %v3464, 1.442695
        %v3585 = vpow.pop %v3584
        %v3586 = vmul.f32 %v3465, 1.442695
        %v3587 = vpow.pop %v3586
        %v3588 = vmul.f32 %v3466, 1.442695
        %v3589 = vpow.pop %v3588
        %v3590 = vmul.f32 %v3467, 1.442695
        %v3591 = vpow.pop %v3590
        %v3592 = vmul.f32 %v3468, 1.442695
        %v3593 = vpow.pop %v3592
        %v3594 = vmul.f32 %v3469, 1.442695
        %v3595 = vpow.pop %v3594
        %v3596 = vmul.f32 %v3470, 1.442695
        %v3597 = vpow.pop %v3596
        %v3598 = vmul.f32 %v3471, 1.442695
        %v3599 = vpow.pop %v3598
        %v3600 = vadd.f32 %v3473, 1.0
        %v3601 = vadd.f32 %v3475, 1.0
        %v3602 = vadd.f32 %v3477, 1.0
        %v3603 = vadd.f32 %v3479, 1.0
        %v3604 = vadd.f32 %v3481, 1.0
        %v3605 = vadd.f32 %v3483, 1.0
        %v3606 = vadd.f32 %v3485, 1.0
        %v3607 = vadd.f32 %v3487, 1.0
        %v3608 = vadd.f32 %v3489, 1.0
        %v3609 = vadd.f32 %v3491, 1.0
        %v3610 = vadd.f32 %v3493, 1.0
        %v3611 = vadd.f32 %v3495, 1.0
        %v3612 = vadd.f32 %v3497, 1.0
        %v3613 = vadd.f32 %v3499, 1.0
        %v3614 = vadd.f32 %v3501, 1.0
        %v3615 = vadd.f32 %v3503, 1.0
        %v3616 = vadd.f32 %v3505, 1.0
        %v3617 = vadd.f32 %v3507, 1.0
        %v3618 = vadd.f32 %v3509, 1.0
        %v3619 = vadd.f32 %v3511, 1.0
        %v3620 = vadd.f32 %v3513, 1.0
        %v3621 = vadd.f32 %v3515, 1.0
        %v3622 = vadd.f32 %v3517, 1.0
        %v3623 = vadd.f32 %v3519, 1.0
        %v3624 = vadd.f32 %v3521, 1.0
        %v3625 = vadd.f32 %v3523, 1.0
        %v3626 = vadd.f32 %v3525, 1.0
        %v3627 = vadd.f32 %v3527, 1.0
        %v3628 = vadd.f32 %v3529, 1.0
        %v3629 = vadd.f32 %v3531, 1.0
        %v3630 = vadd.f32 %v3533, 1.0
        %v3631 = vadd.f32 %v3535, 1.0
        %v3632 = vadd.f32 %v3537, 1.0
        %v3633 = vadd.f32 %v3539, 1.0
        %v3634 = vadd.f32 %v3541, 1.0
        %v3635 = vadd.f32 %v3543, 1.0
        %v3636 = vadd.f32 %v3545, 1.0
        %v3637 = vadd.f32 %v3547, 1.0
        %v3638 = vadd.f32 %v3549, 1.0
        %v3639 = vadd.f32 %v3551, 1.0
        %v3640 = vadd.f32 %v3553, 1.0
        %v3641 = vadd.f32 %v3555, 1.0
        %v3642 = vadd.f32 %v3557, 1.0
        %v3643 = vadd.f32 %v3559, 1.0
        %v3644 = vadd.f32 %v3561, 1.0
        %v3645 = vadd.f32 %v3563, 1.0
        %v3646 = vadd.f32 %v3565, 1.0
        %v3647 = vadd.f32 %v3567, 1.0
        %v3648 = vadd.f32 %v3569, 1.0
        %v3649 = vadd.f32 %v3571, 1.0
        %v3650 = vadd.f32 %v3573, 1.0
        %v3651 = vadd.f32 %v3575, 1.0
        %v3652 = vadd.f32 %v3577, 1.0
        %v3653 = vadd.f32 %v3579, 1.0
        %v3654 = vadd.f32 %v3581, 1.0
        %v3655 = vadd.f32 %v3583, 1.0
        %v3656 = vadd.f32 %v3585, 1.0
        %v3657 = vadd.f32 %v3587, 1.0
        %v3658 = vadd.f32 %v3589, 1.0
        %v3659 = vadd.f32 %v3591, 1.0
        %v3660 = vadd.f32 %v3593, 1.0
        %v3661 = vadd.f32 %v3595, 1.0
        %v3662 = vadd.f32 %v3597, 1.0
        %v3663 = vadd.f32 %v3599, 1.0
        %v3664 = vrcp.pop %v3600
        %v3665 = vrcp.pop %v3601
        %v3666 = vrcp.pop %v3602
        %v3667 = vrcp.pop %v3603
        %v3668 = vrcp.pop %v3604
        %v3669 = vrcp.pop %v3605
        %v3670 = vrcp.pop %v3606
        %v3671 = vrcp.pop %v3607
        %v3672 = vrcp.pop %v3608
        %v3673 = vrcp.pop %v3609
        %v3674 = vrcp.pop %v3610
        %v3675 = vrcp.pop %v3611
        %v3676 = vrcp.pop %v3612
        %v3677 = vrcp.pop %v3613
        %v3678 = vrcp.pop %v3614
        %v3679 = vrcp.pop %v3615
        %v3680 = vrcp.pop %v3616
        %v3681 = vrcp.pop %v3617
        %v3682 = vrcp.pop %v3618
        %v3683 = vrcp.pop %v3619
        %v3684 = vrcp.pop %v3620
        %v3685 = vrcp.pop %v3621
        %v3686 = vrcp.pop %v3622
        %v3687 = vrcp.pop %v3623
        %v3688 = vrcp.pop %v3624
        %v3689 = vrcp.pop %v3625
        %v3690 = vrcp.pop %v3626
        %v3691 = vrcp.pop %v3627
        %v3692 = vrcp.pop %v3628
        %v3693 = vrcp.pop %v3629
        %v3694 = vrcp.pop %v3630
        %v3695 = vrcp.pop %v3631
        %v3696 = vrcp.pop %v3632
        %v3697 = vrcp.pop %v3633
        %v3698 = vrcp.pop %v3634
        %v3699 = vrcp.pop %v3635
        %v3700 = vrcp.pop %v3636
        %v3701 = vrcp.pop %v3637
        %v3702 = vrcp.pop %v3638
        %v3703 = vrcp.pop %v3639
        %v3704 = vrcp.pop %v3640
        %v3705 = vrcp.pop %v3641
        %v3706 = vrcp.pop %v3642
        %v3707 = vrcp.pop %v3643
        %v3708 = vrcp.pop %v3644
        %v3709 = vrcp.pop %v3645
        %v3710 = vrcp.pop %v3646
        %v3711 = vrcp.pop %v3647
        %v3712 = vrcp.pop %v3648
        %v3713 = vrcp.pop %v3649
        %v3714 = vrcp.pop %v3650
        %v3715 = vrcp.pop %v3651
        %v3716 = vrcp.pop %v3652
        %v3717 = vrcp.pop %v3653
        %v3718 = vrcp.pop %v3654
        %v3719 = vrcp.pop %v3655
        %v3720 = vrcp.pop %v3656
        %v3721 = vrcp.pop %v3657
        %v3722 = vrcp.pop %v3658
        %v3723 = vrcp.pop %v3659
        %v3724 = vrcp.pop %v3660
        %v3725 = vrcp.pop %v3661
        %v3726 = vrcp.pop %v3662
        %v3727 = vrcp.pop %v3663
        %v3728 = vmax.f32 %v3664, 0.0
        %v3729 = vmax.f32 %v3665, 0.0
        %v3730 = vmax.f32 %v3666, 0.0
        %v3731 = vmax.f32 %v3667, 0.0
        %v3732 = vmax.f32 %v3668, 0.0
        %v3733 = vmax.f32 %v3669, 0.0
        %v3734 = vmax.f32 %v3670, 0.0
        %v3735 = vmax.f32 %v3671, 0.0
        %v3736 = vmax.f32 %v3672, 0.0
        %v3737 = vmax.f32 %v3673, 0.0
        %v3738 = vmax.f32 %v3674, 0.0
        %v3739 = vmax.f32 %v3675, 0.0
        %v3740 = vmax.f32 %v3676, 0.0
        %v3741 = vmax.f32 %v3677, 0.0
        %v3742 = vmax.f32 %v3678, 0.0
        %v3743 = vmax.f32 %v3679, 0.0
        %v3744 = vmax.f32 %v3680, 0.0
        %v3745 = vmax.f32 %v3681, 0.0
        %v3746 = vmax.f32 %v3682, 0.0
        %v3747 = vmax.f32 %v3683, 0.0
        %v3748 = vmax.f32 %v3684, 0.0
        %v3749 = vmax.f32 %v3685, 0.0
        %v3750 = vmax.f32 %v3686, 0.0
        %v3751 = vmax.f32 %v3687, 0.0
        %v3752 = vmax.f32 %v3688, 0.0
        %v3753 = vmax.f32 %v3689, 0.0
        %v3754 = vmax.f32 %v3690, 0.0
        %v3755 = vmax.f32 %v3691, 0.0
        %v3756 = vmax.f32 %v3692, 0.0
        %v3757 = vmax.f32 %v3693, 0.0
        %v3758 = vmax.f32 %v3694, 0.0
        %v3759 = vmax.f32 %v3695, 0.0
        %v3760 = vmax.f32 %v3696, 0.0
        %v3761 = vmax.f32 %v3697, 0.0
        %v3762 = vmax.f32 %v3698, 0.0
        %v3763 = vmax.f32 %v3699, 0.0
        %v3764 = vmax.f32 %v3700, 0.0
        %v3765 = vmax.f32 %v3701, 0.0
        %v3766 = vmax.f32 %v3702, 0.0
        %v3767 = vmax.f32 %v3703, 0.0
        %v3768 = vmax.f32 %v3704, 0.0
        %v3769 = vmax.f32 %v3705, 0.0
        %v3770 = vmax.f32 %v3706, 0.0
        %v3771 = vmax.f32 %v3707, 0.0
        %v3772 = vmax.f32 %v3708, 0.0
        %v3773 = vmax.f32 %v3709, 0.0
        %v3774 = vmax.f32 %v3710, 0.0
        %v3775 = vmax.f32 %v3711, 0.0
        %v3776 = vmax.f32 %v3712, 0.0
        %v3777 = vmax.f32 %v3713, 0.0
        %v3778 = vmax.f32 %v3714, 0.0
        %v3779 = vmax.f32 %v3715, 0.0
        %v3780 = vmax.f32 %v3716, 0.0
        %v3781 = vmax.f32 %v3717, 0.0
        %v3782 = vmax.f32 %v3718, 0.0
        %v3783 = vmax.f32 %v3719, 0.0
        %v3784 = vmax.f32 %v3720, 0.0
        %v3785 = vmax.f32 %v3721, 0.0
        %v3786 = vmax.f32 %v3722, 0.0
        %v3787 = vmax.f32 %v3723, 0.0
        %v3788 = vmax.f32 %v3724, 0.0
        %v3789 = vmax.f32 %v3725, 0.0
        %v3790 = vmax.f32 %v3726, 0.0
        %v3791 = vmax.f32 %v3727, 0.0
        %v3792 = vmin.f32 %v3728, 1.0
        %v3793 = vmin.f32 %v3729, 1.0
        %v3794 = vmin.f32 %v3730, 1.0
        %v3795 = vmin.f32 %v3731, 1.0
        %v3796 = vmin.f32 %v3732, 1.0
        %v3797 = vmin.f32 %v3733, 1.0
        %v3798 = vmin.f32 %v3734, 1.0
        %v3799 = vmin.f32 %v3735, 1.0
        %v3800 = vmin.f32 %v3736, 1.0
        %v3801 = vmin.f32 %v3737, 1.0
        %v3802 = vmin.f32 %v3738, 1.0
        %v3803 = vmin.f32 %v3739, 1.0
        %v3804 = vmin.f32 %v3740, 1.0
        %v3805 = vmin.f32 %v3741, 1.0
        %v3806 = vmin.f32 %v3742, 1.0
        %v3807 = vmin.f32 %v3743, 1.0
        %v3808 = vmin.f32 %v3744, 1.0
        %v3809 = vmin.f32 %v3745, 1.0
        %v3810 = vmin.f32 %v3746, 1.0
        %v3811 = vmin.f32 %v3747, 1.0
        %v3812 = vmin.f32 %v3748, 1.0
        %v3813 = vmin.f32 %v3749, 1.0
        %v3814 = vmin.f32 %v3750, 1.0
        %v3815 = vmin.f32 %v3751, 1.0
        %v3816 = vmin.f32 %v3752, 1.0
        %v3817 = vmin.f32 %v3753, 1.0
        %v3818 = vmin.f32 %v3754, 1.0
        %v3819 = vmin.f32 %v3755, 1.0
        %v3820 = vmin.f32 %v3756, 1.0
        %v3821 = vmin.f32 %v3757, 1.0
        %v3822 = vmin.f32 %v3758, 1.0
        %v3823 = vmin.f32 %v3759, 1.0
        %v3824 = vmin.f32 %v3760, 1.0
        %v3825 = vmin.f32 %v3761, 1.0
        %v3826 = vmin.f32 %v3762, 1.0
        %v3827 = vmin.f32 %v3763, 1.0
        %v3828 = vmin.f32 %v3764, 1.0
        %v3829 = vmin.f32 %v3765, 1.0
        %v3830 = vmin.f32 %v3766, 1.0
        %v3831 = vmin.f32 %v3767, 1.0
        %v3832 = vmin.f32 %v3768, 1.0
        %v3833 = vmin.f32 %v3769, 1.0
        %v3834 = vmin.f32 %v3770, 1.0
        %v3835 = vmin.f32 %v3771, 1.0
        %v3836 = vmin.f32 %v3772, 1.0
        %v3837 = vmin.f32 %v3773, 1.0
        %v3838 = vmin.f32 %v3774, 1.0
        %v3839 = vmin.f32 %v3775, 1.0
        %v3840 = vmin.f32 %v3776, 1.0
        %v3841 = vmin.f32 %v3777, 1.0
        %v3842 = vmin.f32 %v3778, 1.0
        %v3843 = vmin.f32 %v3779, 1.0
        %v3844 = vmin.f32 %v3780, 1.0
        %v3845 = vmin.f32 %v3781, 1.0
        %v3846 = vmin.f32 %v3782, 1.0
        %v3847 = vmin.f32 %v3783, 1.0
        %v3848 = vmin.f32 %v3784, 1.0
        %v3849 = vmin.f32 %v3785, 1.0
        %v3850 = vmin.f32 %v3786, 1.0
        %v3851 = vmin.f32 %v3787, 1.0
        %v3852 = vmin.f32 %v3788, 1.0
        %v3853 = vmin.f32 %v3789, 1.0
        %v3854 = vmin.f32 %v3790, 1.0
        %v3855 = vmin.f32 %v3791, 1.0
        %v3856 = vpack.c.bf16 %v3794, %v3792
        %v3857 = vpack.c.bf16 %v3795, %v3793
        %v3858 = vpack.c.bf16 %v3798, %v3796
        %v3859 = vpack.c.bf16 %v3799, %v3797
        %v3860 = vpack.c.bf16 %v3802, %v3800
        %v3861 = vpack.c.bf16 %v3803, %v3801
        %v3862 = vpack.c.bf16 %v3806, %v3804
        %v3863 = vpack.c.bf16 %v3807, %v3805
        %v3864 = vpack.c.bf16 %v3810, %v3808
        %v3865 = vpack.c.bf16 %v3811, %v3809
        %v3866 = vpack.c.bf16 %v3814, %v3812
        %v3867 = vpack.c.bf16 %v3815, %v3813
        %v3868 = vpack.c.bf16 %v3818, %v3816
        %v3869 = vpack.c.bf16 %v3819, %v3817
        %v3870 = vpack.c.bf16 %v3822, %v3820
        %v3871 = vpack.c.bf16 %v3823, %v3821
        %v3872 = vpack.c.bf16 %v3826, %v3824
        %v3873 = vpack.c.bf16 %v3827, %v3825
        %v3874 = vpack.c.bf16 %v3830, %v3828
        %v3875 = vpack.c.bf16 %v3831, %v3829
        %v3876 = vpack.c.bf16 %v3834, %v3832
        %v3877 = vpack.c.bf16 %v3835, %v3833
        %v3878 = vpack.c.bf16 %v3838, %v3836
        %v3879 = vpack.c.bf16 %v3839, %v3837
        %v3880 = vpack.c.bf16 %v3842, %v3840
        %v3881 = vpack.c.bf16 %v3843, %v3841
        %v3882 = vpack.c.bf16 %v3846, %v3844
        %v3883 = vpack.c.bf16 %v3847, %v3845
        %v3884 = vpack.c.bf16 %v3850, %v3848
        %v3885 = vpack.c.bf16 %v3851, %v3849
        %v3886 = vpack.c.bf16 %v3854, %v3852
        %v3887 = vpack.c.bf16 %v3855, %v3853
        %v3920 = vunpack.c.l.b16 %v3856
        %v3921 = vunpack.c.l.b16 %v3857
        %v3922 = vunpack.c.h.b16 %v3856
        %v3923 = vunpack.c.h.b16 %v3857
        %v3924 = vunpack.c.l.b16 %v3858
        %v3925 = vunpack.c.l.b16 %v3859
        %v3926 = vunpack.c.h.b16 %v3858
        %v3927 = vunpack.c.h.b16 %v3859
        %v3928 = vunpack.c.l.b16 %v3860
        %v3929 = vunpack.c.l.b16 %v3861
        %v3930 = vunpack.c.h.b16 %v3860
        %v3931 = vunpack.c.h.b16 %v3861
        %v3932 = vunpack.c.l.b16 %v3862
        %v3933 = vunpack.c.l.b16 %v3863
        %v3934 = vunpack.c.h.b16 %v3862
        %v3935 = vunpack.c.h.b16 %v3863
        %v3936 = vunpack.c.l.b16 %v3864
        %v3937 = vunpack.c.l.b16 %v3865
        %v3938 = vunpack.c.h.b16 %v3864
        %v3939 = vunpack.c.h.b16 %v3865
        %v3940 = vunpack.c.l.b16 %v3866
        %v3941 = vunpack.c.l.b16 %v3867
        %v3942 = vunpack.c.h.b16 %v3866
        %v3943 = vunpack.c.h.b16 %v3867
        %v3944 = vunpack.c.l.b16 %v3868
        %v3945 = vunpack.c.l.b16 %v3869
        %v3946 = vunpack.c.h.b16 %v3868
        %v3947 = vunpack.c.h.b16 %v3869
        %v3948 = vunpack.c.l.b16 %v3870
        %v3949 = vunpack.c.l.b16 %v3871
        %v3950 = vunpack.c.h.b16 %v3870
        %v3951 = vunpack.c.h.b16 %v3871
        %v3952 = vunpack.c.l.b16 %v3872
        %v3953 = vunpack.c.l.b16 %v3873
        %v3954 = vunpack.c.h.b16 %v3872
        %v3955 = vunpack.c.h.b16 %v3873
        %v3956 = vunpack.c.l.b16 %v3874
        %v3957 = vunpack.c.l.b16 %v3875
        %v3958 = vunpack.c.h.b16 %v3874
        %v3959 = vunpack.c.h.b16 %v3875
        %v3960 = vunpack.c.l.b16 %v3876
        %v3961 = vunpack.c.l.b16 %v3877
        %v3962 = vunpack.c.h.b16 %v3876
        %v3963 = vunpack.c.h.b16 %v3877
        %v3964 = vunpack.c.l.b16 %v3878
        %v3965 = vunpack.c.l.b16 %v3879
        %v3966 = vunpack.c.h.b16 %v3878
        %v3967 = vunpack.c.h.b16 %v3879
        %v3968 = vunpack.c.l.b16 %v3880
        %v3969 = vunpack.c.l.b16 %v3881
        %v3970 = vunpack.c.h.b16 %v3880
        %v3971 = vunpack.c.h.b16 %v3881
        %v3972 = vunpack.c.l.b16 %v3882
        %v3973 = vunpack.c.l.b16 %v3883
        %v3974 = vunpack.c.h.b16 %v3882
        %v3975 = vunpack.c.h.b16 %v3883
        %v3976 = vunpack.c.l.b16 %v3884
        %v3977 = vunpack.c.l.b16 %v3885
        %v3978 = vunpack.c.h.b16 %v3884
        %v3979 = vunpack.c.h.b16 %v3885
        %v3980 = vunpack.c.l.b16 %v3886
        %v3981 = vunpack.c.l.b16 %v3887
        %v3982 = vunpack.c.h.b16 %v3886
        %v3983 = vunpack.c.h.b16 %v3887
        %v3984 = vpack.c.b16 %v3921, %v3920
        %v3985 = vpack.c.b16 %v3923, %v3922
        %v3986 = vpack.c.b16 %v3925, %v3924
        %v3987 = vpack.c.b16 %v3927, %v3926
        %v3988 = vpack.c.b16 %v3929, %v3928
        %v3989 = vpack.c.b16 %v3931, %v3930
        %v3990 = vpack.c.b16 %v3933, %v3932
        %v3991 = vpack.c.b16 %v3935, %v3934
        %v3992 = vpack.c.b16 %v3937, %v3936
        %v3993 = vpack.c.b16 %v3939, %v3938
        %v3994 = vpack.c.b16 %v3941, %v3940
        %v3995 = vpack.c.b16 %v3943, %v3942
        %v3996 = vpack.c.b16 %v3945, %v3944
        %v3997 = vpack.c.b16 %v3947, %v3946
        %v3998 = vpack.c.b16 %v3949, %v3948
        %v3999 = vpack.c.b16 %v3951, %v3950
        %v4000 = vpack.c.b16 %v3953, %v3952
        %v4001 = vpack.c.b16 %v3955, %v3954
        %v4002 = vpack.c.b16 %v3957, %v3956
        %v4003 = vpack.c.b16 %v3959, %v3958
        %v4004 = vpack.c.b16 %v3961, %v3960
        %v4005 = vpack.c.b16 %v3963, %v3962
        %v4006 = vpack.c.b16 %v3965, %v3964
        %v4007 = vpack.c.b16 %v3967, %v3966
        %v4008 = vpack.c.b16 %v3969, %v3968
        %v4009 = vpack.c.b16 %v3971, %v3970
        %v4010 = vpack.c.b16 %v3973, %v3972
        %v4011 = vpack.c.b16 %v3975, %v3974
        %v4012 = vpack.c.b16 %v3977, %v3976
        %v4013 = vpack.c.b16 %v3979, %v3978
        %v4014 = vpack.c.b16 %v3981, %v3980
        %v4015 = vpack.c.b16 %v3983, %v3982
        %4048 = vst [vmem:[%s551] sm:$0xff] %v3984
        %4049 = vst [vmem:[%s551 + $0x8] sm:$0xff] %v3985
        %4050 = vst [vmem:[%s551 + $0x10] sm:$0xff] %v3986
        %4051 = vst [vmem:[%s551 + $0x18] sm:$0xff] %v3987
        %4052 = vst [vmem:[%s551 + $0x20] sm:$0xff] %v3988
        %4053 = vst [vmem:[%s551 + $0x28] sm:$0xff] %v3989
        %4054 = vst [vmem:[%s551 + $0x30] sm:$0xff] %v3990
        %4055 = vst [vmem:[%s551 + $0x38] sm:$0xff] %v3991
        %4056 = vst [vmem:[%s551 + $0x40] sm:$0xff] %v3992
        %4057 = vst [vmem:[%s551 + $0x48] sm:$0xff] %v3993
        %4058 = vst [vmem:[%s551 + $0x50] sm:$0xff] %v3994
        %4059 = vst [vmem:[%s551 + $0x58] sm:$0xff] %v3995
        %4060 = vst [vmem:[%s551 + $0x60] sm:$0xff] %v3996
        %4061 = vst [vmem:[%s551 + $0x68] sm:$0xff] %v3997
        %4062 = vst [vmem:[%s551 + $0x70] sm:$0xff] %v3998
        %4063 = vst [vmem:[%s551 + $0x78] sm:$0xff] %v3999
        %4064 = vst [vmem:[%s551 + $0x80] sm:$0xff] %v4000
        %4065 = vst [vmem:[%s551 + $0x88] sm:$0xff] %v4001
        %4066 = vst [vmem:[%s551 + $0x90] sm:$0xff] %v4002
        %4067 = vst [vmem:[%s551 + $0x98] sm:$0xff] %v4003
        %4068 = vst [vmem:[%s551 + $0xa0] sm:$0xff] %v4004
        %4069 = vst [vmem:[%s551 + $0xa8] sm:$0xff] %v4005
        %4070 = vst [vmem:[%s551 + $0xb0] sm:$0xff] %v4006
        %4071 = vst [vmem:[%s551 + $0xb8] sm:$0xff] %v4007
        %4072 = vst [vmem:[%s551 + $0xc0] sm:$0xff] %v4008
        %4073 = vst [vmem:[%s551 + $0xc8] sm:$0xff] %v4009
        %4074 = vst [vmem:[%s551 + $0xd0] sm:$0xff] %v4010
        %4075 = vst [vmem:[%s551 + $0xd8] sm:$0xff] %v4011
        %4076 = vst [vmem:[%s551 + $0xe0] sm:$0xff] %v4012
        %4077 = vst [vmem:[%s551 + $0xe8] sm:$0xff] %v4013
        %4078 = vst [vmem:[%s551 + $0xf0] sm:$0xff] %v4014
        %4079 = vst [vmem:[%s551 + $0xf8] sm:$0xff] %v4015
        %v4080 = vpack.c.bf16 %v1577, %v1573
        %v4081 = vpack.c.bf16 %v1587, %v1583
        %v4082 = vpack.c.bf16 %v1597, %v1593
        %v4083 = vpack.c.bf16 %v1607, %v1603
        %v4084 = vpack.c.bf16 %v1617, %v1613
        %v4085 = vpack.c.bf16 %v1627, %v1623
        %v4086 = vpack.c.bf16 %v1637, %v1633
        %v4087 = vpack.c.bf16 %v1647, %v1643
        %v4088 = vpack.c.bf16 %v1657, %v1653
        %v4089 = vpack.c.bf16 %v1667, %v1663
        %v4090 = vpack.c.bf16 %v1677, %v1673
        %v4091 = vpack.c.bf16 %v1687, %v1683
        %v4092 = vpack.c.bf16 %v1697, %v1693
        %v4093 = vpack.c.bf16 %v1707, %v1703
        %v4094 = vpack.c.bf16 %v1717, %v1713
        %v4095 = vpack.c.bf16 %v1727, %v1723
        %v4112 = vunpack.c.l.b16 %v4080
        %v4113 = vunpack.c.h.b16 %v4080
        %v4114 = vunpack.c.l.b16 %v4081
        %v4115 = vunpack.c.h.b16 %v4081
        %v4116 = vunpack.c.l.b16 %v4082
        %v4117 = vunpack.c.h.b16 %v4082
        %v4118 = vunpack.c.l.b16 %v4083
        %v4119 = vunpack.c.h.b16 %v4083
        %v4120 = vunpack.c.l.b16 %v4084
        %v4121 = vunpack.c.h.b16 %v4084
        %v4122 = vunpack.c.l.b16 %v4085
        %v4123 = vunpack.c.h.b16 %v4085
        %v4124 = vunpack.c.l.b16 %v4086
        %v4125 = vunpack.c.h.b16 %v4086
        %v4126 = vunpack.c.l.b16 %v4087
        %v4127 = vunpack.c.h.b16 %v4087
        %v4128 = vunpack.c.l.b16 %v4088
        %v4129 = vunpack.c.h.b16 %v4088
        %v4130 = vunpack.c.l.b16 %v4089
        %v4131 = vunpack.c.h.b16 %v4089
        %v4132 = vunpack.c.l.b16 %v4090
        %v4133 = vunpack.c.h.b16 %v4090
        %v4134 = vunpack.c.l.b16 %v4091
        %v4135 = vunpack.c.h.b16 %v4091
        %v4136 = vunpack.c.l.b16 %v4092
        %v4137 = vunpack.c.h.b16 %v4092
        %v4138 = vunpack.c.l.b16 %v4093
        %v4139 = vunpack.c.h.b16 %v4093
        %v4140 = vunpack.c.l.b16 %v4094
        %v4141 = vunpack.c.h.b16 %v4094
        %v4142 = vunpack.c.l.b16 %v4095
        %v4143 = vunpack.c.h.b16 %v4095
        %v4144 = vpack.c.b16 %v4112, %v4112
        %v4145 = vpack.c.b16 %v4113, %v4113
        %v4146 = vpack.c.b16 %v4114, %v4114
        %v4147 = vpack.c.b16 %v4115, %v4115
        %v4148 = vpack.c.b16 %v4116, %v4116
        %v4149 = vpack.c.b16 %v4117, %v4117
        %v4150 = vpack.c.b16 %v4118, %v4118
        %v4151 = vpack.c.b16 %v4119, %v4119
        %v4152 = vpack.c.b16 %v4120, %v4120
        %v4153 = vpack.c.b16 %v4121, %v4121
        %v4154 = vpack.c.b16 %v4122, %v4122
        %v4155 = vpack.c.b16 %v4123, %v4123
        %v4156 = vpack.c.b16 %v4124, %v4124
        %v4157 = vpack.c.b16 %v4125, %v4125
        %v4158 = vpack.c.b16 %v4126, %v4126
        %v4159 = vpack.c.b16 %v4127, %v4127
        %v4160 = vpack.c.b16 %v4128, %v4128
        %v4161 = vpack.c.b16 %v4129, %v4129
        %v4162 = vpack.c.b16 %v4130, %v4130
        %v4163 = vpack.c.b16 %v4131, %v4131
        %v4164 = vpack.c.b16 %v4132, %v4132
        %v4165 = vpack.c.b16 %v4133, %v4133
        %v4166 = vpack.c.b16 %v4134, %v4134
        %v4167 = vpack.c.b16 %v4135, %v4135
        %v4168 = vpack.c.b16 %v4136, %v4136
        %v4169 = vpack.c.b16 %v4137, %v4137
        %v4170 = vpack.c.b16 %v4138, %v4138
        %v4171 = vpack.c.b16 %v4139, %v4139
        %v4172 = vpack.c.b16 %v4140, %v4140
        %v4173 = vpack.c.b16 %v4141, %v4141
        %v4174 = vpack.c.b16 %v4142, %v4142
        %v4175 = vpack.c.b16 %v4143, %v4143
        %4208 = vst [vmem:[%s579] sm:$0xf] %v4144
        %4209 = vst [vmem:[%s579 + $0x8] sm:$0xf] %v4145
        %4210 = vst [vmem:[%s579 + $0x10] sm:$0xf] %v4146
        %4211 = vst [vmem:[%s579 + $0x18] sm:$0xf] %v4147
        %4212 = vst [vmem:[%s579 + $0x20] sm:$0xf] %v4148
        %4213 = vst [vmem:[%s579 + $0x28] sm:$0xf] %v4149
        %4214 = vst [vmem:[%s579 + $0x30] sm:$0xf] %v4150
        %4215 = vst [vmem:[%s579 + $0x38] sm:$0xf] %v4151
        %4216 = vst [vmem:[%s579 + $0x40] sm:$0xf] %v4152
        %4217 = vst [vmem:[%s579 + $0x48] sm:$0xf] %v4153
        %4218 = vst [vmem:[%s579 + $0x50] sm:$0xf] %v4154
        %4219 = vst [vmem:[%s579 + $0x58] sm:$0xf] %v4155
        %4220 = vst [vmem:[%s579 + $0x60] sm:$0xf] %v4156
        %4221 = vst [vmem:[%s579 + $0x68] sm:$0xf] %v4157
        %4222 = vst [vmem:[%s579 + $0x70] sm:$0xf] %v4158
        %4223 = vst [vmem:[%s579 + $0x78] sm:$0xf] %v4159
        %4224 = vst [vmem:[%s579 + $0x80] sm:$0xf] %v4160
        %4225 = vst [vmem:[%s579 + $0x88] sm:$0xf] %v4161
        %4226 = vst [vmem:[%s579 + $0x90] sm:$0xf] %v4162
        %4227 = vst [vmem:[%s579 + $0x98] sm:$0xf] %v4163
        %4228 = vst [vmem:[%s579 + $0xa0] sm:$0xf] %v4164
        %4229 = vst [vmem:[%s579 + $0xa8] sm:$0xf] %v4165
        %4230 = vst [vmem:[%s579 + $0xb0] sm:$0xf] %v4166
        %4231 = vst [vmem:[%s579 + $0xb8] sm:$0xf] %v4167
        %4232 = vst [vmem:[%s579 + $0xc0] sm:$0xf] %v4168
        %4233 = vst [vmem:[%s579 + $0xc8] sm:$0xf] %v4169
        %4234 = vst [vmem:[%s579 + $0xd0] sm:$0xf] %v4170
        %4235 = vst [vmem:[%s579 + $0xd8] sm:$0xf] %v4171
        %4236 = vst [vmem:[%s579 + $0xe0] sm:$0xf] %v4172
        %4237 = vst [vmem:[%s579 + $0xe8] sm:$0xf] %v4173
        %4238 = vst [vmem:[%s579 + $0xf0] sm:$0xf] %v4174
        %4239 = vst [vmem:[%s579 + $0xf8] sm:$0xf] %v4175
        %v4240 = vpack.c.bf16 %v2148, %v2147
        %v4241 = vpack.c.bf16 %v2150, %v2149
        %v4242 = vpack.c.bf16 %v2152, %v2151
        %v4243 = vpack.c.bf16 %v2154, %v2153
        %v4244 = vpack.c.bf16 %v2156, %v2155
        %v4245 = vpack.c.bf16 %v2158, %v2157
        %v4246 = vpack.c.bf16 %v2160, %v2159
        %v4247 = vpack.c.bf16 %v2162, %v2161
        %v4248 = vpack.c.bf16 %v2164, %v2163
        %v4249 = vpack.c.bf16 %v2166, %v2165
        %v4250 = vpack.c.bf16 %v2168, %v2167
        %v4251 = vpack.c.bf16 %v2170, %v2169
        %v4252 = vpack.c.bf16 %v2172, %v2171
        %v4253 = vpack.c.bf16 %v2174, %v2173
        %v4254 = vpack.c.bf16 %v2176, %v2175
        %v4255 = vpack.c.bf16 %v2178, %v2177
        %v4272 = vunpack.c.l.b16 %v4240
        %v4273 = vunpack.c.h.b16 %v4240
        %v4274 = vunpack.c.l.b16 %v4241
        %v4275 = vunpack.c.h.b16 %v4241
        %v4276 = vunpack.c.l.b16 %v4242
        %v4277 = vunpack.c.h.b16 %v4242
        %v4278 = vunpack.c.l.b16 %v4243
        %v4279 = vunpack.c.h.b16 %v4243
        %v4280 = vunpack.c.l.b16 %v4244
        %v4281 = vunpack.c.h.b16 %v4244
        %v4282 = vunpack.c.l.b16 %v4245
        %v4283 = vunpack.c.h.b16 %v4245
        %v4284 = vunpack.c.l.b16 %v4246
        %v4285 = vunpack.c.h.b16 %v4246
        %v4286 = vunpack.c.l.b16 %v4247
        %v4287 = vunpack.c.h.b16 %v4247
        %v4288 = vunpack.c.l.b16 %v4248
        %v4289 = vunpack.c.h.b16 %v4248
        %v4290 = vunpack.c.l.b16 %v4249
        %v4291 = vunpack.c.h.b16 %v4249
        %v4292 = vunpack.c.l.b16 %v4250
        %v4293 = vunpack.c.h.b16 %v4250
        %v4294 = vunpack.c.l.b16 %v4251
        %v4295 = vunpack.c.h.b16 %v4251
        %v4296 = vunpack.c.l.b16 %v4252
        %v4297 = vunpack.c.h.b16 %v4252
        %v4298 = vunpack.c.l.b16 %v4253
        %v4299 = vunpack.c.h.b16 %v4253
        %v4300 = vunpack.c.l.b16 %v4254
        %v4301 = vunpack.c.h.b16 %v4254
        %v4302 = vunpack.c.l.b16 %v4255
        %v4303 = vunpack.c.h.b16 %v4255
        %v4304 = vpack.c.b16 %v4272, %v4272
        %v4305 = vpack.c.b16 %v4273, %v4273
        %v4306 = vpack.c.b16 %v4274, %v4274
        %v4307 = vpack.c.b16 %v4275, %v4275
        %v4308 = vpack.c.b16 %v4276, %v4276
        %v4309 = vpack.c.b16 %v4277, %v4277
        %v4310 = vpack.c.b16 %v4278, %v4278
        %v4311 = vpack.c.b16 %v4279, %v4279
        %v4312 = vpack.c.b16 %v4280, %v4280
        %v4313 = vpack.c.b16 %v4281, %v4281
        %v4314 = vpack.c.b16 %v4282, %v4282
        %v4315 = vpack.c.b16 %v4283, %v4283
        %v4316 = vpack.c.b16 %v4284, %v4284
        %v4317 = vpack.c.b16 %v4285, %v4285
        %v4318 = vpack.c.b16 %v4286, %v4286
        %v4319 = vpack.c.b16 %v4287, %v4287
        %v4320 = vpack.c.b16 %v4288, %v4288
        %v4321 = vpack.c.b16 %v4289, %v4289
        %v4322 = vpack.c.b16 %v4290, %v4290
        %v4323 = vpack.c.b16 %v4291, %v4291
        %v4324 = vpack.c.b16 %v4292, %v4292
        %v4325 = vpack.c.b16 %v4293, %v4293
        %v4326 = vpack.c.b16 %v4294, %v4294
        %v4327 = vpack.c.b16 %v4295, %v4295
        %v4328 = vpack.c.b16 %v4296, %v4296
        %v4329 = vpack.c.b16 %v4297, %v4297
        %v4330 = vpack.c.b16 %v4298, %v4298
        %v4331 = vpack.c.b16 %v4299, %v4299
        %v4332 = vpack.c.b16 %v4300, %v4300
        %v4333 = vpack.c.b16 %v4301, %v4301
        %v4334 = vpack.c.b16 %v4302, %v4302
        %v4335 = vpack.c.b16 %v4303, %v4303
        %4368 = vst [vmem:[%s579 + $0x4] sm:$0xf] %v4304
        %4369 = vst [vmem:[%s579 + $0xc] sm:$0xf] %v4305
        %4370 = vst [vmem:[%s579 + $0x14] sm:$0xf] %v4306
        %4371 = vst [vmem:[%s579 + $0x1c] sm:$0xf] %v4307
        %4372 = vst [vmem:[%s579 + $0x24] sm:$0xf] %v4308
        %4373 = vst [vmem:[%s579 + $0x2c] sm:$0xf] %v4309
        %4374 = vst [vmem:[%s579 + $0x34] sm:$0xf] %v4310
        %4375 = vst [vmem:[%s579 + $0x3c] sm:$0xf] %v4311
        %4376 = vst [vmem:[%s579 + $0x44] sm:$0xf] %v4312
        %4377 = vst [vmem:[%s579 + $0x4c] sm:$0xf] %v4313
        %4378 = vst [vmem:[%s579 + $0x54] sm:$0xf] %v4314
        %4379 = vst [vmem:[%s579 + $0x5c] sm:$0xf] %v4315
        %4380 = vst [vmem:[%s579 + $0x64] sm:$0xf] %v4316
        %4381 = vst [vmem:[%s579 + $0x6c] sm:$0xf] %v4317
        %4382 = vst [vmem:[%s579 + $0x74] sm:$0xf] %v4318
        %4383 = vst [vmem:[%s579 + $0x7c] sm:$0xf] %v4319
        %4384 = vst [vmem:[%s579 + $0x84] sm:$0xf] %v4320
        %4385 = vst [vmem:[%s579 + $0x8c] sm:$0xf] %v4321
        %4386 = vst [vmem:[%s579 + $0x94] sm:$0xf] %v4322
        %4387 = vst [vmem:[%s579 + $0x9c] sm:$0xf] %v4323
        %4388 = vst [vmem:[%s579 + $0xa4] sm:$0xf] %v4324
        %4389 = vst [vmem:[%s579 + $0xac] sm:$0xf] %v4325
        %4390 = vst [vmem:[%s579 + $0xb4] sm:$0xf] %v4326
        %4391 = vst [vmem:[%s579 + $0xbc] sm:$0xf] %v4327
        %4392 = vst [vmem:[%s579 + $0xc4] sm:$0xf] %v4328
        %4393 = vst [vmem:[%s579 + $0xcc] sm:$0xf] %v4329
        %4394 = vst [vmem:[%s579 + $0xd4] sm:$0xf] %v4330
        %4395 = vst [vmem:[%s579 + $0xdc] sm:$0xf] %v4331
        %4396 = vst [vmem:[%s579 + $0xe4] sm:$0xf] %v4332
        %4397 = vst [vmem:[%s579 + $0xec] sm:$0xf] %v4333
        %4398 = vst [vmem:[%s579 + $0xf4] sm:$0xf] %v4334
        %4399 = vst [vmem:[%s579 + $0xfc] sm:$0xf] %v4335
        %s4400 = sand.u32 %s344, 1
        %s4401 = scalar_lea.sflag [#allocation4], %s4400
        %s4402 = sand.u32 %s344, 1
        %s4403 = smul.addr %s4402, 256
        %s4404 = scalar_lea.vmem [#allocation8], %s4403
        %s4405 = smul.u32 32, %s32
        %p4406 = scmp.lt.s32.totalorder %s4405, 63
        %s4407 = scalar_select %p4406, %s4405, 63
        %s4408 = smul.addr %s4407, 2
        %s4409 = smul.addr %s4408, 4
        %s4410 = scalar_lea.vmem %s15, %s4409
        // Predicated region
        $region89: #{_vae_forward_impl.1} parent=75 // pred_check
          %p4411 = pneg %p354
        $region90: #{_vae_forward_impl.1} parent=75 // pred_check_branch
          %4413 = sbr.rel (%p4411) target = $region92
        $region91: #{_vae_forward_impl.1} parent=75 // pred_region
          %s4414 = smul.u32 32, %s32
          %s4416 = ssub.s32 4096, 4096
          %4417 = vsyncadd %s4401, %s4416
          %s4418 = smul.addr %s4414, 2
          %s4419 = smul.addr %s4418, 64
          %s4420 = scalar_lea.hbm %s14, %s4419
          %s4421 = sshll.u32 %s4404, 4
          %s4422 = int_to_ptr.vmem [resolvable:$true] %s4421
          %4427 = dma.vmem_to_hbm [thread:$0]  %s4422, 4096, %s4420, %s4401, 128, 128, 8
        $region92: #{_vae_forward_impl.1} parent=75 // pred_fallthru
          _
        // Predicated region
        $region93: #{_vae_forward_impl.1} parent=75 // pred_check
          %p4428 = pneg %p380
        $region94: #{_vae_forward_impl.1} parent=75 // pred_check_branch
          %4430 = sbr.rel (%p4428) target = $region96
        $region95: #{_vae_forward_impl.1} parent=75 // pred_region
          %s4431 = smul.u32 32, %s32
        $region96: #{_vae_forward_impl.1} parent=75 // pred_fallthru
          _
      $region76: #{_vae_forward_impl.1} parent=5 // pred_fallthru
        _
      %p4432 = scmp.le.s32.totalorder 2, %s27
      // Predicated region
      $region97: #{_vae_forward_impl.1} parent=5 // pred_check
        %p4433 = pneg %p4432
      $region98: #{_vae_forward_impl.1} parent=5 // pred_check_branch
        %4435 = sbr.rel (%p4433) target = $region100
      $region99: #{_vae_forward_impl.1} parent=5 // pred_region
        %s4436 = ssub.s32 %s27, 2
        // Predicated region
        $region101: #{_vae_forward_impl.1} parent=99 // pred_check
          %p4437 = pneg %p360
        $region102: #{_vae_forward_impl.1} parent=99 // pred_check_branch
          %4439 = sbr.rel (%p4437) target = $region104
        $region103: #{_vae_forward_impl.1} parent=99 // pred_region
          %s4440 = sand.u32 %s345, 1
          %s4441 = scalar_lea.sflag [#allocation4], %s4440
          %s4442 = sand.u32 %s345, 1
          %s4443 = smul.addr %s4442, 256
          %s4444 = scalar_lea.vmem [#allocation8], %s4443
          %4445 = dma.done %s4441, 4096
        $region104: #{_vae_forward_impl.1} parent=99 // pred_fallthru
          _
        // Predicated region
        $region105: #{_vae_forward_impl.1} parent=99 // pred_check
          %p4446 = pneg %p386
        $region106: #{_vae_forward_impl.1} parent=99 // pred_check_branch
          %4448 = sbr.rel (%p4446) target = $region108
        $region107: #{_vae_forward_impl.1} parent=99 // pred_region
          %s4449 = smul.u32 32, %s33
          %p4450 = scmp.lt.s32.totalorder %s4449, 63
          %s4451 = scalar_select %p4450, %s4449, 63
          %s4452 = smul.addr %s4451, 2
          %s4453 = smul.addr %s4452, 4
          %s4454 = scalar_lea.vmem %s15, %s4453
        $region108: #{_vae_forward_impl.1} parent=99 // pred_fallthru
          _
      $region100: #{_vae_forward_impl.1} parent=5 // pred_fallthru
        _
    $region6: #{_vae_forward_impl.1} parent=1 // loop_footer
      %s31 = sadd.s32 1, %s27
    $region7: #{_vae_forward_impl.1} parent=1 // loop_footer_branch
      %26 = sbr.rel target = $region3
    $region8: #{_vae_forward_impl.1} parent=1 // loop_exit
      _
    %4455 = vsyncpa [#allocation3], 1
    %s4456 = scalar_lea.sflag [#allocation3], 1
    %4457 = vsyncpa %s4456, 1
    %4458 = vsyncpa [#allocation6], 1
    %4459 = vsyncpa [#allocation4], 1
    %s4460 = scalar_lea.sflag [#allocation4], 1
    %4461 = vsyncpa %s4460, 1

// kernel: _vae_forward_impl.1
$region0: #{_vae_forward_impl.1}
  #allocation0 [shape = 'u32[]', space=smem, size = 0x4, offset = 0x4, fixed_abs, tag = 'smem constant byte address 0x4 - core index']
  #allocation1 [shape = 'u32[144,128]{1,0:T(1,128)}', space=vmem, size = 0x12000, scoped, tag = 'internal scratch']
  %s0 = inlined_call_operand.vmem [shape: bf16[512,256], index: 0, kind: input, shape index: {}]
  %s1 = inlined_call_operand.vmem [shape: bf16[512,128], index: 1, kind: input, shape index: {}]
  %s2 = inlined_call_operand.vmem [shape: bf16[256,128], index: 2, kind: input, shape index: {}]
  %s3 = inlined_call_operand.vmem [shape: f32[1,128], index: 3, kind: input, shape index: {}]
  %s4 = inlined_call_operand.hbm [shape: bf16[128,128], index: 4, kind: input, shape index: {}]
  %s5 = inlined_call_operand.vmem [shape: f32[1,128], index: 5, kind: input, shape index: {}]
  %s6 = inlined_call_operand.vmem [shape: bf16[128,256], index: 6, kind: input, shape index: {}]
  %s7 = inlined_call_operand.vmem [shape: f32[1,256], index: 7, kind: input, shape index: {}]
  %s8 = inlined_call_operand.hbm [shape: bf16[128,128], index: 8, kind: input, shape index: {}]
  %s9 = inlined_call_operand.vmem [shape: f32[1,128], index: 9, kind: input, shape index: {}]
  %s10 = inlined_call_operand.hbm [shape: bf16[128,128], index: 10, kind: input, shape index: {}]
  %s11 = inlined_call_operand.vmem [shape: f32[1,128], index: 11, kind: input, shape index: {}]
  %s12 = inlined_call_operand.vmem [shape: bf16[128,256], index: 12, kind: input, shape index: {}]
  %s13 = inlined_call_operand.vmem [shape: f32[1,256], index: 13, kind: input, shape index: {}]
  %s14 = inlined_call_operand.hbm [shape: bf16[512,256], index: 14, kind: output, shape index: {0}]
  %s15 = inlined_call_operand.vmem [shape: bf16[512,256], index: 15, kind: output, shape index: {1}]
  %16 = xla_tuple %s14, %s15
  %s17 = sld [smem:[#allocation0]]
  $region109: #{_vae_forward_impl.1} parent=0
    _
  %s19 = ssub.s32 1, %s17
  %s20 = scalar_select 0, %s19, %s17
  $region1: #{_vae_forward_impl.1} parent=0
    #allocation2 [shape = 'u8[32768]{0}', space=vmem, size = 0x8000, scoped, tag = 'input window, operand 4, single buffered']
    #allocation3 [shape = 's32[2]{0}', space=sflag, size = 0x8, scoped, tag = 'scoped memory for _vae_forward_impl.1']
    #allocation4 [shape = 's32[2]{0}', space=sflag, size = 0x8, scoped, tag = 'scoped memory for _vae_forward_impl.1']
    #allocation5 [shape = 'u8[32768]{0}', space=vmem, size = 0x8000, scoped, tag = 'input window, operand 8, single buffered']
    #allocation6 [shape = 's32[1]{0}', space=sflag, size = 0x4, scoped, tag = 'scoped memory for _vae_forward_impl.1']
    #allocation7 [shape = 'u8[32768]{0}', space=vmem, size = 0x8000, scoped, tag = 'input window, operand 10, single buffered']
    #allocation8 [shape = 'u8[262144]{0}', space=vmem, size = 0x40000, scoped, tag = 'output window, operand 0']
    %21 = vsyncpa [#allocation3], 0
    %22 = vsyncpa [#allocation6], 0
    %23 = vsyncpa [#allocation4], 0
    %s24 = scalar_lea.sflag [#allocation4], 1
    %25 = vsyncpa %s24, 0
    loop: start=0, step=1, limit=4
    $region2: #{_vae_forward_impl.1} parent=1 // loop_pre_header
      _
    $region3: #{_vae_forward_impl.1} parent=1 // loop_header
      %s27 = sphi 0, %s31
      %p28 = scmp.ge.s32.totalorder %s27, 4
      %s37 = sphi 0, %s39
      %s40 = sphi 0, %s37
      %s41 = sphi 0, %s40
      %s57 = sphi 0, %s41
      %s63 = sphi 0, %s65
      %s66 = sphi 0, %s63
      %s67 = sphi 0, %s66
      %s83 = sphi 0, %s67
      %s87 = sphi 0, %s87
      %s89 = sphi 0, %s87
      %s90 = sphi 0, %s89
      %s104 = sphi 0, %s90
      %s108 = sphi 0, %s108
      %s110 = sphi 0, %s108
      %s111 = sphi 0, %s110
      %s125 = sphi 0, %s111
      %s129 = sphi 0, %s129
      %s131 = sphi 0, %s129
      %s132 = sphi 0, %s131
      %s146 = sphi 0, %s132
      %s150 = sphi 0, %s150
      %s152 = sphi 0, %s150
      %s153 = sphi 0, %s152
      %s167 = sphi 0, %s153
      %s171 = sphi 0, %s171
      %s173 = sphi 0, %s171
      %s174 = sphi 0, %s173
      %s188 = sphi 0, %s174
      %s192 = sphi 0, %s192
      %s194 = sphi 0, %s192
      %s195 = sphi 0, %s194
      %s209 = sphi 0, %s195
      %s213 = sphi 0, %s213
      %s215 = sphi 0, %s213
      %s216 = sphi 0, %s215
      %s230 = sphi 0, %s216
      %s234 = sphi 0, %s234
      %s236 = sphi 0, %s234
      %s237 = sphi 0, %s236
      %s251 = sphi 0, %s237
      %s255 = sphi 0, %s255
      %s257 = sphi 0, %s255
      %s258 = sphi 0, %s257
      %s272 = sphi 0, %s258
      %s276 = sphi 0, %s276
      %s278 = sphi 0, %s276
      %s279 = sphi 0, %s278
      %s293 = sphi 0, %s279
      %s297 = sphi 0, %s297
      %s299 = sphi 0, %s297
      %s300 = sphi 0, %s299
      %s314 = sphi 0, %s300
      %s318 = sphi 0, %s318
      %s320 = sphi 0, %s318
      %s321 = sphi 0, %s320
      %s335 = sphi 0, %s321
      %s341 = sphi 0, %s343
      %s344 = sphi 0, %s341
      %s345 = sphi 0, %s344
      %s361 = sphi 0, %s345
      %s367 = sphi 0, %s369
      %s370 = sphi 0, %s367
      %s371 = sphi 0, %s370
      %s387 = sphi 0, %s371
    $region4: #{_vae_forward_impl.1} parent=1 // loop_header_branch
      %30 = sbr.rel (%p28) target = $region8
    $region5: #{_vae_forward_impl.1} parent=1 // loop_body
      %s32 = ssub.s32 %s27, 1
      %s33 = ssub.s32 %s27, 2
      %s34 = sadd.s32 %s27, 1
      %s35 = ssub.s32 %s27, %s34
      %p36 = scmp.eq.s32.totalorder %s35, 0
      %s38 = sadd.s32 %s37, 1
      %s39 = scalar_select %p36, %s37, %s38
      %p42 = pneg %p36
      %p43 = scmp.eq.s32.totalorder %s27, 1
      %p44 = por %p42, %p43
      %p45 = scmp.ne.s32.totalorder %s37, %s40
      %p46 = scmp.eq.s32.totalorder %s27, 0
      %p47 = por %p45, %p46
      %p48 = scmp.ne.s32.totalorder %s37, %s40
      %p49 = scmp.eq.s32.totalorder %s32, 1
      %p50 = por %p48, %p49
      %p51 = scmp.ne.s32.totalorder %s40, %s41
      %p52 = scmp.eq.s32.totalorder %s32, 0
      %p53 = por %p51, %p52
      %p54 = scmp.ne.s32.totalorder %s40, %s41
      %p55 = scmp.eq.s32.totalorder %s33, 1
      %p56 = por %p54, %p55
      %p58 = scmp.ne.s32.totalorder %s41, %s57
      %p59 = scmp.eq.s32.totalorder %s33, 0
      %p60 = por %p58, %p59
      %s61 = ssub.s32 %s27, %s34
      %p62 = scmp.eq.s32.totalorder %s61, 0
      %s64 = sadd.s32 %s63, 1
      %s65 = scalar_select %p62, %s63, %s64
      %p68 = pneg %p62
      %p69 = scmp.eq.s32.totalorder %s27, 1
      %p70 = por %p68, %p69
      %p71 = scmp.ne.s32.totalorder %s63, %s66
      %p72 = scmp.eq.s32.totalorder %s27, 0
      %p73 = por %p71, %p72
      %p74 = scmp.ne.s32.totalorder %s63, %s66
      %p75 = scmp.eq.s32.totalorder %s32, 1
      %p76 = por %p74, %p75
      %p77 = scmp.ne.s32.totalorder %s66, %s67
      %p78 = scmp.eq.s32.totalorder %s32, 0
      %p79 = por %p77, %p78
      %p80 = scmp.ne.s32.totalorder %s66, %s67
      %p81 = scmp.eq.s32.totalorder %s33, 1
      %p82 = por %p80, %p81
      %p84 = scmp.ne.s32.totalorder %s67, %s83
      %p85 = scmp.eq.s32.totalorder %s33, 0
      %p86 = por %p84, %p85
      %s88 = sadd.s32 %s87, 1
      %p91 = scmp.eq.s32.totalorder %s27, 1
      %p92 = scmp.ne.s32.totalorder %s87, %s89
      %p93 = scmp.eq.s32.totalorder %s27, 0
      %p94 = por %p92, %p93
      %p95 = scmp.ne.s32.totalorder %s87, %s89
      %p96 = scmp.eq.s32.totalorder %s32, 1
      %p97 = por %p95, %p96
      %p98 = scmp.ne.s32.totalorder %s89, %s90
      %p99 = scmp.eq.s32.totalorder %s32, 0
      %p100 = por %p98, %p99
      %p101 = scmp.ne.s32.totalorder %s89, %s90
      %p102 = scmp.eq.s32.totalorder %s33, 1
      %p103 = por %p101, %p102
      %p105 = scmp.ne.s32.totalorder %s90, %s104
      %p106 = scmp.eq.s32.totalorder %s33, 0
      %p107 = por %p105, %p106
      %s109 = sadd.s32 %s108, 1
      %p112 = scmp.eq.s32.totalorder %s27, 1
      %p113 = scmp.ne.s32.totalorder %s108, %s110
      %p114 = scmp.eq.s32.totalorder %s27, 0
      %p115 = por %p113, %p114
      %p116 = scmp.ne.s32.totalorder %s108, %s110
      %p117 = scmp.eq.s32.totalorder %s32, 1
      %p118 = por %p116, %p117
      %p119 = scmp.ne.s32.totalorder %s110, %s111
      %p120 = scmp.eq.s32.totalorder %s32, 0
      %p121 = por %p119, %p120
      %p122 = scmp.ne.s32.totalorder %s110, %s111
      %p123 = scmp.eq.s32.totalorder %s33, 1
      %p124 = por %p122, %p123
      %p126 = scmp.ne.s32.totalorder %s111, %s125
      %p127 = scmp.eq.s32.totalorder %s33, 0
      %p128 = por %p126, %p127
      %s130 = sadd.s32 %s129, 1
      %p133 = scmp.eq.s32.totalorder %s27, 1
      %p134 = scmp.ne.s32.totalorder %s129, %s131
      %p135 = scmp.eq.s32.totalorder %s27, 0
      %p136 = por %p134, %p135
      %p137 = scmp.ne.s32.totalorder %s129, %s131
      %p138 = scmp.eq.s32.totalorder %s32, 1
      %p139 = por %p137, %p138
      %p140 = scmp.ne.s32.totalorder %s131, %s132
      %p141 = scmp.eq.s32.totalorder %s32, 0
      %p142 = por %p140, %p141
      %p143 = scmp.ne.s32.totalorder %s131, %s132
      %p144 = scmp.eq.s32.totalorder %s33, 1
      %p145 = por %p143, %p144
      %p147 = scmp.ne.s32.totalorder %s132, %s146
      %p148 = scmp.eq.s32.totalorder %s33, 0
      %p149 = por %p147, %p148
      %s151 = sadd.s32 %s150, 1
      %p154 = scmp.eq.s32.totalorder %s27, 1
      %p155 = scmp.ne.s32.totalorder %s150, %s152
      %p156 = scmp.eq.s32.totalorder %s27, 0
      %p157 = por %p155, %p156
      %p158 = scmp.ne.s32.totalorder %s150, %s152
      %p159 = scmp.eq.s32.totalorder %s32, 1
      %p160 = por %p158, %p159
      %p161 = scmp.ne.s32.totalorder %s152, %s153
      %p162 = scmp.eq.s32.totalorder %s32, 0
      %p163 = por %p161, %p162
      %p164 = scmp.ne.s32.totalorder %s152, %s153
      %p165 = scmp.eq.s32.totalorder %s33, 1
      %p166 = por %p164, %p165
      %p168 = scmp.ne.s32.totalorder %s153, %s167
      %p169 = scmp.eq.s32.totalorder %s33, 0
      %p170 = por %p168, %p169
      %s172 = sadd.s32 %s171, 1
      %p175 = scmp.eq.s32.totalorder %s27, 1
      %p176 = scmp.ne.s32.totalorder %s171, %s173
      %p177 = scmp.eq.s32.totalorder %s27, 0
      %p178 = por %p176, %p177
      %p179 = scmp.ne.s32.totalorder %s171, %s173
      %p180 = scmp.eq.s32.totalorder %s32, 1
      %p181 = por %p179, %p180
      %p182 = scmp.ne.s32.totalorder %s173, %s174
      %p183 = scmp.eq.s32.totalorder %s32, 0
      %p184 = por %p182, %p183
      %p185 = scmp.ne.s32.totalorder %s173, %s174
      %p186 = scmp.eq.s32.totalorder %s33, 1
      %p187 = por %p185, %p186
      %p189 = scmp.ne.s32.totalorder %s174, %s188
      %p190 = scmp.eq.s32.totalorder %s33, 0
      %p191 = por %p189, %p190
      %s193 = sadd.s32 %s192, 1
      %p196 = scmp.eq.s32.totalorder %s27, 1
      %p197 = scmp.ne.s32.totalorder %s192, %s194
      %p198 = scmp.eq.s32.totalorder %s27, 0
      %p199 = por %p197, %p198
      %p200 = scmp.ne.s32.totalorder %s192, %s194
      %p201 = scmp.eq.s32.totalorder %s32, 1
      %p202 = por %p200, %p201
      %p203 = scmp.ne.s32.totalorder %s194, %s195
      %p204 = scmp.eq.s32.totalorder %s32, 0
      %p205 = por %p203, %p204
      %p206 = scmp.ne.s32.totalorder %s194, %s195
      %p207 = scmp.eq.s32.totalorder %s33, 1
      %p208 = por %p206, %p207
      %p210 = scmp.ne.s32.totalorder %s195, %s209
      %p211 = scmp.eq.s32.totalorder %s33, 0
      %p212 = por %p210, %p211
      %s214 = sadd.s32 %s213, 1
      %p217 = scmp.eq.s32.totalorder %s27, 1
      %p218 = scmp.ne.s32.totalorder %s213, %s215
      %p219 = scmp.eq.s32.totalorder %s27, 0
      %p220 = por %p218, %p219
      %p221 = scmp.ne.s32.totalorder %s213, %s215
      %p222 = scmp.eq.s32.totalorder %s32, 1
      %p223 = por %p221, %p222
      %p224 = scmp.ne.s32.totalorder %s215, %s216
      %p225 = scmp.eq.s32.totalorder %s32, 0
      %p226 = por %p224, %p225
      %p227 = scmp.ne.s32.totalorder %s215, %s216
      %p228 = scmp.eq.s32.totalorder %s33, 1
      %p229 = por %p227, %p228
      %p231 = scmp.ne.s32.totalorder %s216, %s230
      %p232 = scmp.eq.s32.totalorder %s33, 0
      %p233 = por %p231, %p232
      %s235 = sadd.s32 %s234, 1
      %p238 = scmp.eq.s32.totalorder %s27, 1
      %p239 = scmp.ne.s32.totalorder %s234, %s236
      %p240 = scmp.eq.s32.totalorder %s27, 0
      %p241 = por %p239, %p240
      %p242 = scmp.ne.s32.totalorder %s234, %s236
      %p243 = scmp.eq.s32.totalorder %s32, 1
      %p244 = por %p242, %p243
      %p245 = scmp.ne.s32.totalorder %s236, %s237
      %p246 = scmp.eq.s32.totalorder %s32, 0
      %p247 = por %p245, %p246
      %p248 = scmp.ne.s32.totalorder %s236, %s237
      %p249 = scmp.eq.s32.totalorder %s33, 1
      %p250 = por %p248, %p249
      %p252 = scmp.ne.s32.totalorder %s237, %s251
      %p253 = scmp.eq.s32.totalorder %s33, 0
      %p254 = por %p252, %p253
      %s256 = sadd.s32 %s255, 1
      %p259 = scmp.eq.s32.totalorder %s27, 1
      %p260 = scmp.ne.s32.totalorder %s255, %s257
      %p261 = scmp.eq.s32.totalorder %s27, 0
      %p262 = por %p260, %p261
      %p263 = scmp.ne.s32.totalorder %s255, %s257
      %p264 = scmp.eq.s32.totalorder %s32, 1
      %p265 = por %p263, %p264
      %p266 = scmp.ne.s32.totalorder %s257, %s258
      %p267 = scmp.eq.s32.totalorder %s32, 0
      %p268 = por %p266, %p267
      %p269 = scmp.ne.s32.totalorder %s257, %s258
      %p270 = scmp.eq.s32.totalorder %s33, 1
      %p271 = por %p269, %p270
      %p273 = scmp.ne.s32.totalorder %s258, %s272
      %p274 = scmp.eq.s32.totalorder %s33, 0
      %p275 = por %p273, %p274
      %s277 = sadd.s32 %s276, 1
      %p280 = scmp.eq.s32.totalorder %s27, 1
      %p281 = scmp.ne.s32.totalorder %s276, %s278
      %p282 = scmp.eq.s32.totalorder %s27, 0
      %p283 = por %p281, %p282
      %p284 = scmp.ne.s32.totalorder %s276, %s278
      %p285 = scmp.eq.s32.totalorder %s32, 1
      %p286 = por %p284, %p285
      %p287 = scmp.ne.s32.totalorder %s278, %s279
      %p288 = scmp.eq.s32.totalorder %s32, 0
      %p289 = por %p287, %p288
      %p290 = scmp.ne.s32.totalorder %s278, %s279
      %p291 = scmp.eq.s32.totalorder %s33, 1
      %p292 = por %p290, %p291
      %p294 = scmp.ne.s32.totalorder %s279, %s293
      %p295 = scmp.eq.s32.totalorder %s33, 0
      %p296 = por %p294, %p295
      %s298 = sadd.s32 %s297, 1
      %p301 = scmp.eq.s32.totalorder %s27, 1
      %p302 = scmp.ne.s32.totalorder %s297, %s299
      %p303 = scmp.eq.s32.totalorder %s27, 0
      %p304 = por %p302, %p303
      %p305 = scmp.ne.s32.totalorder %s297, %s299
      %p306 = scmp.eq.s32.totalorder %s32, 1
      %p307 = por %p305, %p306
      %p308 = scmp.ne.s32.totalorder %s299, %s300
      %p309 = scmp.eq.s32.totalorder %s32, 0
      %p310 = por %p308, %p309
      %p311 = scmp.ne.s32.totalorder %s299, %s300
      %p312 = scmp.eq.s32.totalorder %s33, 1
      %p313 = por %p311, %p312
      %p315 = scmp.ne.s32.totalorder %s300, %s314
      %p316 = scmp.eq.s32.totalorder %s33, 0
      %p317 = por %p315, %p316
      %s319 = sadd.s32 %s318, 1
      %p322 = scmp.eq.s32.totalorder %s27, 1
      %p323 = scmp.ne.s32.totalorder %s318, %s320
      %p324 = scmp.eq.s32.totalorder %s27, 0
      %p325 = por %p323, %p324
      %p326 = scmp.ne.s32.totalorder %s318, %s320
      %p327 = scmp.eq.s32.totalorder %s32, 1
      %p328 = por %p326, %p327
      %p329 = scmp.ne.s32.totalorder %s320, %s321
      %p330 = scmp.eq.s32.totalorder %s32, 0
      %p331 = por %p329, %p330
      %p332 = scmp.ne.s32.totalorder %s320, %s321
      %p333 = scmp.eq.s32.totalorder %s33, 1
      %p334 = por %p332, %p333
      %p336 = scmp.ne.s32.totalorder %s321, %s335
      %p337 = scmp.eq.s32.totalorder %s33, 0
      %p338 = por %p336, %p337
      %s339 = ssub.s32 %s27, %s34
      %p340 = scmp.eq.s32.totalorder %s339, 0
      %s342 = sadd.s32 %s341, 1
      %s343 = scalar_select %p340, %s341, %s342
      %p346 = pneg %p340
      %p347 = scmp.eq.s32.totalorder %s27, 1
      %p348 = por %p346, %p347
      %p349 = scmp.ne.s32.totalorder %s341, %s344
      %p350 = scmp.eq.s32.totalorder %s27, 0
      %p351 = por %p349, %p350
      %p352 = scmp.ne.s32.totalorder %s341, %s344
      %p353 = scmp.eq.s32.totalorder %s32, 1
      %p354 = por %p352, %p353
      %p355 = scmp.ne.s32.totalorder %s344, %s345
      %p356 = scmp.eq.s32.totalorder %s32, 0
      %p357 = por %p355, %p356
      %p358 = scmp.ne.s32.totalorder %s344, %s345
      %p359 = scmp.eq.s32.totalorder %s33, 1
      %p360 = por %p358, %p359
      %p362 = scmp.ne.s32.totalorder %s345, %s361
      %p363 = scmp.eq.s32.totalorder %s33, 0
      %p364 = por %p362, %p363
      %s365 = ssub.s32 %s27, %s34
      %p366 = scmp.eq.s32.totalorder %s365, 0
      %s368 = sadd.s32 %s367, 1
      %s369 = scalar_select %p366, %s367, %s368
      %p372 = pneg %p366
      %p373 = scmp.eq.s32.totalorder %s27, 1
      %p374 = por %p372, %p373
      %p375 = scmp.ne.s32.totalorder %s367, %s370
      %p376 = scmp.eq.s32.totalorder %s27, 0
      %p377 = por %p375, %p376
      %p378 = scmp.ne.s32.totalorder %s367, %s370
      %p379 = scmp.eq.s32.totalorder %s32, 1
      %p380 = por %p378, %p379
      %p381 = scmp.ne.s32.totalorder %s370, %s371
      %p382 = scmp.eq.s32.totalorder %s32, 0
      %p383 = por %p381, %p382
      %p384 = scmp.ne.s32.totalorder %s370, %s371
      %p385 = scmp.eq.s32.totalorder %s33, 1
      %p386 = por %p384, %p385
      %p388 = scmp.ne.s32.totalorder %s371, %s387
      %p389 = scmp.eq.s32.totalorder %s33, 0
      %p390 = por %p388, %p389
      %p391 = scmp.le.s32.totalorder 1, %s27
      %p392 = scmp.lt.s32.totalorder %s27, 3
      %p393 = pnand %p391, %p392
      %p394 = pneg %p393
      // Predicated region
      $region9: #{_vae_forward_impl.1} parent=5 // pred_check
        _
      $region10: #{_vae_forward_impl.1} parent=5 // pred_check_branch
        %396 = sbr.rel (%p393) target = $region12
      $region11: #{_vae_forward_impl.1} parent=5 // pred_region
        %s397 = ssub.s32 %s27, 1
        // Predicated region
        $region13: #{_vae_forward_impl.1} parent=11 // pred_check
          %p398 = pneg %p100
        $region14: #{_vae_forward_impl.1} parent=11 // pred_check_branch
          %400 = sbr.rel (%p398) target = $region16
        $region15: #{_vae_forward_impl.1} parent=11 // pred_region
          _
        $region16: #{_vae_forward_impl.1} parent=11 // pred_fallthru
          _
        // Predicated region
        $region17: #{_vae_forward_impl.1} parent=11 // pred_check
          %p401 = pneg %p121
        $region18: #{_vae_forward_impl.1} parent=11 // pred_check_branch
          %403 = sbr.rel (%p401) target = $region20
        $region19: #{_vae_forward_impl.1} parent=11 // pred_region
          _
        $region20: #{_vae_forward_impl.1} parent=11 // pred_fallthru
          _
        // Predicated region
        $region21: #{_vae_forward_impl.1} parent=11 // pred_check
          %p404 = pneg %p142
        $region22: #{_vae_forward_impl.1} parent=11 // pred_check_branch
          %406 = sbr.rel (%p404) target = $region24
        $region23: #{_vae_forward_impl.1} parent=11 // pred_region
          %s408 = ssub.s32 1024, 1024
          %409 = vsyncadd [#allocation3], %s408
          %s410 = sshll.u32 [#allocation2], 4
          %s411 = int_to_ptr.vmem [resolvable:$true] %s410
          %416 = dma.hbm_to_vmem [thread:$0]  %s4, 1024, %s411, [#allocation3], 64, 64, 4
        $region24: #{_vae_forward_impl.1} parent=11 // pred_fallthru
          _
        // Predicated region
        $region25: #{_vae_forward_impl.1} parent=11 // pred_check
          %p417 = pneg %p163
        $region26: #{_vae_forward_impl.1} parent=11 // pred_check_branch
          %419 = sbr.rel (%p417) target = $region28
        $region27: #{_vae_forward_impl.1} parent=11 // pred_region
          _
        $region28: #{_vae_forward_impl.1} parent=11 // pred_fallthru
          _
        // Predicated region
        $region29: #{_vae_forward_impl.1} parent=11 // pred_check
          %p420 = pneg %p184
        $region30: #{_vae_forward_impl.1} parent=11 // pred_check_branch
          %422 = sbr.rel (%p420) target = $region32
        $region31: #{_vae_forward_impl.1} parent=11 // pred_region
          _
        $region32: #{_vae_forward_impl.1} parent=11 // pred_fallthru
          _
        // Predicated region
        $region33: #{_vae_forward_impl.1} parent=11 // pred_check
          %p423 = pneg %p205
        $region34: #{_vae_forward_impl.1} parent=11 // pred_check_branch
          %425 = sbr.rel (%p423) target = $region36
        $region35: #{_vae_forward_impl.1} parent=11 // pred_region
          _
        $region36: #{_vae_forward_impl.1} parent=11 // pred_fallthru
          _
        // Predicated region
        $region37: #{_vae_forward_impl.1} parent=11 // pred_check
          %p426 = pneg %p226
        $region38: #{_vae_forward_impl.1} parent=11 // pred_check_branch
          %428 = sbr.rel (%p426) target = $region40
        $region39: #{_vae_forward_impl.1} parent=11 // pred_region
          %s430 = ssub.s32 1024, 1024
          %431 = vsyncadd [#allocation6], %s430
          %s432 = sshll.u32 [#allocation5], 4
          %s433 = int_to_ptr.vmem [resolvable:$true] %s432
          %438 = dma.hbm_to_vmem [thread:$0]  %s8, 1024, %s433, [#allocation6], 64, 64, 4
        $region40: #{_vae_forward_impl.1} parent=11 // pred_fallthru
          _
        // Predicated region
        $region41: #{_vae_forward_impl.1} parent=11 // pred_check
          %p439 = pneg %p247
        $region42: #{_vae_forward_impl.1} parent=11 // pred_check_branch
          %441 = sbr.rel (%p439) target = $region44
        $region43: #{_vae_forward_impl.1} parent=11 // pred_region
          _
        $region44: #{_vae_forward_impl.1} parent=11 // pred_fallthru
          _
        // Predicated region
        $region45: #{_vae_forward_impl.1} parent=11 // pred_check
          %p442 = pneg %p268
        $region46: #{_vae_forward_impl.1} parent=11 // pred_check_branch
          %444 = sbr.rel (%p442) target = $region48
        $region47: #{_vae_forward_impl.1} parent=11 // pred_region
          %s446 = ssub.s32 1024, 1024
          %447 = vsyncadd [#allocation6], %s446
          %s448 = sshll.u32 [#allocation7], 4
          %s449 = int_to_ptr.vmem [resolvable:$true] %s448
          %454 = dma.hbm_to_vmem [thread:$0]  %s10, 1024, %s449, [#allocation6], 64, 64, 4
        $region48: #{_vae_forward_impl.1} parent=11 // pred_fallthru
          _
        // Predicated region
        $region49: #{_vae_forward_impl.1} parent=11 // pred_check
          %p455 = pneg %p289
        $region50: #{_vae_forward_impl.1} parent=11 // pred_check_branch
          %457 = sbr.rel (%p455) target = $region52
        $region51: #{_vae_forward_impl.1} parent=11 // pred_region
          _
        $region52: #{_vae_forward_impl.1} parent=11 // pred_fallthru
          _
        // Predicated region
        $region53: #{_vae_forward_impl.1} parent=11 // pred_check
          %p458 = pneg %p310
        $region54: #{_vae_forward_impl.1} parent=11 // pred_check_branch
          %460 = sbr.rel (%p458) target = $region56
        $region55: #{_vae_forward_impl.1} parent=11 // pred_region
          _
        $region56: #{_vae_forward_impl.1} parent=11 // pred_fallthru
          _
        // Predicated region
        $region57: #{_vae_forward_impl.1} parent=11 // pred_check
          %p461 = pneg %p331
        $region58: #{_vae_forward_impl.1} parent=11 // pred_check_branch
          %463 = sbr.rel (%p461) target = $region60
        $region59: #{_vae_forward_impl.1} parent=11 // pred_region
          _
        $region60: #{_vae_forward_impl.1} parent=11 // pred_fallthru
          _
      $region12: #{_vae_forward_impl.1} parent=5 // pred_fallthru
        _
      %p464 = scmp.lt.s32.totalorder %s27, 2
      // Predicated region
      $region61: #{_vae_forward_impl.1} parent=5 // pred_check
        %p465 = pneg %p464
      $region62: #{_vae_forward_impl.1} parent=5 // pred_check_branch
        %467 = sbr.rel (%p465) target = $region64
      $region63: #{_vae_forward_impl.1} parent=5 // pred_region
        // Predicated region
        $region65: #{_vae_forward_impl.1} parent=63 // pred_check
          %p468 = pneg %p47
        $region66: #{_vae_forward_impl.1} parent=63 // pred_check_branch
          %470 = sbr.rel (%p468) target = $region68
        $region67: #{_vae_forward_impl.1} parent=63 // pred_region
          %s471 = smul.u32 32, %s27
          %p472 = scmp.lt.s32.totalorder %s471, 63
          %s473 = scalar_select %p472, %s471, 63
          %s474 = smul.addr %s473, 2
          %s475 = smul.addr %s474, 4
          %s476 = scalar_lea.vmem %s0, %s475
          %s477 = smul.u32 32, %s27
        $region68: #{_vae_forward_impl.1} parent=63 // pred_fallthru
          _
        // Predicated region
        $region69: #{_vae_forward_impl.1} parent=63 // pred_check
          %p478 = pneg %p73
        $region70: #{_vae_forward_impl.1} parent=63 // pred_check_branch
          %480 = sbr.rel (%p478) target = $region72
        $region71: #{_vae_forward_impl.1} parent=63 // pred_region
          %s481 = smul.u32 32, %s27
          %p482 = scmp.lt.s32.totalorder %s481, 63
          %s483 = scalar_select %p482, %s481, 63
          %s484 = smul.addr %s483, 4
          %s485 = scalar_lea.vmem %s1, %s484
          %s486 = smul.u32 32, %s27
        $region72: #{_vae_forward_impl.1} parent=63 // pred_fallthru
          _
      $region64: #{_vae_forward_impl.1} parent=5 // pred_fallthru
        _
      %p487 = scmp.le.s32.totalorder 1, %s27
      %p488 = scmp.lt.s32.totalorder %s27, 3
      %p489 = pnand %p487, %p488
      %p490 = pneg %p489
      // Predicated region
      $region73: #{_vae_forward_impl.1} parent=5 // pred_check
        _
      $region74: #{_vae_forward_impl.1} parent=5 // pred_check_branch
        %492 = sbr.rel (%p489) target = $region76
      $region75: #{_vae_forward_impl.1} parent=5 // pred_region
        %s493 = ssub.s32 %s27, 1
        // Predicated region
        $region77: #{_vae_forward_impl.1} parent=75 // pred_check
          %p494 = pneg %p142
        $region78: #{_vae_forward_impl.1} parent=75 // pred_check_branch
          %496 = sbr.rel (%p494) target = $region80
        $region79: #{_vae_forward_impl.1} parent=75 // pred_region
          %497 = dma.done [#allocation3], 1024
        $region80: #{_vae_forward_impl.1} parent=75 // pred_fallthru
          _
        // Predicated region
        $region81: #{_vae_forward_impl.1} parent=75 // pred_check
          %p498 = pneg %p226
        $region82: #{_vae_forward_impl.1} parent=75 // pred_check_branch
          %500 = sbr.rel (%p498) target = $region84
        $region83: #{_vae_forward_impl.1} parent=75 // pred_region
          %501 = dma.done [#allocation6], 1024
        $region84: #{_vae_forward_impl.1} parent=75 // pred_fallthru
          _
        // Predicated region
        $region85: #{_vae_forward_impl.1} parent=75 // pred_check
          %p502 = pneg %p268
        $region86: #{_vae_forward_impl.1} parent=75 // pred_check_branch
          %504 = sbr.rel (%p502) target = $region88
        $region87: #{_vae_forward_impl.1} parent=75 // pred_region
          %505 = dma.done [#allocation6], 1024
        $region88: #{_vae_forward_impl.1} parent=75 // pred_fallthru
          _
        %s506 = smul.u32 32, %s32
        %p507 = scmp.lt.s32.totalorder %s506, 63
        %s508 = scalar_select %p507, %s506, 63
        %s509 = smul.addr %s508, 2
        %s510 = smul.addr %s509, 4
        %s511 = scalar_lea.vmem %s0, %s510
        %p512 = pneg %p53
        %p513 = pneg %p50
        %s514 = smul.u32 32, %s32
        %p515 = scmp.lt.s32.totalorder %s514, 63
        %s516 = scalar_select %p515, %s514, 63
        %s517 = smul.addr %s516, 4
        %s518 = scalar_lea.vmem %s1, %s517
        %p519 = pneg %p79
        %p520 = pneg %p76
        %p521 = pneg %p100
        %p522 = pneg %p97
        %p523 = pneg %p121
        %p524 = pneg %p118
        %p525 = pneg %p142
        %p526 = pneg %p139
        %p527 = pneg %p163
        %p528 = pneg %p160
        %p529 = pneg %p184
        %p530 = pneg %p181
        %p531 = pneg %p205
        %p532 = pneg %p202
        %p533 = pneg %p226
        %p534 = pneg %p223
        %p535 = pneg %p247
        %p536 = pneg %p244
        %p537 = pneg %p268
        %p538 = pneg %p265
        %p539 = pneg %p289
        %p540 = pneg %p286
        %p541 = pneg %p310
        %p542 = pneg %p307
        %p543 = pneg %p331
        %p544 = pneg %p328
        %p545 = pneg %p357
        %p546 = pneg %p354
        %s547 = sand.u32 %s344, 1
        %s548 = scalar_lea.sflag [#allocation4], %s547
        %s549 = sand.u32 %s344, 1
        %s550 = smul.addr %s549, 256
        %s551 = scalar_lea.vmem [#allocation8], %s550
        %p552 = pneg %p383
        %p553 = pneg %p380
        %s554 = smul.u32 32, %s32
        %p555 = scmp.lt.s32.totalorder %s554, 63
        %s556 = scalar_select %p555, %s554, 63
        %s557 = smul.addr %s556, 2
        %s558 = smul.addr %s557, 4
        %s559 = scalar_lea.vmem %s15, %s558
        %s560 = smul.u32 32, %s32
        %p561 = scmp.lt.s32.totalorder %s560, 63
        %s562 = scalar_select %p561, %s560, 63
        %s563 = smul.addr %s562, 2
        %s564 = smul.addr %s563, 4
        %s565 = scalar_lea.vmem %s0, %s564
        %s566 = smul.u32 32, %s32
        %s567 = smul.u32 32, %s32
        %p568 = scmp.lt.s32.totalorder %s567, 63
        %s569 = scalar_select %p568, %s567, 63
        %s570 = smul.addr %s569, 4
        %s571 = scalar_lea.vmem %s1, %s570
        %s572 = smul.u32 32, %s32
        %s573 = smul.u32 32, %s32
        %s574 = smul.u32 32, %s32
        %p575 = scmp.lt.s32.totalorder %s574, 63
        %s576 = scalar_select %p575, %s574, 63
        %s577 = smul.addr %s576, 2
        %s578 = smul.addr %s577, 4
        %s579 = scalar_lea.vmem %s15, %s578
        %s580 = smul.u32 32, %s32
        %v582 = vld [vmem:[%s565] sm:$0xff]
        %v583 = vld [vmem:[%s565 + $0x8] sm:$0xff]
        %v584 = vld [vmem:[%s565 + $0x10] sm:$0xff]
        %v585 = vld [vmem:[%s565 + $0x18] sm:$0xff]
        %v586 = vld [vmem:[%s565 + $0x20] sm:$0xff]
        %v587 = vld [vmem:[%s565 + $0x28] sm:$0xff]
        %v588 = vld [vmem:[%s565 + $0x30] sm:$0xff]
        %v589 = vld [vmem:[%s565 + $0x38] sm:$0xff]
        %v590 = vld [vmem:[%s565 + $0x40] sm:$0xff]
        %v591 = vld [vmem:[%s565 + $0x48] sm:$0xff]
        %v592 = vld [vmem:[%s565 + $0x50] sm:$0xff]
        %v593 = vld [vmem:[%s565 + $0x58] sm:$0xff]
        %v594 = vld [vmem:[%s565 + $0x60] sm:$0xff]
        %v595 = vld [vmem:[%s565 + $0x68] sm:$0xff]
        %v596 = vld [vmem:[%s565 + $0x70] sm:$0xff]
        %v597 = vld [vmem:[%s565 + $0x78] sm:$0xff]
        %v598 = vld [vmem:[%s565 + $0x80] sm:$0xff]
        %v599 = vld [vmem:[%s565 + $0x88] sm:$0xff]
        %v600 = vld [vmem:[%s565 + $0x90] sm:$0xff]
        %v601 = vld [vmem:[%s565 + $0x98] sm:$0xff]
        %v602 = vld [vmem:[%s565 + $0xa0] sm:$0xff]
        %v603 = vld [vmem:[%s565 + $0xa8] sm:$0xff]
        %v604 = vld [vmem:[%s565 + $0xb0] sm:$0xff]
        %v605 = vld [vmem:[%s565 + $0xb8] sm:$0xff]
        %v606 = vld [vmem:[%s565 + $0xc0] sm:$0xff]
        %v607 = vld [vmem:[%s565 + $0xc8] sm:$0xff]
        %v608 = vld [vmem:[%s565 + $0xd0] sm:$0xff]
        %v609 = vld [vmem:[%s565 + $0xd8] sm:$0xff]
        %v610 = vld [vmem:[%s565 + $0xe0] sm:$0xff]
        %v611 = vld [vmem:[%s565 + $0xe8] sm:$0xff]
        %v612 = vld [vmem:[%s565 + $0xf0] sm:$0xff]
        %v613 = vld [vmem:[%s565 + $0xf8] sm:$0xff]
        %v614 = vld [vmem:[%s571] sm:$0xf]
        %v615 = vld [vmem:[%s571 + $0x4] sm:$0xf]
        %v616 = vld [vmem:[%s571 + $0x8] sm:$0xf]
        %v617 = vld [vmem:[%s571 + $0xc] sm:$0xf]
        %v618 = vld [vmem:[%s571 + $0x10] sm:$0xf]
        %v619 = vld [vmem:[%s571 + $0x14] sm:$0xf]
        %v620 = vld [vmem:[%s571 + $0x18] sm:$0xf]
        %v621 = vld [vmem:[%s571 + $0x1c] sm:$0xf]
        %v622 = vld [vmem:[%s571 + $0x20] sm:$0xf]
        %v623 = vld [vmem:[%s571 + $0x24] sm:$0xf]
        %v624 = vld [vmem:[%s571 + $0x28] sm:$0xf]
        %v625 = vld [vmem:[%s571 + $0x2c] sm:$0xf]
        %v626 = vld [vmem:[%s571 + $0x30] sm:$0xf]
        %v627 = vld [vmem:[%s571 + $0x34] sm:$0xf]
        %v628 = vld [vmem:[%s571 + $0x38] sm:$0xf]
        %v629 = vld [vmem:[%s571 + $0x3c] sm:$0xf]
        %v630 = vld [vmem:[%s571 + $0x40] sm:$0xf]
        %v631 = vld [vmem:[%s571 + $0x44] sm:$0xf]
        %v632 = vld [vmem:[%s571 + $0x48] sm:$0xf]
        %v633 = vld [vmem:[%s571 + $0x4c] sm:$0xf]
        %v634 = vld [vmem:[%s571 + $0x50] sm:$0xf]
        %v635 = vld [vmem:[%s571 + $0x54] sm:$0xf]
        %v636 = vld [vmem:[%s571 + $0x58] sm:$0xf]
        %v637 = vld [vmem:[%s571 + $0x5c] sm:$0xf]
        %v638 = vld [vmem:[%s571 + $0x60] sm:$0xf]
        %v639 = vld [vmem:[%s571 + $0x64] sm:$0xf]
        %v640 = vld [vmem:[%s571 + $0x68] sm:$0xf]
        %v641 = vld [vmem:[%s571 + $0x6c] sm:$0xf]
        %v642 = vld [vmem:[%s571 + $0x70] sm:$0xf]
        %v643 = vld [vmem:[%s571 + $0x74] sm:$0xf]
        %v644 = vld [vmem:[%s571 + $0x78] sm:$0xf]
        %v645 = vld [vmem:[%s571 + $0x7c] sm:$0xf]
        %v646 = vld [vmem:[%s2] sm:$0xf]
        %v647 = vld [vmem:[%s2 + $0x4] sm:$0xf]
        %v648 = vld [vmem:[%s2 + $0x8] sm:$0xf]
        %v649 = vld [vmem:[%s2 + $0xc] sm:$0xf]
        %v650 = vld [vmem:[%s2 + $0x10] sm:$0xf]
        %v651 = vld [vmem:[%s2 + $0x14] sm:$0xf]
        %v652 = vld [vmem:[%s2 + $0x18] sm:$0xf]
        %v653 = vld [vmem:[%s2 + $0x1c] sm:$0xf]
        %v654 = vld [vmem:[%s2 + $0x20] sm:$0xf]
        %v655 = vld [vmem:[%s2 + $0x24] sm:$0xf]
        %v656 = vld [vmem:[%s2 + $0x28] sm:$0xf]
        %v657 = vld [vmem:[%s2 + $0x2c] sm:$0xf]
        %v658 = vld [vmem:[%s2 + $0x30] sm:$0xf]
        %v659 = vld [vmem:[%s2 + $0x34] sm:$0xf]
        %v660 = vld [vmem:[%s2 + $0x38] sm:$0xf]
        %v661 = vld [vmem:[%s2 + $0x3c] sm:$0xf]
        %v662 = vld [vmem:[%s2 + $0x40] sm:$0xf]
        %v663 = vld [vmem:[%s2 + $0x44] sm:$0xf]
        %v664 = vld [vmem:[%s2 + $0x48] sm:$0xf]
        %v665 = vld [vmem:[%s2 + $0x4c] sm:$0xf]
        %v666 = vld [vmem:[%s2 + $0x50] sm:$0xf]
        %v667 = vld [vmem:[%s2 + $0x54] sm:$0xf]
        %v668 = vld [vmem:[%s2 + $0x58] sm:$0xf]
        %v669 = vld [vmem:[%s2 + $0x5c] sm:$0xf]
        %v670 = vld [vmem:[%s2 + $0x60] sm:$0xf]
        %v671 = vld [vmem:[%s2 + $0x64] sm:$0xf]
        %v672 = vld [vmem:[%s2 + $0x68] sm:$0xf]
        %v673 = vld [vmem:[%s2 + $0x6c] sm:$0xf]
        %v674 = vld [vmem:[%s2 + $0x70] sm:$0xf]
        %v675 = vld [vmem:[%s2 + $0x74] sm:$0xf]
        %v676 = vld [vmem:[%s2 + $0x78] sm:$0xf]
        %v677 = vld [vmem:[%s2 + $0x7c] sm:$0xf]
        %v678 = vld [vmem:[%s3] sm:$0x1]
        %v680 = vlaneseq
        %v681 = vshrl.u32 %v680, 7
        %v682 = vsub.s32 0, %v681
        %v683 = vrot.slane %v678, %v682
        %v717 = vunpack.c.l.b16 %v582
        %v718 = vunpack.c.h.b16 %v582
        %v719 = vunpack.c.l.b16 %v583
        %v720 = vunpack.c.h.b16 %v583
        %v721 = vunpack.c.l.b16 %v584
        %v722 = vunpack.c.h.b16 %v584
        %v723 = vunpack.c.l.b16 %v585
        %v724 = vunpack.c.h.b16 %v585
        %v725 = vunpack.c.l.b16 %v586
        %v726 = vunpack.c.h.b16 %v586
        %v727 = vunpack.c.l.b16 %v587
        %v728 = vunpack.c.h.b16 %v587
        %v729 = vunpack.c.l.b16 %v588
        %v730 = vunpack.c.h.b16 %v588
        %v731 = vunpack.c.l.b16 %v589
        %v732 = vunpack.c.h.b16 %v589
        %v733 = vunpack.c.l.b16 %v590
        %v734 = vunpack.c.h.b16 %v590
        %v735 = vunpack.c.l.b16 %v591
        %v736 = vunpack.c.h.b16 %v591
        %v737 = vunpack.c.l.b16 %v592
        %v738 = vunpack.c.h.b16 %v592
        %v739 = vunpack.c.l.b16 %v593
        %v740 = vunpack.c.h.b16 %v593
        %v741 = vunpack.c.l.b16 %v594
        %v742 = vunpack.c.h.b16 %v594
        %v743 = vunpack.c.l.b16 %v595
        %v744 = vunpack.c.h.b16 %v595
        %v745 = vunpack.c.l.b16 %v596
        %v746 = vunpack.c.h.b16 %v596
        %v747 = vunpack.c.l.b16 %v597
        %v748 = vunpack.c.h.b16 %v597
        %v749 = vunpack.c.l.b16 %v598
        %v750 = vunpack.c.h.b16 %v598
        %v751 = vunpack.c.l.b16 %v599
        %v752 = vunpack.c.h.b16 %v599
        %v753 = vunpack.c.l.b16 %v600
        %v754 = vunpack.c.h.b16 %v600
        %v755 = vunpack.c.l.b16 %v601
        %v756 = vunpack.c.h.b16 %v601
        %v757 = vunpack.c.l.b16 %v602
        %v758 = vunpack.c.h.b16 %v602
        %v759 = vunpack.c.l.b16 %v603
        %v760 = vunpack.c.h.b16 %v603
        %v761 = vunpack.c.l.b16 %v604
        %v762 = vunpack.c.h.b16 %v604
        %v763 = vunpack.c.l.b16 %v605
        %v764 = vunpack.c.h.b16 %v605
        %v765 = vunpack.c.l.b16 %v606
        %v766 = vunpack.c.h.b16 %v606
        %v767 = vunpack.c.l.b16 %v607
        %v768 = vunpack.c.h.b16 %v607
        %v769 = vunpack.c.l.b16 %v608
        %v770 = vunpack.c.h.b16 %v608
        %v771 = vunpack.c.l.b16 %v609
        %v772 = vunpack.c.h.b16 %v609
        %v773 = vunpack.c.l.b16 %v610
        %v774 = vunpack.c.h.b16 %v610
        %v775 = vunpack.c.l.b16 %v611
        %v776 = vunpack.c.h.b16 %v611
        %v777 = vunpack.c.l.b16 %v612
        %v778 = vunpack.c.h.b16 %v612
        %v779 = vunpack.c.l.b16 %v613
        %v780 = vunpack.c.h.b16 %v613
        %v781 = vpack.c.b16 %v719, %v717
        %v782 = vpack.c.b16 %v720, %v718
        %v783 = vpack.c.b16 %v723, %v721
        %v784 = vpack.c.b16 %v724, %v722
        %v785 = vpack.c.b16 %v727, %v725
        %v786 = vpack.c.b16 %v728, %v726
        %v787 = vpack.c.b16 %v731, %v729
        %v788 = vpack.c.b16 %v732, %v730
        %v789 = vpack.c.b16 %v735, %v733
        %v790 = vpack.c.b16 %v736, %v734
        %v791 = vpack.c.b16 %v739, %v737
        %v792 = vpack.c.b16 %v740, %v738
        %v793 = vpack.c.b16 %v743, %v741
        %v794 = vpack.c.b16 %v744, %v742
        %v795 = vpack.c.b16 %v747, %v745
        %v796 = vpack.c.b16 %v748, %v746
        %v797 = vpack.c.b16 %v751, %v749
        %v798 = vpack.c.b16 %v752, %v750
        %v799 = vpack.c.b16 %v755, %v753
        %v800 = vpack.c.b16 %v756, %v754
        %v801 = vpack.c.b16 %v759, %v757
        %v802 = vpack.c.b16 %v760, %v758
        %v803 = vpack.c.b16 %v763, %v761
        %v804 = vpack.c.b16 %v764, %v762
        %v805 = vpack.c.b16 %v767, %v765
        %v806 = vpack.c.b16 %v768, %v766
        %v807 = vpack.c.b16 %v771, %v769
        %v808 = vpack.c.b16 %v772, %v770
        %v809 = vpack.c.b16 %v775, %v773
        %v810 = vpack.c.b16 %v776, %v774
        %v811 = vpack.c.b16 %v779, %v777
        %v812 = vpack.c.b16 %v780, %v778
        %v877 = vunpack.c.l.b16 %v646
        %v878 = vunpack.c.l.b16 %v647
        %v879 = vunpack.c.l.b16 %v648
        %v880 = vunpack.c.l.b16 %v649
        %v881 = vunpack.c.l.b16 %v650
        %v882 = vunpack.c.l.b16 %v651
        %v883 = vunpack.c.l.b16 %v652
        %v884 = vunpack.c.l.b16 %v653
        %v885 = vunpack.c.l.b16 %v654
        %v886 = vunpack.c.l.b16 %v655
        %v887 = vunpack.c.l.b16 %v656
        %v888 = vunpack.c.l.b16 %v657
        %v889 = vunpack.c.l.b16 %v658
        %v890 = vunpack.c.l.b16 %v659
        %v891 = vunpack.c.l.b16 %v660
        %v892 = vunpack.c.l.b16 %v661
        %v893 = vunpack.c.l.b16 %v662
        %v894 = vunpack.c.l.b16 %v663
        %v895 = vunpack.c.l.b16 %v664
        %v896 = vunpack.c.l.b16 %v665
        %v897 = vunpack.c.l.b16 %v666
        %v898 = vunpack.c.l.b16 %v667
        %v899 = vunpack.c.l.b16 %v668
        %v900 = vunpack.c.l.b16 %v669
        %v901 = vunpack.c.l.b16 %v670
        %v902 = vunpack.c.l.b16 %v671
        %v903 = vunpack.c.l.b16 %v672
        %v904 = vunpack.c.l.b16 %v673
        %v905 = vunpack.c.l.b16 %v674
        %v906 = vunpack.c.l.b16 %v675
        %v907 = vunpack.c.l.b16 %v676
        %v908 = vunpack.c.l.b16 %v677
        %v909 = vpack.c.b16 %v878, %v877
        %v910 = vpack.c.b16 %v880, %v879
        %v911 = vpack.c.b16 %v882, %v881
        %v912 = vpack.c.b16 %v884, %v883
        %v913 = vpack.c.b16 %v886, %v885
        %v914 = vpack.c.b16 %v888, %v887
        %v915 = vpack.c.b16 %v890, %v889
        %v916 = vpack.c.b16 %v892, %v891
        %v917 = vpack.c.b16 %v894, %v893
        %v918 = vpack.c.b16 %v896, %v895
        %v919 = vpack.c.b16 %v898, %v897
        %v920 = vpack.c.b16 %v900, %v899
        %v921 = vpack.c.b16 %v902, %v901
        %v922 = vpack.c.b16 %v904, %v903
        %v923 = vpack.c.b16 %v906, %v905
        %v924 = vpack.c.b16 %v908, %v907
        %941 = vmatprep.subr.bf16.mxu0 0
        %942 = vmatpush1.bf16.msra.mxu0 %v909
        %943 = vmatprep.subr.bf16.mxu0 0
        %944 = vmatpush1.bf16.msra.mxu0 %v910
        %945 = vmatprep.subr.bf16.mxu0 0
        %946 = vmatpush1.bf16.msra.mxu0 %v911
        %947 = vmatprep.subr.bf16.mxu0 0
        %948 = vmatpush1.bf16.msra.mxu0 %v912
        %949 = vmatprep.subr.bf16.mxu0 0
        %950 = vmatpush1.bf16.msra.mxu0 %v913
        %951 = vmatprep.subr.bf16.mxu0 0
        %952 = vmatpush1.bf16.msra.mxu0 %v914
        %953 = vmatprep.subr.bf16.mxu0 0
        %954 = vmatpush1.bf16.msra.mxu0 %v915
        %955 = vmatprep.subr.bf16.mxu0 0
        %956 = vmatpush1.bf16.msra.mxu0 %v916
        %957 = vmatprep.subr.bf16.mxu0 0
        %958 = vmatpush1.bf16.msra.mxu0 %v917
        %959 = vmatprep.subr.bf16.mxu0 0
        %960 = vmatpush1.bf16.msra.mxu0 %v918
        %961 = vmatprep.subr.bf16.mxu0 0
        %962 = vmatpush1.bf16.msra.mxu0 %v919
        %963 = vmatprep.subr.bf16.mxu0 0
        %964 = vmatpush1.bf16.msra.mxu0 %v920
        %965 = vmatprep.subr.bf16.mxu0 0
        %966 = vmatpush1.bf16.msra.mxu0 %v921
        %967 = vmatprep.subr.bf16.mxu0 0
        %968 = vmatpush1.bf16.msra.mxu0 %v922
        %969 = vmatprep.subr.bf16.mxu0 0
        %970 = vmatpush1.bf16.msra.mxu0 %v923
        %971 = vmatprep.subr.bf16.mxu0 0
        %972 = vmatpush1.bf16.msra.mxu0 %v924
        %973 = vmatprep.mubr.bf16.mxu0 %v782
        %974 = vmatmul.mubr.bf16.gmra.mrb[0].mxu0 %v781
        %v975 = vpop.f32.mrb[0].mxu0
        %v976 = vadd.f32 %v683, %v975
        %v977 = vpop.f32.mrb[0].mxu0
        %v978 = vpop.f32.mrb[0].mxu0
        %v979 = vadd.f32 %v683, %v978
        %v980 = vpop.f32.mrb[0].mxu0
        %981 = vmatprep.mubr.bf16.mxu0 %v784
        %982 = vmatmul.mubr.bf16.gmra.mrb[0].mxu0 %v783
        %v983 = vpop.f32.mrb[0].mxu0
        %v984 = vadd.f32 %v683, %v983
        %v985 = vpop.f32.mrb[0].mxu0
        %v986 = vpop.f32.mrb[0].mxu0
        %v987 = vadd.f32 %v683, %v986
        %v988 = vpop.f32.mrb[0].mxu0
        %989 = vmatprep.mubr.bf16.mxu0 %v786
        %990 = vmatmul.mubr.bf16.gmra.mrb[0].mxu0 %v785
        %v991 = vpop.f32.mrb[0].mxu0
        %v992 = vadd.f32 %v683, %v991
        %v993 = vpop.f32.mrb[0].mxu0
        %v994 = vpop.f32.mrb[0].mxu0
        %v995 = vadd.f32 %v683, %v994
        %v996 = vpop.f32.mrb[0].mxu0
        %997 = vmatprep.mubr.bf16.mxu0 %v788
        %998 = vmatmul.mubr.bf16.gmra.mrb[0].mxu0 %v787
        %v999 = vpop.f32.mrb[0].mxu0
        %v1000 = vadd.f32 %v683, %v999
        %v1001 = vpop.f32.mrb[0].mxu0
        %v1002 = vpop.f32.mrb[0].mxu0
        %v1003 = vadd.f32 %v683, %v1002
        %v1004 = vpop.f32.mrb[0].mxu0
        %1005 = vmatprep.mubr.bf16.mxu0 %v790
        %1006 = vmatmul.mubr.bf16.gmra.mrb[0].mxu0 %v789
        %v1007 = vpop.f32.mrb[0].mxu0
        %v1008 = vadd.f32 %v683, %v1007
        %v1009 = vpop.f32.mrb[0].mxu0
        %v1010 = vpop.f32.mrb[0].mxu0
        %v1011 = vadd.f32 %v683, %v1010
        %v1012 = vpop.f32.mrb[0].mxu0
        %1013 = vmatprep.mubr.bf16.mxu0 %v792
        %1014 = vmatmul.mubr.bf16.gmra.mrb[0].mxu0 %v791
        %v1015 = vpop.f32.mrb[0].mxu0
        %v1016 = vadd.f32 %v683, %v1015
        %v1017 = vpop.f32.mrb[0].mxu0
        %v1018 = vpop.f32.mrb[0].mxu0
        %v1019 = vadd.f32 %v683, %v1018
        %v1020 = vpop.f32.mrb[0].mxu0
        %1021 = vmatprep.mubr.bf16.mxu0 %v794
        %1022 = vmatmul.mubr.bf16.gmra.mrb[0].mxu0 %v793
        %v1023 = vpop.f32.mrb[0].mxu0
        %v1024 = vadd.f32 %v683, %v1023
        %v1025 = vpop.f32.mrb[0].mxu0
        %v1026 = vpop.f32.mrb[0].mxu0
        %v1027 = vadd.f32 %v683, %v1026
        %v1028 = vpop.f32.mrb[0].mxu0
        %1029 = vmatprep.mubr.bf16.mxu0 %v796
        %1030 = vmatmul.mubr.bf16.gmra.mrb[0].mxu0 %v795
        %v1031 = vpop.f32.mrb[0].mxu0
        %v1032 = vadd.f32 %v683, %v1031
        %v1033 = vpop.f32.mrb[0].mxu0
        %v1034 = vpop.f32.mrb[0].mxu0
        %v1035 = vadd.f32 %v683, %v1034
        %v1036 = vpop.f32.mrb[0].mxu0
        %1037 = vmatprep.mubr.bf16.mxu0 %v798
        %1038 = vmatmul.mubr.bf16.gmra.mrb[0].mxu0 %v797
        %v1039 = vpop.f32.mrb[0].mxu0
        %v1040 = vadd.f32 %v683, %v1039
        %v1041 = vpop.f32.mrb[0].mxu0
        %v1042 = vpop.f32.mrb[0].mxu0
        %v1043 = vadd.f32 %v683, %v1042
        %v1044 = vpop.f32.mrb[0].mxu0
        %1045 = vmatprep.mubr.bf16.mxu0 %v800
        %1046 = vmatmul.mubr.bf16.gmra.mrb[0].mxu0 %v799
        %v1047 = vpop.f32.mrb[0].mxu0
        %v1048 = vadd.f32 %v683, %v1047
        %v1049 = vpop.f32.mrb[0].mxu0
        %v1050 = vpop.f32.mrb[0].mxu0
        %v1051 = vadd.f32 %v683, %v1050
        %v1052 = vpop.f32.mrb[0].mxu0
        %1053 = vmatprep.mubr.bf16.mxu0 %v802
        %1054 = vmatmul.mubr.bf16.gmra.mrb[0].mxu0 %v801
        %v1055 = vpop.f32.mrb[0].mxu0
        %v1056 = vadd.f32 %v683, %v1055
        %v1057 = vpop.f32.mrb[0].mxu0
        %v1058 = vpop.f32.mrb[0].mxu0
        %v1059 = vadd.f32 %v683, %v1058
        %v1060 = vpop.f32.mrb[0].mxu0
        %1061 = vmatprep.mubr.bf16.mxu0 %v804
        %1062 = vmatmul.mubr.bf16.gmra.mrb[0].mxu0 %v803
        %v1063 = vpop.f32.mrb[0].mxu0
        %v1064 = vadd.f32 %v683, %v1063
        %v1065 = vpop.f32.mrb[0].mxu0
        %v1066 = vpop.f32.mrb[0].mxu0
        %v1067 = vadd.f32 %v683, %v1066
        %v1068 = vpop.f32.mrb[0].mxu0
        %1069 = vmatprep.mubr.bf16.mxu0 %v806
        %1070 = vmatmul.mubr.bf16.gmra.mrb[0].mxu0 %v805
        %v1071 = vpop.f32.mrb[0].mxu0
        %v1072 = vadd.f32 %v683, %v1071
        %v1073 = vpop.f32.mrb[0].mxu0
        %v1074 = vpop.f32.mrb[0].mxu0
        %v1075 = vadd.f32 %v683, %v1074
        %v1076 = vpop.f32.mrb[0].mxu0
        %1077 = vmatprep.mubr.bf16.mxu0 %v808
        %1078 = vmatmul.mubr.bf16.gmra.mrb[0].mxu0 %v807
        %v1079 = vpop.f32.mrb[0].mxu0
        %v1080 = vadd.f32 %v683, %v1079
        %v1081 = vpop.f32.mrb[0].mxu0
        %v1082 = vpop.f32.mrb[0].mxu0
        %v1083 = vadd.f32 %v683, %v1082
        %v1084 = vpop.f32.mrb[0].mxu0
        %1085 = vmatprep.mubr.bf16.mxu0 %v810
        %1086 = vmatmul.mubr.bf16.gmra.mrb[0].mxu0 %v809
        %v1087 = vpop.f32.mrb[0].mxu0
        %v1088 = vadd.f32 %v683, %v1087
        %v1089 = vpop.f32.mrb[0].mxu0
        %v1090 = vpop.f32.mrb[0].mxu0
        %v1091 = vadd.f32 %v683, %v1090
        %v1092 = vpop.f32.mrb[0].mxu0
        %1093 = vmatprep.mubr.bf16.mxu0 %v812
        %1094 = vmatmul.mubr.bf16.gmra.mrb[0].mxu0 %v811
        %v1095 = vpop.f32.mrb[0].mxu0
        %v1096 = vadd.f32 %v683, %v1095
        %v1097 = vpop.f32.mrb[0].mxu0
        %v1098 = vpop.f32.mrb[0].mxu0
        %v1099 = vadd.f32 %v683, %v1098
        %v1100 = vpop.f32.mrb[0].mxu0
        %1101 = vdwg.mxu0
        %v1102 = vmax.f32 %v976, 0.0
        %v1103 = vmax.f32 %v979, 0.0
        %v1104 = vmax.f32 %v984, 0.0
        %v1105 = vmax.f32 %v987, 0.0
        %v1106 = vmax.f32 %v992, 0.0
        %v1107 = vmax.f32 %v995, 0.0
        %v1108 = vmax.f32 %v1000, 0.0
        %v1109 = vmax.f32 %v1003, 0.0
        %v1110 = vmax.f32 %v1008, 0.0
        %v1111 = vmax.f32 %v1011, 0.0
        %v1112 = vmax.f32 %v1016, 0.0
        %v1113 = vmax.f32 %v1019, 0.0
        %v1114 = vmax.f32 %v1024, 0.0
        %v1115 = vmax.f32 %v1027, 0.0
        %v1116 = vmax.f32 %v1032, 0.0
        %v1117 = vmax.f32 %v1035, 0.0
        %v1118 = vmax.f32 %v1040, 0.0
        %v1119 = vmax.f32 %v1043, 0.0
        %v1120 = vmax.f32 %v1048, 0.0
        %v1121 = vmax.f32 %v1051, 0.0
        %v1122 = vmax.f32 %v1056, 0.0
        %v1123 = vmax.f32 %v1059, 0.0
        %v1124 = vmax.f32 %v1064, 0.0
        %v1125 = vmax.f32 %v1067, 0.0
        %v1126 = vmax.f32 %v1072, 0.0
        %v1127 = vmax.f32 %v1075, 0.0
        %v1128 = vmax.f32 %v1080, 0.0
        %v1129 = vmax.f32 %v1083, 0.0
        %v1130 = vmax.f32 %v1088, 0.0
        %v1131 = vmax.f32 %v1091, 0.0
        %v1132 = vmax.f32 %v1096, 0.0
        %v1133 = vmax.f32 %v1099, 0.0
        %v1134 = vpack.c.bf16 %v1103, %v1102
        %v1135 = vpack.c.bf16 %v1105, %v1104
        %v1136 = vpack.c.bf16 %v1107, %v1106
        %v1137 = vpack.c.bf16 %v1109, %v1108
        %v1138 = vpack.c.bf16 %v1111, %v1110
        %v1139 = vpack.c.bf16 %v1113, %v1112
        %v1140 = vpack.c.bf16 %v1115, %v1114
        %v1141 = vpack.c.bf16 %v1117, %v1116
        %v1142 = vpack.c.bf16 %v1119, %v1118
        %v1143 = vpack.c.bf16 %v1121, %v1120
        %v1144 = vpack.c.bf16 %v1123, %v1122
        %v1145 = vpack.c.bf16 %v1125, %v1124
        %v1146 = vpack.c.bf16 %v1127, %v1126
        %v1147 = vpack.c.bf16 %v1129, %v1128
        %v1148 = vpack.c.bf16 %v1131, %v1130
        %v1149 = vpack.c.bf16 %v1133, %v1132
        %v1150 = vld [vmem:[#allocation2] sm:$0xf]
        %v1151 = vld [vmem:[#allocation2 + $0x4] sm:$0xf]
        %v1152 = vld [vmem:[#allocation2 + $0x8] sm:$0xf]
        %v1153 = vld [vmem:[#allocation2 + $0xc] sm:$0xf]
        %v1154 = vld [vmem:[#allocation2 + $0x10] sm:$0xf]
        %v1155 = vld [vmem:[#allocation2 + $0x14] sm:$0xf]
        %v1156 = vld [vmem:[#allocation2 + $0x18] sm:$0xf]
        %v1157 = vld [vmem:[#allocation2 + $0x1c] sm:$0xf]
        %v1158 = vld [vmem:[#allocation2 + $0x20] sm:$0xf]
        %v1159 = vld [vmem:[#allocation2 + $0x24] sm:$0xf]
        %v1160 = vld [vmem:[#allocation2 + $0x28] sm:$0xf]
        %v1161 = vld [vmem:[#allocation2 + $0x2c] sm:$0xf]
        %v1162 = vld [vmem:[#allocation2 + $0x30] sm:$0xf]
        %v1163 = vld [vmem:[#allocation2 + $0x34] sm:$0xf]
        %v1164 = vld [vmem:[#allocation2 + $0x38] sm:$0xf]
        %v1165 = vld [vmem:[#allocation2 + $0x3c] sm:$0xf]
        %v1166 = vld [vmem:[%s5] sm:$0x1]
        %v1168 = vlaneseq
        %v1169 = vshrl.u32 %v1168, 7
        %v1170 = vsub.s32 0, %v1169
        %v1171 = vrot.slane %v1166, %v1170
        %v1189 = vunpack.c.l.b16 %v1150
        %v1190 = vunpack.c.l.b16 %v1151
        %v1191 = vunpack.c.l.b16 %v1152
        %v1192 = vunpack.c.l.b16 %v1153
        %v1193 = vunpack.c.l.b16 %v1154
        %v1194 = vunpack.c.l.b16 %v1155
        %v1195 = vunpack.c.l.b16 %v1156
        %v1196 = vunpack.c.l.b16 %v1157
        %v1197 = vunpack.c.l.b16 %v1158
        %v1198 = vunpack.c.l.b16 %v1159
        %v1199 = vunpack.c.l.b16 %v1160
        %v1200 = vunpack.c.l.b16 %v1161
        %v1201 = vunpack.c.l.b16 %v1162
        %v1202 = vunpack.c.l.b16 %v1163
        %v1203 = vunpack.c.l.b16 %v1164
        %v1204 = vunpack.c.l.b16 %v1165
        %v1205 = vpack.c.b16 %v1190, %v1189
        %v1206 = vpack.c.b16 %v1192, %v1191
        %v1207 = vpack.c.b16 %v1194, %v1193
        %v1208 = vpack.c.b16 %v1196, %v1195
        %v1209 = vpack.c.b16 %v1198, %v1197
        %v1210 = vpack.c.b16 %v1200, %v1199
        %v1211 = vpack.c.b16 %v1202, %v1201
        %v1212 = vpack.c.b16 %v1204, %v1203
        %1221 = vmatprep.subr.bf16.mxu0 0
        %1222 = vmatpush1.bf16.msra.mxu0 %v1205
        %1223 = vmatprep.subr.bf16.mxu0 0
        %1224 = vmatpush1.bf16.msra.mxu0 %v1206
        %1225 = vmatprep.subr.bf16.mxu0 0
        %1226 = vmatpush1.bf16.msra.mxu0 %v1207
        %1227 = vmatprep.subr.bf16.mxu0 0
        %1228 = vmatpush1.bf16.msra.mxu0 %v1208
        %1229 = vmatprep.subr.bf16.mxu0 0
        %1230 = vmatpush1.bf16.msra.mxu0 %v1209
        %1231 = vmatprep.subr.bf16.mxu0 0
        %1232 = vmatpush1.bf16.msra.mxu0 %v1210
        %1233 = vmatprep.subr.bf16.mxu0 0
        %1234 = vmatpush1.bf16.msra.mxu0 %v1211
        %1235 = vmatprep.subr.bf16.mxu0 0
        %1236 = vmatpush1.bf16.msra.mxu0 %v1212
        %1237 = vmatprep.subr.bf16.mxu0 0
        %1238 = vmatpush1.bf16.msra.mxu0 0
        %1239 = vmatprep.subr.bf16.mxu0 0
        %1240 = vmatpush1.bf16.msra.mxu0 0
        %1241 = vmatprep.subr.bf16.mxu0 0
        %1242 = vmatpush1.bf16.msra.mxu0 0
        %1243 = vmatprep.subr.bf16.mxu0 0
        %1244 = vmatpush1.bf16.msra.mxu0 0
        %1245 = vmatprep.subr.bf16.mxu0 0
        %1246 = vmatpush1.bf16.msra.mxu0 0
        %1247 = vmatprep.subr.bf16.mxu0 0
        %1248 = vmatpush1.bf16.msra.mxu0 0
        %1249 = vmatprep.subr.bf16.mxu0 0
        %1250 = vmatpush1.bf16.msra.mxu0 0
        %1251 = vmatprep.subr.bf16.mxu0 0
        %1252 = vmatpush1.bf16.msra.mxu0 0
        %1253 = vmatprep.mubr.bf16.mxu0 0
        %1254 = vmatmul.mubr.bf16.gmra.mrb[0].mxu0 %v1134
        %v1255 = vpop.f32.mrb[0].mxu0
        %v1256 = vadd.f32 %v1171, %v1255
        %v1257 = vpop.f32.mrb[0].mxu0
        %v1258 = vpop.f32.mrb[0].mxu0
        %v1259 = vadd.f32 %v1171, %v1258
        %v1260 = vpop.f32.mrb[0].mxu0
        %1261 = vmatprep.mubr.bf16.mxu0 0
        %1262 = vmatmul.mubr.bf16.gmra.mrb[0].mxu0 %v1135
        %v1263 = vpop.f32.mrb[0].mxu0
        %v1264 = vadd.f32 %v1171, %v1263
        %v1265 = vpop.f32.mrb[0].mxu0
        %v1266 = vpop.f32.mrb[0].mxu0
        %v1267 = vadd.f32 %v1171, %v1266
        %v1268 = vpop.f32.mrb[0].mxu0
        %1269 = vmatprep.mubr.bf16.mxu0 0
        %1270 = vmatmul.mubr.bf16.gmra.mrb[0].mxu0 %v1136
        %v1271 = vpop.f32.mrb[0].mxu0
        %v1272 = vadd.f32 %v1171, %v1271
        %v1273 = vpop.f32.mrb[0].mxu0
        %v1274 = vpop.f32.mrb[0].mxu0
        %v1275 = vadd.f32 %v1171, %v1274
        %v1276 = vpop.f32.mrb[0].mxu0
        %1277 = vmatprep.mubr.bf16.mxu0 0
        %1278 = vmatmul.mubr.bf16.gmra.mrb[0].mxu0 %v1137
        %v1279 = vpop.f32.mrb[0].mxu0
        %v1280 = vadd.f32 %v1171, %v1279
        %v1281 = vpop.f32.mrb[0].mxu0
        %v1282 = vpop.f32.mrb[0].mxu0
        %v1283 = vadd.f32 %v1171, %v1282
        %v1284 = vpop.f32.mrb[0].mxu0
        %1285 = vmatprep.mubr.bf16.mxu0 0
        %1286 = vmatmul.mubr.bf16.gmra.mrb[0].mxu0 %v1138
        %v1287 = vpop.f32.mrb[0].mxu0
        %v1288 = vadd.f32 %v1171, %v1287
        %v1289 = vpop.f32.mrb[0].mxu0
        %v1290 = vpop.f32.mrb[0].mxu0
        %v1291 = vadd.f32 %v1171, %v1290
        %v1292 = vpop.f32.mrb[0].mxu0
        %1293 = vmatprep.mubr.bf16.mxu0 0
        %1294 = vmatmul.mubr.bf16.gmra.mrb[0].mxu0 %v1139
        %v1295 = vpop.f32.mrb[0].mxu0
        %v1296 = vadd.f32 %v1171, %v1295
        %v1297 = vpop.f32.mrb[0].mxu0
        %v1298 = vpop.f32.mrb[0].mxu0
        %v1299 = vadd.f32 %v1171, %v1298
        %v1300 = vpop.f32.mrb[0].mxu0
        %1301 = vmatprep.mubr.bf16.mxu0 0
        %1302 = vmatmul.mubr.bf16.gmra.mrb[0].mxu0 %v1140
        %v1303 = vpop.f32.mrb[0].mxu0
        %v1304 = vadd.f32 %v1171, %v1303
        %v1305 = vpop.f32.mrb[0].mxu0
        %v1306 = vpop.f32.mrb[0].mxu0
        %v1307 = vadd.f32 %v1171, %v1306
        %v1308 = vpop.f32.mrb[0].mxu0
        %1309 = vmatprep.mubr.bf16.mxu0 0
        %1310 = vmatmul.mubr.bf16.gmra.mrb[0].mxu0 %v1141
        %v1311 = vpop.f32.mrb[0].mxu0
        %v1312 = vadd.f32 %v1171, %v1311
        %v1313 = vpop.f32.mrb[0].mxu0
        %v1314 = vpop.f32.mrb[0].mxu0
        %v1315 = vadd.f32 %v1171, %v1314
        %v1316 = vpop.f32.mrb[0].mxu0
        %1317 = vmatprep.mubr.bf16.mxu0 0
        %1318 = vmatmul.mubr.bf16.gmra.mrb[0].mxu0 %v1142
        %v1319 = vpop.f32.mrb[0].mxu0
        %v1320 = vadd.f32 %v1171, %v1319
        %v1321 = vpop.f32.mrb[0].mxu0
        %v1322 = vpop.f32.mrb[0].mxu0
        %v1323 = vadd.f32 %v1171, %v1322
        %v1324 = vpop.f32.mrb[0].mxu0
        %1325 = vmatprep.mubr.bf16.mxu0 0
        %1326 = vmatmul.mubr.bf16.gmra.mrb[0].mxu0 %v1143
        %v1327 = vpop.f32.mrb[0].mxu0
        %v1328 = vadd.f32 %v1171, %v1327
        %v1329 = vpop.f32.mrb[0].mxu0
        %v1330 = vpop.f32.mrb[0].mxu0
        %v1331 = vadd.f32 %v1171, %v1330
        %v1332 = vpop.f32.mrb[0].mxu0
        %1333 = vmatprep.mubr.bf16.mxu0 0
        %1334 = vmatmul.mubr.bf16.gmra.mrb[0].mxu0 %v1144
        %v1335 = vpop.f32.mrb[0].mxu0
        %v1336 = vadd.f32 %v1171, %v1335
        %v1337 = vpop.f32.mrb[0].mxu0
        %v1338 = vpop.f32.mrb[0].mxu0
        %v1339 = vadd.f32 %v1171, %v1338
        %v1340 = vpop.f32.mrb[0].mxu0
        %1341 = vmatprep.mubr.bf16.mxu0 0
        %1342 = vmatmul.mubr.bf16.gmra.mrb[0].mxu0 %v1145
        %v1343 = vpop.f32.mrb[0].mxu0
        %v1344 = vadd.f32 %v1171, %v1343
        %v1345 = vpop.f32.mrb[0].mxu0
        %v1346 = vpop.f32.mrb[0].mxu0
        %v1347 = vadd.f32 %v1171, %v1346
        %v1348 = vpop.f32.mrb[0].mxu0
        %1349 = vmatprep.mubr.bf16.mxu0 0
        %1350 = vmatmul.mubr.bf16.gmra.mrb[0].mxu0 %v1146
        %v1351 = vpop.f32.mrb[0].mxu0
        %v1352 = vadd.f32 %v1171, %v1351
        %v1353 = vpop.f32.mrb[0].mxu0
        %v1354 = vpop.f32.mrb[0].mxu0
        %v1355 = vadd.f32 %v1171, %v1354
        %v1356 = vpop.f32.mrb[0].mxu0
        %1357 = vmatprep.mubr.bf16.mxu0 0
        %1358 = vmatmul.mubr.bf16.gmra.mrb[0].mxu0 %v1147
        %v1359 = vpop.f32.mrb[0].mxu0
        %v1360 = vadd.f32 %v1171, %v1359
        %v1361 = vpop.f32.mrb[0].mxu0
        %v1362 = vpop.f32.mrb[0].mxu0
        %v1363 = vadd.f32 %v1171, %v1362
        %v1364 = vpop.f32.mrb[0].mxu0
        %1365 = vmatprep.mubr.bf16.mxu0 0
        %1366 = vmatmul.mubr.bf16.gmra.mrb[0].mxu0 %v1148
        %v1367 = vpop.f32.mrb[0].mxu0
        %v1368 = vadd.f32 %v1171, %v1367
        %v1369 = vpop.f32.mrb[0].mxu0
        %v1370 = vpop.f32.mrb[0].mxu0
        %v1371 = vadd.f32 %v1171, %v1370
        %v1372 = vpop.f32.mrb[0].mxu0
        %1373 = vmatprep.mubr.bf16.mxu0 0
        %1374 = vmatmul.mubr.bf16.gmra.mrb[0].mxu0 %v1149
        %v1375 = vpop.f32.mrb[0].mxu0
        %v1376 = vadd.f32 %v1171, %v1375
        %v1377 = vpop.f32.mrb[0].mxu0
        %v1378 = vpop.f32.mrb[0].mxu0
        %v1379 = vadd.f32 %v1171, %v1378
        %v1380 = vpop.f32.mrb[0].mxu0
        %1381 = vdwg.mxu0
        %v1382 = vmax.f32 %v1256, 0.0
        %v1383 = vmax.f32 %v1259, 0.0
        %v1384 = vmax.f32 %v1264, 0.0
        %v1385 = vmax.f32 %v1267, 0.0
        %v1386 = vmax.f32 %v1272, 0.0
        %v1387 = vmax.f32 %v1275, 0.0
        %v1388 = vmax.f32 %v1280, 0.0
        %v1389 = vmax.f32 %v1283, 0.0
        %v1390 = vmax.f32 %v1288, 0.0
        %v1391 = vmax.f32 %v1291, 0.0
        %v1392 = vmax.f32 %v1296, 0.0
        %v1393 = vmax.f32 %v1299, 0.0
        %v1394 = vmax.f32 %v1304, 0.0
        %v1395 = vmax.f32 %v1307, 0.0
        %v1396 = vmax.f32 %v1312, 0.0
        %v1397 = vmax.f32 %v1315, 0.0
        %v1398 = vmax.f32 %v1320, 0.0
        %v1399 = vmax.f32 %v1323, 0.0
        %v1400 = vmax.f32 %v1328, 0.0
        %v1401 = vmax.f32 %v1331, 0.0
        %v1402 = vmax.f32 %v1336, 0.0
        %v1403 = vmax.f32 %v1339, 0.0
        %v1404 = vmax.f32 %v1344, 0.0
        %v1405 = vmax.f32 %v1347, 0.0
        %v1406 = vmax.f32 %v1352, 0.0
        %v1407 = vmax.f32 %v1355, 0.0
        %v1408 = vmax.f32 %v1360, 0.0
        %v1409 = vmax.f32 %v1363, 0.0
        %v1410 = vmax.f32 %v1368, 0.0
        %v1411 = vmax.f32 %v1371, 0.0
        %v1412 = vmax.f32 %v1376, 0.0
        %v1413 = vmax.f32 %v1379, 0.0
        %v1414 = vpack.c.bf16 %v1383, %v1382
        %v1415 = vpack.c.bf16 %v1385, %v1384
        %v1416 = vpack.c.bf16 %v1387, %v1386
        %v1417 = vpack.c.bf16 %v1389, %v1388
        %v1418 = vpack.c.bf16 %v1391, %v1390
        %v1419 = vpack.c.bf16 %v1393, %v1392
        %v1420 = vpack.c.bf16 %v1395, %v1394
        %v1421 = vpack.c.bf16 %v1397, %v1396
        %v1422 = vpack.c.bf16 %v1399, %v1398
        %v1423 = vpack.c.bf16 %v1401, %v1400
        %v1424 = vpack.c.bf16 %v1403, %v1402
        %v1425 = vpack.c.bf16 %v1405, %v1404
        %v1426 = vpack.c.bf16 %v1407, %v1406
        %v1427 = vpack.c.bf16 %v1409, %v1408
        %v1428 = vpack.c.bf16 %v1411, %v1410
        %v1429 = vpack.c.bf16 %v1413, %v1412
        %v1430 = vld [vmem:[%s6] sm:$0xff]
        %v1431 = vld [vmem:[%s6 + $0x8] sm:$0xff]
        %v1432 = vld [vmem:[%s6 + $0x10] sm:$0xff]
        %v1433 = vld [vmem:[%s6 + $0x18] sm:$0xff]
        %v1434 = vld [vmem:[%s6 + $0x20] sm:$0xff]
        %v1435 = vld [vmem:[%s6 + $0x28] sm:$0xff]
        %v1436 = vld [vmem:[%s6 + $0x30] sm:$0xff]
        %v1437 = vld [vmem:[%s6 + $0x38] sm:$0xff]
        %v1438 = vld [vmem:[%s6 + $0x40] sm:$0xff]
        %v1439 = vld [vmem:[%s6 + $0x48] sm:$0xff]
        %v1440 = vld [vmem:[%s6 + $0x50] sm:$0xff]
        %v1441 = vld [vmem:[%s6 + $0x58] sm:$0xff]
        %v1442 = vld [vmem:[%s6 + $0x60] sm:$0xff]
        %v1443 = vld [vmem:[%s6 + $0x68] sm:$0xff]
        %v1444 = vld [vmem:[%s6 + $0x70] sm:$0xff]
        %v1445 = vld [vmem:[%s6 + $0x78] sm:$0xff]
        %v1446 = vld [vmem:[%s7] sm:$0x3]
        %v1448 = vlaneseq
        %v1449 = vshrl.u32 %v1448, 7
        %v1450 = vsub.s32 0, %v1449
        %v1451 = vrot.slane %v1446, %v1450
        %v1452 = vlaneseq
        %v1453 = vshrl.u32 %v1452, 7
        %v1454 = vsub.s32 1, %v1453
        %v1455 = vrot.slane %v1446, %v1454
        %v1474 = vunpack.c.l.b16 %v1430
        %v1475 = vunpack.c.h.b16 %v1430
        %v1476 = vunpack.c.l.b16 %v1431
        %v1477 = vunpack.c.h.b16 %v1431
        %v1478 = vunpack.c.l.b16 %v1432
        %v1479 = vunpack.c.h.b16 %v1432
        %v1480 = vunpack.c.l.b16 %v1433
        %v1481 = vunpack.c.h.b16 %v1433
        %v1482 = vunpack.c.l.b16 %v1434
        %v1483 = vunpack.c.h.b16 %v1434
        %v1484 = vunpack.c.l.b16 %v1435
        %v1485 = vunpack.c.h.b16 %v1435
        %v1486 = vunpack.c.l.b16 %v1436
        %v1487 = vunpack.c.h.b16 %v1436
        %v1488 = vunpack.c.l.b16 %v1437
        %v1489 = vunpack.c.h.b16 %v1437
        %v1490 = vunpack.c.l.b16 %v1438
        %v1491 = vunpack.c.h.b16 %v1438
        %v1492 = vunpack.c.l.b16 %v1439
        %v1493 = vunpack.c.h.b16 %v1439
        %v1494 = vunpack.c.l.b16 %v1440
        %v1495 = vunpack.c.h.b16 %v1440
        %v1496 = vunpack.c.l.b16 %v1441
        %v1497 = vunpack.c.h.b16 %v1441
        %v1498 = vunpack.c.l.b16 %v1442
        %v1499 = vunpack.c.h.b16 %v1442
        %v1500 = vunpack.c.l.b16 %v1443
        %v1501 = vunpack.c.h.b16 %v1443
        %v1502 = vunpack.c.l.b16 %v1444
        %v1503 = vunpack.c.h.b16 %v1444
        %v1504 = vunpack.c.l.b16 %v1445
        %v1505 = vunpack.c.h.b16 %v1445
        %v1506 = vpack.c.b16 %v1476, %v1474
        %v1507 = vpack.c.b16 %v1477, %v1475
        %v1508 = vpack.c.b16 %v1480, %v1478
        %v1509 = vpack.c.b16 %v1481, %v1479
        %v1510 = vpack.c.b16 %v1484, %v1482
        %v1511 = vpack.c.b16 %v1485, %v1483
        %v1512 = vpack.c.b16 %v1488, %v1486
        %v1513 = vpack.c.b16 %v1489, %v1487
        %v1514 = vpack.c.b16 %v1492, %v1490
        %v1515 = vpack.c.b16 %v1493, %v1491
        %v1516 = vpack.c.b16 %v1496, %v1494
        %v1517 = vpack.c.b16 %v1497, %v1495
        %v1518 = vpack.c.b16 %v1500, %v1498
        %v1519 = vpack.c.b16 %v1501, %v1499
        %v1520 = vpack.c.b16 %v1504, %v1502
        %v1521 = vpack.c.b16 %v1505, %v1503
        %1538 = vmatprep.subr.bf16.mxu0 %v1507
        %1539 = vmatpush1.bf16.msra.mxu0 %v1506
        %1540 = vmatprep.subr.bf16.mxu0 %v1509
        %1541 = vmatpush1.bf16.msra.mxu0 %v1508
        %1542 = vmatprep.subr.bf16.mxu0 %v1511
        %1543 = vmatpush1.bf16.msra.mxu0 %v1510
        %1544 = vmatprep.subr.bf16.mxu0 %v1513
        %1545 = vmatpush1.bf16.msra.mxu0 %v1512
        %1546 = vmatprep.subr.bf16.mxu0 %v1515
        %1547 = vmatpush1.bf16.msra.mxu0 %v1514
        %1548 = vmatprep.subr.bf16.mxu0 %v1517
        %1549 = vmatpush1.bf16.msra.mxu0 %v1516
        %1550 = vmatprep.subr.bf16.mxu0 %v1519
        %1551 = vmatpush1.bf16.msra.mxu0 %v1518
        %1552 = vmatprep.subr.bf16.mxu0 %v1521
        %1553 = vmatpush1.bf16.msra.mxu0 %v1520
        %1554 = vmatprep.subr.bf16.mxu0 0
        %1555 = vmatpush1.bf16.msra.mxu0 0
        %1556 = vmatprep.subr.bf16.mxu0 0
        %1557 = vmatpush1.bf16.msra.mxu0 0
        %1558 = vmatprep.subr.bf16.mxu0 0
        %1559 = vmatpush1.bf16.msra.mxu0 0
        %1560 = vmatprep.subr.bf16.mxu0 0
        %1561 = vmatpush1.bf16.msra.mxu0 0
        %1562 = vmatprep.subr.bf16.mxu0 0
        %1563 = vmatpush1.bf16.msra.mxu0 0
        %1564 = vmatprep.subr.bf16.mxu0 0
        %1565 = vmatpush1.bf16.msra.mxu0 0
        %1566 = vmatprep.subr.bf16.mxu0 0
        %1567 = vmatpush1.bf16.msra.mxu0 0
        %1568 = vmatprep.subr.bf16.mxu0 0
        %1569 = vmatpush1.bf16.msra.mxu0 0
        %1570 = vmatprep.mubr.bf16.mxu0 0
        %1571 = vmatmul.mubr.bf16.gmra.mrb[0].mxu0 %v1414
        %v1572 = vpop.f32.mrb[0].mxu0
        %v1573 = vadd.f32 %v1451, %v1572
        %v1574 = vpop.f32.mrb[0].mxu0
        %v1575 = vadd.f32 %v1455, %v1574
        %v1576 = vpop.f32.mrb[0].mxu0
        %v1577 = vadd.f32 %v1451, %v1576
        %v1578 = vpop.f32.mrb[0].mxu0
        %v1579 = vadd.f32 %v1455, %v1578
        %1580 = vmatprep.mubr.bf16.mxu0 0
        %1581 = vmatmul.mubr.bf16.gmra.mrb[0].mxu0 %v1415
        %v1582 = vpop.f32.mrb[0].mxu0
        %v1583 = vadd.f32 %v1451, %v1582
        %v1584 = vpop.f32.mrb[0].mxu0
        %v1585 = vadd.f32 %v1455, %v1584
        %v1586 = vpop.f32.mrb[0].mxu0
        %v1587 = vadd.f32 %v1451, %v1586
        %v1588 = vpop.f32.mrb[0].mxu0
        %v1589 = vadd.f32 %v1455, %v1588
        %1590 = vmatprep.mubr.bf16.mxu0 0
        %1591 = vmatmul.mubr.bf16.gmra.mrb[0].mxu0 %v1416
        %v1592 = vpop.f32.mrb[0].mxu0
        %v1593 = vadd.f32 %v1451, %v1592
        %v1594 = vpop.f32.mrb[0].mxu0
        %v1595 = vadd.f32 %v1455, %v1594
        %v1596 = vpop.f32.mrb[0].mxu0
        %v1597 = vadd.f32 %v1451, %v1596
        %v1598 = vpop.f32.mrb[0].mxu0
        %v1599 = vadd.f32 %v1455, %v1598
        %1600 = vmatprep.mubr.bf16.mxu0 0
        %1601 = vmatmul.mubr.bf16.gmra.mrb[0].mxu0 %v1417
        %v1602 = vpop.f32.mrb[0].mxu0
        %v1603 = vadd.f32 %v1451, %v1602
        %v1604 = vpop.f32.mrb[0].mxu0
        %v1605 = vadd.f32 %v1455, %v1604
        %v1606 = vpop.f32.mrb[0].mxu0
        %v1607 = vadd.f32 %v1451, %v1606
        %v1608 = vpop.f32.mrb[0].mxu0
        %v1609 = vadd.f32 %v1455, %v1608
        %1610 = vmatprep.mubr.bf16.mxu0 0
        %1611 = vmatmul.mubr.bf16.gmra.mrb[0].mxu0 %v1418
        %v1612 = vpop.f32.mrb[0].mxu0
        %v1613 = vadd.f32 %v1451, %v1612
        %v1614 = vpop.f32.mrb[0].mxu0
        %v1615 = vadd.f32 %v1455, %v1614
        %v1616 = vpop.f32.mrb[0].mxu0
        %v1617 = vadd.f32 %v1451, %v1616
        %v1618 = vpop.f32.mrb[0].mxu0
        %v1619 = vadd.f32 %v1455, %v1618
        %1620 = vmatprep.mubr.bf16.mxu0 0
        %1621 = vmatmul.mubr.bf16.gmra.mrb[0].mxu0 %v1419
        %v1622 = vpop.f32.mrb[0].mxu0
        %v1623 = vadd.f32 %v1451, %v1622
        %v1624 = vpop.f32.mrb[0].mxu0
        %v1625 = vadd.f32 %v1455, %v1624
        %v1626 = vpop.f32.mrb[0].mxu0
        %v1627 = vadd.f32 %v1451, %v1626
        %v1628 = vpop.f32.mrb[0].mxu0
        %v1629 = vadd.f32 %v1455, %v1628
        %1630 = vmatprep.mubr.bf16.mxu0 0
        %1631 = vmatmul.mubr.bf16.gmra.mrb[0].mxu0 %v1420
        %v1632 = vpop.f32.mrb[0].mxu0
        %v1633 = vadd.f32 %v1451, %v1632
        %v1634 = vpop.f32.mrb[0].mxu0
        %v1635 = vadd.f32 %v1455, %v1634
        %v1636 = vpop.f32.mrb[0].mxu0
        %v1637 = vadd.f32 %v1451, %v1636
        %v1638 = vpop.f32.mrb[0].mxu0
        %v1639 = vadd.f32 %v1455, %v1638
        %1640 = vmatprep.mubr.bf16.mxu0 0
        %1641 = vmatmul.mubr.bf16.gmra.mrb[0].mxu0 %v1421
        %v1642 = vpop.f32.mrb[0].mxu0
        %v1643 = vadd.f32 %v1451, %v1642
        %v1644 = vpop.f32.mrb[0].mxu0
        %v1645 = vadd.f32 %v1455, %v1644
        %v1646 = vpop.f32.mrb[0].mxu0
        %v1647 = vadd.f32 %v1451, %v1646
        %v1648 = vpop.f32.mrb[0].mxu0
        %v1649 = vadd.f32 %v1455, %v1648
        %1650 = vmatprep.mubr.bf16.mxu0 0
        %1651 = vmatmul.mubr.bf16.gmra.mrb[0].mxu0 %v1422
        %v1652 = vpop.f32.mrb[0].mxu0
        %v1653 = vadd.f32 %v1451, %v1652
        %v1654 = vpop.f32.mrb[0].mxu0
        %v1655 = vadd.f32 %v1455, %v1654
        %v1656 = vpop.f32.mrb[0].mxu0
        %v1657 = vadd.f32 %v1451, %v1656
        %v1658 = vpop.f32.mrb[0].mxu0
        %v1659 = vadd.f32 %v1455, %v1658
        %1660 = vmatprep.mubr.bf16.mxu0 0
        %1661 = vmatmul.mubr.bf16.gmra.mrb[0].mxu0 %v1423
        %v1662 = vpop.f32.mrb[0].mxu0
        %v1663 = vadd.f32 %v1451, %v1662
        %v1664 = vpop.f32.mrb[0].mxu0
        %v1665 = vadd.f32 %v1455, %v1664
        %v1666 = vpop.f32.mrb[0].mxu0
        %v1667 = vadd.f32 %v1451, %v1666
        %v1668 = vpop.f32.mrb[0].mxu0
        %v1669 = vadd.f32 %v1455, %v1668
        %1670 = vmatprep.mubr.bf16.mxu0 0
        %1671 = vmatmul.mubr.bf16.gmra.mrb[0].mxu0 %v1424
        %v1672 = vpop.f32.mrb[0].mxu0
        %v1673 = vadd.f32 %v1451, %v1672
        %v1674 = vpop.f32.mrb[0].mxu0
        %v1675 = vadd.f32 %v1455, %v1674
        %v1676 = vpop.f32.mrb[0].mxu0
        %v1677 = vadd.f32 %v1451, %v1676
        %v1678 = vpop.f32.mrb[0].mxu0
        %v1679 = vadd.f32 %v1455, %v1678
        %1680 = vmatprep.mubr.bf16.mxu0 0
        %1681 = vmatmul.mubr.bf16.gmra.mrb[0].mxu0 %v1425
        %v1682 = vpop.f32.mrb[0].mxu0
        %v1683 = vadd.f32 %v1451, %v1682
        %v1684 = vpop.f32.mrb[0].mxu0
        %v1685 = vadd.f32 %v1455, %v1684
        %v1686 = vpop.f32.mrb[0].mxu0
        %v1687 = vadd.f32 %v1451, %v1686
        %v1688 = vpop.f32.mrb[0].mxu0
        %v1689 = vadd.f32 %v1455, %v1688
        %1690 = vmatprep.mubr.bf16.mxu0 0
        %1691 = vmatmul.mubr.bf16.gmra.mrb[0].mxu0 %v1426
        %v1692 = vpop.f32.mrb[0].mxu0
        %v1693 = vadd.f32 %v1451, %v1692
        %v1694 = vpop.f32.mrb[0].mxu0
        %v1695 = vadd.f32 %v1455, %v1694
        %v1696 = vpop.f32.mrb[0].mxu0
        %v1697 = vadd.f32 %v1451, %v1696
        %v1698 = vpop.f32.mrb[0].mxu0
        %v1699 = vadd.f32 %v1455, %v1698
        %1700 = vmatprep.mubr.bf16.mxu0 0
        %1701 = vmatmul.mubr.bf16.gmra.mrb[0].mxu0 %v1427
        %v1702 = vpop.f32.mrb[0].mxu0
        %v1703 = vadd.f32 %v1451, %v1702
        %v1704 = vpop.f32.mrb[0].mxu0
        %v1705 = vadd.f32 %v1455, %v1704
        %v1706 = vpop.f32.mrb[0].mxu0
        %v1707 = vadd.f32 %v1451, %v1706
        %v1708 = vpop.f32.mrb[0].mxu0
        %v1709 = vadd.f32 %v1455, %v1708
        %1710 = vmatprep.mubr.bf16.mxu0 0
        %1711 = vmatmul.mubr.bf16.gmra.mrb[0].mxu0 %v1428
        %v1712 = vpop.f32.mrb[0].mxu0
        %v1713 = vadd.f32 %v1451, %v1712
        %v1714 = vpop.f32.mrb[0].mxu0
        %v1715 = vadd.f32 %v1455, %v1714
        %v1716 = vpop.f32.mrb[0].mxu0
        %v1717 = vadd.f32 %v1451, %v1716
        %v1718 = vpop.f32.mrb[0].mxu0
        %v1719 = vadd.f32 %v1455, %v1718
        %1720 = vmatprep.mubr.bf16.mxu0 0
        %1721 = vmatmul.mubr.bf16.gmra.mrb[0].mxu0 %v1429
        %v1722 = vpop.f32.mrb[0].mxu0
        %v1723 = vadd.f32 %v1451, %v1722
        %v1724 = vpop.f32.mrb[0].mxu0
        %v1725 = vadd.f32 %v1455, %v1724
        %v1726 = vpop.f32.mrb[0].mxu0
        %v1727 = vadd.f32 %v1451, %v1726
        %v1728 = vpop.f32.mrb[0].mxu0
        %v1729 = vadd.f32 %v1455, %v1728
        %1730 = vdwg.mxu0
        %vm1731 = vcmp.gt.f32.partialorder %v1575, 20.0
        %vm1732 = vcmp.gt.f32.partialorder %v1579, 20.0
        %vm1733 = vcmp.gt.f32.partialorder %v1585, 20.0
        %vm1734 = vcmp.gt.f32.partialorder %v1589, 20.0
        %vm1735 = vcmp.gt.f32.partialorder %v1595, 20.0
        %vm1736 = vcmp.gt.f32.partialorder %v1599, 20.0
        %vm1737 = vcmp.gt.f32.partialorder %v1605, 20.0
        %vm1738 = vcmp.gt.f32.partialorder %v1609, 20.0
        %vm1739 = vcmp.gt.f32.partialorder %v1615, 20.0
        %vm1740 = vcmp.gt.f32.partialorder %v1619, 20.0
        %vm1741 = vcmp.gt.f32.partialorder %v1625, 20.0
        %vm1742 = vcmp.gt.f32.partialorder %v1629, 20.0
        %vm1743 = vcmp.gt.f32.partialorder %v1635, 20.0
        %vm1744 = vcmp.gt.f32.partialorder %v1639, 20.0
        %vm1745 = vcmp.gt.f32.partialorder %v1645, 20.0
        %vm1746 = vcmp.gt.f32.partialorder %v1649, 20.0
        %vm1747 = vcmp.gt.f32.partialorder %v1655, 20.0
        %vm1748 = vcmp.gt.f32.partialorder %v1659, 20.0
        %vm1749 = vcmp.gt.f32.partialorder %v1665, 20.0
        %vm1750 = vcmp.gt.f32.partialorder %v1669, 20.0
        %vm1751 = vcmp.gt.f32.partialorder %v1675, 20.0
        %vm1752 = vcmp.gt.f32.partialorder %v1679, 20.0
        %vm1753 = vcmp.gt.f32.partialorder %v1685, 20.0
        %vm1754 = vcmp.gt.f32.partialorder %v1689, 20.0
        %vm1755 = vcmp.gt.f32.partialorder %v1695, 20.0
        %vm1756 = vcmp.gt.f32.partialorder %v1699, 20.0
        %vm1757 = vcmp.gt.f32.partialorder %v1705, 20.0
        %vm1758 = vcmp.gt.f32.partialorder %v1709, 20.0
        %vm1759 = vcmp.gt.f32.partialorder %v1715, 20.0
        %vm1760 = vcmp.gt.f32.partialorder %v1719, 20.0
        %vm1761 = vcmp.gt.f32.partialorder %v1725, 20.0
        %vm1762 = vcmp.gt.f32.partialorder %v1729, 20.0
        %v1763 = vmin.f32 %v1575, 20.0
        %v1764 = vmin.f32 %v1579, 20.0
        %v1765 = vmin.f32 %v1585, 20.0
        %v1766 = vmin.f32 %v1589, 20.0
        %v1767 = vmin.f32 %v1595, 20.0
        %v1768 = vmin.f32 %v1599, 20.0
        %v1769 = vmin.f32 %v1605, 20.0
        %v1770 = vmin.f32 %v1609, 20.0
        %v1771 = vmin.f32 %v1615, 20.0
        %v1772 = vmin.f32 %v1619, 20.0
        %v1773 = vmin.f32 %v1625, 20.0
        %v1774 = vmin.f32 %v1629, 20.0
        %v1775 = vmin.f32 %v1635, 20.0
        %v1776 = vmin.f32 %v1639, 20.0
        %v1777 = vmin.f32 %v1645, 20.0
        %v1778 = vmin.f32 %v1649, 20.0
        %v1779 = vmin.f32 %v1655, 20.0
        %v1780 = vmin.f32 %v1659, 20.0
        %v1781 = vmin.f32 %v1665, 20.0
        %v1782 = vmin.f32 %v1669, 20.0
        %v1783 = vmin.f32 %v1675, 20.0
        %v1784 = vmin.f32 %v1679, 20.0
        %v1785 = vmin.f32 %v1685, 20.0
        %v1786 = vmin.f32 %v1689, 20.0
        %v1787 = vmin.f32 %v1695, 20.0
        %v1788 = vmin.f32 %v1699, 20.0
        %v1789 = vmin.f32 %v1705, 20.0
        %v1790 = vmin.f32 %v1709, 20.0
        %v1791 = vmin.f32 %v1715, 20.0
        %v1792 = vmin.f32 %v1719, 20.0
        %v1793 = vmin.f32 %v1725, 20.0
        %v1794 = vmin.f32 %v1729, 20.0
        %v1795 = vmul.f32 %v1763, 1.442695
        %v1796 = vpow.pop %v1795
        %v1797 = vmul.f32 %v1764, 1.442695
        %v1798 = vpow.pop %v1797
        %v1799 = vmul.f32 %v1765, 1.442695
        %v1800 = vpow.pop %v1799
        %v1801 = vmul.f32 %v1766, 1.442695
        %v1802 = vpow.pop %v1801
        %v1803 = vmul.f32 %v1767, 1.442695
        %v1804 = vpow.pop %v1803
        %v1805 = vmul.f32 %v1768, 1.442695
        %v1806 = vpow.pop %v1805
        %v1807 = vmul.f32 %v1769, 1.442695
        %v1808 = vpow.pop %v1807
        %v1809 = vmul.f32 %v1770, 1.442695
        %v1810 = vpow.pop %v1809
        %v1811 = vmul.f32 %v1771, 1.442695
        %v1812 = vpow.pop %v1811
        %v1813 = vmul.f32 %v1772, 1.442695
        %v1814 = vpow.pop %v1813
        %v1815 = vmul.f32 %v1773, 1.442695
        %v1816 = vpow.pop %v1815
        %v1817 = vmul.f32 %v1774, 1.442695
        %v1818 = vpow.pop %v1817
        %v1819 = vmul.f32 %v1775, 1.442695
        %v1820 = vpow.pop %v1819
        %v1821 = vmul.f32 %v1776, 1.442695
        %v1822 = vpow.pop %v1821
        %v1823 = vmul.f32 %v1777, 1.442695
        %v1824 = vpow.pop %v1823
        %v1825 = vmul.f32 %v1778, 1.442695
        %v1826 = vpow.pop %v1825
        %v1827 = vmul.f32 %v1779, 1.442695
        %v1828 = vpow.pop %v1827
        %v1829 = vmul.f32 %v1780, 1.442695
        %v1830 = vpow.pop %v1829
        %v1831 = vmul.f32 %v1781, 1.442695
        %v1832 = vpow.pop %v1831
        %v1833 = vmul.f32 %v1782, 1.442695
        %v1834 = vpow.pop %v1833
        %v1835 = vmul.f32 %v1783, 1.442695
        %v1836 = vpow.pop %v1835
        %v1837 = vmul.f32 %v1784, 1.442695
        %v1838 = vpow.pop %v1837
        %v1839 = vmul.f32 %v1785, 1.442695
        %v1840 = vpow.pop %v1839
        %v1841 = vmul.f32 %v1786, 1.442695
        %v1842 = vpow.pop %v1841
        %v1843 = vmul.f32 %v1787, 1.442695
        %v1844 = vpow.pop %v1843
        %v1845 = vmul.f32 %v1788, 1.442695
        %v1846 = vpow.pop %v1845
        %v1847 = vmul.f32 %v1789, 1.442695
        %v1848 = vpow.pop %v1847
        %v1849 = vmul.f32 %v1790, 1.442695
        %v1850 = vpow.pop %v1849
        %v1851 = vmul.f32 %v1791, 1.442695
        %v1852 = vpow.pop %v1851
        %v1853 = vmul.f32 %v1792, 1.442695
        %v1854 = vpow.pop %v1853
        %v1855 = vmul.f32 %v1793, 1.442695
        %v1856 = vpow.pop %v1855
        %v1857 = vmul.f32 %v1794, 1.442695
        %v1858 = vpow.pop %v1857
        %v1859 = vadd.f32 %v1796, 1.0
        %v1860 = vlog2.pop %v1859
        %v1861 = vmul.f32 %v1860, 0.6931472
        %v1862 = vmul.f32 -0.5, %v1796
        %v1863 = vadd.f32 %v1862, 1.0
        %v1864 = vmul.f32 %v1863, %v1796
        %v1865 = vand.u32 2147483647, %v1796
        %vm1866 = vcmp.lt.f32.partialorder %v1865, 0.0004427343
        %v1867 = vsel %vm1866, %v1864, %v1861
        %v1868 = vadd.f32 %v1798, 1.0
        %v1869 = vlog2.pop %v1868
        %v1870 = vmul.f32 %v1869, 0.6931472
        %v1871 = vmul.f32 -0.5, %v1798
        %v1872 = vadd.f32 %v1871, 1.0
        %v1873 = vmul.f32 %v1872, %v1798
        %v1874 = vand.u32 2147483647, %v1798
        %vm1875 = vcmp.lt.f32.partialorder %v1874, 0.0004427343
        %v1876 = vsel %vm1875, %v1873, %v1870
        %v1877 = vadd.f32 %v1800, 1.0
        %v1878 = vlog2.pop %v1877
        %v1879 = vmul.f32 %v1878, 0.6931472
        %v1880 = vmul.f32 -0.5, %v1800
        %v1881 = vadd.f32 %v1880, 1.0
        %v1882 = vmul.f32 %v1881, %v1800
        %v1883 = vand.u32 2147483647, %v1800
        %vm1884 = vcmp.lt.f32.partialorder %v1883, 0.0004427343
        %v1885 = vsel %vm1884, %v1882, %v1879
        %v1886 = vadd.f32 %v1802, 1.0
        %v1887 = vlog2.pop %v1886
        %v1888 = vmul.f32 %v1887, 0.6931472
        %v1889 = vmul.f32 -0.5, %v1802
        %v1890 = vadd.f32 %v1889, 1.0
        %v1891 = vmul.f32 %v1890, %v1802
        %v1892 = vand.u32 2147483647, %v1802
        %vm1893 = vcmp.lt.f32.partialorder %v1892, 0.0004427343
        %v1894 = vsel %vm1893, %v1891, %v1888
        %v1895 = vadd.f32 %v1804, 1.0
        %v1896 = vlog2.pop %v1895
        %v1897 = vmul.f32 %v1896, 0.6931472
        %v1898 = vmul.f32 -0.5, %v1804
        %v1899 = vadd.f32 %v1898, 1.0
        %v1900 = vmul.f32 %v1899, %v1804
        %v1901 = vand.u32 2147483647, %v1804
        %vm1902 = vcmp.lt.f32.partialorder %v1901, 0.0004427343
        %v1903 = vsel %vm1902, %v1900, %v1897
        %v1904 = vadd.f32 %v1806, 1.0
        %v1905 = vlog2.pop %v1904
        %v1906 = vmul.f32 %v1905, 0.6931472
        %v1907 = vmul.f32 -0.5, %v1806
        %v1908 = vadd.f32 %v1907, 1.0
        %v1909 = vmul.f32 %v1908, %v1806
        %v1910 = vand.u32 2147483647, %v1806
        %vm1911 = vcmp.lt.f32.partialorder %v1910, 0.0004427343
        %v1912 = vsel %vm1911, %v1909, %v1906
        %v1913 = vadd.f32 %v1808, 1.0
        %v1914 = vlog2.pop %v1913
        %v1915 = vmul.f32 %v1914, 0.6931472
        %v1916 = vmul.f32 -0.5, %v1808
        %v1917 = vadd.f32 %v1916, 1.0
        %v1918 = vmul.f32 %v1917, %v1808
        %v1919 = vand.u32 2147483647, %v1808
        %vm1920 = vcmp.lt.f32.partialorder %v1919, 0.0004427343
        %v1921 = vsel %vm1920, %v1918, %v1915
        %v1922 = vadd.f32 %v1810, 1.0
        %v1923 = vlog2.pop %v1922
        %v1924 = vmul.f32 %v1923, 0.6931472
        %v1925 = vmul.f32 -0.5, %v1810
        %v1926 = vadd.f32 %v1925, 1.0
        %v1927 = vmul.f32 %v1926, %v1810
        %v1928 = vand.u32 2147483647, %v1810
        %vm1929 = vcmp.lt.f32.partialorder %v1928, 0.0004427343
        %v1930 = vsel %vm1929, %v1927, %v1924
        %v1931 = vadd.f32 %v1812, 1.0
        %v1932 = vlog2.pop %v1931
        %v1933 = vmul.f32 %v1932, 0.6931472
        %v1934 = vmul.f32 -0.5, %v1812
        %v1935 = vadd.f32 %v1934, 1.0
        %v1936 = vmul.f32 %v1935, %v1812
        %v1937 = vand.u32 2147483647, %v1812
        %vm1938 = vcmp.lt.f32.partialorder %v1937, 0.0004427343
        %v1939 = vsel %vm1938, %v1936, %v1933
        %v1940 = vadd.f32 %v1814, 1.0
        %v1941 = vlog2.pop %v1940
        %v1942 = vmul.f32 %v1941, 0.6931472
        %v1943 = vmul.f32 -0.5, %v1814
        %v1944 = vadd.f32 %v1943, 1.0
        %v1945 = vmul.f32 %v1944, %v1814
        %v1946 = vand.u32 2147483647, %v1814
        %vm1947 = vcmp.lt.f32.partialorder %v1946, 0.0004427343
        %v1948 = vsel %vm1947, %v1945, %v1942
        %v1949 = vadd.f32 %v1816, 1.0
        %v1950 = vlog2.pop %v1949
        %v1951 = vmul.f32 %v1950, 0.6931472
        %v1952 = vmul.f32 -0.5, %v1816
        %v1953 = vadd.f32 %v1952, 1.0
        %v1954 = vmul.f32 %v1953, %v1816
        %v1955 = vand.u32 2147483647, %v1816
        %vm1956 = vcmp.lt.f32.partialorder %v1955, 0.0004427343
        %v1957 = vsel %vm1956, %v1954, %v1951
        %v1958 = vadd.f32 %v1818, 1.0
        %v1959 = vlog2.pop %v1958
        %v1960 = vmul.f32 %v1959, 0.6931472
        %v1961 = vmul.f32 -0.5, %v1818
        %v1962 = vadd.f32 %v1961, 1.0
        %v1963 = vmul.f32 %v1962, %v1818
        %v1964 = vand.u32 2147483647, %v1818
        %vm1965 = vcmp.lt.f32.partialorder %v1964, 0.0004427343
        %v1966 = vsel %vm1965, %v1963, %v1960
        %v1967 = vadd.f32 %v1820, 1.0
        %v1968 = vlog2.pop %v1967
        %v1969 = vmul.f32 %v1968, 0.6931472
        %v1970 = vmul.f32 -0.5, %v1820
        %v1971 = vadd.f32 %v1970, 1.0
        %v1972 = vmul.f32 %v1971, %v1820
        %v1973 = vand.u32 2147483647, %v1820
        %vm1974 = vcmp.lt.f32.partialorder %v1973, 0.0004427343
        %v1975 = vsel %vm1974, %v1972, %v1969
        %v1976 = vadd.f32 %v1822, 1.0
        %v1977 = vlog2.pop %v1976
        %v1978 = vmul.f32 %v1977, 0.6931472
        %v1979 = vmul.f32 -0.5, %v1822
        %v1980 = vadd.f32 %v1979, 1.0
        %v1981 = vmul.f32 %v1980, %v1822
        %v1982 = vand.u32 2147483647, %v1822
        %vm1983 = vcmp.lt.f32.partialorder %v1982, 0.0004427343
        %v1984 = vsel %vm1983, %v1981, %v1978
        %v1985 = vadd.f32 %v1824, 1.0
        %v1986 = vlog2.pop %v1985
        %v1987 = vmul.f32 %v1986, 0.6931472
        %v1988 = vmul.f32 -0.5, %v1824
        %v1989 = vadd.f32 %v1988, 1.0
        %v1990 = vmul.f32 %v1989, %v1824
        %v1991 = vand.u32 2147483647, %v1824
        %vm1992 = vcmp.lt.f32.partialorder %v1991, 0.0004427343
        %v1993 = vsel %vm1992, %v1990, %v1987
        %v1994 = vadd.f32 %v1826, 1.0
        %v1995 = vlog2.pop %v1994
        %v1996 = vmul.f32 %v1995, 0.6931472
        %v1997 = vmul.f32 -0.5, %v1826
        %v1998 = vadd.f32 %v1997, 1.0
        %v1999 = vmul.f32 %v1998, %v1826
        %v2000 = vand.u32 2147483647, %v1826
        %vm2001 = vcmp.lt.f32.partialorder %v2000, 0.0004427343
        %v2002 = vsel %vm2001, %v1999, %v1996
        %v2003 = vadd.f32 %v1828, 1.0
        %v2004 = vlog2.pop %v2003
        %v2005 = vmul.f32 %v2004, 0.6931472
        %v2006 = vmul.f32 -0.5, %v1828
        %v2007 = vadd.f32 %v2006, 1.0
        %v2008 = vmul.f32 %v2007, %v1828
        %v2009 = vand.u32 2147483647, %v1828
        %vm2010 = vcmp.lt.f32.partialorder %v2009, 0.0004427343
        %v2011 = vsel %vm2010, %v2008, %v2005
        %v2012 = vadd.f32 %v1830, 1.0
        %v2013 = vlog2.pop %v2012
        %v2014 = vmul.f32 %v2013, 0.6931472
        %v2015 = vmul.f32 -0.5, %v1830
        %v2016 = vadd.f32 %v2015, 1.0
        %v2017 = vmul.f32 %v2016, %v1830
        %v2018 = vand.u32 2147483647, %v1830
        %vm2019 = vcmp.lt.f32.partialorder %v2018, 0.0004427343
        %v2020 = vsel %vm2019, %v2017, %v2014
        %v2021 = vadd.f32 %v1832, 1.0
        %v2022 = vlog2.pop %v2021
        %v2023 = vmul.f32 %v2022, 0.6931472
        %v2024 = vmul.f32 -0.5, %v1832
        %v2025 = vadd.f32 %v2024, 1.0
        %v2026 = vmul.f32 %v2025, %v1832
        %v2027 = vand.u32 2147483647, %v1832
        %vm2028 = vcmp.lt.f32.partialorder %v2027, 0.0004427343
        %v2029 = vsel %vm2028, %v2026, %v2023
        %v2030 = vadd.f32 %v1834, 1.0
        %v2031 = vlog2.pop %v2030
        %v2032 = vmul.f32 %v2031, 0.6931472
        %v2033 = vmul.f32 -0.5, %v1834
        %v2034 = vadd.f32 %v2033, 1.0
        %v2035 = vmul.f32 %v2034, %v1834
        %v2036 = vand.u32 2147483647, %v1834
        %vm2037 = vcmp.lt.f32.partialorder %v2036, 0.0004427343
        %v2038 = vsel %vm2037, %v2035, %v2032
        %v2039 = vadd.f32 %v1836, 1.0
        %v2040 = vlog2.pop %v2039
        %v2041 = vmul.f32 %v2040, 0.6931472
        %v2042 = vmul.f32 -0.5, %v1836
        %v2043 = vadd.f32 %v2042, 1.0
        %v2044 = vmul.f32 %v2043, %v1836
        %v2045 = vand.u32 2147483647, %v1836
        %vm2046 = vcmp.lt.f32.partialorder %v2045, 0.0004427343
        %v2047 = vsel %vm2046, %v2044, %v2041
        %v2048 = vadd.f32 %v1838, 1.0
        %v2049 = vlog2.pop %v2048
        %v2050 = vmul.f32 %v2049, 0.6931472
        %v2051 = vmul.f32 -0.5, %v1838
        %v2052 = vadd.f32 %v2051, 1.0
        %v2053 = vmul.f32 %v2052, %v1838
        %v2054 = vand.u32 2147483647, %v1838
        %vm2055 = vcmp.lt.f32.partialorder %v2054, 0.0004427343
        %v2056 = vsel %vm2055, %v2053, %v2050
        %v2057 = vadd.f32 %v1840, 1.0
        %v2058 = vlog2.pop %v2057
        %v2059 = vmul.f32 %v2058, 0.6931472
        %v2060 = vmul.f32 -0.5, %v1840
        %v2061 = vadd.f32 %v2060, 1.0
        %v2062 = vmul.f32 %v2061, %v1840
        %v2063 = vand.u32 2147483647, %v1840
        %vm2064 = vcmp.lt.f32.partialorder %v2063, 0.0004427343
        %v2065 = vsel %vm2064, %v2062, %v2059
        %v2066 = vadd.f32 %v1842, 1.0
        %v2067 = vlog2.pop %v2066
        %v2068 = vmul.f32 %v2067, 0.6931472
        %v2069 = vmul.f32 -0.5, %v1842
        %v2070 = vadd.f32 %v2069, 1.0
        %v2071 = vmul.f32 %v2070, %v1842
        %v2072 = vand.u32 2147483647, %v1842
        %vm2073 = vcmp.lt.f32.partialorder %v2072, 0.0004427343
        %v2074 = vsel %vm2073, %v2071, %v2068
        %v2075 = vadd.f32 %v1844, 1.0
        %v2076 = vlog2.pop %v2075
        %v2077 = vmul.f32 %v2076, 0.6931472
        %v2078 = vmul.f32 -0.5, %v1844
        %v2079 = vadd.f32 %v2078, 1.0
        %v2080 = vmul.f32 %v2079, %v1844
        %v2081 = vand.u32 2147483647, %v1844
        %vm2082 = vcmp.lt.f32.partialorder %v2081, 0.0004427343
        %v2083 = vsel %vm2082, %v2080, %v2077
        %v2084 = vadd.f32 %v1846, 1.0
        %v2085 = vlog2.pop %v2084
        %v2086 = vmul.f32 %v2085, 0.6931472
        %v2087 = vmul.f32 -0.5, %v1846
        %v2088 = vadd.f32 %v2087, 1.0
        %v2089 = vmul.f32 %v2088, %v1846
        %v2090 = vand.u32 2147483647, %v1846
        %vm2091 = vcmp.lt.f32.partialorder %v2090, 0.0004427343
        %v2092 = vsel %vm2091, %v2089, %v2086
        %v2093 = vadd.f32 %v1848, 1.0
        %v2094 = vlog2.pop %v2093
        %v2095 = vmul.f32 %v2094, 0.6931472
        %v2096 = vmul.f32 -0.5, %v1848
        %v2097 = vadd.f32 %v2096, 1.0
        %v2098 = vmul.f32 %v2097, %v1848
        %v2099 = vand.u32 2147483647, %v1848
        %vm2100 = vcmp.lt.f32.partialorder %v2099, 0.0004427343
        %v2101 = vsel %vm2100, %v2098, %v2095
        %v2102 = vadd.f32 %v1850, 1.0
        %v2103 = vlog2.pop %v2102
        %v2104 = vmul.f32 %v2103, 0.6931472
        %v2105 = vmul.f32 -0.5, %v1850
        %v2106 = vadd.f32 %v2105, 1.0
        %v2107 = vmul.f32 %v2106, %v1850
        %v2108 = vand.u32 2147483647, %v1850
        %vm2109 = vcmp.lt.f32.partialorder %v2108, 0.0004427343
        %v2110 = vsel %vm2109, %v2107, %v2104
        %v2111 = vadd.f32 %v1852, 1.0
        %v2112 = vlog2.pop %v2111
        %v2113 = vmul.f32 %v2112, 0.6931472
        %v2114 = vmul.f32 -0.5, %v1852
        %v2115 = vadd.f32 %v2114, 1.0
        %v2116 = vmul.f32 %v2115, %v1852
        %v2117 = vand.u32 2147483647, %v1852
        %vm2118 = vcmp.lt.f32.partialorder %v2117, 0.0004427343
        %v2119 = vsel %vm2118, %v2116, %v2113
        %v2120 = vadd.f32 %v1854, 1.0
        %v2121 = vlog2.pop %v2120
        %v2122 = vmul.f32 %v2121, 0.6931472
        %v2123 = vmul.f32 -0.5, %v1854
        %v2124 = vadd.f32 %v2123, 1.0
        %v2125 = vmul.f32 %v2124, %v1854
        %v2126 = vand.u32 2147483647, %v1854
        %vm2127 = vcmp.lt.f32.partialorder %v2126, 0.0004427343
        %v2128 = vsel %vm2127, %v2125, %v2122
        %v2129 = vadd.f32 %v1856, 1.0
        %v2130 = vlog2.pop %v2129
        %v2131 = vmul.f32 %v2130, 0.6931472
        %v2132 = vmul.f32 -0.5, %v1856
        %v2133 = vadd.f32 %v2132, 1.0
        %v2134 = vmul.f32 %v2133, %v1856
        %v2135 = vand.u32 2147483647, %v1856
        %vm2136 = vcmp.lt.f32.partialorder %v2135, 0.0004427343
        %v2137 = vsel %vm2136, %v2134, %v2131
        %v2138 = vadd.f32 %v1858, 1.0
        %v2139 = vlog2.pop %v2138
        %v2140 = vmul.f32 %v2139, 0.6931472
        %v2141 = vmul.f32 -0.5, %v1858
        %v2142 = vadd.f32 %v2141, 1.0
        %v2143 = vmul.f32 %v2142, %v1858
        %v2144 = vand.u32 2147483647, %v1858
        %vm2145 = vcmp.lt.f32.partialorder %v2144, 0.0004427343
        %v2146 = vsel %vm2145, %v2143, %v2140
        %v2147 = vsel %vm1731, %v1575, %v1867
        %v2148 = vsel %vm1732, %v1579, %v1876
        %v2149 = vsel %vm1733, %v1585, %v1885
        %v2150 = vsel %vm1734, %v1589, %v1894
        %v2151 = vsel %vm1735, %v1595, %v1903
        %v2152 = vsel %vm1736, %v1599, %v1912
        %v2153 = vsel %vm1737, %v1605, %v1921
        %v2154 = vsel %vm1738, %v1609, %v1930
        %v2155 = vsel %vm1739, %v1615, %v1939
        %v2156 = vsel %vm1740, %v1619, %v1948
        %v2157 = vsel %vm1741, %v1625, %v1957
        %v2158 = vsel %vm1742, %v1629, %v1966
        %v2159 = vsel %vm1743, %v1635, %v1975
        %v2160 = vsel %vm1744, %v1639, %v1984
        %v2161 = vsel %vm1745, %v1645, %v1993
        %v2162 = vsel %vm1746, %v1649, %v2002
        %v2163 = vsel %vm1747, %v1655, %v2011
        %v2164 = vsel %vm1748, %v1659, %v2020
        %v2165 = vsel %vm1749, %v1665, %v2029
        %v2166 = vsel %vm1750, %v1669, %v2038
        %v2167 = vsel %vm1751, %v1675, %v2047
        %v2168 = vsel %vm1752, %v1679, %v2056
        %v2169 = vsel %vm1753, %v1685, %v2065
        %v2170 = vsel %vm1754, %v1689, %v2074
        %v2171 = vsel %vm1755, %v1695, %v2083
        %v2172 = vsel %vm1756, %v1699, %v2092
        %v2173 = vsel %vm1757, %v1705, %v2101
        %v2174 = vsel %vm1758, %v1709, %v2110
        %v2175 = vsel %vm1759, %v1715, %v2119
        %v2176 = vsel %vm1760, %v1719, %v2128
        %v2177 = vsel %vm1761, %v1725, %v2137
        %v2178 = vsel %vm1762, %v1729, %v2146
        %v2179 = vadd.f32 %v2147, 1e-10
        %v2180 = vadd.f32 %v2148, 1e-10
        %v2181 = vadd.f32 %v2149, 1e-10
        %v2182 = vadd.f32 %v2150, 1e-10
        %v2183 = vadd.f32 %v2151, 1e-10
        %v2184 = vadd.f32 %v2152, 1e-10
        %v2185 = vadd.f32 %v2153, 1e-10
        %v2186 = vadd.f32 %v2154, 1e-10
        %v2187 = vadd.f32 %v2155, 1e-10
        %v2188 = vadd.f32 %v2156, 1e-10
        %v2189 = vadd.f32 %v2157, 1e-10
        %v2190 = vadd.f32 %v2158, 1e-10
        %v2191 = vadd.f32 %v2159, 1e-10
        %v2192 = vadd.f32 %v2160, 1e-10
        %v2193 = vadd.f32 %v2161, 1e-10
        %v2194 = vadd.f32 %v2162, 1e-10
        %v2195 = vadd.f32 %v2163, 1e-10
        %v2196 = vadd.f32 %v2164, 1e-10
        %v2197 = vadd.f32 %v2165, 1e-10
        %v2198 = vadd.f32 %v2166, 1e-10
        %v2199 = vadd.f32 %v2167, 1e-10
        %v2200 = vadd.f32 %v2168, 1e-10
        %v2201 = vadd.f32 %v2169, 1e-10
        %v2202 = vadd.f32 %v2170, 1e-10
        %v2203 = vadd.f32 %v2171, 1e-10
        %v2204 = vadd.f32 %v2172, 1e-10
        %v2205 = vadd.f32 %v2173, 1e-10
        %v2206 = vadd.f32 %v2174, 1e-10
        %v2207 = vadd.f32 %v2175, 1e-10
        %v2208 = vadd.f32 %v2176, 1e-10
        %v2209 = vadd.f32 %v2177, 1e-10
        %v2210 = vadd.f32 %v2178, 1e-10
        %v2211 = vrsqrt.pop %v2179
        %v2212 = vmul.f32 %v2179, %v2211
        %vm2213 = vcmp.eq.f32.partialorder %v2179, inf
        %v2214 = vsel %vm2213, %v2179, %v2212
        %vm2215 = vcmp.eq.f32.partialorder %v2179, 0.0
        %v2216 = vand.u32 %v2179, 2147483648
        %v2217 = vsel %vm2215, %v2216, %v2214
        %v2218 = vrsqrt.pop %v2180
        %v2219 = vmul.f32 %v2180, %v2218
        %vm2220 = vcmp.eq.f32.partialorder %v2180, inf
        %v2221 = vsel %vm2220, %v2180, %v2219
        %vm2222 = vcmp.eq.f32.partialorder %v2180, 0.0
        %v2223 = vand.u32 %v2180, 2147483648
        %v2224 = vsel %vm2222, %v2223, %v2221
        %v2225 = vrsqrt.pop %v2181
        %v2226 = vmul.f32 %v2181, %v2225
        %vm2227 = vcmp.eq.f32.partialorder %v2181, inf
        %v2228 = vsel %vm2227, %v2181, %v2226
        %vm2229 = vcmp.eq.f32.partialorder %v2181, 0.0
        %v2230 = vand.u32 %v2181, 2147483648
        %v2231 = vsel %vm2229, %v2230, %v2228
        %v2232 = vrsqrt.pop %v2182
        %v2233 = vmul.f32 %v2182, %v2232
        %vm2234 = vcmp.eq.f32.partialorder %v2182, inf
        %v2235 = vsel %vm2234, %v2182, %v2233
        %vm2236 = vcmp.eq.f32.partialorder %v2182, 0.0
        %v2237 = vand.u32 %v2182, 2147483648
        %v2238 = vsel %vm2236, %v2237, %v2235
        %v2239 = vrsqrt.pop %v2183
        %v2240 = vmul.f32 %v2183, %v2239
        %vm2241 = vcmp.eq.f32.partialorder %v2183, inf
        %v2242 = vsel %vm2241, %v2183, %v2240
        %vm2243 = vcmp.eq.f32.partialorder %v2183, 0.0
        %v2244 = vand.u32 %v2183, 2147483648
        %v2245 = vsel %vm2243, %v2244, %v2242
        %v2246 = vrsqrt.pop %v2184
        %v2247 = vmul.f32 %v2184, %v2246
        %vm2248 = vcmp.eq.f32.partialorder %v2184, inf
        %v2249 = vsel %vm2248, %v2184, %v2247
        %vm2250 = vcmp.eq.f32.partialorder %v2184, 0.0
        %v2251 = vand.u32 %v2184, 2147483648
        %v2252 = vsel %vm2250, %v2251, %v2249
        %v2253 = vrsqrt.pop %v2185
        %v2254 = vmul.f32 %v2185, %v2253
        %vm2255 = vcmp.eq.f32.partialorder %v2185, inf
        %v2256 = vsel %vm2255, %v2185, %v2254
        %vm2257 = vcmp.eq.f32.partialorder %v2185, 0.0
        %v2258 = vand.u32 %v2185, 2147483648
        %v2259 = vsel %vm2257, %v2258, %v2256
        %v2260 = vrsqrt.pop %v2186
        %v2261 = vmul.f32 %v2186, %v2260
        %vm2262 = vcmp.eq.f32.partialorder %v2186, inf
        %v2263 = vsel %vm2262, %v2186, %v2261
        %vm2264 = vcmp.eq.f32.partialorder %v2186, 0.0
        %v2265 = vand.u32 %v2186, 2147483648
        %v2266 = vsel %vm2264, %v2265, %v2263
        %v2267 = vrsqrt.pop %v2187
        %v2268 = vmul.f32 %v2187, %v2267
        %vm2269 = vcmp.eq.f32.partialorder %v2187, inf
        %v2270 = vsel %vm2269, %v2187, %v2268
        %vm2271 = vcmp.eq.f32.partialorder %v2187, 0.0
        %v2272 = vand.u32 %v2187, 2147483648
        %v2273 = vsel %vm2271, %v2272, %v2270
        %v2274 = vrsqrt.pop %v2188
        %v2275 = vmul.f32 %v2188, %v2274
        %vm2276 = vcmp.eq.f32.partialorder %v2188, inf
        %v2277 = vsel %vm2276, %v2188, %v2275
        %vm2278 = vcmp.eq.f32.partialorder %v2188, 0.0
        %v2279 = vand.u32 %v2188, 2147483648
        %v2280 = vsel %vm2278, %v2279, %v2277
        %v2281 = vrsqrt.pop %v2189
        %v2282 = vmul.f32 %v2189, %v2281
        %vm2283 = vcmp.eq.f32.partialorder %v2189, inf
        %v2284 = vsel %vm2283, %v2189, %v2282
        %vm2285 = vcmp.eq.f32.partialorder %v2189, 0.0
        %v2286 = vand.u32 %v2189, 2147483648
        %v2287 = vsel %vm2285, %v2286, %v2284
        %v2288 = vrsqrt.pop %v2190
        %v2289 = vmul.f32 %v2190, %v2288
        %vm2290 = vcmp.eq.f32.partialorder %v2190, inf
        %v2291 = vsel %vm2290, %v2190, %v2289
        %vm2292 = vcmp.eq.f32.partialorder %v2190, 0.0
        %v2293 = vand.u32 %v2190, 2147483648
        %v2294 = vsel %vm2292, %v2293, %v2291
        %v2295 = vrsqrt.pop %v2191
        %v2296 = vmul.f32 %v2191, %v2295
        %vm2297 = vcmp.eq.f32.partialorder %v2191, inf
        %v2298 = vsel %vm2297, %v2191, %v2296
        %vm2299 = vcmp.eq.f32.partialorder %v2191, 0.0
        %v2300 = vand.u32 %v2191, 2147483648
        %v2301 = vsel %vm2299, %v2300, %v2298
        %v2302 = vrsqrt.pop %v2192
        %v2303 = vmul.f32 %v2192, %v2302
        %vm2304 = vcmp.eq.f32.partialorder %v2192, inf
        %v2305 = vsel %vm2304, %v2192, %v2303
        %vm2306 = vcmp.eq.f32.partialorder %v2192, 0.0
        %v2307 = vand.u32 %v2192, 2147483648
        %v2308 = vsel %vm2306, %v2307, %v2305
        %v2309 = vrsqrt.pop %v2193
        %v2310 = vmul.f32 %v2193, %v2309
        %vm2311 = vcmp.eq.f32.partialorder %v2193, inf
        %v2312 = vsel %vm2311, %v2193, %v2310
        %vm2313 = vcmp.eq.f32.partialorder %v2193, 0.0
        %v2314 = vand.u32 %v2193, 2147483648
        %v2315 = vsel %vm2313, %v2314, %v2312
        %v2316 = vrsqrt.pop %v2194
        %v2317 = vmul.f32 %v2194, %v2316
        %vm2318 = vcmp.eq.f32.partialorder %v2194, inf
        %v2319 = vsel %vm2318, %v2194, %v2317
        %vm2320 = vcmp.eq.f32.partialorder %v2194, 0.0
        %v2321 = vand.u32 %v2194, 2147483648
        %v2322 = vsel %vm2320, %v2321, %v2319
        %v2323 = vrsqrt.pop %v2195
        %v2324 = vmul.f32 %v2195, %v2323
        %vm2325 = vcmp.eq.f32.partialorder %v2195, inf
        %v2326 = vsel %vm2325, %v2195, %v2324
        %vm2327 = vcmp.eq.f32.partialorder %v2195, 0.0
        %v2328 = vand.u32 %v2195, 2147483648
        %v2329 = vsel %vm2327, %v2328, %v2326
        %v2330 = vrsqrt.pop %v2196
        %v2331 = vmul.f32 %v2196, %v2330
        %vm2332 = vcmp.eq.f32.partialorder %v2196, inf
        %v2333 = vsel %vm2332, %v2196, %v2331
        %vm2334 = vcmp.eq.f32.partialorder %v2196, 0.0
        %v2335 = vand.u32 %v2196, 2147483648
        %v2336 = vsel %vm2334, %v2335, %v2333
        %v2337 = vrsqrt.pop %v2197
        %v2338 = vmul.f32 %v2197, %v2337
        %vm2339 = vcmp.eq.f32.partialorder %v2197, inf
        %v2340 = vsel %vm2339, %v2197, %v2338
        %vm2341 = vcmp.eq.f32.partialorder %v2197, 0.0
        %v2342 = vand.u32 %v2197, 2147483648
        %v2343 = vsel %vm2341, %v2342, %v2340
        %v2344 = vrsqrt.pop %v2198
        %v2345 = vmul.f32 %v2198, %v2344
        %vm2346 = vcmp.eq.f32.partialorder %v2198, inf
        %v2347 = vsel %vm2346, %v2198, %v2345
        %vm2348 = vcmp.eq.f32.partialorder %v2198, 0.0
        %v2349 = vand.u32 %v2198, 2147483648
        %v2350 = vsel %vm2348, %v2349, %v2347
        %v2351 = vrsqrt.pop %v2199
        %v2352 = vmul.f32 %v2199, %v2351
        %vm2353 = vcmp.eq.f32.partialorder %v2199, inf
        %v2354 = vsel %vm2353, %v2199, %v2352
        %vm2355 = vcmp.eq.f32.partialorder %v2199, 0.0
        %v2356 = vand.u32 %v2199, 2147483648
        %v2357 = vsel %vm2355, %v2356, %v2354
        %v2358 = vrsqrt.pop %v2200
        %v2359 = vmul.f32 %v2200, %v2358
        %vm2360 = vcmp.eq.f32.partialorder %v2200, inf
        %v2361 = vsel %vm2360, %v2200, %v2359
        %vm2362 = vcmp.eq.f32.partialorder %v2200, 0.0
        %v2363 = vand.u32 %v2200, 2147483648
        %v2364 = vsel %vm2362, %v2363, %v2361
        %v2365 = vrsqrt.pop %v2201
        %v2366 = vmul.f32 %v2201, %v2365
        %vm2367 = vcmp.eq.f32.partialorder %v2201, inf
        %v2368 = vsel %vm2367, %v2201, %v2366
        %vm2369 = vcmp.eq.f32.partialorder %v2201, 0.0
        %v2370 = vand.u32 %v2201, 2147483648
        %v2371 = vsel %vm2369, %v2370, %v2368
        %v2372 = vrsqrt.pop %v2202
        %v2373 = vmul.f32 %v2202, %v2372
        %vm2374 = vcmp.eq.f32.partialorder %v2202, inf
        %v2375 = vsel %vm2374, %v2202, %v2373
        %vm2376 = vcmp.eq.f32.partialorder %v2202, 0.0
        %v2377 = vand.u32 %v2202, 2147483648
        %v2378 = vsel %vm2376, %v2377, %v2375
        %v2379 = vrsqrt.pop %v2203
        %v2380 = vmul.f32 %v2203, %v2379
        %vm2381 = vcmp.eq.f32.partialorder %v2203, inf
        %v2382 = vsel %vm2381, %v2203, %v2380
        %vm2383 = vcmp.eq.f32.partialorder %v2203, 0.0
        %v2384 = vand.u32 %v2203, 2147483648
        %v2385 = vsel %vm2383, %v2384, %v2382
        %v2386 = vrsqrt.pop %v2204
        %v2387 = vmul.f32 %v2204, %v2386
        %vm2388 = vcmp.eq.f32.partialorder %v2204, inf
        %v2389 = vsel %vm2388, %v2204, %v2387
        %vm2390 = vcmp.eq.f32.partialorder %v2204, 0.0
        %v2391 = vand.u32 %v2204, 2147483648
        %v2392 = vsel %vm2390, %v2391, %v2389
        %v2393 = vrsqrt.pop %v2205
        %v2394 = vmul.f32 %v2205, %v2393
        %vm2395 = vcmp.eq.f32.partialorder %v2205, inf
        %v2396 = vsel %vm2395, %v2205, %v2394
        %vm2397 = vcmp.eq.f32.partialorder %v2205, 0.0
        %v2398 = vand.u32 %v2205, 2147483648
        %v2399 = vsel %vm2397, %v2398, %v2396
        %v2400 = vrsqrt.pop %v2206
        %v2401 = vmul.f32 %v2206, %v2400
        %vm2402 = vcmp.eq.f32.partialorder %v2206, inf
        %v2403 = vsel %vm2402, %v2206, %v2401
        %vm2404 = vcmp.eq.f32.partialorder %v2206, 0.0
        %v2405 = vand.u32 %v2206, 2147483648
        %v2406 = vsel %vm2404, %v2405, %v2403
        %v2407 = vrsqrt.pop %v2207
        %v2408 = vmul.f32 %v2207, %v2407
        %vm2409 = vcmp.eq.f32.partialorder %v2207, inf
        %v2410 = vsel %vm2409, %v2207, %v2408
        %vm2411 = vcmp.eq.f32.partialorder %v2207, 0.0
        %v2412 = vand.u32 %v2207, 2147483648
        %v2413 = vsel %vm2411, %v2412, %v2410
        %v2414 = vrsqrt.pop %v2208
        %v2415 = vmul.f32 %v2208, %v2414
        %vm2416 = vcmp.eq.f32.partialorder %v2208, inf
        %v2417 = vsel %vm2416, %v2208, %v2415
        %vm2418 = vcmp.eq.f32.partialorder %v2208, 0.0
        %v2419 = vand.u32 %v2208, 2147483648
        %v2420 = vsel %vm2418, %v2419, %v2417
        %v2421 = vrsqrt.pop %v2209
        %v2422 = vmul.f32 %v2209, %v2421
        %vm2423 = vcmp.eq.f32.partialorder %v2209, inf
        %v2424 = vsel %vm2423, %v2209, %v2422
        %vm2425 = vcmp.eq.f32.partialorder %v2209, 0.0
        %v2426 = vand.u32 %v2209, 2147483648
        %v2427 = vsel %vm2425, %v2426, %v2424
        %v2428 = vrsqrt.pop %v2210
        %v2429 = vmul.f32 %v2210, %v2428
        %vm2430 = vcmp.eq.f32.partialorder %v2210, inf
        %v2431 = vsel %vm2430, %v2210, %v2429
        %vm2432 = vcmp.eq.f32.partialorder %v2210, 0.0
        %v2433 = vand.u32 %v2210, 2147483648
        %v2434 = vsel %vm2432, %v2433, %v2431
        %v2435 = vunpack.c.l.bf16 %v614
        %v2436 = vunpack.c.l.bf16 %v615
        %v2437 = vunpack.c.l.bf16 %v616
        %v2438 = vunpack.c.l.bf16 %v617
        %v2439 = vunpack.c.l.bf16 %v618
        %v2440 = vunpack.c.l.bf16 %v619
        %v2441 = vunpack.c.l.bf16 %v620
        %v2442 = vunpack.c.l.bf16 %v621
        %v2443 = vunpack.c.l.bf16 %v622
        %v2444 = vunpack.c.l.bf16 %v623
        %v2445 = vunpack.c.l.bf16 %v624
        %v2446 = vunpack.c.l.bf16 %v625
        %v2447 = vunpack.c.l.bf16 %v626
        %v2448 = vunpack.c.l.bf16 %v627
        %v2449 = vunpack.c.l.bf16 %v628
        %v2450 = vunpack.c.l.bf16 %v629
        %v2451 = vunpack.c.l.bf16 %v630
        %v2452 = vunpack.c.l.bf16 %v631
        %v2453 = vunpack.c.l.bf16 %v632
        %v2454 = vunpack.c.l.bf16 %v633
        %v2455 = vunpack.c.l.bf16 %v634
        %v2456 = vunpack.c.l.bf16 %v635
        %v2457 = vunpack.c.l.bf16 %v636
        %v2458 = vunpack.c.l.bf16 %v637
        %v2459 = vunpack.c.l.bf16 %v638
        %v2460 = vunpack.c.l.bf16 %v639
        %v2461 = vunpack.c.l.bf16 %v640
        %v2462 = vunpack.c.l.bf16 %v641
        %v2463 = vunpack.c.l.bf16 %v642
        %v2464 = vunpack.c.l.bf16 %v643
        %v2465 = vunpack.c.l.bf16 %v644
        %v2466 = vunpack.c.l.bf16 %v645
        %v2467 = vmul.f32 %v2435, %v2217
        %v2468 = vmul.f32 %v2436, %v2224
        %v2469 = vmul.f32 %v2437, %v2231
        %v2470 = vmul.f32 %v2438, %v2238
        %v2471 = vmul.f32 %v2439, %v2245
        %v2472 = vmul.f32 %v2440, %v2252
        %v2473 = vmul.f32 %v2441, %v2259
        %v2474 = vmul.f32 %v2442, %v2266
        %v2475 = vmul.f32 %v2443, %v2273
        %v2476 = vmul.f32 %v2444, %v2280
        %v2477 = vmul.f32 %v2445, %v2287
        %v2478 = vmul.f32 %v2446, %v2294
        %v2479 = vmul.f32 %v2447, %v2301
        %v2480 = vmul.f32 %v2448, %v2308
        %v2481 = vmul.f32 %v2449, %v2315
        %v2482 = vmul.f32 %v2450, %v2322
        %v2483 = vmul.f32 %v2451, %v2329
        %v2484 = vmul.f32 %v2452, %v2336
        %v2485 = vmul.f32 %v2453, %v2343
        %v2486 = vmul.f32 %v2454, %v2350
        %v2487 = vmul.f32 %v2455, %v2357
        %v2488 = vmul.f32 %v2456, %v2364
        %v2489 = vmul.f32 %v2457, %v2371
        %v2490 = vmul.f32 %v2458, %v2378
        %v2491 = vmul.f32 %v2459, %v2385
        %v2492 = vmul.f32 %v2460, %v2392
        %v2493 = vmul.f32 %v2461, %v2399
        %v2494 = vmul.f32 %v2462, %v2406
        %v2495 = vmul.f32 %v2463, %v2413
        %v2496 = vmul.f32 %v2464, %v2420
        %v2497 = vmul.f32 %v2465, %v2427
        %v2498 = vmul.f32 %v2466, %v2434
        %v2499 = vadd.f32 %v1573, %v2467
        %v2500 = vadd.f32 %v1577, %v2468
        %v2501 = vadd.f32 %v1583, %v2469
        %v2502 = vadd.f32 %v1587, %v2470
        %v2503 = vadd.f32 %v1593, %v2471
        %v2504 = vadd.f32 %v1597, %v2472
        %v2505 = vadd.f32 %v1603, %v2473
        %v2506 = vadd.f32 %v1607, %v2474
        %v2507 = vadd.f32 %v1613, %v2475
        %v2508 = vadd.f32 %v1617, %v2476
        %v2509 = vadd.f32 %v1623, %v2477
        %v2510 = vadd.f32 %v1627, %v2478
        %v2511 = vadd.f32 %v1633, %v2479
        %v2512 = vadd.f32 %v1637, %v2480
        %v2513 = vadd.f32 %v1643, %v2481
        %v2514 = vadd.f32 %v1647, %v2482
        %v2515 = vadd.f32 %v1653, %v2483
        %v2516 = vadd.f32 %v1657, %v2484
        %v2517 = vadd.f32 %v1663, %v2485
        %v2518 = vadd.f32 %v1667, %v2486
        %v2519 = vadd.f32 %v1673, %v2487
        %v2520 = vadd.f32 %v1677, %v2488
        %v2521 = vadd.f32 %v1683, %v2489
        %v2522 = vadd.f32 %v1687, %v2490
        %v2523 = vadd.f32 %v1693, %v2491
        %v2524 = vadd.f32 %v1697, %v2492
        %v2525 = vadd.f32 %v1703, %v2493
        %v2526 = vadd.f32 %v1707, %v2494
        %v2527 = vadd.f32 %v1713, %v2495
        %v2528 = vadd.f32 %v1717, %v2496
        %v2529 = vadd.f32 %v1723, %v2497
        %v2530 = vadd.f32 %v1727, %v2498
        %v2531 = vpack.c.bf16 %v2500, %v2499
        %v2532 = vpack.c.bf16 %v2502, %v2501
        %v2533 = vpack.c.bf16 %v2504, %v2503
        %v2534 = vpack.c.bf16 %v2506, %v2505
        %v2535 = vpack.c.bf16 %v2508, %v2507
        %v2536 = vpack.c.bf16 %v2510, %v2509
        %v2537 = vpack.c.bf16 %v2512, %v2511
        %v2538 = vpack.c.bf16 %v2514, %v2513
        %v2539 = vpack.c.bf16 %v2516, %v2515
        %v2540 = vpack.c.bf16 %v2518, %v2517
        %v2541 = vpack.c.bf16 %v2520, %v2519
        %v2542 = vpack.c.bf16 %v2522, %v2521
        %v2543 = vpack.c.bf16 %v2524, %v2523
        %v2544 = vpack.c.bf16 %v2526, %v2525
        %v2545 = vpack.c.bf16 %v2528, %v2527
        %v2546 = vpack.c.bf16 %v2530, %v2529
        %v2547 = vld [vmem:[#allocation5] sm:$0xf]
        %v2548 = vld [vmem:[#allocation5 + $0x4] sm:$0xf]
        %v2549 = vld [vmem:[#allocation5 + $0x8] sm:$0xf]
        %v2550 = vld [vmem:[#allocation5 + $0xc] sm:$0xf]
        %v2551 = vld [vmem:[#allocation5 + $0x10] sm:$0xf]
        %v2552 = vld [vmem:[#allocation5 + $0x14] sm:$0xf]
        %v2553 = vld [vmem:[#allocation5 + $0x18] sm:$0xf]
        %v2554 = vld [vmem:[#allocation5 + $0x1c] sm:$0xf]
        %v2555 = vld [vmem:[#allocation5 + $0x20] sm:$0xf]
        %v2556 = vld [vmem:[#allocation5 + $0x24] sm:$0xf]
        %v2557 = vld [vmem:[#allocation5 + $0x28] sm:$0xf]
        %v2558 = vld [vmem:[#allocation5 + $0x2c] sm:$0xf]
        %v2559 = vld [vmem:[#allocation5 + $0x30] sm:$0xf]
        %v2560 = vld [vmem:[#allocation5 + $0x34] sm:$0xf]
        %v2561 = vld [vmem:[#allocation5 + $0x38] sm:$0xf]
        %v2562 = vld [vmem:[#allocation5 + $0x3c] sm:$0xf]
        %v2563 = vld [vmem:[%s9] sm:$0x1]
        %v2565 = vlaneseq
        %v2566 = vshrl.u32 %v2565, 7
        %v2567 = vsub.s32 0, %v2566
        %v2568 = vrot.slane %v2563, %v2567
        %v2586 = vunpack.c.l.b16 %v2547
        %v2587 = vunpack.c.l.b16 %v2548
        %v2588 = vunpack.c.l.b16 %v2549
        %v2589 = vunpack.c.l.b16 %v2550
        %v2590 = vunpack.c.l.b16 %v2551
        %v2591 = vunpack.c.l.b16 %v2552
        %v2592 = vunpack.c.l.b16 %v2553
        %v2593 = vunpack.c.l.b16 %v2554
        %v2594 = vunpack.c.l.b16 %v2555
        %v2595 = vunpack.c.l.b16 %v2556
        %v2596 = vunpack.c.l.b16 %v2557
        %v2597 = vunpack.c.l.b16 %v2558
        %v2598 = vunpack.c.l.b16 %v2559
        %v2599 = vunpack.c.l.b16 %v2560
        %v2600 = vunpack.c.l.b16 %v2561
        %v2601 = vunpack.c.l.b16 %v2562
        %v2602 = vpack.c.b16 %v2587, %v2586
        %v2603 = vpack.c.b16 %v2589, %v2588
        %v2604 = vpack.c.b16 %v2591, %v2590
        %v2605 = vpack.c.b16 %v2593, %v2592
        %v2606 = vpack.c.b16 %v2595, %v2594
        %v2607 = vpack.c.b16 %v2597, %v2596
        %v2608 = vpack.c.b16 %v2599, %v2598
        %v2609 = vpack.c.b16 %v2601, %v2600
        %2618 = vmatprep.subr.bf16.mxu0 0
        %2619 = vmatpush1.bf16.msra.mxu0 %v2602
        %2620 = vmatprep.subr.bf16.mxu0 0
        %2621 = vmatpush1.bf16.msra.mxu0 %v2603
        %2622 = vmatprep.subr.bf16.mxu0 0
        %2623 = vmatpush1.bf16.msra.mxu0 %v2604
        %2624 = vmatprep.subr.bf16.mxu0 0
        %2625 = vmatpush1.bf16.msra.mxu0 %v2605
        %2626 = vmatprep.subr.bf16.mxu0 0
        %2627 = vmatpush1.bf16.msra.mxu0 %v2606
        %2628 = vmatprep.subr.bf16.mxu0 0
        %2629 = vmatpush1.bf16.msra.mxu0 %v2607
        %2630 = vmatprep.subr.bf16.mxu0 0
        %2631 = vmatpush1.bf16.msra.mxu0 %v2608
        %2632 = vmatprep.subr.bf16.mxu0 0
        %2633 = vmatpush1.bf16.msra.mxu0 %v2609
        %2634 = vmatprep.subr.bf16.mxu0 0
        %2635 = vmatpush1.bf16.msra.mxu0 0
        %2636 = vmatprep.subr.bf16.mxu0 0
        %2637 = vmatpush1.bf16.msra.mxu0 0
        %2638 = vmatprep.subr.bf16.mxu0 0
        %2639 = vmatpush1.bf16.msra.mxu0 0
        %2640 = vmatprep.subr.bf16.mxu0 0
        %2641 = vmatpush1.bf16.msra.mxu0 0
        %2642 = vmatprep.subr.bf16.mxu0 0
        %2643 = vmatpush1.bf16.msra.mxu0 0
        %2644 = vmatprep.subr.bf16.mxu0 0
        %2645 = vmatpush1.bf16.msra.mxu0 0
        %2646 = vmatprep.subr.bf16.mxu0 0
        %2647 = vmatpush1.bf16.msra.mxu0 0
        %2648 = vmatprep.subr.bf16.mxu0 0
        %2649 = vmatpush1.bf16.msra.mxu0 0
        %2650 = vmatprep.mubr.bf16.mxu0 0
        %2651 = vmatmul.mubr.bf16.gmra.mrb[0].mxu0 %v2531
        %v2652 = vpop.f32.mrb[0].mxu0
        %v2653 = vadd.f32 %v2568, %v2652
        %v2654 = vpop.f32.mrb[0].mxu0
        %v2655 = vpop.f32.mrb[0].mxu0
        %v2656 = vadd.f32 %v2568, %v2655
        %v2657 = vpop.f32.mrb[0].mxu0
        %2658 = vmatprep.mubr.bf16.mxu0 0
        %2659 = vmatmul.mubr.bf16.gmra.mrb[0].mxu0 %v2532
        %v2660 = vpop.f32.mrb[0].mxu0
        %v2661 = vadd.f32 %v2568, %v2660
        %v2662 = vpop.f32.mrb[0].mxu0
        %v2663 = vpop.f32.mrb[0].mxu0
        %v2664 = vadd.f32 %v2568, %v2663
        %v2665 = vpop.f32.mrb[0].mxu0
        %2666 = vmatprep.mubr.bf16.mxu0 0
        %2667 = vmatmul.mubr.bf16.gmra.mrb[0].mxu0 %v2533
        %v2668 = vpop.f32.mrb[0].mxu0
        %v2669 = vadd.f32 %v2568, %v2668
        %v2670 = vpop.f32.mrb[0].mxu0
        %v2671 = vpop.f32.mrb[0].mxu0
        %v2672 = vadd.f32 %v2568, %v2671
        %v2673 = vpop.f32.mrb[0].mxu0
        %2674 = vmatprep.mubr.bf16.mxu0 0
        %2675 = vmatmul.mubr.bf16.gmra.mrb[0].mxu0 %v2534
        %v2676 = vpop.f32.mrb[0].mxu0
        %v2677 = vadd.f32 %v2568, %v2676
        %v2678 = vpop.f32.mrb[0].mxu0
        %v2679 = vpop.f32.mrb[0].mxu0
        %v2680 = vadd.f32 %v2568, %v2679
        %v2681 = vpop.f32.mrb[0].mxu0
        %2682 = vmatprep.mubr.bf16.mxu0 0
        %2683 = vmatmul.mubr.bf16.gmra.mrb[0].mxu0 %v2535
        %v2684 = vpop.f32.mrb[0].mxu0
        %v2685 = vadd.f32 %v2568, %v2684
        %v2686 = vpop.f32.mrb[0].mxu0
        %v2687 = vpop.f32.mrb[0].mxu0
        %v2688 = vadd.f32 %v2568, %v2687
        %v2689 = vpop.f32.mrb[0].mxu0
        %2690 = vmatprep.mubr.bf16.mxu0 0
        %2691 = vmatmul.mubr.bf16.gmra.mrb[0].mxu0 %v2536
        %v2692 = vpop.f32.mrb[0].mxu0
        %v2693 = vadd.f32 %v2568, %v2692
        %v2694 = vpop.f32.mrb[0].mxu0
        %v2695 = vpop.f32.mrb[0].mxu0
        %v2696 = vadd.f32 %v2568, %v2695
        %v2697 = vpop.f32.mrb[0].mxu0
        %2698 = vmatprep.mubr.bf16.mxu0 0
        %2699 = vmatmul.mubr.bf16.gmra.mrb[0].mxu0 %v2537
        %v2700 = vpop.f32.mrb[0].mxu0
        %v2701 = vadd.f32 %v2568, %v2700
        %v2702 = vpop.f32.mrb[0].mxu0
        %v2703 = vpop.f32.mrb[0].mxu0
        %v2704 = vadd.f32 %v2568, %v2703
        %v2705 = vpop.f32.mrb[0].mxu0
        %2706 = vmatprep.mubr.bf16.mxu0 0
        %2707 = vmatmul.mubr.bf16.gmra.mrb[0].mxu0 %v2538
        %v2708 = vpop.f32.mrb[0].mxu0
        %v2709 = vadd.f32 %v2568, %v2708
        %v2710 = vpop.f32.mrb[0].mxu0
        %v2711 = vpop.f32.mrb[0].mxu0
        %v2712 = vadd.f32 %v2568, %v2711
        %v2713 = vpop.f32.mrb[0].mxu0
        %2714 = vmatprep.mubr.bf16.mxu0 0
        %2715 = vmatmul.mubr.bf16.gmra.mrb[0].mxu0 %v2539
        %v2716 = vpop.f32.mrb[0].mxu0
        %v2717 = vadd.f32 %v2568, %v2716
        %v2718 = vpop.f32.mrb[0].mxu0
        %v2719 = vpop.f32.mrb[0].mxu0
        %v2720 = vadd.f32 %v2568, %v2719
        %v2721 = vpop.f32.mrb[0].mxu0
        %2722 = vmatprep.mubr.bf16.mxu0 0
        %2723 = vmatmul.mubr.bf16.gmra.mrb[0].mxu0 %v2540
        %v2724 = vpop.f32.mrb[0].mxu0
        %v2725 = vadd.f32 %v2568, %v2724
        %v2726 = vpop.f32.mrb[0].mxu0
        %v2727 = vpop.f32.mrb[0].mxu0
        %v2728 = vadd.f32 %v2568, %v2727
        %v2729 = vpop.f32.mrb[0].mxu0
        %2730 = vmatprep.mubr.bf16.mxu0 0
        %2731 = vmatmul.mubr.bf16.gmra.mrb[0].mxu0 %v2541
        %v2732 = vpop.f32.mrb[0].mxu0
        %v2733 = vadd.f32 %v2568, %v2732
        %v2734 = vpop.f32.mrb[0].mxu0
        %v2735 = vpop.f32.mrb[0].mxu0
        %v2736 = vadd.f32 %v2568, %v2735
        %v2737 = vpop.f32.mrb[0].mxu0
        %2738 = vmatprep.mubr.bf16.mxu0 0
        %2739 = vmatmul.mubr.bf16.gmra.mrb[0].mxu0 %v2542
        %v2740 = vpop.f32.mrb[0].mxu0
        %v2741 = vadd.f32 %v2568, %v2740
        %v2742 = vpop.f32.mrb[0].mxu0
        %v2743 = vpop.f32.mrb[0].mxu0
        %v2744 = vadd.f32 %v2568, %v2743
        %v2745 = vpop.f32.mrb[0].mxu0
        %2746 = vmatprep.mubr.bf16.mxu0 0
        %2747 = vmatmul.mubr.bf16.gmra.mrb[0].mxu0 %v2543
        %v2748 = vpop.f32.mrb[0].mxu0
        %v2749 = vadd.f32 %v2568, %v2748
        %v2750 = vpop.f32.mrb[0].mxu0
        %v2751 = vpop.f32.mrb[0].mxu0
        %v2752 = vadd.f32 %v2568, %v2751
        %v2753 = vpop.f32.mrb[0].mxu0
        %2754 = vmatprep.mubr.bf16.mxu0 0
        %2755 = vmatmul.mubr.bf16.gmra.mrb[0].mxu0 %v2544
        %v2756 = vpop.f32.mrb[0].mxu0
        %v2757 = vadd.f32 %v2568, %v2756
        %v2758 = vpop.f32.mrb[0].mxu0
        %v2759 = vpop.f32.mrb[0].mxu0
        %v2760 = vadd.f32 %v2568, %v2759
        %v2761 = vpop.f32.mrb[0].mxu0
        %2762 = vmatprep.mubr.bf16.mxu0 0
        %2763 = vmatmul.mubr.bf16.gmra.mrb[0].mxu0 %v2545
        %v2764 = vpop.f32.mrb[0].mxu0
        %v2765 = vadd.f32 %v2568, %v2764
        %v2766 = vpop.f32.mrb[0].mxu0
        %v2767 = vpop.f32.mrb[0].mxu0
        %v2768 = vadd.f32 %v2568, %v2767
        %v2769 = vpop.f32.mrb[0].mxu0
        %2770 = vmatprep.mubr.bf16.mxu0 0
        %2771 = vmatmul.mubr.bf16.gmra.mrb[0].mxu0 %v2546
        %v2772 = vpop.f32.mrb[0].mxu0
        %v2773 = vadd.f32 %v2568, %v2772
        %v2774 = vpop.f32.mrb[0].mxu0
        %v2775 = vpop.f32.mrb[0].mxu0
        %v2776 = vadd.f32 %v2568, %v2775
        %v2777 = vpop.f32.mrb[0].mxu0
        %2778 = vdwg.mxu0
        %v2779 = vmax.f32 %v2653, 0.0
        %v2780 = vmax.f32 %v2656, 0.0
        %v2781 = vmax.f32 %v2661, 0.0
        %v2782 = vmax.f32 %v2664, 0.0
        %v2783 = vmax.f32 %v2669, 0.0
        %v2784 = vmax.f32 %v2672, 0.0
        %v2785 = vmax.f32 %v2677, 0.0
        %v2786 = vmax.f32 %v2680, 0.0
        %v2787 = vmax.f32 %v2685, 0.0
        %v2788 = vmax.f32 %v2688, 0.0
        %v2789 = vmax.f32 %v2693, 0.0
        %v2790 = vmax.f32 %v2696, 0.0
        %v2791 = vmax.f32 %v2701, 0.0
        %v2792 = vmax.f32 %v2704, 0.0
        %v2793 = vmax.f32 %v2709, 0.0
        %v2794 = vmax.f32 %v2712, 0.0
        %v2795 = vmax.f32 %v2717, 0.0
        %v2796 = vmax.f32 %v2720, 0.0
        %v2797 = vmax.f32 %v2725, 0.0
        %v2798 = vmax.f32 %v2728, 0.0
        %v2799 = vmax.f32 %v2733, 0.0
        %v2800 = vmax.f32 %v2736, 0.0
        %v2801 = vmax.f32 %v2741, 0.0
        %v2802 = vmax.f32 %v2744, 0.0
        %v2803 = vmax.f32 %v2749, 0.0
        %v2804 = vmax.f32 %v2752, 0.0
        %v2805 = vmax.f32 %v2757, 0.0
        %v2806 = vmax.f32 %v2760, 0.0
        %v2807 = vmax.f32 %v2765, 0.0
        %v2808 = vmax.f32 %v2768, 0.0
        %v2809 = vmax.f32 %v2773, 0.0
        %v2810 = vmax.f32 %v2776, 0.0
        %v2811 = vpack.c.bf16 %v2780, %v2779
        %v2812 = vpack.c.bf16 %v2782, %v2781
        %v2813 = vpack.c.bf16 %v2784, %v2783
        %v2814 = vpack.c.bf16 %v2786, %v2785
        %v2815 = vpack.c.bf16 %v2788, %v2787
        %v2816 = vpack.c.bf16 %v2790, %v2789
        %v2817 = vpack.c.bf16 %v2792, %v2791
        %v2818 = vpack.c.bf16 %v2794, %v2793
        %v2819 = vpack.c.bf16 %v2796, %v2795
        %v2820 = vpack.c.bf16 %v2798, %v2797
        %v2821 = vpack.c.bf16 %v2800, %v2799
        %v2822 = vpack.c.bf16 %v2802, %v2801
        %v2823 = vpack.c.bf16 %v2804, %v2803
        %v2824 = vpack.c.bf16 %v2806, %v2805
        %v2825 = vpack.c.bf16 %v2808, %v2807
        %v2826 = vpack.c.bf16 %v2810, %v2809
        %v2827 = vld [vmem:[#allocation7] sm:$0xf]
        %v2828 = vld [vmem:[#allocation7 + $0x4] sm:$0xf]
        %v2829 = vld [vmem:[#allocation7 + $0x8] sm:$0xf]
        %v2830 = vld [vmem:[#allocation7 + $0xc] sm:$0xf]
        %v2831 = vld [vmem:[#allocation7 + $0x10] sm:$0xf]
        %v2832 = vld [vmem:[#allocation7 + $0x14] sm:$0xf]
        %v2833 = vld [vmem:[#allocation7 + $0x18] sm:$0xf]
        %v2834 = vld [vmem:[#allocation7 + $0x1c] sm:$0xf]
        %v2835 = vld [vmem:[#allocation7 + $0x20] sm:$0xf]
        %v2836 = vld [vmem:[#allocation7 + $0x24] sm:$0xf]
        %v2837 = vld [vmem:[#allocation7 + $0x28] sm:$0xf]
        %v2838 = vld [vmem:[#allocation7 + $0x2c] sm:$0xf]
        %v2839 = vld [vmem:[#allocation7 + $0x30] sm:$0xf]
        %v2840 = vld [vmem:[#allocation7 + $0x34] sm:$0xf]
        %v2841 = vld [vmem:[#allocation7 + $0x38] sm:$0xf]
        %v2842 = vld [vmem:[#allocation7 + $0x3c] sm:$0xf]
        %v2843 = vld [vmem:[%s11] sm:$0x1]
        %v2845 = vlaneseq
        %v2846 = vshrl.u32 %v2845, 7
        %v2847 = vsub.s32 0, %v2846
        %v2848 = vrot.slane %v2843, %v2847
        %v2866 = vunpack.c.l.b16 %v2827
        %v2867 = vunpack.c.l.b16 %v2828
        %v2868 = vunpack.c.l.b16 %v2829
        %v2869 = vunpack.c.l.b16 %v2830
        %v2870 = vunpack.c.l.b16 %v2831
        %v2871 = vunpack.c.l.b16 %v2832
        %v2872 = vunpack.c.l.b16 %v2833
        %v2873 = vunpack.c.l.b16 %v2834
        %v2874 = vunpack.c.l.b16 %v2835
        %v2875 = vunpack.c.l.b16 %v2836
        %v2876 = vunpack.c.l.b16 %v2837
        %v2877 = vunpack.c.l.b16 %v2838
        %v2878 = vunpack.c.l.b16 %v2839
        %v2879 = vunpack.c.l.b16 %v2840
        %v2880 = vunpack.c.l.b16 %v2841
        %v2881 = vunpack.c.l.b16 %v2842
        %v2882 = vpack.c.b16 %v2867, %v2866
        %v2883 = vpack.c.b16 %v2869, %v2868
        %v2884 = vpack.c.b16 %v2871, %v2870
        %v2885 = vpack.c.b16 %v2873, %v2872
        %v2886 = vpack.c.b16 %v2875, %v2874
        %v2887 = vpack.c.b16 %v2877, %v2876
        %v2888 = vpack.c.b16 %v2879, %v2878
        %v2889 = vpack.c.b16 %v2881, %v2880
        %2898 = vmatprep.subr.bf16.mxu0 0
        %2899 = vmatpush1.bf16.msra.mxu0 %v2882
        %2900 = vmatprep.subr.bf16.mxu0 0
        %2901 = vmatpush1.bf16.msra.mxu0 %v2883
        %2902 = vmatprep.subr.bf16.mxu0 0
        %2903 = vmatpush1.bf16.msra.mxu0 %v2884
        %2904 = vmatprep.subr.bf16.mxu0 0
        %2905 = vmatpush1.bf16.msra.mxu0 %v2885
        %2906 = vmatprep.subr.bf16.mxu0 0
        %2907 = vmatpush1.bf16.msra.mxu0 %v2886
        %2908 = vmatprep.subr.bf16.mxu0 0
        %2909 = vmatpush1.bf16.msra.mxu0 %v2887
        %2910 = vmatprep.subr.bf16.mxu0 0
        %2911 = vmatpush1.bf16.msra.mxu0 %v2888
        %2912 = vmatprep.subr.bf16.mxu0 0
        %2913 = vmatpush1.bf16.msra.mxu0 %v2889
        %2914 = vmatprep.subr.bf16.mxu0 0
        %2915 = vmatpush1.bf16.msra.mxu0 0
        %2916 = vmatprep.subr.bf16.mxu0 0
        %2917 = vmatpush1.bf16.msra.mxu0 0
        %2918 = vmatprep.subr.bf16.mxu0 0
        %2919 = vmatpush1.bf16.msra.mxu0 0
        %2920 = vmatprep.subr.bf16.mxu0 0
        %2921 = vmatpush1.bf16.msra.mxu0 0
        %2922 = vmatprep.subr.bf16.mxu0 0
        %2923 = vmatpush1.bf16.msra.mxu0 0
        %2924 = vmatprep.subr.bf16.mxu0 0
        %2925 = vmatpush1.bf16.msra.mxu0 0
        %2926 = vmatprep.subr.bf16.mxu0 0
        %2927 = vmatpush1.bf16.msra.mxu0 0
        %2928 = vmatprep.subr.bf16.mxu0 0
        %2929 = vmatpush1.bf16.msra.mxu0 0
        %2930 = vmatprep.mubr.bf16.mxu0 0
        %2931 = vmatmul.mubr.bf16.gmra.mrb[0].mxu0 %v2811
        %v2932 = vpop.f32.mrb[0].mxu0
        %v2933 = vadd.f32 %v2848, %v2932
        %v2934 = vpop.f32.mrb[0].mxu0
        %v2935 = vpop.f32.mrb[0].mxu0
        %v2936 = vadd.f32 %v2848, %v2935
        %v2937 = vpop.f32.mrb[0].mxu0
        %2938 = vmatprep.mubr.bf16.mxu0 0
        %2939 = vmatmul.mubr.bf16.gmra.mrb[0].mxu0 %v2812
        %v2940 = vpop.f32.mrb[0].mxu0
        %v2941 = vadd.f32 %v2848, %v2940
        %v2942 = vpop.f32.mrb[0].mxu0
        %v2943 = vpop.f32.mrb[0].mxu0
        %v2944 = vadd.f32 %v2848, %v2943
        %v2945 = vpop.f32.mrb[0].mxu0
        %2946 = vmatprep.mubr.bf16.mxu0 0
        %2947 = vmatmul.mubr.bf16.gmra.mrb[0].mxu0 %v2813
        %v2948 = vpop.f32.mrb[0].mxu0
        %v2949 = vadd.f32 %v2848, %v2948
        %v2950 = vpop.f32.mrb[0].mxu0
        %v2951 = vpop.f32.mrb[0].mxu0
        %v2952 = vadd.f32 %v2848, %v2951
        %v2953 = vpop.f32.mrb[0].mxu0
        %2954 = vmatprep.mubr.bf16.mxu0 0
        %2955 = vmatmul.mubr.bf16.gmra.mrb[0].mxu0 %v2814
        %v2956 = vpop.f32.mrb[0].mxu0
        %v2957 = vadd.f32 %v2848, %v2956
        %v2958 = vpop.f32.mrb[0].mxu0
        %v2959 = vpop.f32.mrb[0].mxu0
        %v2960 = vadd.f32 %v2848, %v2959
        %v2961 = vpop.f32.mrb[0].mxu0
        %2962 = vmatprep.mubr.bf16.mxu0 0
        %2963 = vmatmul.mubr.bf16.gmra.mrb[0].mxu0 %v2815
        %v2964 = vpop.f32.mrb[0].mxu0
        %v2965 = vadd.f32 %v2848, %v2964
        %v2966 = vpop.f32.mrb[0].mxu0
        %v2967 = vpop.f32.mrb[0].mxu0
        %v2968 = vadd.f32 %v2848, %v2967
        %v2969 = vpop.f32.mrb[0].mxu0
        %2970 = vmatprep.mubr.bf16.mxu0 0
        %2971 = vmatmul.mubr.bf16.gmra.mrb[0].mxu0 %v2816
        %v2972 = vpop.f32.mrb[0].mxu0
        %v2973 = vadd.f32 %v2848, %v2972
        %v2974 = vpop.f32.mrb[0].mxu0
        %v2975 = vpop.f32.mrb[0].mxu0
        %v2976 = vadd.f32 %v2848, %v2975
        %v2977 = vpop.f32.mrb[0].mxu0
        %2978 = vmatprep.mubr.bf16.mxu0 0
        %2979 = vmatmul.mubr.bf16.gmra.mrb[0].mxu0 %v2817
        %v2980 = vpop.f32.mrb[0].mxu0
        %v2981 = vadd.f32 %v2848, %v2980
        %v2982 = vpop.f32.mrb[0].mxu0
        %v2983 = vpop.f32.mrb[0].mxu0
        %v2984 = vadd.f32 %v2848, %v2983
        %v2985 = vpop.f32.mrb[0].mxu0
        %2986 = vmatprep.mubr.bf16.mxu0 0
        %2987 = vmatmul.mubr.bf16.gmra.mrb[0].mxu0 %v2818
        %v2988 = vpop.f32.mrb[0].mxu0
        %v2989 = vadd.f32 %v2848, %v2988
        %v2990 = vpop.f32.mrb[0].mxu0
        %v2991 = vpop.f32.mrb[0].mxu0
        %v2992 = vadd.f32 %v2848, %v2991
        %v2993 = vpop.f32.mrb[0].mxu0
        %2994 = vmatprep.mubr.bf16.mxu0 0
        %2995 = vmatmul.mubr.bf16.gmra.mrb[0].mxu0 %v2819
        %v2996 = vpop.f32.mrb[0].mxu0
        %v2997 = vadd.f32 %v2848, %v2996
        %v2998 = vpop.f32.mrb[0].mxu0
        %v2999 = vpop.f32.mrb[0].mxu0
        %v3000 = vadd.f32 %v2848, %v2999
        %v3001 = vpop.f32.mrb[0].mxu0
        %3002 = vmatprep.mubr.bf16.mxu0 0
        %3003 = vmatmul.mubr.bf16.gmra.mrb[0].mxu0 %v2820
        %v3004 = vpop.f32.mrb[0].mxu0
        %v3005 = vadd.f32 %v2848, %v3004
        %v3006 = vpop.f32.mrb[0].mxu0
        %v3007 = vpop.f32.mrb[0].mxu0
        %v3008 = vadd.f32 %v2848, %v3007
        %v3009 = vpop.f32.mrb[0].mxu0
        %3010 = vmatprep.mubr.bf16.mxu0 0
        %3011 = vmatmul.mubr.bf16.gmra.mrb[0].mxu0 %v2821
        %v3012 = vpop.f32.mrb[0].mxu0
        %v3013 = vadd.f32 %v2848, %v3012
        %v3014 = vpop.f32.mrb[0].mxu0
        %v3015 = vpop.f32.mrb[0].mxu0
        %v3016 = vadd.f32 %v2848, %v3015
        %v3017 = vpop.f32.mrb[0].mxu0
        %3018 = vmatprep.mubr.bf16.mxu0 0
        %3019 = vmatmul.mubr.bf16.gmra.mrb[0].mxu0 %v2822
        %v3020 = vpop.f32.mrb[0].mxu0
        %v3021 = vadd.f32 %v2848, %v3020
        %v3022 = vpop.f32.mrb[0].mxu0
        %v3023 = vpop.f32.mrb[0].mxu0
        %v3024 = vadd.f32 %v2848, %v3023
        %v3025 = vpop.f32.mrb[0].mxu0
        %3026 = vmatprep.mubr.bf16.mxu0 0
        %3027 = vmatmul.mubr.bf16.gmra.mrb[0].mxu0 %v2823
        %v3028 = vpop.f32.mrb[0].mxu0
        %v3029 = vadd.f32 %v2848, %v3028
        %v3030 = vpop.f32.mrb[0].mxu0
        %v3031 = vpop.f32.mrb[0].mxu0
        %v3032 = vadd.f32 %v2848, %v3031
        %v3033 = vpop.f32.mrb[0].mxu0
        %3034 = vmatprep.mubr.bf16.mxu0 0
        %3035 = vmatmul.mubr.bf16.gmra.mrb[0].mxu0 %v2824
        %v3036 = vpop.f32.mrb[0].mxu0
        %v3037 = vadd.f32 %v2848, %v3036
        %v3038 = vpop.f32.mrb[0].mxu0
        %v3039 = vpop.f32.mrb[0].mxu0
        %v3040 = vadd.f32 %v2848, %v3039
        %v3041 = vpop.f32.mrb[0].mxu0
        %3042 = vmatprep.mubr.bf16.mxu0 0
        %3043 = vmatmul.mubr.bf16.gmra.mrb[0].mxu0 %v2825
        %v3044 = vpop.f32.mrb[0].mxu0
        %v3045 = vadd.f32 %v2848, %v3044
        %v3046 = vpop.f32.mrb[0].mxu0
        %v3047 = vpop.f32.mrb[0].mxu0
        %v3048 = vadd.f32 %v2848, %v3047
        %v3049 = vpop.f32.mrb[0].mxu0
        %3050 = vmatprep.mubr.bf16.mxu0 0
        %3051 = vmatmul.mubr.bf16.gmra.mrb[0].mxu0 %v2826
        %v3052 = vpop.f32.mrb[0].mxu0
        %v3053 = vadd.f32 %v2848, %v3052
        %v3054 = vpop.f32.mrb[0].mxu0
        %v3055 = vpop.f32.mrb[0].mxu0
        %v3056 = vadd.f32 %v2848, %v3055
        %v3057 = vpop.f32.mrb[0].mxu0
        %3058 = vdwg.mxu0
        %v3059 = vmax.f32 %v2933, 0.0
        %v3060 = vmax.f32 %v2936, 0.0
        %v3061 = vmax.f32 %v2941, 0.0
        %v3062 = vmax.f32 %v2944, 0.0
        %v3063 = vmax.f32 %v2949, 0.0
        %v3064 = vmax.f32 %v2952, 0.0
        %v3065 = vmax.f32 %v2957, 0.0
        %v3066 = vmax.f32 %v2960, 0.0
        %v3067 = vmax.f32 %v2965, 0.0
        %v3068 = vmax.f32 %v2968, 0.0
        %v3069 = vmax.f32 %v2973, 0.0
        %v3070 = vmax.f32 %v2976, 0.0
        %v3071 = vmax.f32 %v2981, 0.0
        %v3072 = vmax.f32 %v2984, 0.0
        %v3073 = vmax.f32 %v2989, 0.0
        %v3074 = vmax.f32 %v2992, 0.0
        %v3075 = vmax.f32 %v2997, 0.0
        %v3076 = vmax.f32 %v3000, 0.0
        %v3077 = vmax.f32 %v3005, 0.0
        %v3078 = vmax.f32 %v3008, 0.0
        %v3079 = vmax.f32 %v3013, 0.0
        %v3080 = vmax.f32 %v3016, 0.0
        %v3081 = vmax.f32 %v3021, 0.0
        %v3082 = vmax.f32 %v3024, 0.0
        %v3083 = vmax.f32 %v3029, 0.0
        %v3084 = vmax.f32 %v3032, 0.0
        %v3085 = vmax.f32 %v3037, 0.0
        %v3086 = vmax.f32 %v3040, 0.0
        %v3087 = vmax.f32 %v3045, 0.0
        %v3088 = vmax.f32 %v3048, 0.0
        %v3089 = vmax.f32 %v3053, 0.0
        %v3090 = vmax.f32 %v3056, 0.0
        %v3091 = vpack.c.bf16 %v3060, %v3059
        %v3092 = vpack.c.bf16 %v3062, %v3061
        %v3093 = vpack.c.bf16 %v3064, %v3063
        %v3094 = vpack.c.bf16 %v3066, %v3065
        %v3095 = vpack.c.bf16 %v3068, %v3067
        %v3096 = vpack.c.bf16 %v3070, %v3069
        %v3097 = vpack.c.bf16 %v3072, %v3071
        %v3098 = vpack.c.bf16 %v3074, %v3073
        %v3099 = vpack.c.bf16 %v3076, %v3075
        %v3100 = vpack.c.bf16 %v3078, %v3077
        %v3101 = vpack.c.bf16 %v3080, %v3079
        %v3102 = vpack.c.bf16 %v3082, %v3081
        %v3103 = vpack.c.bf16 %v3084, %v3083
        %v3104 = vpack.c.bf16 %v3086, %v3085
        %v3105 = vpack.c.bf16 %v3088, %v3087
        %v3106 = vpack.c.bf16 %v3090, %v3089
        %v3107 = vld [vmem:[%s12] sm:$0xff]
        %v3108 = vld [vmem:[%s12 + $0x8] sm:$0xff]
        %v3109 = vld [vmem:[%s12 + $0x10] sm:$0xff]
        %v3110 = vld [vmem:[%s12 + $0x18] sm:$0xff]
        %v3111 = vld [vmem:[%s12 + $0x20] sm:$0xff]
        %v3112 = vld [vmem:[%s12 + $0x28] sm:$0xff]
        %v3113 = vld [vmem:[%s12 + $0x30] sm:$0xff]
        %v3114 = vld [vmem:[%s12 + $0x38] sm:$0xff]
        %v3115 = vld [vmem:[%s12 + $0x40] sm:$0xff]
        %v3116 = vld [vmem:[%s12 + $0x48] sm:$0xff]
        %v3117 = vld [vmem:[%s12 + $0x50] sm:$0xff]
        %v3118 = vld [vmem:[%s12 + $0x58] sm:$0xff]
        %v3119 = vld [vmem:[%s12 + $0x60] sm:$0xff]
        %v3120 = vld [vmem:[%s12 + $0x68] sm:$0xff]
        %v3121 = vld [vmem:[%s12 + $0x70] sm:$0xff]
        %v3122 = vld [vmem:[%s12 + $0x78] sm:$0xff]
        %v3123 = vld [vmem:[%s13] sm:$0x3]
        %v3125 = vlaneseq
        %v3126 = vshrl.u32 %v3125, 7
        %v3127 = vsub.s32 0, %v3126
        %v3128 = vrot.slane %v3123, %v3127
        %v3129 = vlaneseq
        %v3130 = vshrl.u32 %v3129, 7
        %v3131 = vsub.s32 1, %v3130
        %v3132 = vrot.slane %v3123, %v3131
        %v3151 = vunpack.c.l.b16 %v3107
        %v3152 = vunpack.c.h.b16 %v3107
        %v3153 = vunpack.c.l.b16 %v3108
        %v3154 = vunpack.c.h.b16 %v3108
        %v3155 = vunpack.c.l.b16 %v3109
        %v3156 = vunpack.c.h.b16 %v3109
        %v3157 = vunpack.c.l.b16 %v3110
        %v3158 = vunpack.c.h.b16 %v3110
        %v3159 = vunpack.c.l.b16 %v3111
        %v3160 = vunpack.c.h.b16 %v3111
        %v3161 = vunpack.c.l.b16 %v3112
        %v3162 = vunpack.c.h.b16 %v3112
        %v3163 = vunpack.c.l.b16 %v3113
        %v3164 = vunpack.c.h.b16 %v3113
        %v3165 = vunpack.c.l.b16 %v3114
        %v3166 = vunpack.c.h.b16 %v3114
        %v3167 = vunpack.c.l.b16 %v3115
        %v3168 = vunpack.c.h.b16 %v3115
        %v3169 = vunpack.c.l.b16 %v3116
        %v3170 = vunpack.c.h.b16 %v3116
        %v3171 = vunpack.c.l.b16 %v3117
        %v3172 = vunpack.c.h.b16 %v3117
        %v3173 = vunpack.c.l.b16 %v3118
        %v3174 = vunpack.c.h.b16 %v3118
        %v3175 = vunpack.c.l.b16 %v3119
        %v3176 = vunpack.c.h.b16 %v3119
        %v3177 = vunpack.c.l.b16 %v3120
        %v3178 = vunpack.c.h.b16 %v3120
        %v3179 = vunpack.c.l.b16 %v3121
        %v3180 = vunpack.c.h.b16 %v3121
        %v3181 = vunpack.c.l.b16 %v3122
        %v3182 = vunpack.c.h.b16 %v3122
        %v3183 = vpack.c.b16 %v3153, %v3151
        %v3184 = vpack.c.b16 %v3154, %v3152
        %v3185 = vpack.c.b16 %v3157, %v3155
        %v3186 = vpack.c.b16 %v3158, %v3156
        %v3187 = vpack.c.b16 %v3161, %v3159
        %v3188 = vpack.c.b16 %v3162, %v3160
        %v3189 = vpack.c.b16 %v3165, %v3163
        %v3190 = vpack.c.b16 %v3166, %v3164
        %v3191 = vpack.c.b16 %v3169, %v3167
        %v3192 = vpack.c.b16 %v3170, %v3168
        %v3193 = vpack.c.b16 %v3173, %v3171
        %v3194 = vpack.c.b16 %v3174, %v3172
        %v3195 = vpack.c.b16 %v3177, %v3175
        %v3196 = vpack.c.b16 %v3178, %v3176
        %v3197 = vpack.c.b16 %v3181, %v3179
        %v3198 = vpack.c.b16 %v3182, %v3180
        %3215 = vmatprep.subr.bf16.mxu0 %v3184
        %3216 = vmatpush1.bf16.msra.mxu0 %v3183
        %3217 = vmatprep.subr.bf16.mxu0 %v3186
        %3218 = vmatpush1.bf16.msra.mxu0 %v3185
        %3219 = vmatprep.subr.bf16.mxu0 %v3188
        %3220 = vmatpush1.bf16.msra.mxu0 %v3187
        %3221 = vmatprep.subr.bf16.mxu0 %v3190
        %3222 = vmatpush1.bf16.msra.mxu0 %v3189
        %3223 = vmatprep.subr.bf16.mxu0 %v3192
        %3224 = vmatpush1.bf16.msra.mxu0 %v3191
        %3225 = vmatprep.subr.bf16.mxu0 %v3194
        %3226 = vmatpush1.bf16.msra.mxu0 %v3193
        %3227 = vmatprep.subr.bf16.mxu0 %v3196
        %3228 = vmatpush1.bf16.msra.mxu0 %v3195
        %3229 = vmatprep.subr.bf16.mxu0 %v3198
        %3230 = vmatpush1.bf16.msra.mxu0 %v3197
        %3231 = vmatprep.subr.bf16.mxu0 0
        %3232 = vmatpush1.bf16.msra.mxu0 0
        %3233 = vmatprep.subr.bf16.mxu0 0
        %3234 = vmatpush1.bf16.msra.mxu0 0
        %3235 = vmatprep.subr.bf16.mxu0 0
        %3236 = vmatpush1.bf16.msra.mxu0 0
        %3237 = vmatprep.subr.bf16.mxu0 0
        %3238 = vmatpush1.bf16.msra.mxu0 0
        %3239 = vmatprep.subr.bf16.mxu0 0
        %3240 = vmatpush1.bf16.msra.mxu0 0
        %3241 = vmatprep.subr.bf16.mxu0 0
        %3242 = vmatpush1.bf16.msra.mxu0 0
        %3243 = vmatprep.subr.bf16.mxu0 0
        %3244 = vmatpush1.bf16.msra.mxu0 0
        %3245 = vmatprep.subr.bf16.mxu0 0
        %3246 = vmatpush1.bf16.msra.mxu0 0
        %3247 = vmatprep.mubr.bf16.mxu0 0
        %3248 = vmatmul.mubr.bf16.gmra.mrb[0].mxu0 %v3091
        %v3249 = vpop.f32.mrb[0].mxu0
        %v3250 = vadd.f32 %v3128, %v3249
        %v3251 = vpop.f32.mrb[0].mxu0
        %v3252 = vadd.f32 %v3132, %v3251
        %v3253 = vpop.f32.mrb[0].mxu0
        %v3254 = vadd.f32 %v3128, %v3253
        %v3255 = vpop.f32.mrb[0].mxu0
        %v3256 = vadd.f32 %v3132, %v3255
        %3257 = vmatprep.mubr.bf16.mxu0 0
        %3258 = vmatmul.mubr.bf16.gmra.mrb[0].mxu0 %v3092
        %v3259 = vpop.f32.mrb[0].mxu0
        %v3260 = vadd.f32 %v3128, %v3259
        %v3261 = vpop.f32.mrb[0].mxu0
        %v3262 = vadd.f32 %v3132, %v3261
        %v3263 = vpop.f32.mrb[0].mxu0
        %v3264 = vadd.f32 %v3128, %v3263
        %v3265 = vpop.f32.mrb[0].mxu0
        %v3266 = vadd.f32 %v3132, %v3265
        %3267 = vmatprep.mubr.bf16.mxu0 0
        %3268 = vmatmul.mubr.bf16.gmra.mrb[0].mxu0 %v3093
        %v3269 = vpop.f32.mrb[0].mxu0
        %v3270 = vadd.f32 %v3128, %v3269
        %v3271 = vpop.f32.mrb[0].mxu0
        %v3272 = vadd.f32 %v3132, %v3271
        %v3273 = vpop.f32.mrb[0].mxu0
        %v3274 = vadd.f32 %v3128, %v3273
        %v3275 = vpop.f32.mrb[0].mxu0
        %v3276 = vadd.f32 %v3132, %v3275
        %3277 = vmatprep.mubr.bf16.mxu0 0
        %3278 = vmatmul.mubr.bf16.gmra.mrb[0].mxu0 %v3094
        %v3279 = vpop.f32.mrb[0].mxu0
        %v3280 = vadd.f32 %v3128, %v3279
        %v3281 = vpop.f32.mrb[0].mxu0
        %v3282 = vadd.f32 %v3132, %v3281
        %v3283 = vpop.f32.mrb[0].mxu0
        %v3284 = vadd.f32 %v3128, %v3283
        %v3285 = vpop.f32.mrb[0].mxu0
        %v3286 = vadd.f32 %v3132, %v3285
        %3287 = vmatprep.mubr.bf16.mxu0 0
        %3288 = vmatmul.mubr.bf16.gmra.mrb[0].mxu0 %v3095
        %v3289 = vpop.f32.mrb[0].mxu0
        %v3290 = vadd.f32 %v3128, %v3289
        %v3291 = vpop.f32.mrb[0].mxu0
        %v3292 = vadd.f32 %v3132, %v3291
        %v3293 = vpop.f32.mrb[0].mxu0
        %v3294 = vadd.f32 %v3128, %v3293
        %v3295 = vpop.f32.mrb[0].mxu0
        %v3296 = vadd.f32 %v3132, %v3295
        %3297 = vmatprep.mubr.bf16.mxu0 0
        %3298 = vmatmul.mubr.bf16.gmra.mrb[0].mxu0 %v3096
        %v3299 = vpop.f32.mrb[0].mxu0
        %v3300 = vadd.f32 %v3128, %v3299
        %v3301 = vpop.f32.mrb[0].mxu0
        %v3302 = vadd.f32 %v3132, %v3301
        %v3303 = vpop.f32.mrb[0].mxu0
        %v3304 = vadd.f32 %v3128, %v3303
        %v3305 = vpop.f32.mrb[0].mxu0
        %v3306 = vadd.f32 %v3132, %v3305
        %3307 = vmatprep.mubr.bf16.mxu0 0
        %3308 = vmatmul.mubr.bf16.gmra.mrb[0].mxu0 %v3097
        %v3309 = vpop.f32.mrb[0].mxu0
        %v3310 = vadd.f32 %v3128, %v3309
        %v3311 = vpop.f32.mrb[0].mxu0
        %v3312 = vadd.f32 %v3132, %v3311
        %v3313 = vpop.f32.mrb[0].mxu0
        %v3314 = vadd.f32 %v3128, %v3313
        %v3315 = vpop.f32.mrb[0].mxu0
        %v3316 = vadd.f32 %v3132, %v3315
        %3317 = vmatprep.mubr.bf16.mxu0 0
        %3318 = vmatmul.mubr.bf16.gmra.mrb[0].mxu0 %v3098
        %v3319 = vpop.f32.mrb[0].mxu0
        %v3320 = vadd.f32 %v3128, %v3319
        %v3321 = vpop.f32.mrb[0].mxu0
        %v3322 = vadd.f32 %v3132, %v3321
        %v3323 = vpop.f32.mrb[0].mxu0
        %v3324 = vadd.f32 %v3128, %v3323
        %v3325 = vpop.f32.mrb[0].mxu0
        %v3326 = vadd.f32 %v3132, %v3325
        %3327 = vmatprep.mubr.bf16.mxu0 0
        %3328 = vmatmul.mubr.bf16.gmra.mrb[0].mxu0 %v3099
        %v3329 = vpop.f32.mrb[0].mxu0
        %v3330 = vadd.f32 %v3128, %v3329
        %v3331 = vpop.f32.mrb[0].mxu0
        %v3332 = vadd.f32 %v3132, %v3331
        %v3333 = vpop.f32.mrb[0].mxu0
        %v3334 = vadd.f32 %v3128, %v3333
        %v3335 = vpop.f32.mrb[0].mxu0
        %v3336 = vadd.f32 %v3132, %v3335
        %3337 = vmatprep.mubr.bf16.mxu0 0
        %3338 = vmatmul.mubr.bf16.gmra.mrb[0].mxu0 %v3100
        %v3339 = vpop.f32.mrb[0].mxu0
        %v3340 = vadd.f32 %v3128, %v3339
        %v3341 = vpop.f32.mrb[0].mxu0
        %v3342 = vadd.f32 %v3132, %v3341
        %v3343 = vpop.f32.mrb[0].mxu0
        %v3344 = vadd.f32 %v3128, %v3343
        %v3345 = vpop.f32.mrb[0].mxu0
        %v3346 = vadd.f32 %v3132, %v3345
        %3347 = vmatprep.mubr.bf16.mxu0 0
        %3348 = vmatmul.mubr.bf16.gmra.mrb[0].mxu0 %v3101
        %v3349 = vpop.f32.mrb[0].mxu0
        %v3350 = vadd.f32 %v3128, %v3349
        %v3351 = vpop.f32.mrb[0].mxu0
        %v3352 = vadd.f32 %v3132, %v3351
        %v3353 = vpop.f32.mrb[0].mxu0
        %v3354 = vadd.f32 %v3128, %v3353
        %v3355 = vpop.f32.mrb[0].mxu0
        %v3356 = vadd.f32 %v3132, %v3355
        %3357 = vmatprep.mubr.bf16.mxu0 0
        %3358 = vmatmul.mubr.bf16.gmra.mrb[0].mxu0 %v3102
        %v3359 = vpop.f32.mrb[0].mxu0
        %v3360 = vadd.f32 %v3128, %v3359
        %v3361 = vpop.f32.mrb[0].mxu0
        %v3362 = vadd.f32 %v3132, %v3361
        %v3363 = vpop.f32.mrb[0].mxu0
        %v3364 = vadd.f32 %v3128, %v3363
        %v3365 = vpop.f32.mrb[0].mxu0
        %v3366 = vadd.f32 %v3132, %v3365
        %3367 = vmatprep.mubr.bf16.mxu0 0
        %3368 = vmatmul.mubr.bf16.gmra.mrb[0].mxu0 %v3103
        %v3369 = vpop.f32.mrb[0].mxu0
        %v3370 = vadd.f32 %v3128, %v3369
        %v3371 = vpop.f32.mrb[0].mxu0
        %v3372 = vadd.f32 %v3132, %v3371
        %v3373 = vpop.f32.mrb[0].mxu0
        %v3374 = vadd.f32 %v3128, %v3373
        %v3375 = vpop.f32.mrb[0].mxu0
        %v3376 = vadd.f32 %v3132, %v3375
        %3377 = vmatprep.mubr.bf16.mxu0 0
        %3378 = vmatmul.mubr.bf16.gmra.mrb[0].mxu0 %v3104
        %v3379 = vpop.f32.mrb[0].mxu0
        %v3380 = vadd.f32 %v3128, %v3379
        %v3381 = vpop.f32.mrb[0].mxu0
        %v3382 = vadd.f32 %v3132, %v3381
        %v3383 = vpop.f32.mrb[0].mxu0
        %v3384 = vadd.f32 %v3128, %v3383
        %v3385 = vpop.f32.mrb[0].mxu0
        %v3386 = vadd.f32 %v3132, %v3385
        %3387 = vmatprep.mubr.bf16.mxu0 0
        %3388 = vmatmul.mubr.bf16.gmra.mrb[0].mxu0 %v3105
        %v3389 = vpop.f32.mrb[0].mxu0
        %v3390 = vadd.f32 %v3128, %v3389
        %v3391 = vpop.f32.mrb[0].mxu0
        %v3392 = vadd.f32 %v3132, %v3391
        %v3393 = vpop.f32.mrb[0].mxu0
        %v3394 = vadd.f32 %v3128, %v3393
        %v3395 = vpop.f32.mrb[0].mxu0
        %v3396 = vadd.f32 %v3132, %v3395
        %3397 = vmatprep.mubr.bf16.mxu0 0
        %3398 = vmatmul.mubr.bf16.gmra.mrb[0].mxu0 %v3106
        %v3399 = vpop.f32.mrb[0].mxu0
        %v3400 = vadd.f32 %v3128, %v3399
        %v3401 = vpop.f32.mrb[0].mxu0
        %v3402 = vadd.f32 %v3132, %v3401
        %v3403 = vpop.f32.mrb[0].mxu0
        %v3404 = vadd.f32 %v3128, %v3403
        %v3405 = vpop.f32.mrb[0].mxu0
        %v3406 = vadd.f32 %v3132, %v3405
        %3407 = vdwg.mxu0
        %v3408 = vsub.f32 0.0, %v3250
        %v3409 = vsub.f32 0.0, %v3252
        %v3410 = vsub.f32 0.0, %v3254
        %v3411 = vsub.f32 0.0, %v3256
        %v3412 = vsub.f32 0.0, %v3260
        %v3413 = vsub.f32 0.0, %v3262
        %v3414 = vsub.f32 0.0, %v3264
        %v3415 = vsub.f32 0.0, %v3266
        %v3416 = vsub.f32 0.0, %v3270
        %v3417 = vsub.f32 0.0, %v3272
        %v3418 = vsub.f32 0.0, %v3274
        %v3419 = vsub.f32 0.0, %v3276
        %v3420 = vsub.f32 0.0, %v3280
        %v3421 = vsub.f32 0.0, %v3282
        %v3422 = vsub.f32 0.0, %v3284
        %v3423 = vsub.f32 0.0, %v3286
        %v3424 = vsub.f32 0.0, %v3290
        %v3425 = vsub.f32 0.0, %v3292
        %v3426 = vsub.f32 0.0, %v3294
        %v3427 = vsub.f32 0.0, %v3296
        %v3428 = vsub.f32 0.0, %v3300
        %v3429 = vsub.f32 0.0, %v3302
        %v3430 = vsub.f32 0.0, %v3304
        %v3431 = vsub.f32 0.0, %v3306
        %v3432 = vsub.f32 0.0, %v3310
        %v3433 = vsub.f32 0.0, %v3312
        %v3434 = vsub.f32 0.0, %v3314
        %v3435 = vsub.f32 0.0, %v3316
        %v3436 = vsub.f32 0.0, %v3320
        %v3437 = vsub.f32 0.0, %v3322
        %v3438 = vsub.f32 0.0, %v3324
        %v3439 = vsub.f32 0.0, %v3326
        %v3440 = vsub.f32 0.0, %v3330
        %v3441 = vsub.f32 0.0, %v3332
        %v3442 = vsub.f32 0.0, %v3334
        %v3443 = vsub.f32 0.0, %v3336
        %v3444 = vsub.f32 0.0, %v3340
        %v3445 = vsub.f32 0.0, %v3342
        %v3446 = vsub.f32 0.0, %v3344
        %v3447 = vsub.f32 0.0, %v3346
        %v3448 = vsub.f32 0.0, %v3350
        %v3449 = vsub.f32 0.0, %v3352
        %v3450 = vsub.f32 0.0, %v3354
        %v3451 = vsub.f32 0.0, %v3356
        %v3452 = vsub.f32 0.0, %v3360
        %v3453 = vsub.f32 0.0, %v3362
        %v3454 = vsub.f32 0.0, %v3364
        %v3455 = vsub.f32 0.0, %v3366
        %v3456 = vsub.f32 0.0, %v3370
        %v3457 = vsub.f32 0.0, %v3372
        %v3458 = vsub.f32 0.0, %v3374
        %v3459 = vsub.f32 0.0, %v3376
        %v3460 = vsub.f32 0.0, %v3380
        %v3461 = vsub.f32 0.0, %v3382
        %v3462 = vsub.f32 0.0, %v3384
        %v3463 = vsub.f32 0.0, %v3386
        %v3464 = vsub.f32 0.0, %v3390
        %v3465 = vsub.f32 0.0, %v3392
        %v3466 = vsub.f32 0.0, %v3394
        %v3467 = vsub.f32 0.0, %v3396
        %v3468 = vsub.f32 0.0, %v3400
        %v3469 = vsub.f32 0.0, %v3402
        %v3470 = vsub.f32 0.0, %v3404
        %v3471 = vsub.f32 0.0, %v3406
        %v3472 = vmul.f32 %v3408, 1.442695
        %v3473 = vpow.pop %v3472
        %v3474 = vmul.f32 %v3409, 1.442695
        %v3475 = vpow.pop %v3474
        %v3476 = vmul.f32 %v3410, 1.442695
        %v3477 = vpow.pop %v3476
        %v3478 = vmul.f32 %v3411, 1.442695
        %v3479 = vpow.pop %v3478
        %v3480 = vmul.f32 %v3412, 1.442695
        %v3481 = vpow.pop %v3480
        %v3482 = vmul.f32 %v3413, 1.442695
        %v3483 = vpow.pop %v3482
        %v3484 = vmul.f32 %v3414, 1.442695
        %v3485 = vpow.pop %v3484
        %v3486 = vmul.f32 %v3415, 1.442695
        %v3487 = vpow.pop %v3486
        %v3488 = vmul.f32 %v3416, 1.442695
        %v3489 = vpow.pop %v3488
        %v3490 = vmul.f32 %v3417, 1.442695
        %v3491 = vpow.pop %v3490
        %v3492 = vmul.f32 %v3418, 1.442695
        %v3493 = vpow.pop %v3492
        %v3494 = vmul.f32 %v3419, 1.442695
        %v3495 = vpow.pop %v3494
        %v3496 = vmul.f32 %v3420, 1.442695
        %v3497 = vpow.pop %v3496
        %v3498 = vmul.f32 %v3421, 1.442695
        %v3499 = vpow.pop %v3498
        %v3500 = vmul.f32 %v3422, 1.442695
        %v3501 = vpow.pop %v3500
        %v3502 = vmul.f32 %v3423, 1.442695
        %v3503 = vpow.pop %v3502
        %v3504 = vmul.f32 %v3424, 1.442695
        %v3505 = vpow.pop %v3504
        %v3506 = vmul.f32 %v3425, 1.442695
        %v3507 = vpow.pop %v3506
        %v3508 = vmul.f32 %v3426, 1.442695
        %v3509 = vpow.pop %v3508
        %v3510 = vmul.f32 %v3427, 1.442695
        %v3511 = vpow.pop %v3510
        %v3512 = vmul.f32 %v3428, 1.442695
        %v3513 = vpow.pop %v3512
        %v3514 = vmul.f32 %v3429, 1.442695
        %v3515 = vpow.pop %v3514
        %v3516 = vmul.f32 %v3430, 1.442695
        %v3517 = vpow.pop %v3516
        %v3518 = vmul.f32 %v3431, 1.442695
        %v3519 = vpow.pop %v3518
        %v3520 = vmul.f32 %v3432, 1.442695
        %v3521 = vpow.pop %v3520
        %v3522 = vmul.f32 %v3433, 1.442695
        %v3523 = vpow.pop %v3522
        %v3524 = vmul.f32 %v3434, 1.442695
        %v3525 = vpow.pop %v3524
        %v3526 = vmul.f32 %v3435, 1.442695
        %v3527 = vpow.pop %v3526
        %v3528 = vmul.f32 %v3436, 1.442695
        %v3529 = vpow.pop %v3528
        %v3530 = vmul.f32 %v3437, 1.442695
        %v3531 = vpow.pop %v3530
        %v3532 = vmul.f32 %v3438, 1.442695
        %v3533 = vpow.pop %v3532
        %v3534 = vmul.f32 %v3439, 1.442695
        %v3535 = vpow.pop %v3534
        %v3536 = vmul.f32 %v3440, 1.442695
        %v3537 = vpow.pop %v3536
        %v3538 = vmul.f32 %v3441, 1.442695
        %v3539 = vpow.pop %v3538
        %v3540 = vmul.f32 %v3442, 1.442695
        %v3541 = vpow.pop %v3540
        %v3542 = vmul.f32 %v3443, 1.442695
        %v3543 = vpow.pop %v3542
        %v3544 = vmul.f32 %v3444, 1.442695
        %v3545 = vpow.pop %v3544
        %v3546 = vmul.f32 %v3445, 1.442695
        %v3547 = vpow.pop %v3546
        %v3548 = vmul.f32 %v3446, 1.442695
        %v3549 = vpow.pop %v3548
        %v3550 = vmul.f32 %v3447, 1.442695
        %v3551 = vpow.pop %v3550
        %v3552 = vmul.f32 %v3448, 1.442695
        %v3553 = vpow.pop %v3552
        %v3554 = vmul.f32 %v3449, 1.442695
        %v3555 = vpow.pop %v3554
        %v3556 = vmul.f32 %v3450, 1.442695
        %v3557 = vpow.pop %v3556
        %v3558 = vmul.f32 %v3451, 1.442695
        %v3559 = vpow.pop %v3558
        %v3560 = vmul.f32 %v3452, 1.442695
        %v3561 = vpow.pop %v3560
        %v3562 = vmul.f32 %v3453, 1.442695
        %v3563 = vpow.pop %v3562
        %v3564 = vmul.f32 %v3454, 1.442695
        %v3565 = vpow.pop %v3564
        %v3566 = vmul.f32 %v3455, 1.442695
        %v3567 = vpow.pop %v3566
        %v3568 = vmul.f32 %v3456, 1.442695
        %v3569 = vpow.pop %v3568
        %v3570 = vmul.f32 %v3457, 1.442695
        %v3571 = vpow.pop %v3570
        %v3572 = vmul.f32 %v3458, 1.442695
        %v3573 = vpow.pop %v3572
        %v3574 = vmul.f32 %v3459, 1.442695
        %v3575 = vpow.pop %v3574
        %v3576 = vmul.f32 %v3460, 1.442695
        %v3577 = vpow.pop %v3576
        %v3578 = vmul.f32 %v3461, 1.442695
        %v3579 = vpow.pop %v3578
        %v3580 = vmul.f32 %v3462, 1.442695
        %v3581 = vpow.pop %v3580
        %v3582 = vmul.f32 %v3463, 1.442695
        %v3583 = vpow.pop %v3582
        %v3584 = vmul.f32 %v3464, 1.442695
        %v3585 = vpow.pop %v3584
        %v3586 = vmul.f32 %v3465, 1.442695
        %v3587 = vpow.pop %v3586
        %v3588 = vmul.f32 %v3466, 1.442695
        %v3589 = vpow.pop %v3588
        %v3590 = vmul.f32 %v3467, 1.442695
        %v3591 = vpow.pop %v3590
        %v3592 = vmul.f32 %v3468, 1.442695
        %v3593 = vpow.pop %v3592
        %v3594 = vmul.f32 %v3469, 1.442695
        %v3595 = vpow.pop %v3594
        %v3596 = vmul.f32 %v3470, 1.442695
        %v3597 = vpow.pop %v3596
        %v3598 = vmul.f32 %v3471, 1.442695
        %v3599 = vpow.pop %v3598
        %v3600 = vadd.f32 %v3473, 1.0
        %v3601 = vadd.f32 %v3475, 1.0
        %v3602 = vadd.f32 %v3477, 1.0
        %v3603 = vadd.f32 %v3479, 1.0
        %v3604 = vadd.f32 %v3481, 1.0
        %v3605 = vadd.f32 %v3483, 1.0
        %v3606 = vadd.f32 %v3485, 1.0
        %v3607 = vadd.f32 %v3487, 1.0
        %v3608 = vadd.f32 %v3489, 1.0
        %v3609 = vadd.f32 %v3491, 1.0
        %v3610 = vadd.f32 %v3493, 1.0
        %v3611 = vadd.f32 %v3495, 1.0
        %v3612 = vadd.f32 %v3497, 1.0
        %v3613 = vadd.f32 %v3499, 1.0
        %v3614 = vadd.f32 %v3501, 1.0
        %v3615 = vadd.f32 %v3503, 1.0
        %v3616 = vadd.f32 %v3505, 1.0
        %v3617 = vadd.f32 %v3507, 1.0
        %v3618 = vadd.f32 %v3509, 1.0
        %v3619 = vadd.f32 %v3511, 1.0
        %v3620 = vadd.f32 %v3513, 1.0
        %v3621 = vadd.f32 %v3515, 1.0
        %v3622 = vadd.f32 %v3517, 1.0
        %v3623 = vadd.f32 %v3519, 1.0
        %v3624 = vadd.f32 %v3521, 1.0
        %v3625 = vadd.f32 %v3523, 1.0
        %v3626 = vadd.f32 %v3525, 1.0
        %v3627 = vadd.f32 %v3527, 1.0
        %v3628 = vadd.f32 %v3529, 1.0
        %v3629 = vadd.f32 %v3531, 1.0
        %v3630 = vadd.f32 %v3533, 1.0
        %v3631 = vadd.f32 %v3535, 1.0
        %v3632 = vadd.f32 %v3537, 1.0
        %v3633 = vadd.f32 %v3539, 1.0
        %v3634 = vadd.f32 %v3541, 1.0
        %v3635 = vadd.f32 %v3543, 1.0
        %v3636 = vadd.f32 %v3545, 1.0
        %v3637 = vadd.f32 %v3547, 1.0
        %v3638 = vadd.f32 %v3549, 1.0
        %v3639 = vadd.f32 %v3551, 1.0
        %v3640 = vadd.f32 %v3553, 1.0
        %v3641 = vadd.f32 %v3555, 1.0
        %v3642 = vadd.f32 %v3557, 1.0
        %v3643 = vadd.f32 %v3559, 1.0
        %v3644 = vadd.f32 %v3561, 1.0
        %v3645 = vadd.f32 %v3563, 1.0
        %v3646 = vadd.f32 %v3565, 1.0
        %v3647 = vadd.f32 %v3567, 1.0
        %v3648 = vadd.f32 %v3569, 1.0
        %v3649 = vadd.f32 %v3571, 1.0
        %v3650 = vadd.f32 %v3573, 1.0
        %v3651 = vadd.f32 %v3575, 1.0
        %v3652 = vadd.f32 %v3577, 1.0
        %v3653 = vadd.f32 %v3579, 1.0
        %v3654 = vadd.f32 %v3581, 1.0
        %v3655 = vadd.f32 %v3583, 1.0
        %v3656 = vadd.f32 %v3585, 1.0
        %v3657 = vadd.f32 %v3587, 1.0
        %v3658 = vadd.f32 %v3589, 1.0
        %v3659 = vadd.f32 %v3591, 1.0
        %v3660 = vadd.f32 %v3593, 1.0
        %v3661 = vadd.f32 %v3595, 1.0
        %v3662 = vadd.f32 %v3597, 1.0
        %v3663 = vadd.f32 %v3599, 1.0
        %v3664 = vrcp.pop %v3600
        %v3665 = vrcp.pop %v3601
        %v3666 = vrcp.pop %v3602
        %v3667 = vrcp.pop %v3603
        %v3668 = vrcp.pop %v3604
        %v3669 = vrcp.pop %v3605
        %v3670 = vrcp.pop %v3606
        %v3671 = vrcp.pop %v3607
        %v3672 = vrcp.pop %v3608
        %v3673 = vrcp.pop %v3609
        %v3674 = vrcp.pop %v3610
        %v3675 = vrcp.pop %v3611
        %v3676 = vrcp.pop %v3612
        %v3677 = vrcp.pop %v3613
        %v3678 = vrcp.pop %v3614
        %v3679 = vrcp.pop %v3615
        %v3680 = vrcp.pop %v3616
        %v3681 = vrcp.pop %v3617
        %v3682 = vrcp.pop %v3618
        %v3683 = vrcp.pop %v3619
        %v3684 = vrcp.pop %v3620
        %v3685 = vrcp.pop %v3621
        %v3686 = vrcp.pop %v3622
        %v3687 = vrcp.pop %v3623
        %v3688 = vrcp.pop %v3624
        %v3689 = vrcp.pop %v3625
        %v3690 = vrcp.pop %v3626
        %v3691 = vrcp.pop %v3627
        %v3692 = vrcp.pop %v3628
        %v3693 = vrcp.pop %v3629
        %v3694 = vrcp.pop %v3630
        %v3695 = vrcp.pop %v3631
        %v3696 = vrcp.pop %v3632
        %v3697 = vrcp.pop %v3633
        %v3698 = vrcp.pop %v3634
        %v3699 = vrcp.pop %v3635
        %v3700 = vrcp.pop %v3636
        %v3701 = vrcp.pop %v3637
        %v3702 = vrcp.pop %v3638
        %v3703 = vrcp.pop %v3639
        %v3704 = vrcp.pop %v3640
        %v3705 = vrcp.pop %v3641
        %v3706 = vrcp.pop %v3642
        %v3707 = vrcp.pop %v3643
        %v3708 = vrcp.pop %v3644
        %v3709 = vrcp.pop %v3645
        %v3710 = vrcp.pop %v3646
        %v3711 = vrcp.pop %v3647
        %v3712 = vrcp.pop %v3648
        %v3713 = vrcp.pop %v3649
        %v3714 = vrcp.pop %v3650
        %v3715 = vrcp.pop %v3651
        %v3716 = vrcp.pop %v3652
        %v3717 = vrcp.pop %v3653
        %v3718 = vrcp.pop %v3654
        %v3719 = vrcp.pop %v3655
        %v3720 = vrcp.pop %v3656
        %v3721 = vrcp.pop %v3657
        %v3722 = vrcp.pop %v3658
        %v3723 = vrcp.pop %v3659
        %v3724 = vrcp.pop %v3660
        %v3725 = vrcp.pop %v3661
        %v3726 = vrcp.pop %v3662
        %v3727 = vrcp.pop %v3663
        %v3728 = vmax.f32 %v3664, 0.0
        %v3729 = vmax.f32 %v3665, 0.0
        %v3730 = vmax.f32 %v3666, 0.0
        %v3731 = vmax.f32 %v3667, 0.0
        %v3732 = vmax.f32 %v3668, 0.0
        %v3733 = vmax.f32 %v3669, 0.0
        %v3734 = vmax.f32 %v3670, 0.0
        %v3735 = vmax.f32 %v3671, 0.0
        %v3736 = vmax.f32 %v3672, 0.0
        %v3737 = vmax.f32 %v3673, 0.0
        %v3738 = vmax.f32 %v3674, 0.0
        %v3739 = vmax.f32 %v3675, 0.0
        %v3740 = vmax.f32 %v3676, 0.0
        %v3741 = vmax.f32 %v3677, 0.0
        %v3742 = vmax.f32 %v3678, 0.0
        %v3743 = vmax.f32 %v3679, 0.0
        %v3744 = vmax.f32 %v3680, 0.0
        %v3745 = vmax.f32 %v3681, 0.0
        %v3746 = vmax.f32 %v3682, 0.0
        %v3747 = vmax.f32 %v3683, 0.0
        %v3748 = vmax.f32 %v3684, 0.0
        %v3749 = vmax.f32 %v3685, 0.0
        %v3750 = vmax.f32 %v3686, 0.0
        %v3751 = vmax.f32 %v3687, 0.0
        %v3752 = vmax.f32 %v3688, 0.0
        %v3753 = vmax.f32 %v3689, 0.0
        %v3754 = vmax.f32 %v3690, 0.0
        %v3755 = vmax.f32 %v3691, 0.0
        %v3756 = vmax.f32 %v3692, 0.0
        %v3757 = vmax.f32 %v3693, 0.0
        %v3758 = vmax.f32 %v3694, 0.0
        %v3759 = vmax.f32 %v3695, 0.0
        %v3760 = vmax.f32 %v3696, 0.0
        %v3761 = vmax.f32 %v3697, 0.0
        %v3762 = vmax.f32 %v3698, 0.0
        %v3763 = vmax.f32 %v3699, 0.0
        %v3764 = vmax.f32 %v3700, 0.0
        %v3765 = vmax.f32 %v3701, 0.0
        %v3766 = vmax.f32 %v3702, 0.0
        %v3767 = vmax.f32 %v3703, 0.0
        %v3768 = vmax.f32 %v3704, 0.0
        %v3769 = vmax.f32 %v3705, 0.0
        %v3770 = vmax.f32 %v3706, 0.0
        %v3771 = vmax.f32 %v3707, 0.0
        %v3772 = vmax.f32 %v3708, 0.0
        %v3773 = vmax.f32 %v3709, 0.0
        %v3774 = vmax.f32 %v3710, 0.0
        %v3775 = vmax.f32 %v3711, 0.0
        %v3776 = vmax.f32 %v3712, 0.0
        %v3777 = vmax.f32 %v3713, 0.0
        %v3778 = vmax.f32 %v3714, 0.0
        %v3779 = vmax.f32 %v3715, 0.0
        %v3780 = vmax.f32 %v3716, 0.0
        %v3781 = vmax.f32 %v3717, 0.0
        %v3782 = vmax.f32 %v3718, 0.0
        %v3783 = vmax.f32 %v3719, 0.0
        %v3784 = vmax.f32 %v3720, 0.0
        %v3785 = vmax.f32 %v3721, 0.0
        %v3786 = vmax.f32 %v3722, 0.0
        %v3787 = vmax.f32 %v3723, 0.0
        %v3788 = vmax.f32 %v3724, 0.0
        %v3789 = vmax.f32 %v3725, 0.0
        %v3790 = vmax.f32 %v3726, 0.0
        %v3791 = vmax.f32 %v3727, 0.0
        %v3792 = vmin.f32 %v3728, 1.0
        %v3793 = vmin.f32 %v3729, 1.0
        %v3794 = vmin.f32 %v3730, 1.0
        %v3795 = vmin.f32 %v3731, 1.0
        %v3796 = vmin.f32 %v3732, 1.0
        %v3797 = vmin.f32 %v3733, 1.0
        %v3798 = vmin.f32 %v3734, 1.0
        %v3799 = vmin.f32 %v3735, 1.0
        %v3800 = vmin.f32 %v3736, 1.0
        %v3801 = vmin.f32 %v3737, 1.0
        %v3802 = vmin.f32 %v3738, 1.0
        %v3803 = vmin.f32 %v3739, 1.0
        %v3804 = vmin.f32 %v3740, 1.0
        %v3805 = vmin.f32 %v3741, 1.0
        %v3806 = vmin.f32 %v3742, 1.0
        %v3807 = vmin.f32 %v3743, 1.0
        %v3808 = vmin.f32 %v3744, 1.0
        %v3809 = vmin.f32 %v3745, 1.0
        %v3810 = vmin.f32 %v3746, 1.0
        %v3811 = vmin.f32 %v3747, 1.0
        %v3812 = vmin.f32 %v3748, 1.0
        %v3813 = vmin.f32 %v3749, 1.0
        %v3814 = vmin.f32 %v3750, 1.0
        %v3815 = vmin.f32 %v3751, 1.0
        %v3816 = vmin.f32 %v3752, 1.0
        %v3817 = vmin.f32 %v3753, 1.0
        %v3818 = vmin.f32 %v3754, 1.0
        %v3819 = vmin.f32 %v3755, 1.0
        %v3820 = vmin.f32 %v3756, 1.0
        %v3821 = vmin.f32 %v3757, 1.0
        %v3822 = vmin.f32 %v3758, 1.0
        %v3823 = vmin.f32 %v3759, 1.0
        %v3824 = vmin.f32 %v3760, 1.0
        %v3825 = vmin.f32 %v3761, 1.0
        %v3826 = vmin.f32 %v3762, 1.0
        %v3827 = vmin.f32 %v3763, 1.0
        %v3828 = vmin.f32 %v3764, 1.0
        %v3829 = vmin.f32 %v3765, 1.0
        %v3830 = vmin.f32 %v3766, 1.0
        %v3831 = vmin.f32 %v3767, 1.0
        %v3832 = vmin.f32 %v3768, 1.0
        %v3833 = vmin.f32 %v3769, 1.0
        %v3834 = vmin.f32 %v3770, 1.0
        %v3835 = vmin.f32 %v3771, 1.0
        %v3836 = vmin.f32 %v3772, 1.0
        %v3837 = vmin.f32 %v3773, 1.0
        %v3838 = vmin.f32 %v3774, 1.0
        %v3839 = vmin.f32 %v3775, 1.0
        %v3840 = vmin.f32 %v3776, 1.0
        %v3841 = vmin.f32 %v3777, 1.0
        %v3842 = vmin.f32 %v3778, 1.0
        %v3843 = vmin.f32 %v3779, 1.0
        %v3844 = vmin.f32 %v3780, 1.0
        %v3845 = vmin.f32 %v3781, 1.0
        %v3846 = vmin.f32 %v3782, 1.0
        %v3847 = vmin.f32 %v3783, 1.0
        %v3848 = vmin.f32 %v3784, 1.0
        %v3849 = vmin.f32 %v3785, 1.0
        %v3850 = vmin.f32 %v3786, 1.0
        %v3851 = vmin.f32 %v3787, 1.0
        %v3852 = vmin.f32 %v3788, 1.0
        %v3853 = vmin.f32 %v3789, 1.0
        %v3854 = vmin.f32 %v3790, 1.0
        %v3855 = vmin.f32 %v3791, 1.0
        %v3856 = vpack.c.bf16 %v3794, %v3792
        %v3857 = vpack.c.bf16 %v3795, %v3793
        %v3858 = vpack.c.bf16 %v3798, %v3796
        %v3859 = vpack.c.bf16 %v3799, %v3797
        %v3860 = vpack.c.bf16 %v3802, %v3800
        %v3861 = vpack.c.bf16 %v3803, %v3801
        %v3862 = vpack.c.bf16 %v3806, %v3804
        %v3863 = vpack.c.bf16 %v3807, %v3805
        %v3864 = vpack.c.bf16 %v3810, %v3808
        %v3865 = vpack.c.bf16 %v3811, %v3809
        %v3866 = vpack.c.bf16 %v3814, %v3812
        %v3867 = vpack.c.bf16 %v3815, %v3813
        %v3868 = vpack.c.bf16 %v3818, %v3816
        %v3869 = vpack.c.bf16 %v3819, %v3817
        %v3870 = vpack.c.bf16 %v3822, %v3820
        %v3871 = vpack.c.bf16 %v3823, %v3821
        %v3872 = vpack.c.bf16 %v3826, %v3824
        %v3873 = vpack.c.bf16 %v3827, %v3825
        %v3874 = vpack.c.bf16 %v3830, %v3828
        %v3875 = vpack.c.bf16 %v3831, %v3829
        %v3876 = vpack.c.bf16 %v3834, %v3832
        %v3877 = vpack.c.bf16 %v3835, %v3833
        %v3878 = vpack.c.bf16 %v3838, %v3836
        %v3879 = vpack.c.bf16 %v3839, %v3837
        %v3880 = vpack.c.bf16 %v3842, %v3840
        %v3881 = vpack.c.bf16 %v3843, %v3841
        %v3882 = vpack.c.bf16 %v3846, %v3844
        %v3883 = vpack.c.bf16 %v3847, %v3845
        %v3884 = vpack.c.bf16 %v3850, %v3848
        %v3885 = vpack.c.bf16 %v3851, %v3849
        %v3886 = vpack.c.bf16 %v3854, %v3852
        %v3887 = vpack.c.bf16 %v3855, %v3853
        %v3920 = vunpack.c.l.b16 %v3856
        %v3921 = vunpack.c.l.b16 %v3857
        %v3922 = vunpack.c.h.b16 %v3856
        %v3923 = vunpack.c.h.b16 %v3857
        %v3924 = vunpack.c.l.b16 %v3858
        %v3925 = vunpack.c.l.b16 %v3859
        %v3926 = vunpack.c.h.b16 %v3858
        %v3927 = vunpack.c.h.b16 %v3859
        %v3928 = vunpack.c.l.b16 %v3860
        %v3929 = vunpack.c.l.b16 %v3861
        %v3930 = vunpack.c.h.b16 %v3860
        %v3931 = vunpack.c.h.b16 %v3861
        %v3932 = vunpack.c.l.b16 %v3862
        %v3933 = vunpack.c.l.b16 %v3863
        %v3934 = vunpack.c.h.b16 %v3862
        %v3935 = vunpack.c.h.b16 %v3863
        %v3936 = vunpack.c.l.b16 %v3864
        %v3937 = vunpack.c.l.b16 %v3865
        %v3938 = vunpack.c.h.b16 %v3864
        %v3939 = vunpack.c.h.b16 %v3865
        %v3940 = vunpack.c.l.b16 %v3866
        %v3941 = vunpack.c.l.b16 %v3867
        %v3942 = vunpack.c.h.b16 %v3866
        %v3943 = vunpack.c.h.b16 %v3867
        %v3944 = vunpack.c.l.b16 %v3868
        %v3945 = vunpack.c.l.b16 %v3869
        %v3946 = vunpack.c.h.b16 %v3868
        %v3947 = vunpack.c.h.b16 %v3869
        %v3948 = vunpack.c.l.b16 %v3870
        %v3949 = vunpack.c.l.b16 %v3871
        %v3950 = vunpack.c.h.b16 %v3870
        %v3951 = vunpack.c.h.b16 %v3871
        %v3952 = vunpack.c.l.b16 %v3872
        %v3953 = vunpack.c.l.b16 %v3873
        %v3954 = vunpack.c.h.b16 %v3872
        %v3955 = vunpack.c.h.b16 %v3873
        %v3956 = vunpack.c.l.b16 %v3874
        %v3957 = vunpack.c.l.b16 %v3875
        %v3958 = vunpack.c.h.b16 %v3874
        %v3959 = vunpack.c.h.b16 %v3875
        %v3960 = vunpack.c.l.b16 %v3876
        %v3961 = vunpack.c.l.b16 %v3877
        %v3962 = vunpack.c.h.b16 %v3876
        %v3963 = vunpack.c.h.b16 %v3877
        %v3964 = vunpack.c.l.b16 %v3878
        %v3965 = vunpack.c.l.b16 %v3879
        %v3966 = vunpack.c.h.b16 %v3878
        %v3967 = vunpack.c.h.b16 %v3879
        %v3968 = vunpack.c.l.b16 %v3880
        %v3969 = vunpack.c.l.b16 %v3881
        %v3970 = vunpack.c.h.b16 %v3880
        %v3971 = vunpack.c.h.b16 %v3881
        %v3972 = vunpack.c.l.b16 %v3882
        %v3973 = vunpack.c.l.b16 %v3883
        %v3974 = vunpack.c.h.b16 %v3882
        %v3975 = vunpack.c.h.b16 %v3883
        %v3976 = vunpack.c.l.b16 %v3884
        %v3977 = vunpack.c.l.b16 %v3885
        %v3978 = vunpack.c.h.b16 %v3884
        %v3979 = vunpack.c.h.b16 %v3885
        %v3980 = vunpack.c.l.b16 %v3886
        %v3981 = vunpack.c.l.b16 %v3887
        %v3982 = vunpack.c.h.b16 %v3886
        %v3983 = vunpack.c.h.b16 %v3887
        %v3984 = vpack.c.b16 %v3921, %v3920
        %v3985 = vpack.c.b16 %v3923, %v3922
        %v3986 = vpack.c.b16 %v3925, %v3924
        %v3987 = vpack.c.b16 %v3927, %v3926
        %v3988 = vpack.c.b16 %v3929, %v3928
        %v3989 = vpack.c.b16 %v3931, %v3930
        %v3990 = vpack.c.b16 %v3933, %v3932
        %v3991 = vpack.c.b16 %v3935, %v3934
        %v3992 = vpack.c.b16 %v3937, %v3936
        %v3993 = vpack.c.b16 %v3939, %v3938
        %v3994 = vpack.c.b16 %v3941, %v3940
        %v3995 = vpack.c.b16 %v3943, %v3942
        %v3996 = vpack.c.b16 %v3945, %v3944
        %v3997 = vpack.c.b16 %v3947, %v3946
        %v3998 = vpack.c.b16 %v3949, %v3948
        %v3999 = vpack.c.b16 %v3951, %v3950
        %v4000 = vpack.c.b16 %v3953, %v3952
        %v4001 = vpack.c.b16 %v3955, %v3954
        %v4002 = vpack.c.b16 %v3957, %v3956
        %v4003 = vpack.c.b16 %v3959, %v3958
        %v4004 = vpack.c.b16 %v3961, %v3960
        %v4005 = vpack.c.b16 %v3963, %v3962
        %v4006 = vpack.c.b16 %v3965, %v3964
        %v4007 = vpack.c.b16 %v3967, %v3966
        %v4008 = vpack.c.b16 %v3969, %v3968
        %v4009 = vpack.c.b16 %v3971, %v3970
        %v4010 = vpack.c.b16 %v3973, %v3972
        %v4011 = vpack.c.b16 %v3975, %v3974
        %v4012 = vpack.c.b16 %v3977, %v3976
        %v4013 = vpack.c.b16 %v3979, %v3978
        %v4014 = vpack.c.b16 %v3981, %v3980
        %v4015 = vpack.c.b16 %v3983, %v3982
        %4048 = vst [vmem:[%s551] sm:$0xff] %v3984
        %4049 = vst [vmem:[%s551 + $0x8] sm:$0xff] %v3985
        %4050 = vst [vmem:[%s551 + $0x10] sm:$0xff] %v3986
        %4051 = vst [vmem:[%s551 + $0x18] sm:$0xff] %v3987
        %4052 = vst [vmem:[%s551 + $0x20] sm:$0xff] %v3988
        %4053 = vst [vmem:[%s551 + $0x28] sm:$0xff] %v3989
        %4054 = vst [vmem:[%s551 + $0x30] sm:$0xff] %v3990
        %4055 = vst [vmem:[%s551 + $0x38] sm:$0xff] %v3991
        %4056 = vst [vmem:[%s551 + $0x40] sm:$0xff] %v3992
        %4057 = vst [vmem:[%s551 + $0x48] sm:$0xff] %v3993
        %4058 = vst [vmem:[%s551 + $0x50] sm:$0xff] %v3994
        %4059 = vst [vmem:[%s551 + $0x58] sm:$0xff] %v3995
        %4060 = vst [vmem:[%s551 + $0x60] sm:$0xff] %v3996
        %4061 = vst [vmem:[%s551 + $0x68] sm:$0xff] %v3997
        %4062 = vst [vmem:[%s551 + $0x70] sm:$0xff] %v3998
        %4063 = vst [vmem:[%s551 + $0x78] sm:$0xff] %v3999
        %4064 = vst [vmem:[%s551 + $0x80] sm:$0xff] %v4000
        %4065 = vst [vmem:[%s551 + $0x88] sm:$0xff] %v4001
        %4066 = vst [vmem:[%s551 + $0x90] sm:$0xff] %v4002
        %4067 = vst [vmem:[%s551 + $0x98] sm:$0xff] %v4003
        %4068 = vst [vmem:[%s551 + $0xa0] sm:$0xff] %v4004
        %4069 = vst [vmem:[%s551 + $0xa8] sm:$0xff] %v4005
        %4070 = vst [vmem:[%s551 + $0xb0] sm:$0xff] %v4006
        %4071 = vst [vmem:[%s551 + $0xb8] sm:$0xff] %v4007
        %4072 = vst [vmem:[%s551 + $0xc0] sm:$0xff] %v4008
        %4073 = vst [vmem:[%s551 + $0xc8] sm:$0xff] %v4009
        %4074 = vst [vmem:[%s551 + $0xd0] sm:$0xff] %v4010
        %4075 = vst [vmem:[%s551 + $0xd8] sm:$0xff] %v4011
        %4076 = vst [vmem:[%s551 + $0xe0] sm:$0xff] %v4012
        %4077 = vst [vmem:[%s551 + $0xe8] sm:$0xff] %v4013
        %4078 = vst [vmem:[%s551 + $0xf0] sm:$0xff] %v4014
        %4079 = vst [vmem:[%s551 + $0xf8] sm:$0xff] %v4015
        %v4080 = vpack.c.bf16 %v1577, %v1573
        %v4081 = vpack.c.bf16 %v1587, %v1583
        %v4082 = vpack.c.bf16 %v1597, %v1593
        %v4083 = vpack.c.bf16 %v1607, %v1603
        %v4084 = vpack.c.bf16 %v1617, %v1613
        %v4085 = vpack.c.bf16 %v1627, %v1623
        %v4086 = vpack.c.bf16 %v1637, %v1633
        %v4087 = vpack.c.bf16 %v1647, %v1643
        %v4088 = vpack.c.bf16 %v1657, %v1653
        %v4089 = vpack.c.bf16 %v1667, %v1663
        %v4090 = vpack.c.bf16 %v1677, %v1673
        %v4091 = vpack.c.bf16 %v1687, %v1683
        %v4092 = vpack.c.bf16 %v1697, %v1693
        %v4093 = vpack.c.bf16 %v1707, %v1703
        %v4094 = vpack.c.bf16 %v1717, %v1713
        %v4095 = vpack.c.bf16 %v1727, %v1723
        %v4112 = vunpack.c.l.b16 %v4080
        %v4113 = vunpack.c.h.b16 %v4080
        %v4114 = vunpack.c.l.b16 %v4081
        %v4115 = vunpack.c.h.b16 %v4081
        %v4116 = vunpack.c.l.b16 %v4082
        %v4117 = vunpack.c.h.b16 %v4082
        %v4118 = vunpack.c.l.b16 %v4083
        %v4119 = vunpack.c.h.b16 %v4083
        %v4120 = vunpack.c.l.b16 %v4084
        %v4121 = vunpack.c.h.b16 %v4084
        %v4122 = vunpack.c.l.b16 %v4085
        %v4123 = vunpack.c.h.b16 %v4085
        %v4124 = vunpack.c.l.b16 %v4086
        %v4125 = vunpack.c.h.b16 %v4086
        %v4126 = vunpack.c.l.b16 %v4087
        %v4127 = vunpack.c.h.b16 %v4087
        %v4128 = vunpack.c.l.b16 %v4088
        %v4129 = vunpack.c.h.b16 %v4088
        %v4130 = vunpack.c.l.b16 %v4089
        %v4131 = vunpack.c.h.b16 %v4089
        %v4132 = vunpack.c.l.b16 %v4090
        %v4133 = vunpack.c.h.b16 %v4090
        %v4134 = vunpack.c.l.b16 %v4091
        %v4135 = vunpack.c.h.b16 %v4091
        %v4136 = vunpack.c.l.b16 %v4092
        %v4137 = vunpack.c.h.b16 %v4092
        %v4138 = vunpack.c.l.b16 %v4093
        %v4139 = vunpack.c.h.b16 %v4093
        %v4140 = vunpack.c.l.b16 %v4094
        %v4141 = vunpack.c.h.b16 %v4094
        %v4142 = vunpack.c.l.b16 %v4095
        %v4143 = vunpack.c.h.b16 %v4095
        %v4144 = vpack.c.b16 %v4112, %v4112
        %v4145 = vpack.c.b16 %v4113, %v4113
        %v4146 = vpack.c.b16 %v4114, %v4114
        %v4147 = vpack.c.b16 %v4115, %v4115
        %v4148 = vpack.c.b16 %v4116, %v4116
        %v4149 = vpack.c.b16 %v4117, %v4117
        %v4150 = vpack.c.b16 %v4118, %v4118
        %v4151 = vpack.c.b16 %v4119, %v4119
        %v4152 = vpack.c.b16 %v4120, %v4120
        %v4153 = vpack.c.b16 %v4121, %v4121
        %v4154 = vpack.c.b16 %v4122, %v4122
        %v4155 = vpack.c.b16 %v4123, %v4123
        %v4156 = vpack.c.b16 %v4124, %v4124
        %v4157 = vpack.c.b16 %v4125, %v4125
        %v4158 = vpack.c.b16 %v4126, %v4126
        %v4159 = vpack.c.b16 %v4127, %v4127
        %v4160 = vpack.c.b16 %v4128, %v4128
        %v4161 = vpack.c.b16 %v4129, %v4129
        %v4162 = vpack.c.b16 %v4130, %v4130
        %v4163 = vpack.c.b16 %v4131, %v4131
        %v4164 = vpack.c.b16 %v4132, %v4132
        %v4165 = vpack.c.b16 %v4133, %v4133
        %v4166 = vpack.c.b16 %v4134, %v4134
        %v4167 = vpack.c.b16 %v4135, %v4135
        %v4168 = vpack.c.b16 %v4136, %v4136
        %v4169 = vpack.c.b16 %v4137, %v4137
        %v4170 = vpack.c.b16 %v4138, %v4138
        %v4171 = vpack.c.b16 %v4139, %v4139
        %v4172 = vpack.c.b16 %v4140, %v4140
        %v4173 = vpack.c.b16 %v4141, %v4141
        %v4174 = vpack.c.b16 %v4142, %v4142
        %v4175 = vpack.c.b16 %v4143, %v4143
        %4208 = vst [vmem:[%s579] sm:$0xf] %v4144
        %4209 = vst [vmem:[%s579 + $0x8] sm:$0xf] %v4145
        %4210 = vst [vmem:[%s579 + $0x10] sm:$0xf] %v4146
        %4211 = vst [vmem:[%s579 + $0x18] sm:$0xf] %v4147
        %4212 = vst [vmem:[%s579 + $0x20] sm:$0xf] %v4148
        %4213 = vst [vmem:[%s579 + $0x28] sm:$0xf] %v4149
        %4214 = vst [vmem:[%s579 + $0x30] sm:$0xf] %v4150
        %4215 = vst [vmem:[%s579 + $0x38] sm:$0xf] %v4151
        %4216 = vst [vmem:[%s579 + $0x40] sm:$0xf] %v4152
        %4217 = vst [vmem:[%s579 + $0x48] sm:$0xf] %v4153
        %4218 = vst [vmem:[%s579 + $0x50] sm:$0xf] %v4154
        %4219 = vst [vmem:[%s579 + $0x58] sm:$0xf] %v4155
        %4220 = vst [vmem:[%s579 + $0x60] sm:$0xf] %v4156
        %4221 = vst [vmem:[%s579 + $0x68] sm:$0xf] %v4157
        %4222 = vst [vmem:[%s579 + $0x70] sm:$0xf] %v4158
        %4223 = vst [vmem:[%s579 + $0x78] sm:$0xf] %v4159
        %4224 = vst [vmem:[%s579 + $0x80] sm:$0xf] %v4160
        %4225 = vst [vmem:[%s579 + $0x88] sm:$0xf] %v4161
        %4226 = vst [vmem:[%s579 + $0x90] sm:$0xf] %v4162
        %4227 = vst [vmem:[%s579 + $0x98] sm:$0xf] %v4163
        %4228 = vst [vmem:[%s579 + $0xa0] sm:$0xf] %v4164
        %4229 = vst [vmem:[%s579 + $0xa8] sm:$0xf] %v4165
        %4230 = vst [vmem:[%s579 + $0xb0] sm:$0xf] %v4166
        %4231 = vst [vmem:[%s579 + $0xb8] sm:$0xf] %v4167
        %4232 = vst [vmem:[%s579 + $0xc0] sm:$0xf] %v4168
        %4233 = vst [vmem:[%s579 + $0xc8] sm:$0xf] %v4169
        %4234 = vst [vmem:[%s579 + $0xd0] sm:$0xf] %v4170
        %4235 = vst [vmem:[%s579 + $0xd8] sm:$0xf] %v4171
        %4236 = vst [vmem:[%s579 + $0xe0] sm:$0xf] %v4172
        %4237 = vst [vmem:[%s579 + $0xe8] sm:$0xf] %v4173
        %4238 = vst [vmem:[%s579 + $0xf0] sm:$0xf] %v4174
        %4239 = vst [vmem:[%s579 + $0xf8] sm:$0xf] %v4175
        %v4240 = vpack.c.bf16 %v2148, %v2147
        %v4241 = vpack.c.bf16 %v2150, %v2149
        %v4242 = vpack.c.bf16 %v2152, %v2151
        %v4243 = vpack.c.bf16 %v2154, %v2153
        %v4244 = vpack.c.bf16 %v2156, %v2155
        %v4245 = vpack.c.bf16 %v2158, %v2157
        %v4246 = vpack.c.bf16 %v2160, %v2159
        %v4247 = vpack.c.bf16 %v2162, %v2161
        %v4248 = vpack.c.bf16 %v2164, %v2163
        %v4249 = vpack.c.bf16 %v2166, %v2165
        %v4250 = vpack.c.bf16 %v2168, %v2167
        %v4251 = vpack.c.bf16 %v2170, %v2169
        %v4252 = vpack.c.bf16 %v2172, %v2171
        %v4253 = vpack.c.bf16 %v2174, %v2173
        %v4254 = vpack.c.bf16 %v2176, %v2175
        %v4255 = vpack.c.bf16 %v2178, %v2177
        %v4272 = vunpack.c.l.b16 %v4240
        %v4273 = vunpack.c.h.b16 %v4240
        %v4274 = vunpack.c.l.b16 %v4241
        %v4275 = vunpack.c.h.b16 %v4241
        %v4276 = vunpack.c.l.b16 %v4242
        %v4277 = vunpack.c.h.b16 %v4242
        %v4278 = vunpack.c.l.b16 %v4243
        %v4279 = vunpack.c.h.b16 %v4243
        %v4280 = vunpack.c.l.b16 %v4244
        %v4281 = vunpack.c.h.b16 %v4244
        %v4282 = vunpack.c.l.b16 %v4245
        %v4283 = vunpack.c.h.b16 %v4245
        %v4284 = vunpack.c.l.b16 %v4246
        %v4285 = vunpack.c.h.b16 %v4246
        %v4286 = vunpack.c.l.b16 %v4247
        %v4287 = vunpack.c.h.b16 %v4247
        %v4288 = vunpack.c.l.b16 %v4248
        %v4289 = vunpack.c.h.b16 %v4248
        %v4290 = vunpack.c.l.b16 %v4249
        %v4291 = vunpack.c.h.b16 %v4249
        %v4292 = vunpack.c.l.b16 %v4250
        %v4293 = vunpack.c.h.b16 %v4250
        %v4294 = vunpack.c.l.b16 %v4251
        %v4295 = vunpack.c.h.b16 %v4251
        %v4296 = vunpack.c.l.b16 %v4252
        %v4297 = vunpack.c.h.b16 %v4252
        %v4298 = vunpack.c.l.b16 %v4253
        %v4299 = vunpack.c.h.b16 %v4253
        %v4300 = vunpack.c.l.b16 %v4254
        %v4301 = vunpack.c.h.b16 %v4254
        %v4302 = vunpack.c.l.b16 %v4255
        %v4303 = vunpack.c.h.b16 %v4255
        %v4304 = vpack.c.b16 %v4272, %v4272
        %v4305 = vpack.c.b16 %v4273, %v4273
        %v4306 = vpack.c.b16 %v4274, %v4274
        %v4307 = vpack.c.b16 %v4275, %v4275
        %v4308 = vpack.c.b16 %v4276, %v4276
        %v4309 = vpack.c.b16 %v4277, %v4277
        %v4310 = vpack.c.b16 %v4278, %v4278
        %v4311 = vpack.c.b16 %v4279, %v4279
        %v4312 = vpack.c.b16 %v4280, %v4280
        %v4313 = vpack.c.b16 %v4281, %v4281
        %v4314 = vpack.c.b16 %v4282, %v4282
        %v4315 = vpack.c.b16 %v4283, %v4283
        %v4316 = vpack.c.b16 %v4284, %v4284
        %v4317 = vpack.c.b16 %v4285, %v4285
        %v4318 = vpack.c.b16 %v4286, %v4286
        %v4319 = vpack.c.b16 %v4287, %v4287
        %v4320 = vpack.c.b16 %v4288, %v4288
        %v4321 = vpack.c.b16 %v4289, %v4289
        %v4322 = vpack.c.b16 %v4290, %v4290
        %v4323 = vpack.c.b16 %v4291, %v4291
        %v4324 = vpack.c.b16 %v4292, %v4292
        %v4325 = vpack.c.b16 %v4293, %v4293
        %v4326 = vpack.c.b16 %v4294, %v4294
        %v4327 = vpack.c.b16 %v4295, %v4295
        %v4328 = vpack.c.b16 %v4296, %v4296
        %v4329 = vpack.c.b16 %v4297, %v4297
        %v4330 = vpack.c.b16 %v4298, %v4298
        %v4331 = vpack.c.b16 %v4299, %v4299
        %v4332 = vpack.c.b16 %v4300, %v4300
        %v4333 = vpack.c.b16 %v4301, %v4301
        %v4334 = vpack.c.b16 %v4302, %v4302
        %v4335 = vpack.c.b16 %v4303, %v4303
        %4368 = vst [vmem:[%s579 + $0x4] sm:$0xf] %v4304
        %4369 = vst [vmem:[%s579 + $0xc] sm:$0xf] %v4305
        %4370 = vst [vmem:[%s579 + $0x14] sm:$0xf] %v4306
        %4371 = vst [vmem:[%s579 + $0x1c] sm:$0xf] %v4307
        %4372 = vst [vmem:[%s579 + $0x24] sm:$0xf] %v4308
        %4373 = vst [vmem:[%s579 + $0x2c] sm:$0xf] %v4309
        %4374 = vst [vmem:[%s579 + $0x34] sm:$0xf] %v4310
        %4375 = vst [vmem:[%s579 + $0x3c] sm:$0xf] %v4311
        %4376 = vst [vmem:[%s579 + $0x44] sm:$0xf] %v4312
        %4377 = vst [vmem:[%s579 + $0x4c] sm:$0xf] %v4313
        %4378 = vst [vmem:[%s579 + $0x54] sm:$0xf] %v4314
        %4379 = vst [vmem:[%s579 + $0x5c] sm:$0xf] %v4315
        %4380 = vst [vmem:[%s579 + $0x64] sm:$0xf] %v4316
        %4381 = vst [vmem:[%s579 + $0x6c] sm:$0xf] %v4317
        %4382 = vst [vmem:[%s579 + $0x74] sm:$0xf] %v4318
        %4383 = vst [vmem:[%s579 + $0x7c] sm:$0xf] %v4319
        %4384 = vst [vmem:[%s579 + $0x84] sm:$0xf] %v4320
        %4385 = vst [vmem:[%s579 + $0x8c] sm:$0xf] %v4321
        %4386 = vst [vmem:[%s579 + $0x94] sm:$0xf] %v4322
        %4387 = vst [vmem:[%s579 + $0x9c] sm:$0xf] %v4323
        %4388 = vst [vmem:[%s579 + $0xa4] sm:$0xf] %v4324
        %4389 = vst [vmem:[%s579 + $0xac] sm:$0xf] %v4325
        %4390 = vst [vmem:[%s579 + $0xb4] sm:$0xf] %v4326
        %4391 = vst [vmem:[%s579 + $0xbc] sm:$0xf] %v4327
        %4392 = vst [vmem:[%s579 + $0xc4] sm:$0xf] %v4328
        %4393 = vst [vmem:[%s579 + $0xcc] sm:$0xf] %v4329
        %4394 = vst [vmem:[%s579 + $0xd4] sm:$0xf] %v4330
        %4395 = vst [vmem:[%s579 + $0xdc] sm:$0xf] %v4331
        %4396 = vst [vmem:[%s579 + $0xe4] sm:$0xf] %v4332
        %4397 = vst [vmem:[%s579 + $0xec] sm:$0xf] %v4333
        %4398 = vst [vmem:[%s579 + $0xf4] sm:$0xf] %v4334
        %4399 = vst [vmem:[%s579 + $0xfc] sm:$0xf] %v4335
        %s4400 = sand.u32 %s344, 1
        %s4401 = scalar_lea.sflag [#allocation4], %s4400
        %s4402 = sand.u32 %s344, 1
        %s4403 = smul.addr %s4402, 256
        %s4404 = scalar_lea.vmem [#allocation8], %s4403
        %s4405 = smul.u32 32, %s32
        %p4406 = scmp.lt.s32.totalorder %s4405, 63
        %s4407 = scalar_select %p4406, %s4405, 63
        %s4408 = smul.addr %s4407, 2
        %s4409 = smul.addr %s4408, 4
        %s4410 = scalar_lea.vmem %s15, %s4409
        // Predicated region
        $region89: #{_vae_forward_impl.1} parent=75 // pred_check
          %p4411 = pneg %p354
        $region90: #{_vae_forward_impl.1} parent=75 // pred_check_branch
          %4413 = sbr.rel (%p4411) target = $region92
        $region91: #{_vae_forward_impl.1} parent=75 // pred_region
          %s4414 = smul.u32 32, %s32
          %s4416 = ssub.s32 4096, 4096
          %4417 = vsyncadd %s4401, %s4416
          %s4418 = smul.addr %s4414, 2
          %s4419 = smul.addr %s4418, 64
          %s4420 = scalar_lea.hbm %s14, %s4419
          %s4421 = sshll.u32 %s4404, 4
          %s4422 = int_to_ptr.vmem [resolvable:$true] %s4421
          %4427 = dma.vmem_to_hbm [thread:$0]  %s4422, 4096, %s4420, %s4401, 128, 128, 8
        $region92: #{_vae_forward_impl.1} parent=75 // pred_fallthru
          _
        // Predicated region
        $region93: #{_vae_forward_impl.1} parent=75 // pred_check
          %p4428 = pneg %p380
        $region94: #{_vae_forward_impl.1} parent=75 // pred_check_branch
          %4430 = sbr.rel (%p4428) target = $region96
        $region95: #{_vae_forward_impl.1} parent=75 // pred_region
          %s4431 = smul.u32 32, %s32
        $region96: #{_vae_forward_impl.1} parent=75 // pred_fallthru
          _
      $region76: #{_vae_forward_impl.1} parent=5 // pred_fallthru
        _
      %p4432 = scmp.le.s32.totalorder 2, %s27
      // Predicated region
      $region97: #{_vae_forward_impl.1} parent=5 // pred_check
        %p4433 = pneg %p4432
      $region98: #{_vae_forward_impl.1} parent=5 // pred_check_branch
        %4435 = sbr.rel (%p4433) target = $region100
      $region99: #{_vae_forward_impl.1} parent=5 // pred_region
        %s4436 = ssub.s32 %s27, 2
        // Predicated region
        $region101: #{_vae_forward_impl.1} parent=99 // pred_check
          %p4437 = pneg %p360
        $region102: #{_vae_forward_impl.1} parent=99 // pred_check_branch
          %4439 = sbr.rel (%p4437) target = $region104
        $region103: #{_vae_forward_impl.1} parent=99 // pred_region
          %s4440 = sand.u32 %s345, 1
          %s4441 = scalar_lea.sflag [#allocation4], %s4440
          %s4442 = sand.u32 %s345, 1
          %s4443 = smul.addr %s4442, 256
          %s4444 = scalar_lea.vmem [#allocation8], %s4443
          %4445 = dma.done %s4441, 4096
        $region104: #{_vae_forward_impl.1} parent=99 // pred_fallthru
          _
        // Predicated region
        $region105: #{_vae_forward_impl.1} parent=99 // pred_check
          %p4446 = pneg %p386
        $region106: #{_vae_forward_impl.1} parent=99 // pred_check_branch
          %4448 = sbr.rel (%p4446) target = $region108
        $region107: #{_vae_forward_impl.1} parent=99 // pred_region
          %s4449 = smul.u32 32, %s33
          %p4450 = scmp.lt.s32.totalorder %s4449, 63
          %s4451 = scalar_select %p4450, %s4449, 63
          %s4452 = smul.addr %s4451, 2
          %s4453 = smul.addr %s4452, 4
          %s4454 = scalar_lea.vmem %s15, %s4453
        $region108: #{_vae_forward_impl.1} parent=99 // pred_fallthru
          _
      $region100: #{_vae_forward_impl.1} parent=5 // pred_fallthru
        _
    $region6: #{_vae_forward_impl.1} parent=1 // loop_footer
      %s31 = sadd.s32 1, %s27
    $region7: #{_vae_forward_impl.1} parent=1 // loop_footer_branch
      %26 = sbr.rel target = $region3
    $region8: #{_vae_forward_impl.1} parent=1 // loop_exit
      _
    %4455 = vsyncpa [#allocation3], 1
    %s4456 = scalar_lea.sflag [#allocation3], 1
    %4457 = vsyncpa %s4456, 1
    %4458 = vsyncpa [#allocation6], 1
    %4459 = vsyncpa [#allocation4], 1
    %s4460 = scalar_lea.sflag [#allocation4], 1
    %4461 = vsyncpa %s4460, 1

</llo_original>
